<compile_context>
chip_gen: v5e
topology: v5e:2x2
jax: 0.10.0
libtpu: 0.0.40
codegen_flags: <defaults>
</compile_context>

<pallas_src>
import jax
import jax.numpy as jnp
from jax import lax
from jax.experimental import pallas as pl
from jax.experimental.pallas import tpu as pltpu

EPS = 1e-5          # PyTorch BatchNorm2d default eps
N_CLASSES = 10
POOL = 8
LANES = 128         # TPU lane width


def _round_up(v, m):
    return ((v + m - 1) // m) * m


def _pick_group(n, m_img, target_m=1024):
    """Largest divisor g of n with g*m_img <= target_m, keeping >=2 grid steps."""
    best = 1
    for d in range(1, n + 1):
        if n % d == 0 and d * m_img <= target_m and n // d >= 2:
            best = max(best, d)
    return best


# ---------------------------------------------------------------------------
# Pallas kernels
# ---------------------------------------------------------------------------
def _convbn_kernel(x_ref, w_ref, ss_ref, o_ref):
    """Fused Conv2d(KxK) + bias + ReLU + BatchNorm2d(eval) for one image group.

    x_ref : (1, GM, Kp)       bf16  K-packed im2col rows (taps*cin + ones col)
    w_ref : (Kp, Cout_pad)    bf16  K-packed weights (conv bias folded in)
    ss_ref: (8, Cout_pad)     f32   row 0 = BN scale, row 1 = BN shift
    o_ref : (1, GM, Cout_pad) bf16  lane-dense output
    """
    acc = jnp.dot(x_ref[0], w_ref[...], preferred_element_type=jnp.float32)
    z = jnp.maximum(acc, 0.0) * ss_ref[0:1, :] + ss_ref[1:2, :]
    o_ref[0] = z.astype(o_ref.dtype)


def _make_final_kernel(g, s):
    """Fused 1x1 convbn + AvgPool2d(POOL) + Flatten for one image group."""
    def kernel(x_ref, w_ref, ss_ref, o_ref):
        # x_ref: (1, g*s, Kp) bf16, w_ref: (Kp, Cp) bf16, ss_ref: (8, Cp) f32,
        # o_ref: (1, g, Cp) f32.
        acc = jnp.dot(x_ref[0], w_ref[...], preferred_element_type=jnp.float32)
        z = jnp.maximum(acc, 0.0) * ss_ref[0:1, :] + ss_ref[1:2, :]
        o_ref[0] = jnp.mean(z.reshape(g, s, z.shape[-1]), axis=1)
    return kernel


# ---------------------------------------------------------------------------
# Wrapper-side parameter folding / K-packing
# ---------------------------------------------------------------------------
def _fold_bn_scale_shift(gamma, beta, mean, var, cout_pad):
    cout = gamma.shape[0]
    scale = gamma / jnp.sqrt(var + EPS)
    shift = beta - mean * scale
    ss = jnp.zeros((8, cout_pad), jnp.float32)
    ss = ss.at[0, :cout].set(scale)
    ss = ss.at[1, :cout].set(shift)
    return ss


def _pack_weight(w, b, kpad, cout_pad):
    """(ksz, ksz, cin, cout) conv weight + bias -> (kpad, cout_pad) bf16."""
    ksz, _, cin, cout = w.shape
    wk = w.reshape(ksz * ksz * cin, cout)
    wk = jnp.concatenate([wk, b[None, :]], axis=0)   # bias row, pairs with ones col
    wk = jnp.pad(wk, ((0, kpad - wk.shape[0]), (0, cout_pad - cout)))
    return wk.astype(jnp.bfloat16)


def _im2col(x, cin, ksz, stride, pad):
    """x: (N, H, W, C>=cin) bf16 -> (N, Hout, Wout, ksz*ksz*cin + 1) bf16.

    Tap order matches the weight flattening (kh, kw, cin); an extra ones
    column (for the folded conv bias) is appended last.  Stride and spatial
    padding are absorbed here, so the kernel is a single dense matmul.
    """
    n, h, w, _ = x.shape
    xp = jnp.pad(x[..., :cin], ((0, 0), (pad, pad), (pad, pad), (0, 0)))
    hp, wp = h + 2 * pad, w + 2 * pad
    hout = (hp - ksz) // stride + 1
    wout = (wp - ksz) // stride + 1
    taps = []
    for kh in range(ksz):
        for kw in range(ksz):
            taps.append(xp[:, kh:kh + (hout - 1) * stride + 1:stride,
                           kw:kw + (wout - 1) * stride + 1:stride, :])
    ones = jnp.ones((n, hout, wout, 1), x.dtype)
    return jnp.concatenate(taps + [ones], axis=-1), hout, wout


# ---------------------------------------------------------------------------
# Layer wrappers
# ---------------------------------------------------------------------------
def convbn_layer(x, params, ksz, stride, pad):
    """Fused Conv2d + ReLU + BatchNorm2d(eval).  x: (N, H, W, C) bf16 NHWC.

    Returns (N, Hout, Wout, cout_pad) bf16; padded channels are never read
    back (the next layer's K-packing slices the dense cin channels only).
    """
    w, b, gamma, beta, mean, var = params            # w: (ksz, ksz, cin, cout)
    cin, cout = w.shape[2], w.shape[3]
    cout_pad = _round_up(cout, LANES)

    patches, hout, wout = _im2col(x, cin, ksz, stride, pad)
    n = x.shape[0]
    k = patches.shape[-1]                            # ksz*ksz*cin + 1
    kpad = _round_up(k, 8)
    if kpad > k:
        patches = jnp.pad(patches, ((0, 0), (0, 0), (0, 0), (0, kpad - k)))

    m_img = hout * wout
    g = _pick_group(n, m_img)                        # g divides n: no tail masking
    ng, gm = n // g, g * m_img
    xin = patches.reshape(ng, gm, kpad)

    wk = _pack_weight(w, b, kpad, cout_pad)
    ss = _fold_bn_scale_shift(gamma, beta, mean, var, cout_pad)

    out = pl.pallas_call(
        _convbn_kernel,
        out_shape=jax.ShapeDtypeStruct((ng, gm, cout_pad), jnp.bfloat16),
        grid=(ng,),
        in_specs=[
            pl.BlockSpec((1, gm, kpad), lambda i: (i, 0, 0)),
            pl.BlockSpec((kpad, cout_pad), lambda i: (0, 0)),
            pl.BlockSpec((8, cout_pad), lambda i: (0, 0)),
        ],
        out_specs=pl.BlockSpec((1, gm, cout_pad), lambda i: (i, 0, 0)),
        compiler_params=pltpu.CompilerParams(dimension_semantics=("parallel",)),
    )(xin, wk, ss)
    return out.reshape(n, hout, wout, cout_pad)


def convbn_pool_final(x, params):
    """Fused 1x1 convbn + AvgPool2d(POOL) + Flatten.  x: (N, POOL, POOL, C) bf16."""
    w, b, gamma, beta, mean, var = params            # w: (1, 1, cin, cout)
    n, h, wd, _ = x.shape
    assert h == POOL and wd == POOL, (h, wd)
    cin, cout = w.shape[2], w.shape[3]
    cout_pad = _round_up(cout, LANES)
    s = h * wd

    k = cin + 1
    kpad = _round_up(k, 8)
    ones = jnp.ones((n, h, wd, 1), x.dtype)
    xin = jnp.concatenate([x[..., :cin], ones], axis=-1)
    if kpad > k:
        xin = jnp.pad(xin, ((0, 0), (0, 0), (0, 0), (0, kpad - k)))

    g = _pick_group(n, s)
    ng = n // g
    xin = xin.reshape(ng, g * s, kpad)

    wk = _pack_weight(w, b, kpad, cout_pad)
    ss = _fold_bn_scale_shift(gamma, beta, mean, var, cout_pad)

    out = pl.pallas_call(
        _make_final_kernel(g, s),
        out_shape=jax.ShapeDtypeStruct((ng, g, cout_pad), jnp.float32),
        grid=(ng,),
        in_specs=[
            pl.BlockSpec((1, g * s, kpad), lambda i: (i, 0, 0)),
            pl.BlockSpec((kpad, cout_pad), lambda i: (0, 0)),
            pl.BlockSpec((8, cout_pad), lambda i: (0, 0)),
        ],
        out_specs=pl.BlockSpec((1, g, cout_pad), lambda i: (i, 0, 0)),
        compiler_params=pltpu.CompilerParams(dimension_semantics=("parallel",)),
    )(xin, wk, ss)
    return out.reshape(n, cout_pad)[:, :cout]


# ---------------------------------------------------------------------------
# Model definition (allcnn_t), parameters and forward
# ---------------------------------------------------------------------------
def layer_configs(c1, c2):
    # (cin, cout, ksz, stride, pad) for every convbn block, in order.
    return [
        (3,  c1, 3, 1, 1),
        (c1, c1, 3, 1, 1),
        (c1, c1, 3, 2, 1),
        (c1, c2, 3, 1, 1),
        (c2, c2, 3, 1, 1),
        (c2, c2, 3, 2, 1),
        (c2, c2, 3, 1, 1),
        (c2, c2, 3, 1, 1),
        (c2, N_CLASSES, 1, 1, 0),
    ]


def init_params(key, cfgs):
    params = []
    for (cin, cout, ksz, _, _) in cfgs:
        key, kw, kb, kg, kbt, km, kv = jax.random.split(key, 7)
        fan_in = cin * ksz * ksz
        bound = 1.0 / jnp.sqrt(fan_in)
        w = jax.random.uniform(kw, (ksz, ksz, cin, cout), jnp.float32, -bound, bound)
        b = jax.random.uniform(kb, (cout,), jnp.float32, -bound, bound)
        gamma = jax.random.uniform(kg, (cout,), jnp.float32, 0.5, 1.5)
        beta = jax.random.uniform(kbt, (cout,), jnp.float32, -0.1, 0.1)
        mean = 0.1 * jax.random.normal(km, (cout,), jnp.float32)
        var = jax.random.uniform(kv, (cout,), jnp.float32, 0.5, 1.5)
        params.append((w, b, gamma, beta, mean, var))
    return params


def allcnn_t_forward(x_nchw, params, cfgs):
    # nn.Dropout layers are identity in eval mode (no RNG applied).
    x = jnp.transpose(x_nchw, (0, 2, 3, 1)).astype(jnp.bfloat16)   # NCHW -> NHWC bf16
    for p, (_, _, ksz, stride, pad) in zip(params[:-1], cfgs[:-1]):
        x = convbn_layer(x, p, ksz, stride, pad)
    return convbn_pool_final(x, params[-1])          # (N, 10)


# Pure-JAX reference mirroring the kernel numerics (bf16 matmul operands,
# f32 accumulation / elementwise math).  Used only for correctness checking.
def reference_forward(x_nchw, params, cfgs):
    x = jnp.transpose(x_nchw, (0, 2, 3, 1)).astype(jnp.float32)
    for (w, b, gamma, beta, mean, var), (_, _, _, s, pad) in zip(params, cfgs):
        y = lax.conv_general_dilated(
            x.astype(jnp.bfloat16), w.astype(jnp.bfloat16), (s, s),
            [(pad, pad), (pad, pad)],
            dimension_numbers=("NHWC", "HWIO", "NHWC"),
            preferred_element_type=jnp.float32)
        scale = gamma / jnp.sqrt(var + EPS)
        y = jnp.maximum(y + b, 0.0) * scale + (beta - mean * scale)
        x = y
    return jnp.mean(x, axis=(1, 2))                  # AvgPool2d(POOL) + Flatten


if __name__ == "__main__":
    # Small instantiation of allcnn_t(c1=16, c2=32); input spatial size must be
    # 32x32 so that two stride-2 convs + AvgPool2d(8) reduce to 1x1.
    c1, c2 = 16, 32
    cfgs = layer_configs(c1, c2)

    key = jax.random.PRNGKey(0)
    key, kx = jax.random.split(key)
    x = jax.random.normal(kx, (2, 3, 32, 32), jnp.float32)   # NCHW like PyTorch
    params = init_params(key, cfgs)

    fwd = jax.jit(lambda xx, pp: allcnn_t_forward(xx, pp, cfgs))
    out = jax.block_until_ready(fwd(x, params))
    assert out.shape == (2, N_CLASSES), out.shape
    assert bool(jnp.all(jnp.isfinite(out)))

    ref = jax.block_until_ready(reference_forward(x, params, cfgs))
    err = float(jnp.max(jnp.abs(out - ref)))
    assert err < 2e-2, f"max abs error vs reference: {err}"

    print("KERNEL_OK")
</pallas_src>

<mosaic_0001>
module attributes {stable_mosaic.version = 11 : i64} {
  func.func @_convbn_kernel(%arg0: i32, %arg1: memref<1x1024x32xbf16, #tpu.memory_space<vmem>>, %arg2: memref<32x128xbf16, #tpu.memory_space<vmem>>, %arg3: memref<8x128xf32, #tpu.memory_space<vmem>>, %arg4: memref<1x1024x128xbf16, #tpu.memory_space<vmem>>) attributes {dimension_semantics = [#tpu.dimension_semantics<parallel>], iteration_bounds = array<i64: 2>, scalar_prefetch = 0 : i64, scratch_operands = 0 : i64, tpu.core_type = #tpu.core_type<tc>, window_params = [{transform_indices = @transform_0, window_bounds = array<i64: 1, 1024, 32>}, {pipeline_mode = #tpu.pipeline_mode<synchronous>, transform_indices = @transform_1, window_bounds = array<i64: 32, 128>}, {pipeline_mode = #tpu.pipeline_mode<synchronous>, transform_indices = @transform_2, window_bounds = array<i64: 8, 128>}, {transform_indices = @transform_3, window_bounds = array<i64: 1, 1024, 128>}]} {
    %c0 = arith.constant 0 : index
    %c0_0 = arith.constant 0 : index
    %c0_1 = arith.constant 0 : index
    %0 = vector.load %arg1[%c0, %c0_0, %c0_1] : memref<1x1024x32xbf16, #tpu.memory_space<vmem>>, vector<1x1024x32xbf16>
    %1 = vector.shape_cast %0 : vector<1x1024x32xbf16> to vector<1024x32xbf16>
    %c0_2 = arith.constant 0 : index
    %c0_3 = arith.constant 0 : index
    %2 = vector.load %arg2[%c0_2, %c0_3] : memref<32x128xbf16, #tpu.memory_space<vmem>>, vector<32x128xbf16>
    %cst = arith.constant dense<0.000000e+00> : vector<1024x128xf32>
    %3 = tpu.matmul %1, %2, %cst {dimension_numbers = #tpu.dot_dimension_numbers<[1], [0], [0], [1], [0, 0, 1, 1], [], []>} : vector<1024x32xbf16>, vector<32x128xbf16>, vector<1024x128xf32> -> vector<1024x128xf32>
    %cst_4 = arith.constant 0.000000e+00 : f32
    %4 = vector.broadcast %cst_4 : f32 to vector<1024x128xf32>
    %5 = arith.maximumf %3, %4 : vector<1024x128xf32>
    %c0_5 = arith.constant 0 : index
    %c0_6 = arith.constant 0 : index
    %6 = vector.load %arg3[%c0_5, %c0_6] : memref<8x128xf32, #tpu.memory_space<vmem>>, vector<1x128xf32>
    %7 = vector.broadcast %6 : vector<1x128xf32> to vector<1024x128xf32>
    %8 = arith.mulf %5, %7 : vector<1024x128xf32>
    %c1 = arith.constant 1 : index
    %c0_7 = arith.constant 0 : index
    %9 = vector.load %arg3[%c1, %c0_7] : memref<8x128xf32, #tpu.memory_space<vmem>>, vector<1x128xf32>
    %10 = vector.broadcast %9 : vector<1x128xf32> to vector<1024x128xf32>
    %11 = arith.addf %8, %10 : vector<1024x128xf32>
    %12 = arith.truncf %11 : vector<1024x128xf32> to vector<1024x128xbf16>
    %c0_8 = arith.constant 0 : index
    %c0_9 = arith.constant 0 : index
    %c0_10 = arith.constant 0 : index
    %13 = vector.load %arg4[%c0_8, %c0_9, %c0_10] : memref<1x1024x128xbf16, #tpu.memory_space<vmem>>, vector<1x1024x128xbf16>
    %14 = vector.shape_cast %13 : vector<1x1024x128xbf16> to vector<1024x128xbf16>
    %15 = vector.shape_cast %12 : vector<1024x128xbf16> to vector<1x1024x128xbf16>
    tpu.vector_store %arg4[%c0_8, %c0_9, %c0_10], %15 {strides = array<i32>} : memref<1x1024x128xbf16, #tpu.memory_space<vmem>>, vector<1x1024x128xbf16>,
    return
  }
  func.func @transform_0(%arg0: i32) -> (i32, i32, i32) {
    %c0_i32 = arith.constant 0 : i32
    %c0_i32_0 = arith.constant 0 : i32
    %c0_i32_1 = arith.constant 0 : i32
    return %arg0, %c0_i32, %c0_i32_0 : i32, i32, i32
  }
  func.func @transform_1(%arg0: i32) -> (i32, i32) {
    %c0_i32 = arith.constant 0 : i32
    %c0_i32_0 = arith.constant 0 : i32
    %c0_i32_1 = arith.constant 0 : i32
    return %c0_i32, %c0_i32_0 : i32, i32
  }
  func.func @transform_2(%arg0: i32) -> (i32, i32) {
    %c0_i32 = arith.constant 0 : i32
    %c0_i32_0 = arith.constant 0 : i32
    %c0_i32_1 = arith.constant 0 : i32
    return %c0_i32, %c0_i32_0 : i32, i32
  }
  func.func @transform_3(%arg0: i32) -> (i32, i32, i32) {
    %c0_i32 = arith.constant 0 : i32
    %c0_i32_0 = arith.constant 0 : i32
    %c0_i32_1 = arith.constant 0 : i32
    return %arg0, %c0_i32, %c0_i32_0 : i32, i32, i32
  }
}

module attributes {stable_mosaic.version = 11 : i64} {
  func.func @_convbn_kernel(%arg0: i32, %arg1: memref<1x1024x152xbf16, #tpu.memory_space<vmem>>, %arg2: memref<152x128xbf16, #tpu.memory_space<vmem>>, %arg3: memref<8x128xf32, #tpu.memory_space<vmem>>, %arg4: memref<1x1024x128xbf16, #tpu.memory_space<vmem>>) attributes {dimension_semantics = [#tpu.dimension_semantics<parallel>], iteration_bounds = array<i64: 2>, scalar_prefetch = 0 : i64, scratch_operands = 0 : i64, tpu.core_type = #tpu.core_type<tc>, window_params = [{transform_indices = @transform_0, window_bounds = array<i64: 1, 1024, 152>}, {pipeline_mode = #tpu.pipeline_mode<synchronous>, transform_indices = @transform_1, window_bounds = array<i64: 152, 128>}, {pipeline_mode = #tpu.pipeline_mode<synchronous>, transform_indices = @transform_2, window_bounds = array<i64: 8, 128>}, {transform_indices = @transform_3, window_bounds = array<i64: 1, 1024, 128>}]} {
    %c0 = arith.constant 0 : index
    %c0_0 = arith.constant 0 : index
    %c0_1 = arith.constant 0 : index
    %0 = vector.load %arg1[%c0, %c0_0, %c0_1] : memref<1x1024x152xbf16, #tpu.memory_space<vmem>>, vector<1x1024x152xbf16>
    %1 = vector.shape_cast %0 : vector<1x1024x152xbf16> to vector<1024x152xbf16>
    %c0_2 = arith.constant 0 : index
    %c0_3 = arith.constant 0 : index
    %2 = vector.load %arg2[%c0_2, %c0_3] : memref<152x128xbf16, #tpu.memory_space<vmem>>, vector<152x128xbf16>
    %cst = arith.constant dense<0.000000e+00> : vector<1024x128xf32>
    %3 = tpu.matmul %1, %2, %cst {dimension_numbers = #tpu.dot_dimension_numbers<[1], [0], [0], [1], [0, 0, 1, 1], [], []>} : vector<1024x152xbf16>, vector<152x128xbf16>, vector<1024x128xf32> -> vector<1024x128xf32>
    %cst_4 = arith.constant 0.000000e+00 : f32
    %4 = vector.broadcast %cst_4 : f32 to vector<1024x128xf32>
    %5 = arith.maximumf %3, %4 : vector<1024x128xf32>
    %c0_5 = arith.constant 0 : index
    %c0_6 = arith.constant 0 : index
    %6 = vector.load %arg3[%c0_5, %c0_6] : memref<8x128xf32, #tpu.memory_space<vmem>>, vector<1x128xf32>
    %7 = vector.broadcast %6 : vector<1x128xf32> to vector<1024x128xf32>
    %8 = arith.mulf %5, %7 : vector<1024x128xf32>
    %c1 = arith.constant 1 : index
    %c0_7 = arith.constant 0 : index
    %9 = vector.load %arg3[%c1, %c0_7] : memref<8x128xf32, #tpu.memory_space<vmem>>, vector<1x128xf32>
    %10 = vector.broadcast %9 : vector<1x128xf32> to vector<1024x128xf32>
    %11 = arith.addf %8, %10 : vector<1024x128xf32>
    %12 = arith.truncf %11 : vector<1024x128xf32> to vector<1024x128xbf16>
    %c0_8 = arith.constant 0 : index
    %c0_9 = arith.constant 0 : index
    %c0_10 = arith.constant 0 : index
    %13 = vector.load %arg4[%c0_8, %c0_9, %c0_10] : memref<1x1024x128xbf16, #tpu.memory_space<vmem>>, vector<1x1024x128xbf16>
    %14 = vector.shape_cast %13 : vector<1x1024x128xbf16> to vector<1024x128xbf16>
    %15 = vector.shape_cast %12 : vector<1024x128xbf16> to vector<1x1024x128xbf16>
    tpu.vector_store %arg4[%c0_8, %c0_9, %c0_10], %15 {strides = array<i32>} : memref<1x1024x128xbf16, #tpu.memory_space<vmem>>, vector<1x1024x128xbf16>,
    return
  }
  func.func @transform_0(%arg0: i32) -> (i32, i32, i32) {
    %c0_i32 = arith.constant 0 : i32
    %c0_i32_0 = arith.constant 0 : i32
    %c0_i32_1 = arith.constant 0 : i32
    return %arg0, %c0_i32, %c0_i32_0 : i32, i32, i32
  }
  func.func @transform_1(%arg0: i32) -> (i32, i32) {
    %c0_i32 = arith.constant 0 : i32
    %c0_i32_0 = arith.constant 0 : i32
    %c0_i32_1 = arith.constant 0 : i32
    return %c0_i32, %c0_i32_0 : i32, i32
  }
  func.func @transform_2(%arg0: i32) -> (i32, i32) {
    %c0_i32 = arith.constant 0 : i32
    %c0_i32_0 = arith.constant 0 : i32
    %c0_i32_1 = arith.constant 0 : i32
    return %c0_i32, %c0_i32_0 : i32, i32
  }
  func.func @transform_3(%arg0: i32) -> (i32, i32, i32) {
    %c0_i32 = arith.constant 0 : i32
    %c0_i32_0 = arith.constant 0 : i32
    %c0_i32_1 = arith.constant 0 : i32
    return %arg0, %c0_i32, %c0_i32_0 : i32, i32, i32
  }
}

module attributes {stable_mosaic.version = 11 : i64} {
  func.func @_convbn_kernel(%arg0: i32, %arg1: memref<1x256x152xbf16, #tpu.memory_space<vmem>>, %arg2: memref<152x128xbf16, #tpu.memory_space<vmem>>, %arg3: memref<8x128xf32, #tpu.memory_space<vmem>>, %arg4: memref<1x256x128xbf16, #tpu.memory_space<vmem>>) attributes {dimension_semantics = [#tpu.dimension_semantics<parallel>], iteration_bounds = array<i64: 2>, scalar_prefetch = 0 : i64, scratch_operands = 0 : i64, tpu.core_type = #tpu.core_type<tc>, window_params = [{transform_indices = @transform_0, window_bounds = array<i64: 1, 256, 152>}, {pipeline_mode = #tpu.pipeline_mode<synchronous>, transform_indices = @transform_1, window_bounds = array<i64: 152, 128>}, {pipeline_mode = #tpu.pipeline_mode<synchronous>, transform_indices = @transform_2, window_bounds = array<i64: 8, 128>}, {transform_indices = @transform_3, window_bounds = array<i64: 1, 256, 128>}]} {
    %c0 = arith.constant 0 : index
    %c0_0 = arith.constant 0 : index
    %c0_1 = arith.constant 0 : index
    %0 = vector.load %arg1[%c0, %c0_0, %c0_1] : memref<1x256x152xbf16, #tpu.memory_space<vmem>>, vector<1x256x152xbf16>
    %1 = vector.shape_cast %0 : vector<1x256x152xbf16> to vector<256x152xbf16>
    %c0_2 = arith.constant 0 : index
    %c0_3 = arith.constant 0 : index
    %2 = vector.load %arg2[%c0_2, %c0_3] : memref<152x128xbf16, #tpu.memory_space<vmem>>, vector<152x128xbf16>
    %cst = arith.constant dense<0.000000e+00> : vector<256x128xf32>
    %3 = tpu.matmul %1, %2, %cst {dimension_numbers = #tpu.dot_dimension_numbers<[1], [0], [0], [1], [0, 0, 1, 1], [], []>} : vector<256x152xbf16>, vector<152x128xbf16>, vector<256x128xf32> -> vector<256x128xf32>
    %cst_4 = arith.constant 0.000000e+00 : f32
    %4 = vector.broadcast %cst_4 : f32 to vector<256x128xf32>
    %5 = arith.maximumf %3, %4 : vector<256x128xf32>
    %c0_5 = arith.constant 0 : index
    %c0_6 = arith.constant 0 : index
    %6 = vector.load %arg3[%c0_5, %c0_6] : memref<8x128xf32, #tpu.memory_space<vmem>>, vector<1x128xf32>
    %7 = vector.broadcast %6 : vector<1x128xf32> to vector<256x128xf32>
    %8 = arith.mulf %5, %7 : vector<256x128xf32>
    %c1 = arith.constant 1 : index
    %c0_7 = arith.constant 0 : index
    %9 = vector.load %arg3[%c1, %c0_7] : memref<8x128xf32, #tpu.memory_space<vmem>>, vector<1x128xf32>
    %10 = vector.broadcast %9 : vector<1x128xf32> to vector<256x128xf32>
    %11 = arith.addf %8, %10 : vector<256x128xf32>
    %12 = arith.truncf %11 : vector<256x128xf32> to vector<256x128xbf16>
    %c0_8 = arith.constant 0 : index
    %c0_9 = arith.constant 0 : index
    %c0_10 = arith.constant 0 : index
    %13 = vector.load %arg4[%c0_8, %c0_9, %c0_10] : memref<1x256x128xbf16, #tpu.memory_space<vmem>>, vector<1x256x128xbf16>
    %14 = vector.shape_cast %13 : vector<1x256x128xbf16> to vector<256x128xbf16>
    %15 = vector.shape_cast %12 : vector<256x128xbf16> to vector<1x256x128xbf16>
    tpu.vector_store %arg4[%c0_8, %c0_9, %c0_10], %15 {strides = array<i32>} : memref<1x256x128xbf16, #tpu.memory_space<vmem>>, vector<1x256x128xbf16>,
    return
  }
  func.func @transform_0(%arg0: i32) -> (i32, i32, i32) {
    %c0_i32 = arith.constant 0 : i32
    %c0_i32_0 = arith.constant 0 : i32
    %c0_i32_1 = arith.constant 0 : i32
    return %arg0, %c0_i32, %c0_i32_0 : i32, i32, i32
  }
  func.func @transform_1(%arg0: i32) -> (i32, i32) {
    %c0_i32 = arith.constant 0 : i32
    %c0_i32_0 = arith.constant 0 : i32
    %c0_i32_1 = arith.constant 0 : i32
    return %c0_i32, %c0_i32_0 : i32, i32
  }
  func.func @transform_2(%arg0: i32) -> (i32, i32) {
    %c0_i32 = arith.constant 0 : i32
    %c0_i32_0 = arith.constant 0 : i32
    %c0_i32_1 = arith.constant 0 : i32
    return %c0_i32, %c0_i32_0 : i32, i32
  }
  func.func @transform_3(%arg0: i32) -> (i32, i32, i32) {
    %c0_i32 = arith.constant 0 : i32
    %c0_i32_0 = arith.constant 0 : i32
    %c0_i32_1 = arith.constant 0 : i32
    return %arg0, %c0_i32, %c0_i32_0 : i32, i32, i32
  }
}

module attributes {stable_mosaic.version = 11 : i64} {
  func.func @_convbn_kernel(%arg0: i32, %arg1: memref<1x256x296xbf16, #tpu.memory_space<vmem>>, %arg2: memref<296x128xbf16, #tpu.memory_space<vmem>>, %arg3: memref<8x128xf32, #tpu.memory_space<vmem>>, %arg4: memref<1x256x128xbf16, #tpu.memory_space<vmem>>) attributes {dimension_semantics = [#tpu.dimension_semantics<parallel>], iteration_bounds = array<i64: 2>, scalar_prefetch = 0 : i64, scratch_operands = 0 : i64, tpu.core_type = #tpu.core_type<tc>, window_params = [{transform_indices = @transform_0, window_bounds = array<i64: 1, 256, 296>}, {pipeline_mode = #tpu.pipeline_mode<synchronous>, transform_indices = @transform_1, window_bounds = array<i64: 296, 128>}, {pipeline_mode = #tpu.pipeline_mode<synchronous>, transform_indices = @transform_2, window_bounds = array<i64: 8, 128>}, {transform_indices = @transform_3, window_bounds = array<i64: 1, 256, 128>}]} {
    %c0 = arith.constant 0 : index
    %c0_0 = arith.constant 0 : index
    %c0_1 = arith.constant 0 : index
    %0 = vector.load %arg1[%c0, %c0_0, %c0_1] : memref<1x256x296xbf16, #tpu.memory_space<vmem>>, vector<1x256x296xbf16>
    %1 = vector.shape_cast %0 : vector<1x256x296xbf16> to vector<256x296xbf16>
    %c0_2 = arith.constant 0 : index
    %c0_3 = arith.constant 0 : index
    %2 = vector.load %arg2[%c0_2, %c0_3] : memref<296x128xbf16, #tpu.memory_space<vmem>>, vector<296x128xbf16>
    %cst = arith.constant dense<0.000000e+00> : vector<256x128xf32>
    %3 = tpu.matmul %1, %2, %cst {dimension_numbers = #tpu.dot_dimension_numbers<[1], [0], [0], [1], [0, 0, 1, 1], [], []>} : vector<256x296xbf16>, vector<296x128xbf16>, vector<256x128xf32> -> vector<256x128xf32>
    %cst_4 = arith.constant 0.000000e+00 : f32
    %4 = vector.broadcast %cst_4 : f32 to vector<256x128xf32>
    %5 = arith.maximumf %3, %4 : vector<256x128xf32>
    %c0_5 = arith.constant 0 : index
    %c0_6 = arith.constant 0 : index
    %6 = vector.load %arg3[%c0_5, %c0_6] : memref<8x128xf32, #tpu.memory_space<vmem>>, vector<1x128xf32>
    %7 = vector.broadcast %6 : vector<1x128xf32> to vector<256x128xf32>
    %8 = arith.mulf %5, %7 : vector<256x128xf32>
    %c1 = arith.constant 1 : index
    %c0_7 = arith.constant 0 : index
    %9 = vector.load %arg3[%c1, %c0_7] : memref<8x128xf32, #tpu.memory_space<vmem>>, vector<1x128xf32>
    %10 = vector.broadcast %9 : vector<1x128xf32> to vector<256x128xf32>
    %11 = arith.addf %8, %10 : vector<256x128xf32>
    %12 = arith.truncf %11 : vector<256x128xf32> to vector<256x128xbf16>
    %c0_8 = arith.constant 0 : index
    %c0_9 = arith.constant 0 : index
    %c0_10 = arith.constant 0 : index
    %13 = vector.load %arg4[%c0_8, %c0_9, %c0_10] : memref<1x256x128xbf16, #tpu.memory_space<vmem>>, vector<1x256x128xbf16>
    %14 = vector.shape_cast %13 : vector<1x256x128xbf16> to vector<256x128xbf16>
    %15 = vector.shape_cast %12 : vector<256x128xbf16> to vector<1x256x128xbf16>
    tpu.vector_store %arg4[%c0_8, %c0_9, %c0_10], %15 {strides = array<i32>} : memref<1x256x128xbf16, #tpu.memory_space<vmem>>, vector<1x256x128xbf16>,
    return
  }
  func.func @transform_0(%arg0: i32) -> (i32, i32, i32) {
    %c0_i32 = arith.constant 0 : i32
    %c0_i32_0 = arith.constant 0 : i32
    %c0_i32_1 = arith.constant 0 : i32
    return %arg0, %c0_i32, %c0_i32_0 : i32, i32, i32
  }
  func.func @transform_1(%arg0: i32) -> (i32, i32) {
    %c0_i32 = arith.constant 0 : i32
    %c0_i32_0 = arith.constant 0 : i32
    %c0_i32_1 = arith.constant 0 : i32
    return %c0_i32, %c0_i32_0 : i32, i32
  }
  func.func @transform_2(%arg0: i32) -> (i32, i32) {
    %c0_i32 = arith.constant 0 : i32
    %c0_i32_0 = arith.constant 0 : i32
    %c0_i32_1 = arith.constant 0 : i32
    return %c0_i32, %c0_i32_0 : i32, i32
  }
  func.func @transform_3(%arg0: i32) -> (i32, i32, i32) {
    %c0_i32 = arith.constant 0 : i32
    %c0_i32_0 = arith.constant 0 : i32
    %c0_i32_1 = arith.constant 0 : i32
    return %arg0, %c0_i32, %c0_i32_0 : i32, i32, i32
  }
}

module attributes {stable_mosaic.version = 11 : i64} {
  func.func @_convbn_kernel(%arg0: i32, %arg1: memref<1x64x296xbf16, #tpu.memory_space<vmem>>, %arg2: memref<296x128xbf16, #tpu.memory_space<vmem>>, %arg3: memref<8x128xf32, #tpu.memory_space<vmem>>, %arg4: memref<1x64x128xbf16, #tpu.memory_space<vmem>>) attributes {dimension_semantics = [#tpu.dimension_semantics<parallel>], iteration_bounds = array<i64: 2>, scalar_prefetch = 0 : i64, scratch_operands = 0 : i64, tpu.core_type = #tpu.core_type<tc>, window_params = [{transform_indices = @transform_0, window_bounds = array<i64: 1, 64, 296>}, {pipeline_mode = #tpu.pipeline_mode<synchronous>, transform_indices = @transform_1, window_bounds = array<i64: 296, 128>}, {pipeline_mode = #tpu.pipeline_mode<synchronous>, transform_indices = @transform_2, window_bounds = array<i64: 8, 128>}, {transform_indices = @transform_3, window_bounds = array<i64: 1, 64, 128>}]} {
    %c0 = arith.constant 0 : index
    %c0_0 = arith.constant 0 : index
    %c0_1 = arith.constant 0 : index
    %0 = vector.load %arg1[%c0, %c0_0, %c0_1] : memref<1x64x296xbf16, #tpu.memory_space<vmem>>, vector<1x64x296xbf16>
    %1 = vector.shape_cast %0 : vector<1x64x296xbf16> to vector<64x296xbf16>
    %c0_2 = arith.constant 0 : index
    %c0_3 = arith.constant 0 : index
    %2 = vector.load %arg2[%c0_2, %c0_3] : memref<296x128xbf16, #tpu.memory_space<vmem>>, vector<296x128xbf16>
    %cst = arith.constant dense<0.000000e+00> : vector<64x128xf32>
    %3 = tpu.matmul %1, %2, %cst {dimension_numbers = #tpu.dot_dimension_numbers<[1], [0], [0], [1], [0, 0, 1, 1], [], []>} : vector<64x296xbf16>, vector<296x128xbf16>, vector<64x128xf32> -> vector<64x128xf32>
    %cst_4 = arith.constant 0.000000e+00 : f32
    %4 = vector.broadcast %cst_4 : f32 to vector<64x128xf32>
    %5 = arith.maximumf %3, %4 : vector<64x128xf32>
    %c0_5 = arith.constant 0 : index
    %c0_6 = arith.constant 0 : index
    %6 = vector.load %arg3[%c0_5, %c0_6] : memref<8x128xf32, #tpu.memory_space<vmem>>, vector<1x128xf32>
    %7 = vector.broadcast %6 : vector<1x128xf32> to vector<64x128xf32>
    %8 = arith.mulf %5, %7 : vector<64x128xf32>
    %c1 = arith.constant 1 : index
    %c0_7 = arith.constant 0 : index
    %9 = vector.load %arg3[%c1, %c0_7] : memref<8x128xf32, #tpu.memory_space<vmem>>, vector<1x128xf32>
    %10 = vector.broadcast %9 : vector<1x128xf32> to vector<64x128xf32>
    %11 = arith.addf %8, %10 : vector<64x128xf32>
    %12 = arith.truncf %11 : vector<64x128xf32> to vector<64x128xbf16>
    %c0_8 = arith.constant 0 : index
    %c0_9 = arith.constant 0 : index
    %c0_10 = arith.constant 0 : index
    %13 = vector.load %arg4[%c0_8, %c0_9, %c0_10] : memref<1x64x128xbf16, #tpu.memory_space<vmem>>, vector<1x64x128xbf16>
    %14 = vector.shape_cast %13 : vector<1x64x128xbf16> to vector<64x128xbf16>
    %15 = vector.shape_cast %12 : vector<64x128xbf16> to vector<1x64x128xbf16>
    tpu.vector_store %arg4[%c0_8, %c0_9, %c0_10], %15 {strides = array<i32>} : memref<1x64x128xbf16, #tpu.memory_space<vmem>>, vector<1x64x128xbf16>,
    return
  }
  func.func @transform_0(%arg0: i32) -> (i32, i32, i32) {
    %c0_i32 = arith.constant 0 : i32
    %c0_i32_0 = arith.constant 0 : i32
    %c0_i32_1 = arith.constant 0 : i32
    return %arg0, %c0_i32, %c0_i32_0 : i32, i32, i32
  }
  func.func @transform_1(%arg0: i32) -> (i32, i32) {
    %c0_i32 = arith.constant 0 : i32
    %c0_i32_0 = arith.constant 0 : i32
    %c0_i32_1 = arith.constant 0 : i32
    return %c0_i32, %c0_i32_0 : i32, i32
  }
  func.func @transform_2(%arg0: i32) -> (i32, i32) {
    %c0_i32 = arith.constant 0 : i32
    %c0_i32_0 = arith.constant 0 : i32
    %c0_i32_1 = arith.constant 0 : i32
    return %c0_i32, %c0_i32_0 : i32, i32
  }
  func.func @transform_3(%arg0: i32) -> (i32, i32, i32) {
    %c0_i32 = arith.constant 0 : i32
    %c0_i32_0 = arith.constant 0 : i32
    %c0_i32_1 = arith.constant 0 : i32
    return %arg0, %c0_i32, %c0_i32_0 : i32, i32, i32
  }
}

module attributes {stable_mosaic.version = 11 : i64} {
  func.func @kernel(%arg0: i32, %arg1: memref<1x64x40xbf16, #tpu.memory_space<vmem>>, %arg2: memref<40x128xbf16, #tpu.memory_space<vmem>>, %arg3: memref<8x128xf32, #tpu.memory_space<vmem>>, %arg4: memref<1x1x128xf32, #tpu.memory_space<vmem>>) attributes {dimension_semantics = [#tpu.dimension_semantics<parallel>], iteration_bounds = array<i64: 2>, scalar_prefetch = 0 : i64, scratch_operands = 0 : i64, tpu.core_type = #tpu.core_type<tc>, window_params = [{transform_indices = @transform_0, window_bounds = array<i64: 1, 64, 40>}, {pipeline_mode = #tpu.pipeline_mode<synchronous>, transform_indices = @transform_1, window_bounds = array<i64: 40, 128>}, {pipeline_mode = #tpu.pipeline_mode<synchronous>, transform_indices = @transform_2, window_bounds = array<i64: 8, 128>}, {transform_indices = @transform_3, window_bounds = array<i64: 1, 1, 128>}]} {
    %c0 = arith.constant 0 : index
    %c0_0 = arith.constant 0 : index
    %c0_1 = arith.constant 0 : index
    %0 = vector.load %arg1[%c0, %c0_0, %c0_1] : memref<1x64x40xbf16, #tpu.memory_space<vmem>>, vector<1x64x40xbf16>
    %1 = vector.shape_cast %0 : vector<1x64x40xbf16> to vector<64x40xbf16>
    %c0_2 = arith.constant 0 : index
    %c0_3 = arith.constant 0 : index
    %2 = vector.load %arg2[%c0_2, %c0_3] : memref<40x128xbf16, #tpu.memory_space<vmem>>, vector<40x128xbf16>
    %cst = arith.constant dense<0.000000e+00> : vector<64x128xf32>
    %3 = tpu.matmul %1, %2, %cst {dimension_numbers = #tpu.dot_dimension_numbers<[1], [0], [0], [1], [0, 0, 1, 1], [], []>} : vector<64x40xbf16>, vector<40x128xbf16>, vector<64x128xf32> -> vector<64x128xf32>
    %cst_4 = arith.constant 0.000000e+00 : f32
    %4 = vector.broadcast %cst_4 : f32 to vector<64x128xf32>
    %5 = arith.maximumf %3, %4 : vector<64x128xf32>
    %c0_5 = arith.constant 0 : index
    %c0_6 = arith.constant 0 : index
    %6 = vector.load %arg3[%c0_5, %c0_6] : memref<8x128xf32, #tpu.memory_space<vmem>>, vector<1x128xf32>
    %7 = vector.broadcast %6 : vector<1x128xf32> to vector<64x128xf32>
    %8 = arith.mulf %5, %7 : vector<64x128xf32>
    %c1 = arith.constant 1 : index
    %c0_7 = arith.constant 0 : index
    %9 = vector.load %arg3[%c1, %c0_7] : memref<8x128xf32, #tpu.memory_space<vmem>>, vector<1x128xf32>
    %10 = vector.broadcast %9 : vector<1x128xf32> to vector<64x128xf32>
    %11 = arith.addf %8, %10 : vector<64x128xf32>
    %12 = vector.shape_cast %11 : vector<64x128xf32> to vector<1x64x128xf32>
    %cst_8 = arith.constant dense<0.000000e+00> : vector<1x128xf32>
    %13 = vector.multi_reduction <add>, %12, %cst_8 [1] : vector<1x64x128xf32> to vector<1x128xf32>
    %cst_9 = arith.constant 6.400000e+01 : f32
    %14 = vector.broadcast %cst_9 : f32 to vector<1x128xf32>
    %15 = arith.divf %13, %14 : vector<1x128xf32>
    %c0_10 = arith.constant 0 : index
    %c0_11 = arith.constant 0 : index
    %c0_12 = arith.constant 0 : index
    %16 = vector.load %arg4[%c0_10, %c0_11, %c0_12] : memref<1x1x128xf32, #tpu.memory_space<vmem>>, vector<1x1x128xf32>
    %17 = vector.shape_cast %16 : vector<1x1x128xf32> to vector<1x128xf32>
    %18 = vector.shape_cast %15 : vector<1x128xf32> to vector<1x1x128xf32>
    tpu.vector_store %arg4[%c0_10, %c0_11, %c0_12], %18 {strides = array<i32>} : memref<1x1x128xf32, #tpu.memory_space<vmem>>, vector<1x1x128xf32>,
    return
  }
  func.func @transform_0(%arg0: i32) -> (i32, i32, i32) {
    %c0_i32 = arith.constant 0 : i32
    %c0_i32_0 = arith.constant 0 : i32
    %c0_i32_1 = arith.constant 0 : i32
    return %arg0, %c0_i32, %c0_i32_0 : i32, i32, i32
  }
  func.func @transform_1(%arg0: i32) -> (i32, i32) {
    %c0_i32 = arith.constant 0 : i32
    %c0_i32_0 = arith.constant 0 : i32
    %c0_i32_1 = arith.constant 0 : i32
    return %c0_i32, %c0_i32_0 : i32, i32
  }
  func.func @transform_2(%arg0: i32) -> (i32, i32) {
    %c0_i32 = arith.constant 0 : i32
    %c0_i32_0 = arith.constant 0 : i32
    %c0_i32_1 = arith.constant 0 : i32
    return %c0_i32, %c0_i32_0 : i32, i32
  }
  func.func @transform_3(%arg0: i32) -> (i32, i32, i32) {
    %c0_i32 = arith.constant 0 : i32
    %c0_i32_0 = arith.constant 0 : i32
    %c0_i32_1 = arith.constant 0 : i32
    return %arg0, %c0_i32, %c0_i32_0 : i32, i32, i32
  }
}

</mosaic_0001>

<llo_original>
// kernel: _lambda_.9
$region0: #{_lambda_.9}
  #allocation0 [shape = 'u32[]', space=smem, size = 0x4, offset = 0x4, fixed_abs, tag = 'smem constant byte address 0x4 - core index']
  #allocation1 [shape = 'u32[72,128]{1,0:T(1,128)}', space=vmem, size = 0x9000, scoped, tag = 'internal scratch']
  %s0 = inlined_call_operand.vmem [shape: bf16[2,1024,32], index: 0, kind: input, shape index: {}]
  %s1 = inlined_call_operand.vmem [shape: bf16[32,128], index: 1, kind: input, shape index: {}]
  %s2 = inlined_call_operand.vmem [shape: f32[8,128], index: 2, kind: input, shape index: {}]
  %s3 = inlined_call_operand.vmem [shape: bf16[2,1024,128], index: 3, kind: output, shape index: {}]
  %s4 = sld [smem:[#allocation0]]
  $region45: #{_lambda_.9} parent=0
    _
  %s6 = ssub.s32 1, %s4
  %s7 = scalar_select 0, %s6, %s4
  loop: start=0, step=1, limit=4
  $region2: #{_lambda_.9} parent=0 // loop_pre_header
    _
  $region3: #{_lambda_.9} parent=0 // loop_header
    %s9 = sphi 0, %s13
    %p10 = scmp.ge.s32.totalorder %s9, 4
    %s19 = sphi 0, %s21
    %s22 = sphi 0, %s19
    %s23 = sphi 0, %s22
    %s39 = sphi 0, %s23
    %s43 = sphi 0, %s43
    %s45 = sphi 0, %s43
    %s46 = sphi 0, %s45
    %s60 = sphi 0, %s46
    %s64 = sphi 0, %s64
    %s66 = sphi 0, %s64
    %s67 = sphi 0, %s66
    %s81 = sphi 0, %s67
    %s87 = sphi 0, %s89
    %s90 = sphi 0, %s87
    %s91 = sphi 0, %s90
    %s107 = sphi 0, %s91
  $region4: #{_lambda_.9} parent=0 // loop_header_branch
    %12 = sbr.rel (%p10) target = $region8
  $region5: #{_lambda_.9} parent=0 // loop_body
    %s14 = ssub.s32 %s9, 1
    %s15 = ssub.s32 %s9, 2
    %s16 = sadd.s32 %s9, 1
    %s17 = ssub.s32 %s9, %s16
    %p18 = scmp.eq.s32.totalorder %s17, 0
    %s20 = sadd.s32 %s19, 1
    %s21 = scalar_select %p18, %s19, %s20
    %p24 = pneg %p18
    %p25 = scmp.eq.s32.totalorder %s9, 1
    %p26 = por %p24, %p25
    %p27 = scmp.ne.s32.totalorder %s19, %s22
    %p28 = scmp.eq.s32.totalorder %s9, 0
    %p29 = por %p27, %p28
    %p30 = scmp.ne.s32.totalorder %s19, %s22
    %p31 = scmp.eq.s32.totalorder %s14, 1
    %p32 = por %p30, %p31
    %p33 = scmp.ne.s32.totalorder %s22, %s23
    %p34 = scmp.eq.s32.totalorder %s14, 0
    %p35 = por %p33, %p34
    %p36 = scmp.ne.s32.totalorder %s22, %s23
    %p37 = scmp.eq.s32.totalorder %s15, 1
    %p38 = por %p36, %p37
    %p40 = scmp.ne.s32.totalorder %s23, %s39
    %p41 = scmp.eq.s32.totalorder %s15, 0
    %p42 = por %p40, %p41
    %s44 = sadd.s32 %s43, 1
    %p47 = scmp.eq.s32.totalorder %s9, 1
    %p48 = scmp.ne.s32.totalorder %s43, %s45
    %p49 = scmp.eq.s32.totalorder %s9, 0
    %p50 = por %p48, %p49
    %p51 = scmp.ne.s32.totalorder %s43, %s45
    %p52 = scmp.eq.s32.totalorder %s14, 1
    %p53 = por %p51, %p52
    %p54 = scmp.ne.s32.totalorder %s45, %s46
    %p55 = scmp.eq.s32.totalorder %s14, 0
    %p56 = por %p54, %p55
    %p57 = scmp.ne.s32.totalorder %s45, %s46
    %p58 = scmp.eq.s32.totalorder %s15, 1
    %p59 = por %p57, %p58
    %p61 = scmp.ne.s32.totalorder %s46, %s60
    %p62 = scmp.eq.s32.totalorder %s15, 0
    %p63 = por %p61, %p62
    %s65 = sadd.s32 %s64, 1
    %p68 = scmp.eq.s32.totalorder %s9, 1
    %p69 = scmp.ne.s32.totalorder %s64, %s66
    %p70 = scmp.eq.s32.totalorder %s9, 0
    %p71 = por %p69, %p70
    %p72 = scmp.ne.s32.totalorder %s64, %s66
    %p73 = scmp.eq.s32.totalorder %s14, 1
    %p74 = por %p72, %p73
    %p75 = scmp.ne.s32.totalorder %s66, %s67
    %p76 = scmp.eq.s32.totalorder %s14, 0
    %p77 = por %p75, %p76
    %p78 = scmp.ne.s32.totalorder %s66, %s67
    %p79 = scmp.eq.s32.totalorder %s15, 1
    %p80 = por %p78, %p79
    %p82 = scmp.ne.s32.totalorder %s67, %s81
    %p83 = scmp.eq.s32.totalorder %s15, 0
    %p84 = por %p82, %p83
    %s85 = ssub.s32 %s9, %s16
    %p86 = scmp.eq.s32.totalorder %s85, 0
    %s88 = sadd.s32 %s87, 1
    %s89 = scalar_select %p86, %s87, %s88
    %p92 = pneg %p86
    %p93 = scmp.eq.s32.totalorder %s9, 1
    %p94 = por %p92, %p93
    %p95 = scmp.ne.s32.totalorder %s87, %s90
    %p96 = scmp.eq.s32.totalorder %s9, 0
    %p97 = por %p95, %p96
    %p98 = scmp.ne.s32.totalorder %s87, %s90
    %p99 = scmp.eq.s32.totalorder %s14, 1
    %p100 = por %p98, %p99
    %p101 = scmp.ne.s32.totalorder %s90, %s91
    %p102 = scmp.eq.s32.totalorder %s14, 0
    %p103 = por %p101, %p102
    %p104 = scmp.ne.s32.totalorder %s90, %s91
    %p105 = scmp.eq.s32.totalorder %s15, 1
    %p106 = por %p104, %p105
    %p108 = scmp.ne.s32.totalorder %s91, %s107
    %p109 = scmp.eq.s32.totalorder %s15, 0
    %p110 = por %p108, %p109
    %p111 = scmp.le.s32.totalorder 1, %s9
    %p112 = scmp.lt.s32.totalorder %s9, 3
    %p113 = pnand %p111, %p112
    %p114 = pneg %p113
    // Predicated region
    $region9: #{_lambda_.9} parent=5 // pred_check
      _
    $region10: #{_lambda_.9} parent=5 // pred_check_branch
      %116 = sbr.rel (%p113) target = $region12
    $region11: #{_lambda_.9} parent=5 // pred_region
      %s117 = ssub.s32 %s9, 1
      // Predicated region
      $region13: #{_lambda_.9} parent=11 // pred_check
        %p118 = pneg %p56
      $region14: #{_lambda_.9} parent=11 // pred_check_branch
        %120 = sbr.rel (%p118) target = $region16
      $region15: #{_lambda_.9} parent=11 // pred_region
        _
      $region16: #{_lambda_.9} parent=11 // pred_fallthru
        _
      // Predicated region
      $region17: #{_lambda_.9} parent=11 // pred_check
        %p121 = pneg %p77
      $region18: #{_lambda_.9} parent=11 // pred_check_branch
        %123 = sbr.rel (%p121) target = $region20
      $region19: #{_lambda_.9} parent=11 // pred_region
        _
      $region20: #{_lambda_.9} parent=11 // pred_fallthru
        _
    $region12: #{_lambda_.9} parent=5 // pred_fallthru
      _
    %p124 = scmp.lt.s32.totalorder %s9, 2
    // Predicated region
    $region21: #{_lambda_.9} parent=5 // pred_check
      %p125 = pneg %p124
    $region22: #{_lambda_.9} parent=5 // pred_check_branch
      %127 = sbr.rel (%p125) target = $region24
    $region23: #{_lambda_.9} parent=5 // pred_region
      // Predicated region
      $region25: #{_lambda_.9} parent=23 // pred_check
        %p128 = pneg %p29
      $region26: #{_lambda_.9} parent=23 // pred_check_branch
        %130 = sbr.rel (%p128) target = $region28
      $region27: #{_lambda_.9} parent=23 // pred_region
        %p131 = scmp.lt.s32.totalorder %s9, 1
        %s132 = scalar_select %p131, %s9, 1
        %s133 = smul.addr %s132, 128
        %s134 = smul.addr %s133, 4
        %s135 = scalar_lea.vmem %s0, %s134
      $region28: #{_lambda_.9} parent=23 // pred_fallthru
        _
    $region24: #{_lambda_.9} parent=5 // pred_fallthru
      _
    %p136 = scmp.le.s32.totalorder 1, %s9
    %p137 = scmp.lt.s32.totalorder %s9, 3
    %p138 = pnand %p136, %p137
    %p139 = pneg %p138
    // Predicated region
    $region29: #{_lambda_.9} parent=5 // pred_check
      _
    $region30: #{_lambda_.9} parent=5 // pred_check_branch
      %141 = sbr.rel (%p138) target = $region32
    $region31: #{_lambda_.9} parent=5 // pred_region
      %s142 = ssub.s32 %s9, 1
      %p143 = scmp.lt.s32.totalorder %s14, 1
      %s144 = scalar_select %p143, %s14, 1
      %s145 = smul.addr %s144, 128
      %s146 = smul.addr %s145, 4
      %s147 = scalar_lea.vmem %s0, %s146
      %p148 = pneg %p35
      %p149 = pneg %p32
      %p150 = pneg %p56
      %p151 = pneg %p53
      %p152 = pneg %p77
      %p153 = pneg %p74
      %p154 = pneg %p103
      %p155 = pneg %p100
      %p156 = scmp.lt.s32.totalorder %s14, 1
      %s157 = scalar_select %p156, %s14, 1
      %s158 = smul.addr %s157, 128
      %s159 = smul.addr %s158, 4
      %s160 = scalar_lea.vmem %s3, %s159
      %p161 = scmp.lt.s32.totalorder %s14, 1
      %s162 = scalar_select %p161, %s14, 1
      %s163 = smul.addr %s162, 128
      %s164 = smul.addr %s163, 4
      %s165 = scalar_lea.vmem %s0, %s164
      %p166 = scmp.lt.s32.totalorder %s14, 1
      %s167 = scalar_select %p166, %s14, 1
      %s168 = smul.addr %s167, 128
      %s169 = smul.addr %s168, 4
      %s170 = scalar_lea.vmem %s3, %s169
      %v172 = vld [vmem:[%s165] sm:$0xf]
      %v173 = vld [vmem:[%s165 + $0x4] sm:$0xf]
      %v174 = vld [vmem:[%s165 + $0x8] sm:$0xf]
      %v175 = vld [vmem:[%s165 + $0xc] sm:$0xf]
      %v176 = vld [vmem:[%s165 + $0x10] sm:$0xf]
      %v177 = vld [vmem:[%s165 + $0x14] sm:$0xf]
      %v178 = vld [vmem:[%s165 + $0x18] sm:$0xf]
      %v179 = vld [vmem:[%s165 + $0x1c] sm:$0xf]
      %v180 = vld [vmem:[%s165 + $0x20] sm:$0xf]
      %v181 = vld [vmem:[%s165 + $0x24] sm:$0xf]
      %v182 = vld [vmem:[%s165 + $0x28] sm:$0xf]
      %v183 = vld [vmem:[%s165 + $0x2c] sm:$0xf]
      %v184 = vld [vmem:[%s165 + $0x30] sm:$0xf]
      %v185 = vld [vmem:[%s165 + $0x34] sm:$0xf]
      %v186 = vld [vmem:[%s165 + $0x38] sm:$0xf]
      %v187 = vld [vmem:[%s165 + $0x3c] sm:$0xf]
      %v188 = vld [vmem:[%s165 + $0x40] sm:$0xf]
      %v189 = vld [vmem:[%s165 + $0x44] sm:$0xf]
      %v190 = vld [vmem:[%s165 + $0x48] sm:$0xf]
      %v191 = vld [vmem:[%s165 + $0x4c] sm:$0xf]
      %v192 = vld [vmem:[%s165 + $0x50] sm:$0xf]
      %v193 = vld [vmem:[%s165 + $0x54] sm:$0xf]
      %v194 = vld [vmem:[%s165 + $0x58] sm:$0xf]
      %v195 = vld [vmem:[%s165 + $0x5c] sm:$0xf]
      %v196 = vld [vmem:[%s165 + $0x60] sm:$0xf]
      %v197 = vld [vmem:[%s165 + $0x64] sm:$0xf]
      %v198 = vld [vmem:[%s165 + $0x68] sm:$0xf]
      %v199 = vld [vmem:[%s165 + $0x6c] sm:$0xf]
      %v200 = vld [vmem:[%s165 + $0x70] sm:$0xf]
      %v201 = vld [vmem:[%s165 + $0x74] sm:$0xf]
      %v202 = vld [vmem:[%s165 + $0x78] sm:$0xf]
      %v203 = vld [vmem:[%s165 + $0x7c] sm:$0xf]
      %v204 = vld [vmem:[%s165 + $0x80] sm:$0xf]
      %v205 = vld [vmem:[%s165 + $0x84] sm:$0xf]
      %v206 = vld [vmem:[%s165 + $0x88] sm:$0xf]
      %v207 = vld [vmem:[%s165 + $0x8c] sm:$0xf]
      %v208 = vld [vmem:[%s165 + $0x90] sm:$0xf]
      %v209 = vld [vmem:[%s165 + $0x94] sm:$0xf]
      %v210 = vld [vmem:[%s165 + $0x98] sm:$0xf]
      %v211 = vld [vmem:[%s165 + $0x9c] sm:$0xf]
      %v212 = vld [vmem:[%s165 + $0xa0] sm:$0xf]
      %v213 = vld [vmem:[%s165 + $0xa4] sm:$0xf]
      %v214 = vld [vmem:[%s165 + $0xa8] sm:$0xf]
      %v215 = vld [vmem:[%s165 + $0xac] sm:$0xf]
      %v216 = vld [vmem:[%s165 + $0xb0] sm:$0xf]
      %v217 = vld [vmem:[%s165 + $0xb4] sm:$0xf]
      %v218 = vld [vmem:[%s165 + $0xb8] sm:$0xf]
      %v219 = vld [vmem:[%s165 + $0xbc] sm:$0xf]
      %v220 = vld [vmem:[%s165 + $0xc0] sm:$0xf]
      %v221 = vld [vmem:[%s165 + $0xc4] sm:$0xf]
      %v222 = vld [vmem:[%s165 + $0xc8] sm:$0xf]
      %v223 = vld [vmem:[%s165 + $0xcc] sm:$0xf]
      %v224 = vld [vmem:[%s165 + $0xd0] sm:$0xf]
      %v225 = vld [vmem:[%s165 + $0xd4] sm:$0xf]
      %v226 = vld [vmem:[%s165 + $0xd8] sm:$0xf]
      %v227 = vld [vmem:[%s165 + $0xdc] sm:$0xf]
      %v228 = vld [vmem:[%s165 + $0xe0] sm:$0xf]
      %v229 = vld [vmem:[%s165 + $0xe4] sm:$0xf]
      %v230 = vld [vmem:[%s165 + $0xe8] sm:$0xf]
      %v231 = vld [vmem:[%s165 + $0xec] sm:$0xf]
      %v232 = vld [vmem:[%s165 + $0xf0] sm:$0xf]
      %v233 = vld [vmem:[%s165 + $0xf4] sm:$0xf]
      %v234 = vld [vmem:[%s165 + $0xf8] sm:$0xf]
      %v235 = vld [vmem:[%s165 + $0xfc] sm:$0xf]
      %v236 = vld [vmem:[%s165 + $0x100] sm:$0xf]
      %v237 = vld [vmem:[%s165 + $0x104] sm:$0xf]
      %v238 = vld [vmem:[%s165 + $0x108] sm:$0xf]
      %v239 = vld [vmem:[%s165 + $0x10c] sm:$0xf]
      %v240 = vld [vmem:[%s165 + $0x110] sm:$0xf]
      %v241 = vld [vmem:[%s165 + $0x114] sm:$0xf]
      %v242 = vld [vmem:[%s165 + $0x118] sm:$0xf]
      %v243 = vld [vmem:[%s165 + $0x11c] sm:$0xf]
      %v244 = vld [vmem:[%s165 + $0x120] sm:$0xf]
      %v245 = vld [vmem:[%s165 + $0x124] sm:$0xf]
      %v246 = vld [vmem:[%s165 + $0x128] sm:$0xf]
      %v247 = vld [vmem:[%s165 + $0x12c] sm:$0xf]
      %v248 = vld [vmem:[%s165 + $0x130] sm:$0xf]
      %v249 = vld [vmem:[%s165 + $0x134] sm:$0xf]
      %v250 = vld [vmem:[%s165 + $0x138] sm:$0xf]
      %v251 = vld [vmem:[%s165 + $0x13c] sm:$0xf]
      %v252 = vld [vmem:[%s165 + $0x140] sm:$0xf]
      %v253 = vld [vmem:[%s165 + $0x144] sm:$0xf]
      %v254 = vld [vmem:[%s165 + $0x148] sm:$0xf]
      %v255 = vld [vmem:[%s165 + $0x14c] sm:$0xf]
      %v256 = vld [vmem:[%s165 + $0x150] sm:$0xf]
      %v257 = vld [vmem:[%s165 + $0x154] sm:$0xf]
      %v258 = vld [vmem:[%s165 + $0x158] sm:$0xf]
      %v259 = vld [vmem:[%s165 + $0x15c] sm:$0xf]
      %v260 = vld [vmem:[%s165 + $0x160] sm:$0xf]
      %v261 = vld [vmem:[%s165 + $0x164] sm:$0xf]
      %v262 = vld [vmem:[%s165 + $0x168] sm:$0xf]
      %v263 = vld [vmem:[%s165 + $0x16c] sm:$0xf]
      %v264 = vld [vmem:[%s165 + $0x170] sm:$0xf]
      %v265 = vld [vmem:[%s165 + $0x174] sm:$0xf]
      %v266 = vld [vmem:[%s165 + $0x178] sm:$0xf]
      %v267 = vld [vmem:[%s165 + $0x17c] sm:$0xf]
      %v268 = vld [vmem:[%s165 + $0x180] sm:$0xf]
      %v269 = vld [vmem:[%s165 + $0x184] sm:$0xf]
      %v270 = vld [vmem:[%s165 + $0x188] sm:$0xf]
      %v271 = vld [vmem:[%s165 + $0x18c] sm:$0xf]
      %v272 = vld [vmem:[%s165 + $0x190] sm:$0xf]
      %v273 = vld [vmem:[%s165 + $0x194] sm:$0xf]
      %v274 = vld [vmem:[%s165 + $0x198] sm:$0xf]
      %v275 = vld [vmem:[%s165 + $0x19c] sm:$0xf]
      %v276 = vld [vmem:[%s165 + $0x1a0] sm:$0xf]
      %v277 = vld [vmem:[%s165 + $0x1a4] sm:$0xf]
      %v278 = vld [vmem:[%s165 + $0x1a8] sm:$0xf]
      %v279 = vld [vmem:[%s165 + $0x1ac] sm:$0xf]
      %v280 = vld [vmem:[%s165 + $0x1b0] sm:$0xf]
      %v281 = vld [vmem:[%s165 + $0x1b4] sm:$0xf]
      %v282 = vld [vmem:[%s165 + $0x1b8] sm:$0xf]
      %v283 = vld [vmem:[%s165 + $0x1bc] sm:$0xf]
      %v284 = vld [vmem:[%s165 + $0x1c0] sm:$0xf]
      %v285 = vld [vmem:[%s165 + $0x1c4] sm:$0xf]
      %v286 = vld [vmem:[%s165 + $0x1c8] sm:$0xf]
      %v287 = vld [vmem:[%s165 + $0x1cc] sm:$0xf]
      %v288 = vld [vmem:[%s165 + $0x1d0] sm:$0xf]
      %v289 = vld [vmem:[%s165 + $0x1d4] sm:$0xf]
      %v290 = vld [vmem:[%s165 + $0x1d8] sm:$0xf]
      %v291 = vld [vmem:[%s165 + $0x1dc] sm:$0xf]
      %v292 = vld [vmem:[%s165 + $0x1e0] sm:$0xf]
      %v293 = vld [vmem:[%s165 + $0x1e4] sm:$0xf]
      %v294 = vld [vmem:[%s165 + $0x1e8] sm:$0xf]
      %v295 = vld [vmem:[%s165 + $0x1ec] sm:$0xf]
      %v296 = vld [vmem:[%s165 + $0x1f0] sm:$0xf]
      %v297 = vld [vmem:[%s165 + $0x1f4] sm:$0xf]
      %v298 = vld [vmem:[%s165 + $0x1f8] sm:$0xf]
      %v299 = vld [vmem:[%s165 + $0x1fc] sm:$0xf]
      %v300 = vld [vmem:[%s1] sm:$0xf]
      %v301 = vld [vmem:[%s1 + $0x4] sm:$0xf]
      %v302 = vld [vmem:[%s1 + $0x8] sm:$0xf]
      %v303 = vld [vmem:[%s1 + $0xc] sm:$0xf]
      %v432 = vunpack.c.l.b16 %v172
      %v433 = vunpack.c.l.b16 %v173
      %v434 = vunpack.c.l.b16 %v174
      %v435 = vunpack.c.l.b16 %v175
      %v436 = vunpack.c.l.b16 %v176
      %v437 = vunpack.c.l.b16 %v177
      %v438 = vunpack.c.l.b16 %v178
      %v439 = vunpack.c.l.b16 %v179
      %v440 = vunpack.c.l.b16 %v180
      %v441 = vunpack.c.l.b16 %v181
      %v442 = vunpack.c.l.b16 %v182
      %v443 = vunpack.c.l.b16 %v183
      %v444 = vunpack.c.l.b16 %v184
      %v445 = vunpack.c.l.b16 %v185
      %v446 = vunpack.c.l.b16 %v186
      %v447 = vunpack.c.l.b16 %v187
      %v448 = vunpack.c.l.b16 %v188
      %v449 = vunpack.c.l.b16 %v189
      %v450 = vunpack.c.l.b16 %v190
      %v451 = vunpack.c.l.b16 %v191
      %v452 = vunpack.c.l.b16 %v192
      %v453 = vunpack.c.l.b16 %v193
      %v454 = vunpack.c.l.b16 %v194
      %v455 = vunpack.c.l.b16 %v195
      %v456 = vunpack.c.l.b16 %v196
      %v457 = vunpack.c.l.b16 %v197
      %v458 = vunpack.c.l.b16 %v198
      %v459 = vunpack.c.l.b16 %v199
      %v460 = vunpack.c.l.b16 %v200
      %v461 = vunpack.c.l.b16 %v201
      %v462 = vunpack.c.l.b16 %v202
      %v463 = vunpack.c.l.b16 %v203
      %v464 = vunpack.c.l.b16 %v204
      %v465 = vunpack.c.l.b16 %v205
      %v466 = vunpack.c.l.b16 %v206
      %v467 = vunpack.c.l.b16 %v207
      %v468 = vunpack.c.l.b16 %v208
      %v469 = vunpack.c.l.b16 %v209
      %v470 = vunpack.c.l.b16 %v210
      %v471 = vunpack.c.l.b16 %v211
      %v472 = vunpack.c.l.b16 %v212
      %v473 = vunpack.c.l.b16 %v213
      %v474 = vunpack.c.l.b16 %v214
      %v475 = vunpack.c.l.b16 %v215
      %v476 = vunpack.c.l.b16 %v216
      %v477 = vunpack.c.l.b16 %v217
      %v478 = vunpack.c.l.b16 %v218
      %v479 = vunpack.c.l.b16 %v219
      %v480 = vunpack.c.l.b16 %v220
      %v481 = vunpack.c.l.b16 %v221
      %v482 = vunpack.c.l.b16 %v222
      %v483 = vunpack.c.l.b16 %v223
      %v484 = vunpack.c.l.b16 %v224
      %v485 = vunpack.c.l.b16 %v225
      %v486 = vunpack.c.l.b16 %v226
      %v487 = vunpack.c.l.b16 %v227
      %v488 = vunpack.c.l.b16 %v228
      %v489 = vunpack.c.l.b16 %v229
      %v490 = vunpack.c.l.b16 %v230
      %v491 = vunpack.c.l.b16 %v231
      %v492 = vunpack.c.l.b16 %v232
      %v493 = vunpack.c.l.b16 %v233
      %v494 = vunpack.c.l.b16 %v234
      %v495 = vunpack.c.l.b16 %v235
      %v496 = vunpack.c.l.b16 %v236
      %v497 = vunpack.c.l.b16 %v237
      %v498 = vunpack.c.l.b16 %v238
      %v499 = vunpack.c.l.b16 %v239
      %v500 = vunpack.c.l.b16 %v240
      %v501 = vunpack.c.l.b16 %v241
      %v502 = vunpack.c.l.b16 %v242
      %v503 = vunpack.c.l.b16 %v243
      %v504 = vunpack.c.l.b16 %v244
      %v505 = vunpack.c.l.b16 %v245
      %v506 = vunpack.c.l.b16 %v246
      %v507 = vunpack.c.l.b16 %v247
      %v508 = vunpack.c.l.b16 %v248
      %v509 = vunpack.c.l.b16 %v249
      %v510 = vunpack.c.l.b16 %v250
      %v511 = vunpack.c.l.b16 %v251
      %v512 = vunpack.c.l.b16 %v252
      %v513 = vunpack.c.l.b16 %v253
      %v514 = vunpack.c.l.b16 %v254
      %v515 = vunpack.c.l.b16 %v255
      %v516 = vunpack.c.l.b16 %v256
      %v517 = vunpack.c.l.b16 %v257
      %v518 = vunpack.c.l.b16 %v258
      %v519 = vunpack.c.l.b16 %v259
      %v520 = vunpack.c.l.b16 %v260
      %v521 = vunpack.c.l.b16 %v261
      %v522 = vunpack.c.l.b16 %v262
      %v523 = vunpack.c.l.b16 %v263
      %v524 = vunpack.c.l.b16 %v264
      %v525 = vunpack.c.l.b16 %v265
      %v526 = vunpack.c.l.b16 %v266
      %v527 = vunpack.c.l.b16 %v267
      %v528 = vunpack.c.l.b16 %v268
      %v529 = vunpack.c.l.b16 %v269
      %v530 = vunpack.c.l.b16 %v270
      %v531 = vunpack.c.l.b16 %v271
      %v532 = vunpack.c.l.b16 %v272
      %v533 = vunpack.c.l.b16 %v273
      %v534 = vunpack.c.l.b16 %v274
      %v535 = vunpack.c.l.b16 %v275
      %v536 = vunpack.c.l.b16 %v276
      %v537 = vunpack.c.l.b16 %v277
      %v538 = vunpack.c.l.b16 %v278
      %v539 = vunpack.c.l.b16 %v279
      %v540 = vunpack.c.l.b16 %v280
      %v541 = vunpack.c.l.b16 %v281
      %v542 = vunpack.c.l.b16 %v282
      %v543 = vunpack.c.l.b16 %v283
      %v544 = vunpack.c.l.b16 %v284
      %v545 = vunpack.c.l.b16 %v285
      %v546 = vunpack.c.l.b16 %v286
      %v547 = vunpack.c.l.b16 %v287
      %v548 = vunpack.c.l.b16 %v288
      %v549 = vunpack.c.l.b16 %v289
      %v550 = vunpack.c.l.b16 %v290
      %v551 = vunpack.c.l.b16 %v291
      %v552 = vunpack.c.l.b16 %v292
      %v553 = vunpack.c.l.b16 %v293
      %v554 = vunpack.c.l.b16 %v294
      %v555 = vunpack.c.l.b16 %v295
      %v556 = vunpack.c.l.b16 %v296
      %v557 = vunpack.c.l.b16 %v297
      %v558 = vunpack.c.l.b16 %v298
      %v559 = vunpack.c.l.b16 %v299
      %v560 = vpack.c.b16 %v433, %v432
      %v561 = vpack.c.b16 %v435, %v434
      %v562 = vpack.c.b16 %v437, %v436
      %v563 = vpack.c.b16 %v439, %v438
      %v564 = vpack.c.b16 %v441, %v440
      %v565 = vpack.c.b16 %v443, %v442
      %v566 = vpack.c.b16 %v445, %v444
      %v567 = vpack.c.b16 %v447, %v446
      %v568 = vpack.c.b16 %v449, %v448
      %v569 = vpack.c.b16 %v451, %v450
      %v570 = vpack.c.b16 %v453, %v452
      %v571 = vpack.c.b16 %v455, %v454
      %v572 = vpack.c.b16 %v457, %v456
      %v573 = vpack.c.b16 %v459, %v458
      %v574 = vpack.c.b16 %v461, %v460
      %v575 = vpack.c.b16 %v463, %v462
      %v576 = vpack.c.b16 %v465, %v464
      %v577 = vpack.c.b16 %v467, %v466
      %v578 = vpack.c.b16 %v469, %v468
      %v579 = vpack.c.b16 %v471, %v470
      %v580 = vpack.c.b16 %v473, %v472
      %v581 = vpack.c.b16 %v475, %v474
      %v582 = vpack.c.b16 %v477, %v476
      %v583 = vpack.c.b16 %v479, %v478
      %v584 = vpack.c.b16 %v481, %v480
      %v585 = vpack.c.b16 %v483, %v482
      %v586 = vpack.c.b16 %v485, %v484
      %v587 = vpack.c.b16 %v487, %v486
      %v588 = vpack.c.b16 %v489, %v488
      %v589 = vpack.c.b16 %v491, %v490
      %v590 = vpack.c.b16 %v493, %v492
      %v591 = vpack.c.b16 %v495, %v494
      %v592 = vpack.c.b16 %v497, %v496
      %v593 = vpack.c.b16 %v499, %v498
      %v594 = vpack.c.b16 %v501, %v500
      %v595 = vpack.c.b16 %v503, %v502
      %v596 = vpack.c.b16 %v505, %v504
      %v597 = vpack.c.b16 %v507, %v506
      %v598 = vpack.c.b16 %v509, %v508
      %v599 = vpack.c.b16 %v511, %v510
      %v600 = vpack.c.b16 %v513, %v512
      %v601 = vpack.c.b16 %v515, %v514
      %v602 = vpack.c.b16 %v517, %v516
      %v603 = vpack.c.b16 %v519, %v518
      %v604 = vpack.c.b16 %v521, %v520
      %v605 = vpack.c.b16 %v523, %v522
      %v606 = vpack.c.b16 %v525, %v524
      %v607 = vpack.c.b16 %v527, %v526
      %v608 = vpack.c.b16 %v529, %v528
      %v609 = vpack.c.b16 %v531, %v530
      %v610 = vpack.c.b16 %v533, %v532
      %v611 = vpack.c.b16 %v535, %v534
      %v612 = vpack.c.b16 %v537, %v536
      %v613 = vpack.c.b16 %v539, %v538
      %v614 = vpack.c.b16 %v541, %v540
      %v615 = vpack.c.b16 %v543, %v542
      %v616 = vpack.c.b16 %v545, %v544
      %v617 = vpack.c.b16 %v547, %v546
      %v618 = vpack.c.b16 %v549, %v548
      %v619 = vpack.c.b16 %v551, %v550
      %v620 = vpack.c.b16 %v553, %v552
      %v621 = vpack.c.b16 %v555, %v554
      %v622 = vpack.c.b16 %v557, %v556
      %v623 = vpack.c.b16 %v559, %v558
      %v628 = vunpack.c.l.b16 %v300
      %v629 = vunpack.c.l.b16 %v301
      %v630 = vunpack.c.l.b16 %v302
      %v631 = vunpack.c.l.b16 %v303
      %v632 = vpack.c.b16 %v629, %v628
      %v633 = vpack.c.b16 %v631, %v630
      %vm636 = vcmask 261120
      %v638 = vsel %vm636, %v560, 0
      %v641 = vsel %vm636, %v561, 0
      %v644 = vsel %vm636, %v562, 0
      %v647 = vsel %vm636, %v563, 0
      %v650 = vsel %vm636, %v564, 0
      %v653 = vsel %vm636, %v565, 0
      %v656 = vsel %vm636, %v566, 0
      %v659 = vsel %vm636, %v567, 0
      %v662 = vsel %vm636, %v568, 0
      %v665 = vsel %vm636, %v569, 0
      %v668 = vsel %vm636, %v570, 0
      %v671 = vsel %vm636, %v571, 0
      %v674 = vsel %vm636, %v572, 0
      %v677 = vsel %vm636, %v573, 0
      %v680 = vsel %vm636, %v574, 0
      %v683 = vsel %vm636, %v575, 0
      %v686 = vsel %vm636, %v576, 0
      %v689 = vsel %vm636, %v577, 0
      %v692 = vsel %vm636, %v578, 0
      %v695 = vsel %vm636, %v579, 0
      %v698 = vsel %vm636, %v580, 0
      %v701 = vsel %vm636, %v581, 0
      %v704 = vsel %vm636, %v582, 0
      %v707 = vsel %vm636, %v583, 0
      %v710 = vsel %vm636, %v584, 0
      %v713 = vsel %vm636, %v585, 0
      %v716 = vsel %vm636, %v586, 0
      %v719 = vsel %vm636, %v587, 0
      %v722 = vsel %vm636, %v588, 0
      %v725 = vsel %vm636, %v589, 0
      %v728 = vsel %vm636, %v590, 0
      %v731 = vsel %vm636, %v591, 0
      %v734 = vsel %vm636, %v592, 0
      %v737 = vsel %vm636, %v593, 0
      %v740 = vsel %vm636, %v594, 0
      %v743 = vsel %vm636, %v595, 0
      %v746 = vsel %vm636, %v596, 0
      %v749 = vsel %vm636, %v597, 0
      %v752 = vsel %vm636, %v598, 0
      %v755 = vsel %vm636, %v599, 0
      %v758 = vsel %vm636, %v600, 0
      %v761 = vsel %vm636, %v601, 0
      %v764 = vsel %vm636, %v602, 0
      %v767 = vsel %vm636, %v603, 0
      %v770 = vsel %vm636, %v604, 0
      %v773 = vsel %vm636, %v605, 0
      %v776 = vsel %vm636, %v606, 0
      %v779 = vsel %vm636, %v607, 0
      %v782 = vsel %vm636, %v608, 0
      %v785 = vsel %vm636, %v609, 0
      %v788 = vsel %vm636, %v610, 0
      %v791 = vsel %vm636, %v611, 0
      %v794 = vsel %vm636, %v612, 0
      %v797 = vsel %vm636, %v613, 0
      %v800 = vsel %vm636, %v614, 0
      %v803 = vsel %vm636, %v615, 0
      %v806 = vsel %vm636, %v616, 0
      %v809 = vsel %vm636, %v617, 0
      %v812 = vsel %vm636, %v618, 0
      %v815 = vsel %vm636, %v619, 0
      %v818 = vsel %vm636, %v620, 0
      %v821 = vsel %vm636, %v621, 0
      %v824 = vsel %vm636, %v622, 0
      %v827 = vsel %vm636, %v623, 0
      %829 = vmatpush.bf16.msra.mxu0 0
      %830 = vmatpush.bf16.msra.mxu0 0
      %831 = vmatpush.bf16.msra.mxu0 0
      %832 = vmatpush.bf16.msra.mxu0 0
      %833 = vmatpush.bf16.msra.mxu0 0
      %834 = vmatpush.bf16.msra.mxu0 0
      %835 = vmatpush.bf16.msra.mxu0 %v633
      %836 = vmatpush.bf16.msra.mxu0 %v632
      %837 = vmatmul.bf16.gmra.mxu0 %v638
      %v838 = vpop.f32.mrf.mxu0
      %v839 = vadd.f32 0.0, %v838
      %v840 = vpop.f32.mrf.mxu0
      %v841 = vadd.f32 0.0, %v840
      %842 = vmatmul.bf16.gmra.mxu0 %v641
      %v843 = vpop.f32.mrf.mxu0
      %v844 = vadd.f32 0.0, %v843
      %v845 = vpop.f32.mrf.mxu0
      %v846 = vadd.f32 0.0, %v845
      %847 = vmatmul.bf16.gmra.mxu0 %v644
      %v848 = vpop.f32.mrf.mxu0
      %v849 = vadd.f32 0.0, %v848
      %v850 = vpop.f32.mrf.mxu0
      %v851 = vadd.f32 0.0, %v850
      %852 = vmatmul.bf16.gmra.mxu0 %v647
      %v853 = vpop.f32.mrf.mxu0
      %v854 = vadd.f32 0.0, %v853
      %v855 = vpop.f32.mrf.mxu0
      %v856 = vadd.f32 0.0, %v855
      %857 = vmatmul.bf16.gmra.mxu0 %v650
      %v858 = vpop.f32.mrf.mxu0
      %v859 = vadd.f32 0.0, %v858
      %v860 = vpop.f32.mrf.mxu0
      %v861 = vadd.f32 0.0, %v860
      %862 = vmatmul.bf16.gmra.mxu0 %v653
      %v863 = vpop.f32.mrf.mxu0
      %v864 = vadd.f32 0.0, %v863
      %v865 = vpop.f32.mrf.mxu0
      %v866 = vadd.f32 0.0, %v865
      %867 = vmatmul.bf16.gmra.mxu0 %v656
      %v868 = vpop.f32.mrf.mxu0
      %v869 = vadd.f32 0.0, %v868
      %v870 = vpop.f32.mrf.mxu0
      %v871 = vadd.f32 0.0, %v870
      %872 = vmatmul.bf16.gmra.mxu0 %v659
      %v873 = vpop.f32.mrf.mxu0
      %v874 = vadd.f32 0.0, %v873
      %v875 = vpop.f32.mrf.mxu0
      %v876 = vadd.f32 0.0, %v875
      %877 = vmatmul.bf16.gmra.mxu0 %v662
      %v878 = vpop.f32.mrf.mxu0
      %v879 = vadd.f32 0.0, %v878
      %v880 = vpop.f32.mrf.mxu0
      %v881 = vadd.f32 0.0, %v880
      %882 = vmatmul.bf16.gmra.mxu0 %v665
      %v883 = vpop.f32.mrf.mxu0
      %v884 = vadd.f32 0.0, %v883
      %v885 = vpop.f32.mrf.mxu0
      %v886 = vadd.f32 0.0, %v885
      %887 = vmatmul.bf16.gmra.mxu0 %v668
      %v888 = vpop.f32.mrf.mxu0
      %v889 = vadd.f32 0.0, %v888
      %v890 = vpop.f32.mrf.mxu0
      %v891 = vadd.f32 0.0, %v890
      %892 = vmatmul.bf16.gmra.mxu0 %v671
      %v893 = vpop.f32.mrf.mxu0
      %v894 = vadd.f32 0.0, %v893
      %v895 = vpop.f32.mrf.mxu0
      %v896 = vadd.f32 0.0, %v895
      %897 = vmatmul.bf16.gmra.mxu0 %v674
      %v898 = vpop.f32.mrf.mxu0
      %v899 = vadd.f32 0.0, %v898
      %v900 = vpop.f32.mrf.mxu0
      %v901 = vadd.f32 0.0, %v900
      %902 = vmatmul.bf16.gmra.mxu0 %v677
      %v903 = vpop.f32.mrf.mxu0
      %v904 = vadd.f32 0.0, %v903
      %v905 = vpop.f32.mrf.mxu0
      %v906 = vadd.f32 0.0, %v905
      %907 = vmatmul.bf16.gmra.mxu0 %v680
      %v908 = vpop.f32.mrf.mxu0
      %v909 = vadd.f32 0.0, %v908
      %v910 = vpop.f32.mrf.mxu0
      %v911 = vadd.f32 0.0, %v910
      %912 = vmatmul.bf16.gmra.mxu0 %v683
      %v913 = vpop.f32.mrf.mxu0
      %v914 = vadd.f32 0.0, %v913
      %v915 = vpop.f32.mrf.mxu0
      %v916 = vadd.f32 0.0, %v915
      %917 = vmatmul.bf16.gmra.mxu0 %v686
      %v918 = vpop.f32.mrf.mxu0
      %v919 = vadd.f32 0.0, %v918
      %v920 = vpop.f32.mrf.mxu0
      %v921 = vadd.f32 0.0, %v920
      %922 = vmatmul.bf16.gmra.mxu0 %v689
      %v923 = vpop.f32.mrf.mxu0
      %v924 = vadd.f32 0.0, %v923
      %v925 = vpop.f32.mrf.mxu0
      %v926 = vadd.f32 0.0, %v925
      %927 = vmatmul.bf16.gmra.mxu0 %v692
      %v928 = vpop.f32.mrf.mxu0
      %v929 = vadd.f32 0.0, %v928
      %v930 = vpop.f32.mrf.mxu0
      %v931 = vadd.f32 0.0, %v930
      %932 = vmatmul.bf16.gmra.mxu0 %v695
      %v933 = vpop.f32.mrf.mxu0
      %v934 = vadd.f32 0.0, %v933
      %v935 = vpop.f32.mrf.mxu0
      %v936 = vadd.f32 0.0, %v935
      %937 = vmatmul.bf16.gmra.mxu0 %v698
      %v938 = vpop.f32.mrf.mxu0
      %v939 = vadd.f32 0.0, %v938
      %v940 = vpop.f32.mrf.mxu0
      %v941 = vadd.f32 0.0, %v940
      %942 = vmatmul.bf16.gmra.mxu0 %v701
      %v943 = vpop.f32.mrf.mxu0
      %v944 = vadd.f32 0.0, %v943
      %v945 = vpop.f32.mrf.mxu0
      %v946 = vadd.f32 0.0, %v945
      %947 = vmatmul.bf16.gmra.mxu0 %v704
      %v948 = vpop.f32.mrf.mxu0
      %v949 = vadd.f32 0.0, %v948
      %v950 = vpop.f32.mrf.mxu0
      %v951 = vadd.f32 0.0, %v950
      %952 = vmatmul.bf16.gmra.mxu0 %v707
      %v953 = vpop.f32.mrf.mxu0
      %v954 = vadd.f32 0.0, %v953
      %v955 = vpop.f32.mrf.mxu0
      %v956 = vadd.f32 0.0, %v955
      %957 = vmatmul.bf16.gmra.mxu0 %v710
      %v958 = vpop.f32.mrf.mxu0
      %v959 = vadd.f32 0.0, %v958
      %v960 = vpop.f32.mrf.mxu0
      %v961 = vadd.f32 0.0, %v960
      %962 = vmatmul.bf16.gmra.mxu0 %v713
      %v963 = vpop.f32.mrf.mxu0
      %v964 = vadd.f32 0.0, %v963
      %v965 = vpop.f32.mrf.mxu0
      %v966 = vadd.f32 0.0, %v965
      %967 = vmatmul.bf16.gmra.mxu0 %v716
      %v968 = vpop.f32.mrf.mxu0
      %v969 = vadd.f32 0.0, %v968
      %v970 = vpop.f32.mrf.mxu0
      %v971 = vadd.f32 0.0, %v970
      %972 = vmatmul.bf16.gmra.mxu0 %v719
      %v973 = vpop.f32.mrf.mxu0
      %v974 = vadd.f32 0.0, %v973
      %v975 = vpop.f32.mrf.mxu0
      %v976 = vadd.f32 0.0, %v975
      %977 = vmatmul.bf16.gmra.mxu0 %v722
      %v978 = vpop.f32.mrf.mxu0
      %v979 = vadd.f32 0.0, %v978
      %v980 = vpop.f32.mrf.mxu0
      %v981 = vadd.f32 0.0, %v980
      %982 = vmatmul.bf16.gmra.mxu0 %v725
      %v983 = vpop.f32.mrf.mxu0
      %v984 = vadd.f32 0.0, %v983
      %v985 = vpop.f32.mrf.mxu0
      %v986 = vadd.f32 0.0, %v985
      %987 = vmatmul.bf16.gmra.mxu0 %v728
      %v988 = vpop.f32.mrf.mxu0
      %v989 = vadd.f32 0.0, %v988
      %v990 = vpop.f32.mrf.mxu0
      %v991 = vadd.f32 0.0, %v990
      %992 = vmatmul.bf16.gmra.mxu0 %v731
      %v993 = vpop.f32.mrf.mxu0
      %v994 = vadd.f32 0.0, %v993
      %v995 = vpop.f32.mrf.mxu0
      %v996 = vadd.f32 0.0, %v995
      %997 = vmatmul.bf16.gmra.mxu0 %v734
      %v998 = vpop.f32.mrf.mxu0
      %v999 = vadd.f32 0.0, %v998
      %v1000 = vpop.f32.mrf.mxu0
      %v1001 = vadd.f32 0.0, %v1000
      %1002 = vmatmul.bf16.gmra.mxu0 %v737
      %v1003 = vpop.f32.mrf.mxu0
      %v1004 = vadd.f32 0.0, %v1003
      %v1005 = vpop.f32.mrf.mxu0
      %v1006 = vadd.f32 0.0, %v1005
      %1007 = vmatmul.bf16.gmra.mxu0 %v740
      %v1008 = vpop.f32.mrf.mxu0
      %v1009 = vadd.f32 0.0, %v1008
      %v1010 = vpop.f32.mrf.mxu0
      %v1011 = vadd.f32 0.0, %v1010
      %1012 = vmatmul.bf16.gmra.mxu0 %v743
      %v1013 = vpop.f32.mrf.mxu0
      %v1014 = vadd.f32 0.0, %v1013
      %v1015 = vpop.f32.mrf.mxu0
      %v1016 = vadd.f32 0.0, %v1015
      %1017 = vmatmul.bf16.gmra.mxu0 %v746
      %v1018 = vpop.f32.mrf.mxu0
      %v1019 = vadd.f32 0.0, %v1018
      %v1020 = vpop.f32.mrf.mxu0
      %v1021 = vadd.f32 0.0, %v1020
      %1022 = vmatmul.bf16.gmra.mxu0 %v749
      %v1023 = vpop.f32.mrf.mxu0
      %v1024 = vadd.f32 0.0, %v1023
      %v1025 = vpop.f32.mrf.mxu0
      %v1026 = vadd.f32 0.0, %v1025
      %1027 = vmatmul.bf16.gmra.mxu0 %v752
      %v1028 = vpop.f32.mrf.mxu0
      %v1029 = vadd.f32 0.0, %v1028
      %v1030 = vpop.f32.mrf.mxu0
      %v1031 = vadd.f32 0.0, %v1030
      %1032 = vmatmul.bf16.gmra.mxu0 %v755
      %v1033 = vpop.f32.mrf.mxu0
      %v1034 = vadd.f32 0.0, %v1033
      %v1035 = vpop.f32.mrf.mxu0
      %v1036 = vadd.f32 0.0, %v1035
      %1037 = vmatmul.bf16.gmra.mxu0 %v758
      %v1038 = vpop.f32.mrf.mxu0
      %v1039 = vadd.f32 0.0, %v1038
      %v1040 = vpop.f32.mrf.mxu0
      %v1041 = vadd.f32 0.0, %v1040
      %1042 = vmatmul.bf16.gmra.mxu0 %v761
      %v1043 = vpop.f32.mrf.mxu0
      %v1044 = vadd.f32 0.0, %v1043
      %v1045 = vpop.f32.mrf.mxu0
      %v1046 = vadd.f32 0.0, %v1045
      %1047 = vmatmul.bf16.gmra.mxu0 %v764
      %v1048 = vpop.f32.mrf.mxu0
      %v1049 = vadd.f32 0.0, %v1048
      %v1050 = vpop.f32.mrf.mxu0
      %v1051 = vadd.f32 0.0, %v1050
      %1052 = vmatmul.bf16.gmra.mxu0 %v767
      %v1053 = vpop.f32.mrf.mxu0
      %v1054 = vadd.f32 0.0, %v1053
      %v1055 = vpop.f32.mrf.mxu0
      %v1056 = vadd.f32 0.0, %v1055
      %1057 = vmatmul.bf16.gmra.mxu0 %v770
      %v1058 = vpop.f32.mrf.mxu0
      %v1059 = vadd.f32 0.0, %v1058
      %v1060 = vpop.f32.mrf.mxu0
      %v1061 = vadd.f32 0.0, %v1060
      %1062 = vmatmul.bf16.gmra.mxu0 %v773
      %v1063 = vpop.f32.mrf.mxu0
      %v1064 = vadd.f32 0.0, %v1063
      %v1065 = vpop.f32.mrf.mxu0
      %v1066 = vadd.f32 0.0, %v1065
      %1067 = vmatmul.bf16.gmra.mxu0 %v776
      %v1068 = vpop.f32.mrf.mxu0
      %v1069 = vadd.f32 0.0, %v1068
      %v1070 = vpop.f32.mrf.mxu0
      %v1071 = vadd.f32 0.0, %v1070
      %1072 = vmatmul.bf16.gmra.mxu0 %v779
      %v1073 = vpop.f32.mrf.mxu0
      %v1074 = vadd.f32 0.0, %v1073
      %v1075 = vpop.f32.mrf.mxu0
      %v1076 = vadd.f32 0.0, %v1075
      %1077 = vmatmul.bf16.gmra.mxu0 %v782
      %v1078 = vpop.f32.mrf.mxu0
      %v1079 = vadd.f32 0.0, %v1078
      %v1080 = vpop.f32.mrf.mxu0
      %v1081 = vadd.f32 0.0, %v1080
      %1082 = vmatmul.bf16.gmra.mxu0 %v785
      %v1083 = vpop.f32.mrf.mxu0
      %v1084 = vadd.f32 0.0, %v1083
      %v1085 = vpop.f32.mrf.mxu0
      %v1086 = vadd.f32 0.0, %v1085
      %1087 = vmatmul.bf16.gmra.mxu0 %v788
      %v1088 = vpop.f32.mrf.mxu0
      %v1089 = vadd.f32 0.0, %v1088
      %v1090 = vpop.f32.mrf.mxu0
      %v1091 = vadd.f32 0.0, %v1090
      %1092 = vmatmul.bf16.gmra.mxu0 %v791
      %v1093 = vpop.f32.mrf.mxu0
      %v1094 = vadd.f32 0.0, %v1093
      %v1095 = vpop.f32.mrf.mxu0
      %v1096 = vadd.f32 0.0, %v1095
      %1097 = vmatmul.bf16.gmra.mxu0 %v794
      %v1098 = vpop.f32.mrf.mxu0
      %v1099 = vadd.f32 0.0, %v1098
      %v1100 = vpop.f32.mrf.mxu0
      %v1101 = vadd.f32 0.0, %v1100
      %1102 = vmatmul.bf16.gmra.mxu0 %v797
      %v1103 = vpop.f32.mrf.mxu0
      %v1104 = vadd.f32 0.0, %v1103
      %v1105 = vpop.f32.mrf.mxu0
      %v1106 = vadd.f32 0.0, %v1105
      %1107 = vmatmul.bf16.gmra.mxu0 %v800
      %v1108 = vpop.f32.mrf.mxu0
      %v1109 = vadd.f32 0.0, %v1108
      %v1110 = vpop.f32.mrf.mxu0
      %v1111 = vadd.f32 0.0, %v1110
      %1112 = vmatmul.bf16.gmra.mxu0 %v803
      %v1113 = vpop.f32.mrf.mxu0
      %v1114 = vadd.f32 0.0, %v1113
      %v1115 = vpop.f32.mrf.mxu0
      %v1116 = vadd.f32 0.0, %v1115
      %1117 = vmatmul.bf16.gmra.mxu0 %v806
      %v1118 = vpop.f32.mrf.mxu0
      %v1119 = vadd.f32 0.0, %v1118
      %v1120 = vpop.f32.mrf.mxu0
      %v1121 = vadd.f32 0.0, %v1120
      %1122 = vmatmul.bf16.gmra.mxu0 %v809
      %v1123 = vpop.f32.mrf.mxu0
      %v1124 = vadd.f32 0.0, %v1123
      %v1125 = vpop.f32.mrf.mxu0
      %v1126 = vadd.f32 0.0, %v1125
      %1127 = vmatmul.bf16.gmra.mxu0 %v812
      %v1128 = vpop.f32.mrf.mxu0
      %v1129 = vadd.f32 0.0, %v1128
      %v1130 = vpop.f32.mrf.mxu0
      %v1131 = vadd.f32 0.0, %v1130
      %1132 = vmatmul.bf16.gmra.mxu0 %v815
      %v1133 = vpop.f32.mrf.mxu0
      %v1134 = vadd.f32 0.0, %v1133
      %v1135 = vpop.f32.mrf.mxu0
      %v1136 = vadd.f32 0.0, %v1135
      %1137 = vmatmul.bf16.gmra.mxu0 %v818
      %v1138 = vpop.f32.mrf.mxu0
      %v1139 = vadd.f32 0.0, %v1138
      %v1140 = vpop.f32.mrf.mxu0
      %v1141 = vadd.f32 0.0, %v1140
      %1142 = vmatmul.bf16.gmra.mxu0 %v821
      %v1143 = vpop.f32.mrf.mxu0
      %v1144 = vadd.f32 0.0, %v1143
      %v1145 = vpop.f32.mrf.mxu0
      %v1146 = vadd.f32 0.0, %v1145
      %1147 = vmatmul.bf16.gmra.mxu0 %v824
      %v1148 = vpop.f32.mrf.mxu0
      %v1149 = vadd.f32 0.0, %v1148
      %v1150 = vpop.f32.mrf.mxu0
      %v1151 = vadd.f32 0.0, %v1150
      %1152 = vmatmul.bf16.gmra.mxu0 %v827
      %v1153 = vpop.f32.mrf.mxu0
      %v1154 = vadd.f32 0.0, %v1153
      %v1155 = vpop.f32.mrf.mxu0
      %v1156 = vadd.f32 0.0, %v1155
      %1157 = vdwg.mxu0
      %v1158 = vmax.f32 %v839, 0.0
      %v1159 = vmax.f32 %v841, 0.0
      %v1160 = vmax.f32 %v844, 0.0
      %v1161 = vmax.f32 %v846, 0.0
      %v1162 = vmax.f32 %v849, 0.0
      %v1163 = vmax.f32 %v851, 0.0
      %v1164 = vmax.f32 %v854, 0.0
      %v1165 = vmax.f32 %v856, 0.0
      %v1166 = vmax.f32 %v859, 0.0
      %v1167 = vmax.f32 %v861, 0.0
      %v1168 = vmax.f32 %v864, 0.0
      %v1169 = vmax.f32 %v866, 0.0
      %v1170 = vmax.f32 %v869, 0.0
      %v1171 = vmax.f32 %v871, 0.0
      %v1172 = vmax.f32 %v874, 0.0
      %v1173 = vmax.f32 %v876, 0.0
      %v1174 = vmax.f32 %v879, 0.0
      %v1175 = vmax.f32 %v881, 0.0
      %v1176 = vmax.f32 %v884, 0.0
      %v1177 = vmax.f32 %v886, 0.0
      %v1178 = vmax.f32 %v889, 0.0
      %v1179 = vmax.f32 %v891, 0.0
      %v1180 = vmax.f32 %v894, 0.0
      %v1181 = vmax.f32 %v896, 0.0
      %v1182 = vmax.f32 %v899, 0.0
      %v1183 = vmax.f32 %v901, 0.0
      %v1184 = vmax.f32 %v904, 0.0
      %v1185 = vmax.f32 %v906, 0.0
      %v1186 = vmax.f32 %v909, 0.0
      %v1187 = vmax.f32 %v911, 0.0
      %v1188 = vmax.f32 %v914, 0.0
      %v1189 = vmax.f32 %v916, 0.0
      %v1190 = vmax.f32 %v919, 0.0
      %v1191 = vmax.f32 %v921, 0.0
      %v1192 = vmax.f32 %v924, 0.0
      %v1193 = vmax.f32 %v926, 0.0
      %v1194 = vmax.f32 %v929, 0.0
      %v1195 = vmax.f32 %v931, 0.0
      %v1196 = vmax.f32 %v934, 0.0
      %v1197 = vmax.f32 %v936, 0.0
      %v1198 = vmax.f32 %v939, 0.0
      %v1199 = vmax.f32 %v941, 0.0
      %v1200 = vmax.f32 %v944, 0.0
      %v1201 = vmax.f32 %v946, 0.0
      %v1202 = vmax.f32 %v949, 0.0
      %v1203 = vmax.f32 %v951, 0.0
      %v1204 = vmax.f32 %v954, 0.0
      %v1205 = vmax.f32 %v956, 0.0
      %v1206 = vmax.f32 %v959, 0.0
      %v1207 = vmax.f32 %v961, 0.0
      %v1208 = vmax.f32 %v964, 0.0
      %v1209 = vmax.f32 %v966, 0.0
      %v1210 = vmax.f32 %v969, 0.0
      %v1211 = vmax.f32 %v971, 0.0
      %v1212 = vmax.f32 %v974, 0.0
      %v1213 = vmax.f32 %v976, 0.0
      %v1214 = vmax.f32 %v979, 0.0
      %v1215 = vmax.f32 %v981, 0.0
      %v1216 = vmax.f32 %v984, 0.0
      %v1217 = vmax.f32 %v986, 0.0
      %v1218 = vmax.f32 %v989, 0.0
      %v1219 = vmax.f32 %v991, 0.0
      %v1220 = vmax.f32 %v994, 0.0
      %v1221 = vmax.f32 %v996, 0.0
      %v1222 = vmax.f32 %v999, 0.0
      %v1223 = vmax.f32 %v1001, 0.0
      %v1224 = vmax.f32 %v1004, 0.0
      %v1225 = vmax.f32 %v1006, 0.0
      %v1226 = vmax.f32 %v1009, 0.0
      %v1227 = vmax.f32 %v1011, 0.0
      %v1228 = vmax.f32 %v1014, 0.0
      %v1229 = vmax.f32 %v1016, 0.0
      %v1230 = vmax.f32 %v1019, 0.0
      %v1231 = vmax.f32 %v1021, 0.0
      %v1232 = vmax.f32 %v1024, 0.0
      %v1233 = vmax.f32 %v1026, 0.0
      %v1234 = vmax.f32 %v1029, 0.0
      %v1235 = vmax.f32 %v1031, 0.0
      %v1236 = vmax.f32 %v1034, 0.0
      %v1237 = vmax.f32 %v1036, 0.0
      %v1238 = vmax.f32 %v1039, 0.0
      %v1239 = vmax.f32 %v1041, 0.0
      %v1240 = vmax.f32 %v1044, 0.0
      %v1241 = vmax.f32 %v1046, 0.0
      %v1242 = vmax.f32 %v1049, 0.0
      %v1243 = vmax.f32 %v1051, 0.0
      %v1244 = vmax.f32 %v1054, 0.0
      %v1245 = vmax.f32 %v1056, 0.0
      %v1246 = vmax.f32 %v1059, 0.0
      %v1247 = vmax.f32 %v1061, 0.0
      %v1248 = vmax.f32 %v1064, 0.0
      %v1249 = vmax.f32 %v1066, 0.0
      %v1250 = vmax.f32 %v1069, 0.0
      %v1251 = vmax.f32 %v1071, 0.0
      %v1252 = vmax.f32 %v1074, 0.0
      %v1253 = vmax.f32 %v1076, 0.0
      %v1254 = vmax.f32 %v1079, 0.0
      %v1255 = vmax.f32 %v1081, 0.0
      %v1256 = vmax.f32 %v1084, 0.0
      %v1257 = vmax.f32 %v1086, 0.0
      %v1258 = vmax.f32 %v1089, 0.0
      %v1259 = vmax.f32 %v1091, 0.0
      %v1260 = vmax.f32 %v1094, 0.0
      %v1261 = vmax.f32 %v1096, 0.0
      %v1262 = vmax.f32 %v1099, 0.0
      %v1263 = vmax.f32 %v1101, 0.0
      %v1264 = vmax.f32 %v1104, 0.0
      %v1265 = vmax.f32 %v1106, 0.0
      %v1266 = vmax.f32 %v1109, 0.0
      %v1267 = vmax.f32 %v1111, 0.0
      %v1268 = vmax.f32 %v1114, 0.0
      %v1269 = vmax.f32 %v1116, 0.0
      %v1270 = vmax.f32 %v1119, 0.0
      %v1271 = vmax.f32 %v1121, 0.0
      %v1272 = vmax.f32 %v1124, 0.0
      %v1273 = vmax.f32 %v1126, 0.0
      %v1274 = vmax.f32 %v1129, 0.0
      %v1275 = vmax.f32 %v1131, 0.0
      %v1276 = vmax.f32 %v1134, 0.0
      %v1277 = vmax.f32 %v1136, 0.0
      %v1278 = vmax.f32 %v1139, 0.0
      %v1279 = vmax.f32 %v1141, 0.0
      %v1280 = vmax.f32 %v1144, 0.0
      %v1281 = vmax.f32 %v1146, 0.0
      %v1282 = vmax.f32 %v1149, 0.0
      %v1283 = vmax.f32 %v1151, 0.0
      %v1284 = vmax.f32 %v1154, 0.0
      %v1285 = vmax.f32 %v1156, 0.0
      %v1286 = vld [vmem:[%s2] sm:$0x1]
      %v1287 = vperm.slane %v1286, 0
      %v1288 = vmul.f32 %v1158, %v1287
      %v1289 = vmul.f32 %v1159, %v1287
      %v1290 = vmul.f32 %v1160, %v1287
      %v1291 = vmul.f32 %v1161, %v1287
      %v1292 = vmul.f32 %v1162, %v1287
      %v1293 = vmul.f32 %v1163, %v1287
      %v1294 = vmul.f32 %v1164, %v1287
      %v1295 = vmul.f32 %v1165, %v1287
      %v1296 = vmul.f32 %v1166, %v1287
      %v1297 = vmul.f32 %v1167, %v1287
      %v1298 = vmul.f32 %v1168, %v1287
      %v1299 = vmul.f32 %v1169, %v1287
      %v1300 = vmul.f32 %v1170, %v1287
      %v1301 = vmul.f32 %v1171, %v1287
      %v1302 = vmul.f32 %v1172, %v1287
      %v1303 = vmul.f32 %v1173, %v1287
      %v1304 = vmul.f32 %v1174, %v1287
      %v1305 = vmul.f32 %v1175, %v1287
      %v1306 = vmul.f32 %v1176, %v1287
      %v1307 = vmul.f32 %v1177, %v1287
      %v1308 = vmul.f32 %v1178, %v1287
      %v1309 = vmul.f32 %v1179, %v1287
      %v1310 = vmul.f32 %v1180, %v1287
      %v1311 = vmul.f32 %v1181, %v1287
      %v1312 = vmul.f32 %v1182, %v1287
      %v1313 = vmul.f32 %v1183, %v1287
      %v1314 = vmul.f32 %v1184, %v1287
      %v1315 = vmul.f32 %v1185, %v1287
      %v1316 = vmul.f32 %v1186, %v1287
      %v1317 = vmul.f32 %v1187, %v1287
      %v1318 = vmul.f32 %v1188, %v1287
      %v1319 = vmul.f32 %v1189, %v1287
      %v1320 = vmul.f32 %v1190, %v1287
      %v1321 = vmul.f32 %v1191, %v1287
      %v1322 = vmul.f32 %v1192, %v1287
      %v1323 = vmul.f32 %v1193, %v1287
      %v1324 = vmul.f32 %v1194, %v1287
      %v1325 = vmul.f32 %v1195, %v1287
      %v1326 = vmul.f32 %v1196, %v1287
      %v1327 = vmul.f32 %v1197, %v1287
      %v1328 = vmul.f32 %v1198, %v1287
      %v1329 = vmul.f32 %v1199, %v1287
      %v1330 = vmul.f32 %v1200, %v1287
      %v1331 = vmul.f32 %v1201, %v1287
      %v1332 = vmul.f32 %v1202, %v1287
      %v1333 = vmul.f32 %v1203, %v1287
      %v1334 = vmul.f32 %v1204, %v1287
      %v1335 = vmul.f32 %v1205, %v1287
      %v1336 = vmul.f32 %v1206, %v1287
      %v1337 = vmul.f32 %v1207, %v1287
      %v1338 = vmul.f32 %v1208, %v1287
      %v1339 = vmul.f32 %v1209, %v1287
      %v1340 = vmul.f32 %v1210, %v1287
      %v1341 = vmul.f32 %v1211, %v1287
      %v1342 = vmul.f32 %v1212, %v1287
      %v1343 = vmul.f32 %v1213, %v1287
      %v1344 = vmul.f32 %v1214, %v1287
      %v1345 = vmul.f32 %v1215, %v1287
      %v1346 = vmul.f32 %v1216, %v1287
      %v1347 = vmul.f32 %v1217, %v1287
      %v1348 = vmul.f32 %v1218, %v1287
      %v1349 = vmul.f32 %v1219, %v1287
      %v1350 = vmul.f32 %v1220, %v1287
      %v1351 = vmul.f32 %v1221, %v1287
      %v1352 = vmul.f32 %v1222, %v1287
      %v1353 = vmul.f32 %v1223, %v1287
      %v1354 = vmul.f32 %v1224, %v1287
      %v1355 = vmul.f32 %v1225, %v1287
      %v1356 = vmul.f32 %v1226, %v1287
      %v1357 = vmul.f32 %v1227, %v1287
      %v1358 = vmul.f32 %v1228, %v1287
      %v1359 = vmul.f32 %v1229, %v1287
      %v1360 = vmul.f32 %v1230, %v1287
      %v1361 = vmul.f32 %v1231, %v1287
      %v1362 = vmul.f32 %v1232, %v1287
      %v1363 = vmul.f32 %v1233, %v1287
      %v1364 = vmul.f32 %v1234, %v1287
      %v1365 = vmul.f32 %v1235, %v1287
      %v1366 = vmul.f32 %v1236, %v1287
      %v1367 = vmul.f32 %v1237, %v1287
      %v1368 = vmul.f32 %v1238, %v1287
      %v1369 = vmul.f32 %v1239, %v1287
      %v1370 = vmul.f32 %v1240, %v1287
      %v1371 = vmul.f32 %v1241, %v1287
      %v1372 = vmul.f32 %v1242, %v1287
      %v1373 = vmul.f32 %v1243, %v1287
      %v1374 = vmul.f32 %v1244, %v1287
      %v1375 = vmul.f32 %v1245, %v1287
      %v1376 = vmul.f32 %v1246, %v1287
      %v1377 = vmul.f32 %v1247, %v1287
      %v1378 = vmul.f32 %v1248, %v1287
      %v1379 = vmul.f32 %v1249, %v1287
      %v1380 = vmul.f32 %v1250, %v1287
      %v1381 = vmul.f32 %v1251, %v1287
      %v1382 = vmul.f32 %v1252, %v1287
      %v1383 = vmul.f32 %v1253, %v1287
      %v1384 = vmul.f32 %v1254, %v1287
      %v1385 = vmul.f32 %v1255, %v1287
      %v1386 = vmul.f32 %v1256, %v1287
      %v1387 = vmul.f32 %v1257, %v1287
      %v1388 = vmul.f32 %v1258, %v1287
      %v1389 = vmul.f32 %v1259, %v1287
      %v1390 = vmul.f32 %v1260, %v1287
      %v1391 = vmul.f32 %v1261, %v1287
      %v1392 = vmul.f32 %v1262, %v1287
      %v1393 = vmul.f32 %v1263, %v1287
      %v1394 = vmul.f32 %v1264, %v1287
      %v1395 = vmul.f32 %v1265, %v1287
      %v1396 = vmul.f32 %v1266, %v1287
      %v1397 = vmul.f32 %v1267, %v1287
      %v1398 = vmul.f32 %v1268, %v1287
      %v1399 = vmul.f32 %v1269, %v1287
      %v1400 = vmul.f32 %v1270, %v1287
      %v1401 = vmul.f32 %v1271, %v1287
      %v1402 = vmul.f32 %v1272, %v1287
      %v1403 = vmul.f32 %v1273, %v1287
      %v1404 = vmul.f32 %v1274, %v1287
      %v1405 = vmul.f32 %v1275, %v1287
      %v1406 = vmul.f32 %v1276, %v1287
      %v1407 = vmul.f32 %v1277, %v1287
      %v1408 = vmul.f32 %v1278, %v1287
      %v1409 = vmul.f32 %v1279, %v1287
      %v1410 = vmul.f32 %v1280, %v1287
      %v1411 = vmul.f32 %v1281, %v1287
      %v1412 = vmul.f32 %v1282, %v1287
      %v1413 = vmul.f32 %v1283, %v1287
      %v1414 = vmul.f32 %v1284, %v1287
      %v1415 = vmul.f32 %v1285, %v1287
      %v1416 = vld [vmem:[%s2 + $0x1] sm:$0x1]
      %v1417 = vperm.slane %v1416, 0
      %v1418 = vadd.f32 %v1288, %v1417
      %v1419 = vadd.f32 %v1289, %v1417
      %v1420 = vadd.f32 %v1290, %v1417
      %v1421 = vadd.f32 %v1291, %v1417
      %v1422 = vadd.f32 %v1292, %v1417
      %v1423 = vadd.f32 %v1293, %v1417
      %v1424 = vadd.f32 %v1294, %v1417
      %v1425 = vadd.f32 %v1295, %v1417
      %v1426 = vadd.f32 %v1296, %v1417
      %v1427 = vadd.f32 %v1297, %v1417
      %v1428 = vadd.f32 %v1298, %v1417
      %v1429 = vadd.f32 %v1299, %v1417
      %v1430 = vadd.f32 %v1300, %v1417
      %v1431 = vadd.f32 %v1301, %v1417
      %v1432 = vadd.f32 %v1302, %v1417
      %v1433 = vadd.f32 %v1303, %v1417
      %v1434 = vadd.f32 %v1304, %v1417
      %v1435 = vadd.f32 %v1305, %v1417
      %v1436 = vadd.f32 %v1306, %v1417
      %v1437 = vadd.f32 %v1307, %v1417
      %v1438 = vadd.f32 %v1308, %v1417
      %v1439 = vadd.f32 %v1309, %v1417
      %v1440 = vadd.f32 %v1310, %v1417
      %v1441 = vadd.f32 %v1311, %v1417
      %v1442 = vadd.f32 %v1312, %v1417
      %v1443 = vadd.f32 %v1313, %v1417
      %v1444 = vadd.f32 %v1314, %v1417
      %v1445 = vadd.f32 %v1315, %v1417
      %v1446 = vadd.f32 %v1316, %v1417
      %v1447 = vadd.f32 %v1317, %v1417
      %v1448 = vadd.f32 %v1318, %v1417
      %v1449 = vadd.f32 %v1319, %v1417
      %v1450 = vadd.f32 %v1320, %v1417
      %v1451 = vadd.f32 %v1321, %v1417
      %v1452 = vadd.f32 %v1322, %v1417
      %v1453 = vadd.f32 %v1323, %v1417
      %v1454 = vadd.f32 %v1324, %v1417
      %v1455 = vadd.f32 %v1325, %v1417
      %v1456 = vadd.f32 %v1326, %v1417
      %v1457 = vadd.f32 %v1327, %v1417
      %v1458 = vadd.f32 %v1328, %v1417
      %v1459 = vadd.f32 %v1329, %v1417
      %v1460 = vadd.f32 %v1330, %v1417
      %v1461 = vadd.f32 %v1331, %v1417
      %v1462 = vadd.f32 %v1332, %v1417
      %v1463 = vadd.f32 %v1333, %v1417
      %v1464 = vadd.f32 %v1334, %v1417
      %v1465 = vadd.f32 %v1335, %v1417
      %v1466 = vadd.f32 %v1336, %v1417
      %v1467 = vadd.f32 %v1337, %v1417
      %v1468 = vadd.f32 %v1338, %v1417
      %v1469 = vadd.f32 %v1339, %v1417
      %v1470 = vadd.f32 %v1340, %v1417
      %v1471 = vadd.f32 %v1341, %v1417
      %v1472 = vadd.f32 %v1342, %v1417
      %v1473 = vadd.f32 %v1343, %v1417
      %v1474 = vadd.f32 %v1344, %v1417
      %v1475 = vadd.f32 %v1345, %v1417
      %v1476 = vadd.f32 %v1346, %v1417
      %v1477 = vadd.f32 %v1347, %v1417
      %v1478 = vadd.f32 %v1348, %v1417
      %v1479 = vadd.f32 %v1349, %v1417
      %v1480 = vadd.f32 %v1350, %v1417
      %v1481 = vadd.f32 %v1351, %v1417
      %v1482 = vadd.f32 %v1352, %v1417
      %v1483 = vadd.f32 %v1353, %v1417
      %v1484 = vadd.f32 %v1354, %v1417
      %v1485 = vadd.f32 %v1355, %v1417
      %v1486 = vadd.f32 %v1356, %v1417
      %v1487 = vadd.f32 %v1357, %v1417
      %v1488 = vadd.f32 %v1358, %v1417
      %v1489 = vadd.f32 %v1359, %v1417
      %v1490 = vadd.f32 %v1360, %v1417
      %v1491 = vadd.f32 %v1361, %v1417
      %v1492 = vadd.f32 %v1362, %v1417
      %v1493 = vadd.f32 %v1363, %v1417
      %v1494 = vadd.f32 %v1364, %v1417
      %v1495 = vadd.f32 %v1365, %v1417
      %v1496 = vadd.f32 %v1366, %v1417
      %v1497 = vadd.f32 %v1367, %v1417
      %v1498 = vadd.f32 %v1368, %v1417
      %v1499 = vadd.f32 %v1369, %v1417
      %v1500 = vadd.f32 %v1370, %v1417
      %v1501 = vadd.f32 %v1371, %v1417
      %v1502 = vadd.f32 %v1372, %v1417
      %v1503 = vadd.f32 %v1373, %v1417
      %v1504 = vadd.f32 %v1374, %v1417
      %v1505 = vadd.f32 %v1375, %v1417
      %v1506 = vadd.f32 %v1376, %v1417
      %v1507 = vadd.f32 %v1377, %v1417
      %v1508 = vadd.f32 %v1378, %v1417
      %v1509 = vadd.f32 %v1379, %v1417
      %v1510 = vadd.f32 %v1380, %v1417
      %v1511 = vadd.f32 %v1381, %v1417
      %v1512 = vadd.f32 %v1382, %v1417
      %v1513 = vadd.f32 %v1383, %v1417
      %v1514 = vadd.f32 %v1384, %v1417
      %v1515 = vadd.f32 %v1385, %v1417
      %v1516 = vadd.f32 %v1386, %v1417
      %v1517 = vadd.f32 %v1387, %v1417
      %v1518 = vadd.f32 %v1388, %v1417
      %v1519 = vadd.f32 %v1389, %v1417
      %v1520 = vadd.f32 %v1390, %v1417
      %v1521 = vadd.f32 %v1391, %v1417
      %v1522 = vadd.f32 %v1392, %v1417
      %v1523 = vadd.f32 %v1393, %v1417
      %v1524 = vadd.f32 %v1394, %v1417
      %v1525 = vadd.f32 %v1395, %v1417
      %v1526 = vadd.f32 %v1396, %v1417
      %v1527 = vadd.f32 %v1397, %v1417
      %v1528 = vadd.f32 %v1398, %v1417
      %v1529 = vadd.f32 %v1399, %v1417
      %v1530 = vadd.f32 %v1400, %v1417
      %v1531 = vadd.f32 %v1401, %v1417
      %v1532 = vadd.f32 %v1402, %v1417
      %v1533 = vadd.f32 %v1403, %v1417
      %v1534 = vadd.f32 %v1404, %v1417
      %v1535 = vadd.f32 %v1405, %v1417
      %v1536 = vadd.f32 %v1406, %v1417
      %v1537 = vadd.f32 %v1407, %v1417
      %v1538 = vadd.f32 %v1408, %v1417
      %v1539 = vadd.f32 %v1409, %v1417
      %v1540 = vadd.f32 %v1410, %v1417
      %v1541 = vadd.f32 %v1411, %v1417
      %v1542 = vadd.f32 %v1412, %v1417
      %v1543 = vadd.f32 %v1413, %v1417
      %v1544 = vadd.f32 %v1414, %v1417
      %v1545 = vadd.f32 %v1415, %v1417
      %v1546 = vpack.c.bf16 %v1418, %v1418
      %v1547 = vpack.c.bf16 %v1419, %v1419
      %v1548 = vpack.c.bf16 %v1420, %v1420
      %v1549 = vpack.c.bf16 %v1421, %v1421
      %v1550 = vpack.c.bf16 %v1422, %v1422
      %v1551 = vpack.c.bf16 %v1423, %v1423
      %v1552 = vpack.c.bf16 %v1424, %v1424
      %v1553 = vpack.c.bf16 %v1425, %v1425
      %v1554 = vpack.c.bf16 %v1426, %v1426
      %v1555 = vpack.c.bf16 %v1427, %v1427
      %v1556 = vpack.c.bf16 %v1428, %v1428
      %v1557 = vpack.c.bf16 %v1429, %v1429
      %v1558 = vpack.c.bf16 %v1430, %v1430
      %v1559 = vpack.c.bf16 %v1431, %v1431
      %v1560 = vpack.c.bf16 %v1432, %v1432
      %v1561 = vpack.c.bf16 %v1433, %v1433
      %v1562 = vpack.c.bf16 %v1434, %v1434
      %v1563 = vpack.c.bf16 %v1435, %v1435
      %v1564 = vpack.c.bf16 %v1436, %v1436
      %v1565 = vpack.c.bf16 %v1437, %v1437
      %v1566 = vpack.c.bf16 %v1438, %v1438
      %v1567 = vpack.c.bf16 %v1439, %v1439
      %v1568 = vpack.c.bf16 %v1440, %v1440
      %v1569 = vpack.c.bf16 %v1441, %v1441
      %v1570 = vpack.c.bf16 %v1442, %v1442
      %v1571 = vpack.c.bf16 %v1443, %v1443
      %v1572 = vpack.c.bf16 %v1444, %v1444
      %v1573 = vpack.c.bf16 %v1445, %v1445
      %v1574 = vpack.c.bf16 %v1446, %v1446
      %v1575 = vpack.c.bf16 %v1447, %v1447
      %v1576 = vpack.c.bf16 %v1448, %v1448
      %v1577 = vpack.c.bf16 %v1449, %v1449
      %v1578 = vpack.c.bf16 %v1450, %v1450
      %v1579 = vpack.c.bf16 %v1451, %v1451
      %v1580 = vpack.c.bf16 %v1452, %v1452
      %v1581 = vpack.c.bf16 %v1453, %v1453
      %v1582 = vpack.c.bf16 %v1454, %v1454
      %v1583 = vpack.c.bf16 %v1455, %v1455
      %v1584 = vpack.c.bf16 %v1456, %v1456
      %v1585 = vpack.c.bf16 %v1457, %v1457
      %v1586 = vpack.c.bf16 %v1458, %v1458
      %v1587 = vpack.c.bf16 %v1459, %v1459
      %v1588 = vpack.c.bf16 %v1460, %v1460
      %v1589 = vpack.c.bf16 %v1461, %v1461
      %v1590 = vpack.c.bf16 %v1462, %v1462
      %v1591 = vpack.c.bf16 %v1463, %v1463
      %v1592 = vpack.c.bf16 %v1464, %v1464
      %v1593 = vpack.c.bf16 %v1465, %v1465
      %v1594 = vpack.c.bf16 %v1466, %v1466
      %v1595 = vpack.c.bf16 %v1467, %v1467
      %v1596 = vpack.c.bf16 %v1468, %v1468
      %v1597 = vpack.c.bf16 %v1469, %v1469
      %v1598 = vpack.c.bf16 %v1470, %v1470
      %v1599 = vpack.c.bf16 %v1471, %v1471
      %v1600 = vpack.c.bf16 %v1472, %v1472
      %v1601 = vpack.c.bf16 %v1473, %v1473
      %v1602 = vpack.c.bf16 %v1474, %v1474
      %v1603 = vpack.c.bf16 %v1475, %v1475
      %v1604 = vpack.c.bf16 %v1476, %v1476
      %v1605 = vpack.c.bf16 %v1477, %v1477
      %v1606 = vpack.c.bf16 %v1478, %v1478
      %v1607 = vpack.c.bf16 %v1479, %v1479
      %v1608 = vpack.c.bf16 %v1480, %v1480
      %v1609 = vpack.c.bf16 %v1481, %v1481
      %v1610 = vpack.c.bf16 %v1482, %v1482
      %v1611 = vpack.c.bf16 %v1483, %v1483
      %v1612 = vpack.c.bf16 %v1484, %v1484
      %v1613 = vpack.c.bf16 %v1485, %v1485
      %v1614 = vpack.c.bf16 %v1486, %v1486
      %v1615 = vpack.c.bf16 %v1487, %v1487
      %v1616 = vpack.c.bf16 %v1488, %v1488
      %v1617 = vpack.c.bf16 %v1489, %v1489
      %v1618 = vpack.c.bf16 %v1490, %v1490
      %v1619 = vpack.c.bf16 %v1491, %v1491
      %v1620 = vpack.c.bf16 %v1492, %v1492
      %v1621 = vpack.c.bf16 %v1493, %v1493
      %v1622 = vpack.c.bf16 %v1494, %v1494
      %v1623 = vpack.c.bf16 %v1495, %v1495
      %v1624 = vpack.c.bf16 %v1496, %v1496
      %v1625 = vpack.c.bf16 %v1497, %v1497
      %v1626 = vpack.c.bf16 %v1498, %v1498
      %v1627 = vpack.c.bf16 %v1499, %v1499
      %v1628 = vpack.c.bf16 %v1500, %v1500
      %v1629 = vpack.c.bf16 %v1501, %v1501
      %v1630 = vpack.c.bf16 %v1502, %v1502
      %v1631 = vpack.c.bf16 %v1503, %v1503
      %v1632 = vpack.c.bf16 %v1504, %v1504
      %v1633 = vpack.c.bf16 %v1505, %v1505
      %v1634 = vpack.c.bf16 %v1506, %v1506
      %v1635 = vpack.c.bf16 %v1507, %v1507
      %v1636 = vpack.c.bf16 %v1508, %v1508
      %v1637 = vpack.c.bf16 %v1509, %v1509
      %v1638 = vpack.c.bf16 %v1510, %v1510
      %v1639 = vpack.c.bf16 %v1511, %v1511
      %v1640 = vpack.c.bf16 %v1512, %v1512
      %v1641 = vpack.c.bf16 %v1513, %v1513
      %v1642 = vpack.c.bf16 %v1514, %v1514
      %v1643 = vpack.c.bf16 %v1515, %v1515
      %v1644 = vpack.c.bf16 %v1516, %v1516
      %v1645 = vpack.c.bf16 %v1517, %v1517
      %v1646 = vpack.c.bf16 %v1518, %v1518
      %v1647 = vpack.c.bf16 %v1519, %v1519
      %v1648 = vpack.c.bf16 %v1520, %v1520
      %v1649 = vpack.c.bf16 %v1521, %v1521
      %v1650 = vpack.c.bf16 %v1522, %v1522
      %v1651 = vpack.c.bf16 %v1523, %v1523
      %v1652 = vpack.c.bf16 %v1524, %v1524
      %v1653 = vpack.c.bf16 %v1525, %v1525
      %v1654 = vpack.c.bf16 %v1526, %v1526
      %v1655 = vpack.c.bf16 %v1527, %v1527
      %v1656 = vpack.c.bf16 %v1528, %v1528
      %v1657 = vpack.c.bf16 %v1529, %v1529
      %v1658 = vpack.c.bf16 %v1530, %v1530
      %v1659 = vpack.c.bf16 %v1531, %v1531
      %v1660 = vpack.c.bf16 %v1532, %v1532
      %v1661 = vpack.c.bf16 %v1533, %v1533
      %v1662 = vpack.c.bf16 %v1534, %v1534
      %v1663 = vpack.c.bf16 %v1535, %v1535
      %v1664 = vpack.c.bf16 %v1536, %v1536
      %v1665 = vpack.c.bf16 %v1537, %v1537
      %v1666 = vpack.c.bf16 %v1538, %v1538
      %v1667 = vpack.c.bf16 %v1539, %v1539
      %v1668 = vpack.c.bf16 %v1540, %v1540
      %v1669 = vpack.c.bf16 %v1541, %v1541
      %v1670 = vpack.c.bf16 %v1542, %v1542
      %v1671 = vpack.c.bf16 %v1543, %v1543
      %v1672 = vpack.c.bf16 %v1544, %v1544
      %v1673 = vpack.c.bf16 %v1545, %v1545
      %1674 = vst [vmem:[%s170] sm:$0xf] %v1546
      %1675 = vst [vmem:[%s170 + $0x4] sm:$0xf] %v1547
      %1676 = vst [vmem:[%s170 + $0x8] sm:$0xf] %v1548
      %1677 = vst [vmem:[%s170 + $0xc] sm:$0xf] %v1549
      %1678 = vst [vmem:[%s170 + $0x10] sm:$0xf] %v1550
      %1679 = vst [vmem:[%s170 + $0x14] sm:$0xf] %v1551
      %1680 = vst [vmem:[%s170 + $0x18] sm:$0xf] %v1552
      %1681 = vst [vmem:[%s170 + $0x1c] sm:$0xf] %v1553
      %1682 = vst [vmem:[%s170 + $0x20] sm:$0xf] %v1554
      %1683 = vst [vmem:[%s170 + $0x24] sm:$0xf] %v1555
      %1684 = vst [vmem:[%s170 + $0x28] sm:$0xf] %v1556
      %1685 = vst [vmem:[%s170 + $0x2c] sm:$0xf] %v1557
      %1686 = vst [vmem:[%s170 + $0x30] sm:$0xf] %v1558
      %1687 = vst [vmem:[%s170 + $0x34] sm:$0xf] %v1559
      %1688 = vst [vmem:[%s170 + $0x38] sm:$0xf] %v1560
      %1689 = vst [vmem:[%s170 + $0x3c] sm:$0xf] %v1561
      %1690 = vst [vmem:[%s170 + $0x40] sm:$0xf] %v1562
      %1691 = vst [vmem:[%s170 + $0x44] sm:$0xf] %v1563
      %1692 = vst [vmem:[%s170 + $0x48] sm:$0xf] %v1564
      %1693 = vst [vmem:[%s170 + $0x4c] sm:$0xf] %v1565
      %1694 = vst [vmem:[%s170 + $0x50] sm:$0xf] %v1566
      %1695 = vst [vmem:[%s170 + $0x54] sm:$0xf] %v1567
      %1696 = vst [vmem:[%s170 + $0x58] sm:$0xf] %v1568
      %1697 = vst [vmem:[%s170 + $0x5c] sm:$0xf] %v1569
      %1698 = vst [vmem:[%s170 + $0x60] sm:$0xf] %v1570
      %1699 = vst [vmem:[%s170 + $0x64] sm:$0xf] %v1571
      %1700 = vst [vmem:[%s170 + $0x68] sm:$0xf] %v1572
      %1701 = vst [vmem:[%s170 + $0x6c] sm:$0xf] %v1573
      %1702 = vst [vmem:[%s170 + $0x70] sm:$0xf] %v1574
      %1703 = vst [vmem:[%s170 + $0x74] sm:$0xf] %v1575
      %1704 = vst [vmem:[%s170 + $0x78] sm:$0xf] %v1576
      %1705 = vst [vmem:[%s170 + $0x7c] sm:$0xf] %v1577
      %1706 = vst [vmem:[%s170 + $0x80] sm:$0xf] %v1578
      %1707 = vst [vmem:[%s170 + $0x84] sm:$0xf] %v1579
      %1708 = vst [vmem:[%s170 + $0x88] sm:$0xf] %v1580
      %1709 = vst [vmem:[%s170 + $0x8c] sm:$0xf] %v1581
      %1710 = vst [vmem:[%s170 + $0x90] sm:$0xf] %v1582
      %1711 = vst [vmem:[%s170 + $0x94] sm:$0xf] %v1583
      %1712 = vst [vmem:[%s170 + $0x98] sm:$0xf] %v1584
      %1713 = vst [vmem:[%s170 + $0x9c] sm:$0xf] %v1585
      %1714 = vst [vmem:[%s170 + $0xa0] sm:$0xf] %v1586
      %1715 = vst [vmem:[%s170 + $0xa4] sm:$0xf] %v1587
      %1716 = vst [vmem:[%s170 + $0xa8] sm:$0xf] %v1588
      %1717 = vst [vmem:[%s170 + $0xac] sm:$0xf] %v1589
      %1718 = vst [vmem:[%s170 + $0xb0] sm:$0xf] %v1590
      %1719 = vst [vmem:[%s170 + $0xb4] sm:$0xf] %v1591
      %1720 = vst [vmem:[%s170 + $0xb8] sm:$0xf] %v1592
      %1721 = vst [vmem:[%s170 + $0xbc] sm:$0xf] %v1593
      %1722 = vst [vmem:[%s170 + $0xc0] sm:$0xf] %v1594
      %1723 = vst [vmem:[%s170 + $0xc4] sm:$0xf] %v1595
      %1724 = vst [vmem:[%s170 + $0xc8] sm:$0xf] %v1596
      %1725 = vst [vmem:[%s170 + $0xcc] sm:$0xf] %v1597
      %1726 = vst [vmem:[%s170 + $0xd0] sm:$0xf] %v1598
      %1727 = vst [vmem:[%s170 + $0xd4] sm:$0xf] %v1599
      %1728 = vst [vmem:[%s170 + $0xd8] sm:$0xf] %v1600
      %1729 = vst [vmem:[%s170 + $0xdc] sm:$0xf] %v1601
      %1730 = vst [vmem:[%s170 + $0xe0] sm:$0xf] %v1602
      %1731 = vst [vmem:[%s170 + $0xe4] sm:$0xf] %v1603
      %1732 = vst [vmem:[%s170 + $0xe8] sm:$0xf] %v1604
      %1733 = vst [vmem:[%s170 + $0xec] sm:$0xf] %v1605
      %1734 = vst [vmem:[%s170 + $0xf0] sm:$0xf] %v1606
      %1735 = vst [vmem:[%s170 + $0xf4] sm:$0xf] %v1607
      %1736 = vst [vmem:[%s170 + $0xf8] sm:$0xf] %v1608
      %1737 = vst [vmem:[%s170 + $0xfc] sm:$0xf] %v1609
      %1738 = vst [vmem:[%s170 + $0x100] sm:$0xf] %v1610
      %1739 = vst [vmem:[%s170 + $0x104] sm:$0xf] %v1611
      %1740 = vst [vmem:[%s170 + $0x108] sm:$0xf] %v1612
      %1741 = vst [vmem:[%s170 + $0x10c] sm:$0xf] %v1613
      %1742 = vst [vmem:[%s170 + $0x110] sm:$0xf] %v1614
      %1743 = vst [vmem:[%s170 + $0x114] sm:$0xf] %v1615
      %1744 = vst [vmem:[%s170 + $0x118] sm:$0xf] %v1616
      %1745 = vst [vmem:[%s170 + $0x11c] sm:$0xf] %v1617
      %1746 = vst [vmem:[%s170 + $0x120] sm:$0xf] %v1618
      %1747 = vst [vmem:[%s170 + $0x124] sm:$0xf] %v1619
      %1748 = vst [vmem:[%s170 + $0x128] sm:$0xf] %v1620
      %1749 = vst [vmem:[%s170 + $0x12c] sm:$0xf] %v1621
      %1750 = vst [vmem:[%s170 + $0x130] sm:$0xf] %v1622
      %1751 = vst [vmem:[%s170 + $0x134] sm:$0xf] %v1623
      %1752 = vst [vmem:[%s170 + $0x138] sm:$0xf] %v1624
      %1753 = vst [vmem:[%s170 + $0x13c] sm:$0xf] %v1625
      %1754 = vst [vmem:[%s170 + $0x140] sm:$0xf] %v1626
      %1755 = vst [vmem:[%s170 + $0x144] sm:$0xf] %v1627
      %1756 = vst [vmem:[%s170 + $0x148] sm:$0xf] %v1628
      %1757 = vst [vmem:[%s170 + $0x14c] sm:$0xf] %v1629
      %1758 = vst [vmem:[%s170 + $0x150] sm:$0xf] %v1630
      %1759 = vst [vmem:[%s170 + $0x154] sm:$0xf] %v1631
      %1760 = vst [vmem:[%s170 + $0x158] sm:$0xf] %v1632
      %1761 = vst [vmem:[%s170 + $0x15c] sm:$0xf] %v1633
      %1762 = vst [vmem:[%s170 + $0x160] sm:$0xf] %v1634
      %1763 = vst [vmem:[%s170 + $0x164] sm:$0xf] %v1635
      %1764 = vst [vmem:[%s170 + $0x168] sm:$0xf] %v1636
      %1765 = vst [vmem:[%s170 + $0x16c] sm:$0xf] %v1637
      %1766 = vst [vmem:[%s170 + $0x170] sm:$0xf] %v1638
      %1767 = vst [vmem:[%s170 + $0x174] sm:$0xf] %v1639
      %1768 = vst [vmem:[%s170 + $0x178] sm:$0xf] %v1640
      %1769 = vst [vmem:[%s170 + $0x17c] sm:$0xf] %v1641
      %1770 = vst [vmem:[%s170 + $0x180] sm:$0xf] %v1642
      %1771 = vst [vmem:[%s170 + $0x184] sm:$0xf] %v1643
      %1772 = vst [vmem:[%s170 + $0x188] sm:$0xf] %v1644
      %1773 = vst [vmem:[%s170 + $0x18c] sm:$0xf] %v1645
      %1774 = vst [vmem:[%s170 + $0x190] sm:$0xf] %v1646
      %1775 = vst [vmem:[%s170 + $0x194] sm:$0xf] %v1647
      %1776 = vst [vmem:[%s170 + $0x198] sm:$0xf] %v1648
      %1777 = vst [vmem:[%s170 + $0x19c] sm:$0xf] %v1649
      %1778 = vst [vmem:[%s170 + $0x1a0] sm:$0xf] %v1650
      %1779 = vst [vmem:[%s170 + $0x1a4] sm:$0xf] %v1651
      %1780 = vst [vmem:[%s170 + $0x1a8] sm:$0xf] %v1652
      %1781 = vst [vmem:[%s170 + $0x1ac] sm:$0xf] %v1653
      %1782 = vst [vmem:[%s170 + $0x1b0] sm:$0xf] %v1654
      %1783 = vst [vmem:[%s170 + $0x1b4] sm:$0xf] %v1655
      %1784 = vst [vmem:[%s170 + $0x1b8] sm:$0xf] %v1656
      %1785 = vst [vmem:[%s170 + $0x1bc] sm:$0xf] %v1657
      %1786 = vst [vmem:[%s170 + $0x1c0] sm:$0xf] %v1658
      %1787 = vst [vmem:[%s170 + $0x1c4] sm:$0xf] %v1659
      %1788 = vst [vmem:[%s170 + $0x1c8] sm:$0xf] %v1660
      %1789 = vst [vmem:[%s170 + $0x1cc] sm:$0xf] %v1661
      %1790 = vst [vmem:[%s170 + $0x1d0] sm:$0xf] %v1662
      %1791 = vst [vmem:[%s170 + $0x1d4] sm:$0xf] %v1663
      %1792 = vst [vmem:[%s170 + $0x1d8] sm:$0xf] %v1664
      %1793 = vst [vmem:[%s170 + $0x1dc] sm:$0xf] %v1665
      %1794 = vst [vmem:[%s170 + $0x1e0] sm:$0xf] %v1666
      %1795 = vst [vmem:[%s170 + $0x1e4] sm:$0xf] %v1667
      %1796 = vst [vmem:[%s170 + $0x1e8] sm:$0xf] %v1668
      %1797 = vst [vmem:[%s170 + $0x1ec] sm:$0xf] %v1669
      %1798 = vst [vmem:[%s170 + $0x1f0] sm:$0xf] %v1670
      %1799 = vst [vmem:[%s170 + $0x1f4] sm:$0xf] %v1671
      %1800 = vst [vmem:[%s170 + $0x1f8] sm:$0xf] %v1672
      %1801 = vst [vmem:[%s170 + $0x1fc] sm:$0xf] %v1673
      %p1802 = scmp.lt.s32.totalorder %s14, 1
      %s1803 = scalar_select %p1802, %s14, 1
      %s1804 = smul.addr %s1803, 128
      %s1805 = smul.addr %s1804, 4
      %s1806 = scalar_lea.vmem %s3, %s1805
      // Predicated region
      $region33: #{_lambda_.9} parent=31 // pred_check
        %p1807 = pneg %p100
      $region34: #{_lambda_.9} parent=31 // pred_check_branch
        %1809 = sbr.rel (%p1807) target = $region36
      $region35: #{_lambda_.9} parent=31 // pred_region
        _
      $region36: #{_lambda_.9} parent=31 // pred_fallthru
        _
    $region32: #{_lambda_.9} parent=5 // pred_fallthru
      _
    %p1810 = scmp.le.s32.totalorder 2, %s9
    // Predicated region
    $region37: #{_lambda_.9} parent=5 // pred_check
      %p1811 = pneg %p1810
    $region38: #{_lambda_.9} parent=5 // pred_check_branch
      %1813 = sbr.rel (%p1811) target = $region40
    $region39: #{_lambda_.9} parent=5 // pred_region
      %s1814 = ssub.s32 %s9, 2
      // Predicated region
      $region41: #{_lambda_.9} parent=39 // pred_check
        %p1815 = pneg %p106
      $region42: #{_lambda_.9} parent=39 // pred_check_branch
        %1817 = sbr.rel (%p1815) target = $region44
      $region43: #{_lambda_.9} parent=39 // pred_region
        %p1818 = scmp.lt.s32.totalorder %s15, 1
        %s1819 = scalar_select %p1818, %s15, 1
        %s1820 = smul.addr %s1819, 128
        %s1821 = smul.addr %s1820, 4
        %s1822 = scalar_lea.vmem %s3, %s1821
      $region44: #{_lambda_.9} parent=39 // pred_fallthru
        _
    $region40: #{_lambda_.9} parent=5 // pred_fallthru
      _
  $region6: #{_lambda_.9} parent=0 // loop_footer
    %s13 = sadd.s32 1, %s9
  $region7: #{_lambda_.9} parent=0 // loop_footer_branch
    %8 = sbr.rel target = $region3
  $region8: #{_lambda_.9} parent=0 // loop_exit
    _

// kernel: _lambda_.10
$region0: #{_lambda_.10}
  #allocation0 [shape = 'u32[]', space=smem, size = 0x4, offset = 0x4, fixed_abs, tag = 'smem constant byte address 0x4 - core index']
  #allocation1 [shape = 'u32[72,128]{1,0:T(1,128)}', space=vmem, size = 0x9000, scoped, tag = 'internal scratch']
  %s0 = inlined_call_operand.vmem [shape: bf16[2,1024,152], index: 0, kind: input, shape index: {}]
  %s1 = inlined_call_operand.vmem [shape: bf16[152,128], index: 1, kind: input, shape index: {}]
  %s2 = inlined_call_operand.vmem [shape: f32[8,128], index: 2, kind: input, shape index: {}]
  %s3 = inlined_call_operand.vmem [shape: bf16[2,1024,128], index: 3, kind: output, shape index: {}]
  %s4 = sld [smem:[#allocation0]]
  $region45: #{_lambda_.10} parent=0
    _
  %s6 = ssub.s32 1, %s4
  %s7 = scalar_select 0, %s6, %s4
  loop: start=0, step=1, limit=4
  $region2: #{_lambda_.10} parent=0 // loop_pre_header
    _
  $region3: #{_lambda_.10} parent=0 // loop_header
    %s9 = sphi 0, %s13
    %p10 = scmp.ge.s32.totalorder %s9, 4
    %s19 = sphi 0, %s21
    %s22 = sphi 0, %s19
    %s23 = sphi 0, %s22
    %s39 = sphi 0, %s23
    %s43 = sphi 0, %s43
    %s45 = sphi 0, %s43
    %s46 = sphi 0, %s45
    %s60 = sphi 0, %s46
    %s64 = sphi 0, %s64
    %s66 = sphi 0, %s64
    %s67 = sphi 0, %s66
    %s81 = sphi 0, %s67
    %s87 = sphi 0, %s89
    %s90 = sphi 0, %s87
    %s91 = sphi 0, %s90
    %s107 = sphi 0, %s91
  $region4: #{_lambda_.10} parent=0 // loop_header_branch
    %12 = sbr.rel (%p10) target = $region8
  $region5: #{_lambda_.10} parent=0 // loop_body
    %s14 = ssub.s32 %s9, 1
    %s15 = ssub.s32 %s9, 2
    %s16 = sadd.s32 %s9, 1
    %s17 = ssub.s32 %s9, %s16
    %p18 = scmp.eq.s32.totalorder %s17, 0
    %s20 = sadd.s32 %s19, 1
    %s21 = scalar_select %p18, %s19, %s20
    %p24 = pneg %p18
    %p25 = scmp.eq.s32.totalorder %s9, 1
    %p26 = por %p24, %p25
    %p27 = scmp.ne.s32.totalorder %s19, %s22
    %p28 = scmp.eq.s32.totalorder %s9, 0
    %p29 = por %p27, %p28
    %p30 = scmp.ne.s32.totalorder %s19, %s22
    %p31 = scmp.eq.s32.totalorder %s14, 1
    %p32 = por %p30, %p31
    %p33 = scmp.ne.s32.totalorder %s22, %s23
    %p34 = scmp.eq.s32.totalorder %s14, 0
    %p35 = por %p33, %p34
    %p36 = scmp.ne.s32.totalorder %s22, %s23
    %p37 = scmp.eq.s32.totalorder %s15, 1
    %p38 = por %p36, %p37
    %p40 = scmp.ne.s32.totalorder %s23, %s39
    %p41 = scmp.eq.s32.totalorder %s15, 0
    %p42 = por %p40, %p41
    %s44 = sadd.s32 %s43, 1
    %p47 = scmp.eq.s32.totalorder %s9, 1
    %p48 = scmp.ne.s32.totalorder %s43, %s45
    %p49 = scmp.eq.s32.totalorder %s9, 0
    %p50 = por %p48, %p49
    %p51 = scmp.ne.s32.totalorder %s43, %s45
    %p52 = scmp.eq.s32.totalorder %s14, 1
    %p53 = por %p51, %p52
    %p54 = scmp.ne.s32.totalorder %s45, %s46
    %p55 = scmp.eq.s32.totalorder %s14, 0
    %p56 = por %p54, %p55
    %p57 = scmp.ne.s32.totalorder %s45, %s46
    %p58 = scmp.eq.s32.totalorder %s15, 1
    %p59 = por %p57, %p58
    %p61 = scmp.ne.s32.totalorder %s46, %s60
    %p62 = scmp.eq.s32.totalorder %s15, 0
    %p63 = por %p61, %p62
    %s65 = sadd.s32 %s64, 1
    %p68 = scmp.eq.s32.totalorder %s9, 1
    %p69 = scmp.ne.s32.totalorder %s64, %s66
    %p70 = scmp.eq.s32.totalorder %s9, 0
    %p71 = por %p69, %p70
    %p72 = scmp.ne.s32.totalorder %s64, %s66
    %p73 = scmp.eq.s32.totalorder %s14, 1
    %p74 = por %p72, %p73
    %p75 = scmp.ne.s32.totalorder %s66, %s67
    %p76 = scmp.eq.s32.totalorder %s14, 0
    %p77 = por %p75, %p76
    %p78 = scmp.ne.s32.totalorder %s66, %s67
    %p79 = scmp.eq.s32.totalorder %s15, 1
    %p80 = por %p78, %p79
    %p82 = scmp.ne.s32.totalorder %s67, %s81
    %p83 = scmp.eq.s32.totalorder %s15, 0
    %p84 = por %p82, %p83
    %s85 = ssub.s32 %s9, %s16
    %p86 = scmp.eq.s32.totalorder %s85, 0
    %s88 = sadd.s32 %s87, 1
    %s89 = scalar_select %p86, %s87, %s88
    %p92 = pneg %p86
    %p93 = scmp.eq.s32.totalorder %s9, 1
    %p94 = por %p92, %p93
    %p95 = scmp.ne.s32.totalorder %s87, %s90
    %p96 = scmp.eq.s32.totalorder %s9, 0
    %p97 = por %p95, %p96
    %p98 = scmp.ne.s32.totalorder %s87, %s90
    %p99 = scmp.eq.s32.totalorder %s14, 1
    %p100 = por %p98, %p99
    %p101 = scmp.ne.s32.totalorder %s90, %s91
    %p102 = scmp.eq.s32.totalorder %s14, 0
    %p103 = por %p101, %p102
    %p104 = scmp.ne.s32.totalorder %s90, %s91
    %p105 = scmp.eq.s32.totalorder %s15, 1
    %p106 = por %p104, %p105
    %p108 = scmp.ne.s32.totalorder %s91, %s107
    %p109 = scmp.eq.s32.totalorder %s15, 0
    %p110 = por %p108, %p109
    %p111 = scmp.le.s32.totalorder 1, %s9
    %p112 = scmp.lt.s32.totalorder %s9, 3
    %p113 = pnand %p111, %p112
    %p114 = pneg %p113
    // Predicated region
    $region9: #{_lambda_.10} parent=5 // pred_check
      _
    $region10: #{_lambda_.10} parent=5 // pred_check_branch
      %116 = sbr.rel (%p113) target = $region12
    $region11: #{_lambda_.10} parent=5 // pred_region
      %s117 = ssub.s32 %s9, 1
      // Predicated region
      $region13: #{_lambda_.10} parent=11 // pred_check
        %p118 = pneg %p56
      $region14: #{_lambda_.10} parent=11 // pred_check_branch
        %120 = sbr.rel (%p118) target = $region16
      $region15: #{_lambda_.10} parent=11 // pred_region
        _
      $region16: #{_lambda_.10} parent=11 // pred_fallthru
        _
      // Predicated region
      $region17: #{_lambda_.10} parent=11 // pred_check
        %p121 = pneg %p77
      $region18: #{_lambda_.10} parent=11 // pred_check_branch
        %123 = sbr.rel (%p121) target = $region20
      $region19: #{_lambda_.10} parent=11 // pred_region
        _
      $region20: #{_lambda_.10} parent=11 // pred_fallthru
        _
    $region12: #{_lambda_.10} parent=5 // pred_fallthru
      _
    %p124 = scmp.lt.s32.totalorder %s9, 2
    // Predicated region
    $region21: #{_lambda_.10} parent=5 // pred_check
      %p125 = pneg %p124
    $region22: #{_lambda_.10} parent=5 // pred_check_branch
      %127 = sbr.rel (%p125) target = $region24
    $region23: #{_lambda_.10} parent=5 // pred_region
      // Predicated region
      $region25: #{_lambda_.10} parent=23 // pred_check
        %p128 = pneg %p29
      $region26: #{_lambda_.10} parent=23 // pred_check_branch
        %130 = sbr.rel (%p128) target = $region28
      $region27: #{_lambda_.10} parent=23 // pred_region
        %p131 = scmp.lt.s32.totalorder %s9, 1
        %s132 = scalar_select %p131, %s9, 1
        %s133 = smul.addr %s132, 256
        %s134 = smul.addr %s133, 4
        %s135 = scalar_lea.vmem %s0, %s134
      $region28: #{_lambda_.10} parent=23 // pred_fallthru
        _
    $region24: #{_lambda_.10} parent=5 // pred_fallthru
      _
    %p136 = scmp.le.s32.totalorder 1, %s9
    %p137 = scmp.lt.s32.totalorder %s9, 3
    %p138 = pnand %p136, %p137
    %p139 = pneg %p138
    // Predicated region
    $region29: #{_lambda_.10} parent=5 // pred_check
      _
    $region30: #{_lambda_.10} parent=5 // pred_check_branch
      %141 = sbr.rel (%p138) target = $region32
    $region31: #{_lambda_.10} parent=5 // pred_region
      %s142 = ssub.s32 %s9, 1
      %p143 = scmp.lt.s32.totalorder %s14, 1
      %s144 = scalar_select %p143, %s14, 1
      %s145 = smul.addr %s144, 256
      %s146 = smul.addr %s145, 4
      %s147 = scalar_lea.vmem %s0, %s146
      %p148 = pneg %p35
      %p149 = pneg %p32
      %p150 = pneg %p56
      %p151 = pneg %p53
      %p152 = pneg %p77
      %p153 = pneg %p74
      %p154 = pneg %p103
      %p155 = pneg %p100
      %p156 = scmp.lt.s32.totalorder %s14, 1
      %s157 = scalar_select %p156, %s14, 1
      %s158 = smul.addr %s157, 128
      %s159 = smul.addr %s158, 4
      %s160 = scalar_lea.vmem %s3, %s159
      %p161 = scmp.lt.s32.totalorder %s14, 1
      %s162 = scalar_select %p161, %s14, 1
      %s163 = smul.addr %s162, 256
      %s164 = smul.addr %s163, 4
      %s165 = scalar_lea.vmem %s0, %s164
      %p166 = scmp.lt.s32.totalorder %s14, 1
      %s167 = scalar_select %p166, %s14, 1
      %s168 = smul.addr %s167, 128
      %s169 = smul.addr %s168, 4
      %s170 = scalar_lea.vmem %s3, %s169
      %v172 = vld [vmem:[%s165] sm:$0xff]
      %v173 = vld [vmem:[%s165 + $0x8] sm:$0xff]
      %v174 = vld [vmem:[%s165 + $0x10] sm:$0xff]
      %v175 = vld [vmem:[%s165 + $0x18] sm:$0xff]
      %v176 = vld [vmem:[%s165 + $0x20] sm:$0xff]
      %v177 = vld [vmem:[%s165 + $0x28] sm:$0xff]
      %v178 = vld [vmem:[%s165 + $0x30] sm:$0xff]
      %v179 = vld [vmem:[%s165 + $0x38] sm:$0xff]
      %v180 = vld [vmem:[%s165 + $0x40] sm:$0xff]
      %v181 = vld [vmem:[%s165 + $0x48] sm:$0xff]
      %v182 = vld [vmem:[%s165 + $0x50] sm:$0xff]
      %v183 = vld [vmem:[%s165 + $0x58] sm:$0xff]
      %v184 = vld [vmem:[%s165 + $0x60] sm:$0xff]
      %v185 = vld [vmem:[%s165 + $0x68] sm:$0xff]
      %v186 = vld [vmem:[%s165 + $0x70] sm:$0xff]
      %v187 = vld [vmem:[%s165 + $0x78] sm:$0xff]
      %v188 = vld [vmem:[%s165 + $0x80] sm:$0xff]
      %v189 = vld [vmem:[%s165 + $0x88] sm:$0xff]
      %v190 = vld [vmem:[%s165 + $0x90] sm:$0xff]
      %v191 = vld [vmem:[%s165 + $0x98] sm:$0xff]
      %v192 = vld [vmem:[%s165 + $0xa0] sm:$0xff]
      %v193 = vld [vmem:[%s165 + $0xa8] sm:$0xff]
      %v194 = vld [vmem:[%s165 + $0xb0] sm:$0xff]
      %v195 = vld [vmem:[%s165 + $0xb8] sm:$0xff]
      %v196 = vld [vmem:[%s165 + $0xc0] sm:$0xff]
      %v197 = vld [vmem:[%s165 + $0xc8] sm:$0xff]
      %v198 = vld [vmem:[%s165 + $0xd0] sm:$0xff]
      %v199 = vld [vmem:[%s165 + $0xd8] sm:$0xff]
      %v200 = vld [vmem:[%s165 + $0xe0] sm:$0xff]
      %v201 = vld [vmem:[%s165 + $0xe8] sm:$0xff]
      %v202 = vld [vmem:[%s165 + $0xf0] sm:$0xff]
      %v203 = vld [vmem:[%s165 + $0xf8] sm:$0xff]
      %v204 = vld [vmem:[%s165 + $0x100] sm:$0xff]
      %v205 = vld [vmem:[%s165 + $0x108] sm:$0xff]
      %v206 = vld [vmem:[%s165 + $0x110] sm:$0xff]
      %v207 = vld [vmem:[%s165 + $0x118] sm:$0xff]
      %v208 = vld [vmem:[%s165 + $0x120] sm:$0xff]
      %v209 = vld [vmem:[%s165 + $0x128] sm:$0xff]
      %v210 = vld [vmem:[%s165 + $0x130] sm:$0xff]
      %v211 = vld [vmem:[%s165 + $0x138] sm:$0xff]
      %v212 = vld [vmem:[%s165 + $0x140] sm:$0xff]
      %v213 = vld [vmem:[%s165 + $0x148] sm:$0xff]
      %v214 = vld [vmem:[%s165 + $0x150] sm:$0xff]
      %v215 = vld [vmem:[%s165 + $0x158] sm:$0xff]
      %v216 = vld [vmem:[%s165 + $0x160] sm:$0xff]
      %v217 = vld [vmem:[%s165 + $0x168] sm:$0xff]
      %v218 = vld [vmem:[%s165 + $0x170] sm:$0xff]
      %v219 = vld [vmem:[%s165 + $0x178] sm:$0xff]
      %v220 = vld [vmem:[%s165 + $0x180] sm:$0xff]
      %v221 = vld [vmem:[%s165 + $0x188] sm:$0xff]
      %v222 = vld [vmem:[%s165 + $0x190] sm:$0xff]
      %v223 = vld [vmem:[%s165 + $0x198] sm:$0xff]
      %v224 = vld [vmem:[%s165 + $0x1a0] sm:$0xff]
      %v225 = vld [vmem:[%s165 + $0x1a8] sm:$0xff]
      %v226 = vld [vmem:[%s165 + $0x1b0] sm:$0xff]
      %v227 = vld [vmem:[%s165 + $0x1b8] sm:$0xff]
      %v228 = vld [vmem:[%s165 + $0x1c0] sm:$0xff]
      %v229 = vld [vmem:[%s165 + $0x1c8] sm:$0xff]
      %v230 = vld [vmem:[%s165 + $0x1d0] sm:$0xff]
      %v231 = vld [vmem:[%s165 + $0x1d8] sm:$0xff]
      %v232 = vld [vmem:[%s165 + $0x1e0] sm:$0xff]
      %v233 = vld [vmem:[%s165 + $0x1e8] sm:$0xff]
      %v234 = vld [vmem:[%s165 + $0x1f0] sm:$0xff]
      %v235 = vld [vmem:[%s165 + $0x1f8] sm:$0xff]
      %v236 = vld [vmem:[%s165 + $0x200] sm:$0xff]
      %v237 = vld [vmem:[%s165 + $0x208] sm:$0xff]
      %v238 = vld [vmem:[%s165 + $0x210] sm:$0xff]
      %v239 = vld [vmem:[%s165 + $0x218] sm:$0xff]
      %v240 = vld [vmem:[%s165 + $0x220] sm:$0xff]
      %v241 = vld [vmem:[%s165 + $0x228] sm:$0xff]
      %v242 = vld [vmem:[%s165 + $0x230] sm:$0xff]
      %v243 = vld [vmem:[%s165 + $0x238] sm:$0xff]
      %v244 = vld [vmem:[%s165 + $0x240] sm:$0xff]
      %v245 = vld [vmem:[%s165 + $0x248] sm:$0xff]
      %v246 = vld [vmem:[%s165 + $0x250] sm:$0xff]
      %v247 = vld [vmem:[%s165 + $0x258] sm:$0xff]
      %v248 = vld [vmem:[%s165 + $0x260] sm:$0xff]
      %v249 = vld [vmem:[%s165 + $0x268] sm:$0xff]
      %v250 = vld [vmem:[%s165 + $0x270] sm:$0xff]
      %v251 = vld [vmem:[%s165 + $0x278] sm:$0xff]
      %v252 = vld [vmem:[%s165 + $0x280] sm:$0xff]
      %v253 = vld [vmem:[%s165 + $0x288] sm:$0xff]
      %v254 = vld [vmem:[%s165 + $0x290] sm:$0xff]
      %v255 = vld [vmem:[%s165 + $0x298] sm:$0xff]
      %v256 = vld [vmem:[%s165 + $0x2a0] sm:$0xff]
      %v257 = vld [vmem:[%s165 + $0x2a8] sm:$0xff]
      %v258 = vld [vmem:[%s165 + $0x2b0] sm:$0xff]
      %v259 = vld [vmem:[%s165 + $0x2b8] sm:$0xff]
      %v260 = vld [vmem:[%s165 + $0x2c0] sm:$0xff]
      %v261 = vld [vmem:[%s165 + $0x2c8] sm:$0xff]
      %v262 = vld [vmem:[%s165 + $0x2d0] sm:$0xff]
      %v263 = vld [vmem:[%s165 + $0x2d8] sm:$0xff]
      %v264 = vld [vmem:[%s165 + $0x2e0] sm:$0xff]
      %v265 = vld [vmem:[%s165 + $0x2e8] sm:$0xff]
      %v266 = vld [vmem:[%s165 + $0x2f0] sm:$0xff]
      %v267 = vld [vmem:[%s165 + $0x2f8] sm:$0xff]
      %v268 = vld [vmem:[%s165 + $0x300] sm:$0xff]
      %v269 = vld [vmem:[%s165 + $0x308] sm:$0xff]
      %v270 = vld [vmem:[%s165 + $0x310] sm:$0xff]
      %v271 = vld [vmem:[%s165 + $0x318] sm:$0xff]
      %v272 = vld [vmem:[%s165 + $0x320] sm:$0xff]
      %v273 = vld [vmem:[%s165 + $0x328] sm:$0xff]
      %v274 = vld [vmem:[%s165 + $0x330] sm:$0xff]
      %v275 = vld [vmem:[%s165 + $0x338] sm:$0xff]
      %v276 = vld [vmem:[%s165 + $0x340] sm:$0xff]
      %v277 = vld [vmem:[%s165 + $0x348] sm:$0xff]
      %v278 = vld [vmem:[%s165 + $0x350] sm:$0xff]
      %v279 = vld [vmem:[%s165 + $0x358] sm:$0xff]
      %v280 = vld [vmem:[%s165 + $0x360] sm:$0xff]
      %v281 = vld [vmem:[%s165 + $0x368] sm:$0xff]
      %v282 = vld [vmem:[%s165 + $0x370] sm:$0xff]
      %v283 = vld [vmem:[%s165 + $0x378] sm:$0xff]
      %v284 = vld [vmem:[%s165 + $0x380] sm:$0xff]
      %v285 = vld [vmem:[%s165 + $0x388] sm:$0xff]
      %v286 = vld [vmem:[%s165 + $0x390] sm:$0xff]
      %v287 = vld [vmem:[%s165 + $0x398] sm:$0xff]
      %v288 = vld [vmem:[%s165 + $0x3a0] sm:$0xff]
      %v289 = vld [vmem:[%s165 + $0x3a8] sm:$0xff]
      %v290 = vld [vmem:[%s165 + $0x3b0] sm:$0xff]
      %v291 = vld [vmem:[%s165 + $0x3b8] sm:$0xff]
      %v292 = vld [vmem:[%s165 + $0x3c0] sm:$0xff]
      %v293 = vld [vmem:[%s165 + $0x3c8] sm:$0xff]
      %v294 = vld [vmem:[%s165 + $0x3d0] sm:$0xff]
      %v295 = vld [vmem:[%s165 + $0x3d8] sm:$0xff]
      %v296 = vld [vmem:[%s165 + $0x3e0] sm:$0xff]
      %v297 = vld [vmem:[%s165 + $0x3e8] sm:$0xff]
      %v298 = vld [vmem:[%s165 + $0x3f0] sm:$0xff]
      %v299 = vld [vmem:[%s165 + $0x3f8] sm:$0xff]
      %v300 = vld [vmem:[%s1] sm:$0xf]
      %v301 = vld [vmem:[%s1 + $0x4] sm:$0xf]
      %v302 = vld [vmem:[%s1 + $0x8] sm:$0xf]
      %v303 = vld [vmem:[%s1 + $0xc] sm:$0xf]
      %v304 = vld [vmem:[%s1 + $0x10] sm:$0xf]
      %v305 = vld [vmem:[%s1 + $0x14] sm:$0xf]
      %v306 = vld [vmem:[%s1 + $0x18] sm:$0xf]
      %v307 = vld [vmem:[%s1 + $0x1c] sm:$0xf]
      %v308 = vld [vmem:[%s1 + $0x20] sm:$0xf]
      %v309 = vld [vmem:[%s1 + $0x24] sm:$0xf]
      %v310 = vld [vmem:[%s1 + $0x28] sm:$0xf]
      %v311 = vld [vmem:[%s1 + $0x2c] sm:$0xf]
      %v312 = vld [vmem:[%s1 + $0x30] sm:$0xf]
      %v313 = vld [vmem:[%s1 + $0x34] sm:$0xf]
      %v314 = vld [vmem:[%s1 + $0x38] sm:$0xf]
      %v315 = vld [vmem:[%s1 + $0x3c] sm:$0xf]
      %v316 = vld [vmem:[%s1 + $0x40] sm:$0xf]
      %v317 = vld [vmem:[%s1 + $0x44] sm:$0xf]
      %v318 = vld [vmem:[%s1 + $0x48] sm:$0xf]
      %v447 = vunpack.c.l.b16 %v172
      %v448 = vunpack.c.h.b16 %v172
      %v449 = vunpack.c.l.b16 %v173
      %v450 = vunpack.c.h.b16 %v173
      %v451 = vunpack.c.l.b16 %v174
      %v452 = vunpack.c.h.b16 %v174
      %v453 = vunpack.c.l.b16 %v175
      %v454 = vunpack.c.h.b16 %v175
      %v455 = vunpack.c.l.b16 %v176
      %v456 = vunpack.c.h.b16 %v176
      %v457 = vunpack.c.l.b16 %v177
      %v458 = vunpack.c.h.b16 %v177
      %v459 = vunpack.c.l.b16 %v178
      %v460 = vunpack.c.h.b16 %v178
      %v461 = vunpack.c.l.b16 %v179
      %v462 = vunpack.c.h.b16 %v179
      %v463 = vunpack.c.l.b16 %v180
      %v464 = vunpack.c.h.b16 %v180
      %v465 = vunpack.c.l.b16 %v181
      %v466 = vunpack.c.h.b16 %v181
      %v467 = vunpack.c.l.b16 %v182
      %v468 = vunpack.c.h.b16 %v182
      %v469 = vunpack.c.l.b16 %v183
      %v470 = vunpack.c.h.b16 %v183
      %v471 = vunpack.c.l.b16 %v184
      %v472 = vunpack.c.h.b16 %v184
      %v473 = vunpack.c.l.b16 %v185
      %v474 = vunpack.c.h.b16 %v185
      %v475 = vunpack.c.l.b16 %v186
      %v476 = vunpack.c.h.b16 %v186
      %v477 = vunpack.c.l.b16 %v187
      %v478 = vunpack.c.h.b16 %v187
      %v479 = vunpack.c.l.b16 %v188
      %v480 = vunpack.c.h.b16 %v188
      %v481 = vunpack.c.l.b16 %v189
      %v482 = vunpack.c.h.b16 %v189
      %v483 = vunpack.c.l.b16 %v190
      %v484 = vunpack.c.h.b16 %v190
      %v485 = vunpack.c.l.b16 %v191
      %v486 = vunpack.c.h.b16 %v191
      %v487 = vunpack.c.l.b16 %v192
      %v488 = vunpack.c.h.b16 %v192
      %v489 = vunpack.c.l.b16 %v193
      %v490 = vunpack.c.h.b16 %v193
      %v491 = vunpack.c.l.b16 %v194
      %v492 = vunpack.c.h.b16 %v194
      %v493 = vunpack.c.l.b16 %v195
      %v494 = vunpack.c.h.b16 %v195
      %v495 = vunpack.c.l.b16 %v196
      %v496 = vunpack.c.h.b16 %v196
      %v497 = vunpack.c.l.b16 %v197
      %v498 = vunpack.c.h.b16 %v197
      %v499 = vunpack.c.l.b16 %v198
      %v500 = vunpack.c.h.b16 %v198
      %v501 = vunpack.c.l.b16 %v199
      %v502 = vunpack.c.h.b16 %v199
      %v503 = vunpack.c.l.b16 %v200
      %v504 = vunpack.c.h.b16 %v200
      %v505 = vunpack.c.l.b16 %v201
      %v506 = vunpack.c.h.b16 %v201
      %v507 = vunpack.c.l.b16 %v202
      %v508 = vunpack.c.h.b16 %v202
      %v509 = vunpack.c.l.b16 %v203
      %v510 = vunpack.c.h.b16 %v203
      %v511 = vunpack.c.l.b16 %v204
      %v512 = vunpack.c.h.b16 %v204
      %v513 = vunpack.c.l.b16 %v205
      %v514 = vunpack.c.h.b16 %v205
      %v515 = vunpack.c.l.b16 %v206
      %v516 = vunpack.c.h.b16 %v206
      %v517 = vunpack.c.l.b16 %v207
      %v518 = vunpack.c.h.b16 %v207
      %v519 = vunpack.c.l.b16 %v208
      %v520 = vunpack.c.h.b16 %v208
      %v521 = vunpack.c.l.b16 %v209
      %v522 = vunpack.c.h.b16 %v209
      %v523 = vunpack.c.l.b16 %v210
      %v524 = vunpack.c.h.b16 %v210
      %v525 = vunpack.c.l.b16 %v211
      %v526 = vunpack.c.h.b16 %v211
      %v527 = vunpack.c.l.b16 %v212
      %v528 = vunpack.c.h.b16 %v212
      %v529 = vunpack.c.l.b16 %v213
      %v530 = vunpack.c.h.b16 %v213
      %v531 = vunpack.c.l.b16 %v214
      %v532 = vunpack.c.h.b16 %v214
      %v533 = vunpack.c.l.b16 %v215
      %v534 = vunpack.c.h.b16 %v215
      %v535 = vunpack.c.l.b16 %v216
      %v536 = vunpack.c.h.b16 %v216
      %v537 = vunpack.c.l.b16 %v217
      %v538 = vunpack.c.h.b16 %v217
      %v539 = vunpack.c.l.b16 %v218
      %v540 = vunpack.c.h.b16 %v218
      %v541 = vunpack.c.l.b16 %v219
      %v542 = vunpack.c.h.b16 %v219
      %v543 = vunpack.c.l.b16 %v220
      %v544 = vunpack.c.h.b16 %v220
      %v545 = vunpack.c.l.b16 %v221
      %v546 = vunpack.c.h.b16 %v221
      %v547 = vunpack.c.l.b16 %v222
      %v548 = vunpack.c.h.b16 %v222
      %v549 = vunpack.c.l.b16 %v223
      %v550 = vunpack.c.h.b16 %v223
      %v551 = vunpack.c.l.b16 %v224
      %v552 = vunpack.c.h.b16 %v224
      %v553 = vunpack.c.l.b16 %v225
      %v554 = vunpack.c.h.b16 %v225
      %v555 = vunpack.c.l.b16 %v226
      %v556 = vunpack.c.h.b16 %v226
      %v557 = vunpack.c.l.b16 %v227
      %v558 = vunpack.c.h.b16 %v227
      %v559 = vunpack.c.l.b16 %v228
      %v560 = vunpack.c.h.b16 %v228
      %v561 = vunpack.c.l.b16 %v229
      %v562 = vunpack.c.h.b16 %v229
      %v563 = vunpack.c.l.b16 %v230
      %v564 = vunpack.c.h.b16 %v230
      %v565 = vunpack.c.l.b16 %v231
      %v566 = vunpack.c.h.b16 %v231
      %v567 = vunpack.c.l.b16 %v232
      %v568 = vunpack.c.h.b16 %v232
      %v569 = vunpack.c.l.b16 %v233
      %v570 = vunpack.c.h.b16 %v233
      %v571 = vunpack.c.l.b16 %v234
      %v572 = vunpack.c.h.b16 %v234
      %v573 = vunpack.c.l.b16 %v235
      %v574 = vunpack.c.h.b16 %v235
      %v575 = vunpack.c.l.b16 %v236
      %v576 = vunpack.c.h.b16 %v236
      %v577 = vunpack.c.l.b16 %v237
      %v578 = vunpack.c.h.b16 %v237
      %v579 = vunpack.c.l.b16 %v238
      %v580 = vunpack.c.h.b16 %v238
      %v581 = vunpack.c.l.b16 %v239
      %v582 = vunpack.c.h.b16 %v239
      %v583 = vunpack.c.l.b16 %v240
      %v584 = vunpack.c.h.b16 %v240
      %v585 = vunpack.c.l.b16 %v241
      %v586 = vunpack.c.h.b16 %v241
      %v587 = vunpack.c.l.b16 %v242
      %v588 = vunpack.c.h.b16 %v242
      %v589 = vunpack.c.l.b16 %v243
      %v590 = vunpack.c.h.b16 %v243
      %v591 = vunpack.c.l.b16 %v244
      %v592 = vunpack.c.h.b16 %v244
      %v593 = vunpack.c.l.b16 %v245
      %v594 = vunpack.c.h.b16 %v245
      %v595 = vunpack.c.l.b16 %v246
      %v596 = vunpack.c.h.b16 %v246
      %v597 = vunpack.c.l.b16 %v247
      %v598 = vunpack.c.h.b16 %v247
      %v599 = vunpack.c.l.b16 %v248
      %v600 = vunpack.c.h.b16 %v248
      %v601 = vunpack.c.l.b16 %v249
      %v602 = vunpack.c.h.b16 %v249
      %v603 = vunpack.c.l.b16 %v250
      %v604 = vunpack.c.h.b16 %v250
      %v605 = vunpack.c.l.b16 %v251
      %v606 = vunpack.c.h.b16 %v251
      %v607 = vunpack.c.l.b16 %v252
      %v608 = vunpack.c.h.b16 %v252
      %v609 = vunpack.c.l.b16 %v253
      %v610 = vunpack.c.h.b16 %v253
      %v611 = vunpack.c.l.b16 %v254
      %v612 = vunpack.c.h.b16 %v254
      %v613 = vunpack.c.l.b16 %v255
      %v614 = vunpack.c.h.b16 %v255
      %v615 = vunpack.c.l.b16 %v256
      %v616 = vunpack.c.h.b16 %v256
      %v617 = vunpack.c.l.b16 %v257
      %v618 = vunpack.c.h.b16 %v257
      %v619 = vunpack.c.l.b16 %v258
      %v620 = vunpack.c.h.b16 %v258
      %v621 = vunpack.c.l.b16 %v259
      %v622 = vunpack.c.h.b16 %v259
      %v623 = vunpack.c.l.b16 %v260
      %v624 = vunpack.c.h.b16 %v260
      %v625 = vunpack.c.l.b16 %v261
      %v626 = vunpack.c.h.b16 %v261
      %v627 = vunpack.c.l.b16 %v262
      %v628 = vunpack.c.h.b16 %v262
      %v629 = vunpack.c.l.b16 %v263
      %v630 = vunpack.c.h.b16 %v263
      %v631 = vunpack.c.l.b16 %v264
      %v632 = vunpack.c.h.b16 %v264
      %v633 = vunpack.c.l.b16 %v265
      %v634 = vunpack.c.h.b16 %v265
      %v635 = vunpack.c.l.b16 %v266
      %v636 = vunpack.c.h.b16 %v266
      %v637 = vunpack.c.l.b16 %v267
      %v638 = vunpack.c.h.b16 %v267
      %v639 = vunpack.c.l.b16 %v268
      %v640 = vunpack.c.h.b16 %v268
      %v641 = vunpack.c.l.b16 %v269
      %v642 = vunpack.c.h.b16 %v269
      %v643 = vunpack.c.l.b16 %v270
      %v644 = vunpack.c.h.b16 %v270
      %v645 = vunpack.c.l.b16 %v271
      %v646 = vunpack.c.h.b16 %v271
      %v647 = vunpack.c.l.b16 %v272
      %v648 = vunpack.c.h.b16 %v272
      %v649 = vunpack.c.l.b16 %v273
      %v650 = vunpack.c.h.b16 %v273
      %v651 = vunpack.c.l.b16 %v274
      %v652 = vunpack.c.h.b16 %v274
      %v653 = vunpack.c.l.b16 %v275
      %v654 = vunpack.c.h.b16 %v275
      %v655 = vunpack.c.l.b16 %v276
      %v656 = vunpack.c.h.b16 %v276
      %v657 = vunpack.c.l.b16 %v277
      %v658 = vunpack.c.h.b16 %v277
      %v659 = vunpack.c.l.b16 %v278
      %v660 = vunpack.c.h.b16 %v278
      %v661 = vunpack.c.l.b16 %v279
      %v662 = vunpack.c.h.b16 %v279
      %v663 = vunpack.c.l.b16 %v280
      %v664 = vunpack.c.h.b16 %v280
      %v665 = vunpack.c.l.b16 %v281
      %v666 = vunpack.c.h.b16 %v281
      %v667 = vunpack.c.l.b16 %v282
      %v668 = vunpack.c.h.b16 %v282
      %v669 = vunpack.c.l.b16 %v283
      %v670 = vunpack.c.h.b16 %v283
      %v671 = vunpack.c.l.b16 %v284
      %v672 = vunpack.c.h.b16 %v284
      %v673 = vunpack.c.l.b16 %v285
      %v674 = vunpack.c.h.b16 %v285
      %v675 = vunpack.c.l.b16 %v286
      %v676 = vunpack.c.h.b16 %v286
      %v677 = vunpack.c.l.b16 %v287
      %v678 = vunpack.c.h.b16 %v287
      %v679 = vunpack.c.l.b16 %v288
      %v680 = vunpack.c.h.b16 %v288
      %v681 = vunpack.c.l.b16 %v289
      %v682 = vunpack.c.h.b16 %v289
      %v683 = vunpack.c.l.b16 %v290
      %v684 = vunpack.c.h.b16 %v290
      %v685 = vunpack.c.l.b16 %v291
      %v686 = vunpack.c.h.b16 %v291
      %v687 = vunpack.c.l.b16 %v292
      %v688 = vunpack.c.h.b16 %v292
      %v689 = vunpack.c.l.b16 %v293
      %v690 = vunpack.c.h.b16 %v293
      %v691 = vunpack.c.l.b16 %v294
      %v692 = vunpack.c.h.b16 %v294
      %v693 = vunpack.c.l.b16 %v295
      %v694 = vunpack.c.h.b16 %v295
      %v695 = vunpack.c.l.b16 %v296
      %v696 = vunpack.c.h.b16 %v296
      %v697 = vunpack.c.l.b16 %v297
      %v698 = vunpack.c.h.b16 %v297
      %v699 = vunpack.c.l.b16 %v298
      %v700 = vunpack.c.h.b16 %v298
      %v701 = vunpack.c.l.b16 %v299
      %v702 = vunpack.c.h.b16 %v299
      %v703 = vpack.c.b16 %v449, %v447
      %v704 = vpack.c.b16 %v450, %v448
      %v705 = vpack.c.b16 %v453, %v451
      %v706 = vpack.c.b16 %v454, %v452
      %v707 = vpack.c.b16 %v457, %v455
      %v708 = vpack.c.b16 %v458, %v456
      %v709 = vpack.c.b16 %v461, %v459
      %v710 = vpack.c.b16 %v462, %v460
      %v711 = vpack.c.b16 %v465, %v463
      %v712 = vpack.c.b16 %v466, %v464
      %v713 = vpack.c.b16 %v469, %v467
      %v714 = vpack.c.b16 %v470, %v468
      %v715 = vpack.c.b16 %v473, %v471
      %v716 = vpack.c.b16 %v474, %v472
      %v717 = vpack.c.b16 %v477, %v475
      %v718 = vpack.c.b16 %v478, %v476
      %v719 = vpack.c.b16 %v481, %v479
      %v720 = vpack.c.b16 %v482, %v480
      %v721 = vpack.c.b16 %v485, %v483
      %v722 = vpack.c.b16 %v486, %v484
      %v723 = vpack.c.b16 %v489, %v487
      %v724 = vpack.c.b16 %v490, %v488
      %v725 = vpack.c.b16 %v493, %v491
      %v726 = vpack.c.b16 %v494, %v492
      %v727 = vpack.c.b16 %v497, %v495
      %v728 = vpack.c.b16 %v498, %v496
      %v729 = vpack.c.b16 %v501, %v499
      %v730 = vpack.c.b16 %v502, %v500
      %v731 = vpack.c.b16 %v505, %v503
      %v732 = vpack.c.b16 %v506, %v504
      %v733 = vpack.c.b16 %v509, %v507
      %v734 = vpack.c.b16 %v510, %v508
      %v735 = vpack.c.b16 %v513, %v511
      %v736 = vpack.c.b16 %v514, %v512
      %v737 = vpack.c.b16 %v517, %v515
      %v738 = vpack.c.b16 %v518, %v516
      %v739 = vpack.c.b16 %v521, %v519
      %v740 = vpack.c.b16 %v522, %v520
      %v741 = vpack.c.b16 %v525, %v523
      %v742 = vpack.c.b16 %v526, %v524
      %v743 = vpack.c.b16 %v529, %v527
      %v744 = vpack.c.b16 %v530, %v528
      %v745 = vpack.c.b16 %v533, %v531
      %v746 = vpack.c.b16 %v534, %v532
      %v747 = vpack.c.b16 %v537, %v535
      %v748 = vpack.c.b16 %v538, %v536
      %v749 = vpack.c.b16 %v541, %v539
      %v750 = vpack.c.b16 %v542, %v540
      %v751 = vpack.c.b16 %v545, %v543
      %v752 = vpack.c.b16 %v546, %v544
      %v753 = vpack.c.b16 %v549, %v547
      %v754 = vpack.c.b16 %v550, %v548
      %v755 = vpack.c.b16 %v553, %v551
      %v756 = vpack.c.b16 %v554, %v552
      %v757 = vpack.c.b16 %v557, %v555
      %v758 = vpack.c.b16 %v558, %v556
      %v759 = vpack.c.b16 %v561, %v559
      %v760 = vpack.c.b16 %v562, %v560
      %v761 = vpack.c.b16 %v565, %v563
      %v762 = vpack.c.b16 %v566, %v564
      %v763 = vpack.c.b16 %v569, %v567
      %v764 = vpack.c.b16 %v570, %v568
      %v765 = vpack.c.b16 %v573, %v571
      %v766 = vpack.c.b16 %v574, %v572
      %v767 = vpack.c.b16 %v577, %v575
      %v768 = vpack.c.b16 %v578, %v576
      %v769 = vpack.c.b16 %v581, %v579
      %v770 = vpack.c.b16 %v582, %v580
      %v771 = vpack.c.b16 %v585, %v583
      %v772 = vpack.c.b16 %v586, %v584
      %v773 = vpack.c.b16 %v589, %v587
      %v774 = vpack.c.b16 %v590, %v588
      %v775 = vpack.c.b16 %v593, %v591
      %v776 = vpack.c.b16 %v594, %v592
      %v777 = vpack.c.b16 %v597, %v595
      %v778 = vpack.c.b16 %v598, %v596
      %v779 = vpack.c.b16 %v601, %v599
      %v780 = vpack.c.b16 %v602, %v600
      %v781 = vpack.c.b16 %v605, %v603
      %v782 = vpack.c.b16 %v606, %v604
      %v783 = vpack.c.b16 %v609, %v607
      %v784 = vpack.c.b16 %v610, %v608
      %v785 = vpack.c.b16 %v613, %v611
      %v786 = vpack.c.b16 %v614, %v612
      %v787 = vpack.c.b16 %v617, %v615
      %v788 = vpack.c.b16 %v618, %v616
      %v789 = vpack.c.b16 %v621, %v619
      %v790 = vpack.c.b16 %v622, %v620
      %v791 = vpack.c.b16 %v625, %v623
      %v792 = vpack.c.b16 %v626, %v624
      %v793 = vpack.c.b16 %v629, %v627
      %v794 = vpack.c.b16 %v630, %v628
      %v795 = vpack.c.b16 %v633, %v631
      %v796 = vpack.c.b16 %v634, %v632
      %v797 = vpack.c.b16 %v637, %v635
      %v798 = vpack.c.b16 %v638, %v636
      %v799 = vpack.c.b16 %v641, %v639
      %v800 = vpack.c.b16 %v642, %v640
      %v801 = vpack.c.b16 %v645, %v643
      %v802 = vpack.c.b16 %v646, %v644
      %v803 = vpack.c.b16 %v649, %v647
      %v804 = vpack.c.b16 %v650, %v648
      %v805 = vpack.c.b16 %v653, %v651
      %v806 = vpack.c.b16 %v654, %v652
      %v807 = vpack.c.b16 %v657, %v655
      %v808 = vpack.c.b16 %v658, %v656
      %v809 = vpack.c.b16 %v661, %v659
      %v810 = vpack.c.b16 %v662, %v660
      %v811 = vpack.c.b16 %v665, %v663
      %v812 = vpack.c.b16 %v666, %v664
      %v813 = vpack.c.b16 %v669, %v667
      %v814 = vpack.c.b16 %v670, %v668
      %v815 = vpack.c.b16 %v673, %v671
      %v816 = vpack.c.b16 %v674, %v672
      %v817 = vpack.c.b16 %v677, %v675
      %v818 = vpack.c.b16 %v678, %v676
      %v819 = vpack.c.b16 %v681, %v679
      %v820 = vpack.c.b16 %v682, %v680
      %v821 = vpack.c.b16 %v685, %v683
      %v822 = vpack.c.b16 %v686, %v684
      %v823 = vpack.c.b16 %v689, %v687
      %v824 = vpack.c.b16 %v690, %v688
      %v825 = vpack.c.b16 %v693, %v691
      %v826 = vpack.c.b16 %v694, %v692
      %v827 = vpack.c.b16 %v697, %v695
      %v828 = vpack.c.b16 %v698, %v696
      %v829 = vpack.c.b16 %v701, %v699
      %v830 = vpack.c.b16 %v702, %v700
      %v914 = vunpack.c.l.b16 %v300
      %v915 = vunpack.c.l.b16 %v301
      %v916 = vunpack.c.l.b16 %v302
      %v917 = vunpack.c.l.b16 %v303
      %v918 = vunpack.c.l.b16 %v304
      %v919 = vunpack.c.l.b16 %v305
      %v920 = vunpack.c.l.b16 %v306
      %v921 = vunpack.c.l.b16 %v307
      %v922 = vunpack.c.l.b16 %v308
      %v923 = vunpack.c.l.b16 %v309
      %v924 = vunpack.c.l.b16 %v310
      %v925 = vunpack.c.l.b16 %v311
      %v926 = vunpack.c.l.b16 %v312
      %v927 = vunpack.c.l.b16 %v313
      %v928 = vunpack.c.l.b16 %v314
      %v929 = vunpack.c.l.b16 %v315
      %v930 = vunpack.c.l.b16 %v316
      %v931 = vunpack.c.l.b16 %v317
      %v932 = vunpack.c.l.b16 %v318
      %v933 = vpack.c.b16 %v915, %v914
      %v934 = vpack.c.b16 %v917, %v916
      %v935 = vpack.c.b16 %v919, %v918
      %v936 = vpack.c.b16 %v921, %v920
      %v937 = vpack.c.b16 %v923, %v922
      %v938 = vpack.c.b16 %v925, %v924
      %v939 = vpack.c.b16 %v927, %v926
      %v940 = vpack.c.b16 %v929, %v928
      %v941 = vpack.c.b16 %v931, %v930
      %v942 = vpack.c.b16 %v932, %v932
      %vm952 = vcmask 195584
      %v954 = vsel %vm952, %v704, 0
      %v957 = vsel %vm952, %v706, 0
      %v960 = vsel %vm952, %v708, 0
      %v963 = vsel %vm952, %v710, 0
      %v966 = vsel %vm952, %v712, 0
      %v969 = vsel %vm952, %v714, 0
      %v972 = vsel %vm952, %v716, 0
      %v975 = vsel %vm952, %v718, 0
      %v978 = vsel %vm952, %v720, 0
      %v981 = vsel %vm952, %v722, 0
      %v984 = vsel %vm952, %v724, 0
      %v987 = vsel %vm952, %v726, 0
      %v990 = vsel %vm952, %v728, 0
      %v993 = vsel %vm952, %v730, 0
      %v996 = vsel %vm952, %v732, 0
      %v999 = vsel %vm952, %v734, 0
      %v1002 = vsel %vm952, %v736, 0
      %v1005 = vsel %vm952, %v738, 0
      %v1008 = vsel %vm952, %v740, 0
      %v1011 = vsel %vm952, %v742, 0
      %v1014 = vsel %vm952, %v744, 0
      %v1017 = vsel %vm952, %v746, 0
      %v1020 = vsel %vm952, %v748, 0
      %v1023 = vsel %vm952, %v750, 0
      %v1026 = vsel %vm952, %v752, 0
      %v1029 = vsel %vm952, %v754, 0
      %v1032 = vsel %vm952, %v756, 0
      %v1035 = vsel %vm952, %v758, 0
      %v1038 = vsel %vm952, %v760, 0
      %v1041 = vsel %vm952, %v762, 0
      %v1044 = vsel %vm952, %v764, 0
      %v1047 = vsel %vm952, %v766, 0
      %v1050 = vsel %vm952, %v768, 0
      %v1053 = vsel %vm952, %v770, 0
      %v1056 = vsel %vm952, %v772, 0
      %v1059 = vsel %vm952, %v774, 0
      %v1062 = vsel %vm952, %v776, 0
      %v1065 = vsel %vm952, %v778, 0
      %v1068 = vsel %vm952, %v780, 0
      %v1071 = vsel %vm952, %v782, 0
      %v1074 = vsel %vm952, %v784, 0
      %v1077 = vsel %vm952, %v786, 0
      %v1080 = vsel %vm952, %v788, 0
      %v1083 = vsel %vm952, %v790, 0
      %v1086 = vsel %vm952, %v792, 0
      %v1089 = vsel %vm952, %v794, 0
      %v1092 = vsel %vm952, %v796, 0
      %v1095 = vsel %vm952, %v798, 0
      %v1098 = vsel %vm952, %v800, 0
      %v1101 = vsel %vm952, %v802, 0
      %v1104 = vsel %vm952, %v804, 0
      %v1107 = vsel %vm952, %v806, 0
      %v1110 = vsel %vm952, %v808, 0
      %v1113 = vsel %vm952, %v810, 0
      %v1116 = vsel %vm952, %v812, 0
      %v1119 = vsel %vm952, %v814, 0
      %v1122 = vsel %vm952, %v816, 0
      %v1125 = vsel %vm952, %v818, 0
      %v1128 = vsel %vm952, %v820, 0
      %v1131 = vsel %vm952, %v822, 0
      %v1134 = vsel %vm952, %v824, 0
      %v1137 = vsel %vm952, %v826, 0
      %v1140 = vsel %vm952, %v828, 0
      %v1143 = vsel %vm952, %v830, 0
      %vm1145 = vcmask 1043456
      %v1147 = vsel %vm1145, %v942, 0
      %1149 = vmatpush.bf16.msra.mxu0 %v940
      %1150 = vmatpush.bf16.msra.mxu0 %v939
      %1151 = vmatpush.bf16.msra.mxu0 %v938
      %1152 = vmatpush.bf16.msra.mxu0 %v937
      %1153 = vmatpush.bf16.msra.mxu0 %v936
      %1154 = vmatpush.bf16.msra.mxu0 %v935
      %1155 = vmatpush.bf16.msra.mxu0 %v934
      %1156 = vmatpush.bf16.msra.mxu0 %v933
      %1157 = vmatmul.bf16.gmra.mxu0 %v703
      %v1158 = vpop.f32.mrf.mxu0
      %v1159 = vadd.f32 0.0, %v1158
      %v1160 = vpop.f32.mrf.mxu0
      %v1161 = vadd.f32 0.0, %v1160
      %1162 = vmatmul.bf16.gmra.mxu0 %v705
      %v1163 = vpop.f32.mrf.mxu0
      %v1164 = vadd.f32 0.0, %v1163
      %v1165 = vpop.f32.mrf.mxu0
      %v1166 = vadd.f32 0.0, %v1165
      %1167 = vmatmul.bf16.gmra.mxu0 %v707
      %v1168 = vpop.f32.mrf.mxu0
      %v1169 = vadd.f32 0.0, %v1168
      %v1170 = vpop.f32.mrf.mxu0
      %v1171 = vadd.f32 0.0, %v1170
      %1172 = vmatmul.bf16.gmra.mxu0 %v709
      %v1173 = vpop.f32.mrf.mxu0
      %v1174 = vadd.f32 0.0, %v1173
      %v1175 = vpop.f32.mrf.mxu0
      %v1176 = vadd.f32 0.0, %v1175
      %1177 = vmatmul.bf16.gmra.mxu0 %v711
      %v1178 = vpop.f32.mrf.mxu0
      %v1179 = vadd.f32 0.0, %v1178
      %v1180 = vpop.f32.mrf.mxu0
      %v1181 = vadd.f32 0.0, %v1180
      %1182 = vmatmul.bf16.gmra.mxu0 %v713
      %v1183 = vpop.f32.mrf.mxu0
      %v1184 = vadd.f32 0.0, %v1183
      %v1185 = vpop.f32.mrf.mxu0
      %v1186 = vadd.f32 0.0, %v1185
      %1187 = vmatmul.bf16.gmra.mxu0 %v715
      %v1188 = vpop.f32.mrf.mxu0
      %v1189 = vadd.f32 0.0, %v1188
      %v1190 = vpop.f32.mrf.mxu0
      %v1191 = vadd.f32 0.0, %v1190
      %1192 = vmatmul.bf16.gmra.mxu0 %v717
      %v1193 = vpop.f32.mrf.mxu0
      %v1194 = vadd.f32 0.0, %v1193
      %v1195 = vpop.f32.mrf.mxu0
      %v1196 = vadd.f32 0.0, %v1195
      %1197 = vmatmul.bf16.gmra.mxu0 %v719
      %v1198 = vpop.f32.mrf.mxu0
      %v1199 = vadd.f32 0.0, %v1198
      %v1200 = vpop.f32.mrf.mxu0
      %v1201 = vadd.f32 0.0, %v1200
      %1202 = vmatmul.bf16.gmra.mxu0 %v721
      %v1203 = vpop.f32.mrf.mxu0
      %v1204 = vadd.f32 0.0, %v1203
      %v1205 = vpop.f32.mrf.mxu0
      %v1206 = vadd.f32 0.0, %v1205
      %1207 = vmatmul.bf16.gmra.mxu0 %v723
      %v1208 = vpop.f32.mrf.mxu0
      %v1209 = vadd.f32 0.0, %v1208
      %v1210 = vpop.f32.mrf.mxu0
      %v1211 = vadd.f32 0.0, %v1210
      %1212 = vmatmul.bf16.gmra.mxu0 %v725
      %v1213 = vpop.f32.mrf.mxu0
      %v1214 = vadd.f32 0.0, %v1213
      %v1215 = vpop.f32.mrf.mxu0
      %v1216 = vadd.f32 0.0, %v1215
      %1217 = vmatmul.bf16.gmra.mxu0 %v727
      %v1218 = vpop.f32.mrf.mxu0
      %v1219 = vadd.f32 0.0, %v1218
      %v1220 = vpop.f32.mrf.mxu0
      %v1221 = vadd.f32 0.0, %v1220
      %1222 = vmatmul.bf16.gmra.mxu0 %v729
      %v1223 = vpop.f32.mrf.mxu0
      %v1224 = vadd.f32 0.0, %v1223
      %v1225 = vpop.f32.mrf.mxu0
      %v1226 = vadd.f32 0.0, %v1225
      %1227 = vmatmul.bf16.gmra.mxu0 %v731
      %v1228 = vpop.f32.mrf.mxu0
      %v1229 = vadd.f32 0.0, %v1228
      %v1230 = vpop.f32.mrf.mxu0
      %v1231 = vadd.f32 0.0, %v1230
      %1232 = vmatmul.bf16.gmra.mxu0 %v733
      %v1233 = vpop.f32.mrf.mxu0
      %v1234 = vadd.f32 0.0, %v1233
      %v1235 = vpop.f32.mrf.mxu0
      %v1236 = vadd.f32 0.0, %v1235
      %1237 = vmatmul.bf16.gmra.mxu0 %v735
      %v1238 = vpop.f32.mrf.mxu0
      %v1239 = vadd.f32 0.0, %v1238
      %v1240 = vpop.f32.mrf.mxu0
      %v1241 = vadd.f32 0.0, %v1240
      %1242 = vmatmul.bf16.gmra.mxu0 %v737
      %v1243 = vpop.f32.mrf.mxu0
      %v1244 = vadd.f32 0.0, %v1243
      %v1245 = vpop.f32.mrf.mxu0
      %v1246 = vadd.f32 0.0, %v1245
      %1247 = vmatmul.bf16.gmra.mxu0 %v739
      %v1248 = vpop.f32.mrf.mxu0
      %v1249 = vadd.f32 0.0, %v1248
      %v1250 = vpop.f32.mrf.mxu0
      %v1251 = vadd.f32 0.0, %v1250
      %1252 = vmatmul.bf16.gmra.mxu0 %v741
      %v1253 = vpop.f32.mrf.mxu0
      %v1254 = vadd.f32 0.0, %v1253
      %v1255 = vpop.f32.mrf.mxu0
      %v1256 = vadd.f32 0.0, %v1255
      %1257 = vmatmul.bf16.gmra.mxu0 %v743
      %v1258 = vpop.f32.mrf.mxu0
      %v1259 = vadd.f32 0.0, %v1258
      %v1260 = vpop.f32.mrf.mxu0
      %v1261 = vadd.f32 0.0, %v1260
      %1262 = vmatmul.bf16.gmra.mxu0 %v745
      %v1263 = vpop.f32.mrf.mxu0
      %v1264 = vadd.f32 0.0, %v1263
      %v1265 = vpop.f32.mrf.mxu0
      %v1266 = vadd.f32 0.0, %v1265
      %1267 = vmatmul.bf16.gmra.mxu0 %v747
      %v1268 = vpop.f32.mrf.mxu0
      %v1269 = vadd.f32 0.0, %v1268
      %v1270 = vpop.f32.mrf.mxu0
      %v1271 = vadd.f32 0.0, %v1270
      %1272 = vmatmul.bf16.gmra.mxu0 %v749
      %v1273 = vpop.f32.mrf.mxu0
      %v1274 = vadd.f32 0.0, %v1273
      %v1275 = vpop.f32.mrf.mxu0
      %v1276 = vadd.f32 0.0, %v1275
      %1277 = vmatmul.bf16.gmra.mxu0 %v751
      %v1278 = vpop.f32.mrf.mxu0
      %v1279 = vadd.f32 0.0, %v1278
      %v1280 = vpop.f32.mrf.mxu0
      %v1281 = vadd.f32 0.0, %v1280
      %1282 = vmatmul.bf16.gmra.mxu0 %v753
      %v1283 = vpop.f32.mrf.mxu0
      %v1284 = vadd.f32 0.0, %v1283
      %v1285 = vpop.f32.mrf.mxu0
      %v1286 = vadd.f32 0.0, %v1285
      %1287 = vmatmul.bf16.gmra.mxu0 %v755
      %v1288 = vpop.f32.mrf.mxu0
      %v1289 = vadd.f32 0.0, %v1288
      %v1290 = vpop.f32.mrf.mxu0
      %v1291 = vadd.f32 0.0, %v1290
      %1292 = vmatmul.bf16.gmra.mxu0 %v757
      %v1293 = vpop.f32.mrf.mxu0
      %v1294 = vadd.f32 0.0, %v1293
      %v1295 = vpop.f32.mrf.mxu0
      %v1296 = vadd.f32 0.0, %v1295
      %1297 = vmatmul.bf16.gmra.mxu0 %v759
      %v1298 = vpop.f32.mrf.mxu0
      %v1299 = vadd.f32 0.0, %v1298
      %v1300 = vpop.f32.mrf.mxu0
      %v1301 = vadd.f32 0.0, %v1300
      %1302 = vmatmul.bf16.gmra.mxu0 %v761
      %v1303 = vpop.f32.mrf.mxu0
      %v1304 = vadd.f32 0.0, %v1303
      %v1305 = vpop.f32.mrf.mxu0
      %v1306 = vadd.f32 0.0, %v1305
      %1307 = vmatmul.bf16.gmra.mxu0 %v763
      %v1308 = vpop.f32.mrf.mxu0
      %v1309 = vadd.f32 0.0, %v1308
      %v1310 = vpop.f32.mrf.mxu0
      %v1311 = vadd.f32 0.0, %v1310
      %1312 = vmatmul.bf16.gmra.mxu0 %v765
      %v1313 = vpop.f32.mrf.mxu0
      %v1314 = vadd.f32 0.0, %v1313
      %v1315 = vpop.f32.mrf.mxu0
      %v1316 = vadd.f32 0.0, %v1315
      %1317 = vmatmul.bf16.gmra.mxu0 %v767
      %v1318 = vpop.f32.mrf.mxu0
      %v1319 = vadd.f32 0.0, %v1318
      %v1320 = vpop.f32.mrf.mxu0
      %v1321 = vadd.f32 0.0, %v1320
      %1322 = vmatmul.bf16.gmra.mxu0 %v769
      %v1323 = vpop.f32.mrf.mxu0
      %v1324 = vadd.f32 0.0, %v1323
      %v1325 = vpop.f32.mrf.mxu0
      %v1326 = vadd.f32 0.0, %v1325
      %1327 = vmatmul.bf16.gmra.mxu0 %v771
      %v1328 = vpop.f32.mrf.mxu0
      %v1329 = vadd.f32 0.0, %v1328
      %v1330 = vpop.f32.mrf.mxu0
      %v1331 = vadd.f32 0.0, %v1330
      %1332 = vmatmul.bf16.gmra.mxu0 %v773
      %v1333 = vpop.f32.mrf.mxu0
      %v1334 = vadd.f32 0.0, %v1333
      %v1335 = vpop.f32.mrf.mxu0
      %v1336 = vadd.f32 0.0, %v1335
      %1337 = vmatmul.bf16.gmra.mxu0 %v775
      %v1338 = vpop.f32.mrf.mxu0
      %v1339 = vadd.f32 0.0, %v1338
      %v1340 = vpop.f32.mrf.mxu0
      %v1341 = vadd.f32 0.0, %v1340
      %1342 = vmatmul.bf16.gmra.mxu0 %v777
      %v1343 = vpop.f32.mrf.mxu0
      %v1344 = vadd.f32 0.0, %v1343
      %v1345 = vpop.f32.mrf.mxu0
      %v1346 = vadd.f32 0.0, %v1345
      %1347 = vmatmul.bf16.gmra.mxu0 %v779
      %v1348 = vpop.f32.mrf.mxu0
      %v1349 = vadd.f32 0.0, %v1348
      %v1350 = vpop.f32.mrf.mxu0
      %v1351 = vadd.f32 0.0, %v1350
      %1352 = vmatmul.bf16.gmra.mxu0 %v781
      %v1353 = vpop.f32.mrf.mxu0
      %v1354 = vadd.f32 0.0, %v1353
      %v1355 = vpop.f32.mrf.mxu0
      %v1356 = vadd.f32 0.0, %v1355
      %1357 = vmatmul.bf16.gmra.mxu0 %v783
      %v1358 = vpop.f32.mrf.mxu0
      %v1359 = vadd.f32 0.0, %v1358
      %v1360 = vpop.f32.mrf.mxu0
      %v1361 = vadd.f32 0.0, %v1360
      %1362 = vmatmul.bf16.gmra.mxu0 %v785
      %v1363 = vpop.f32.mrf.mxu0
      %v1364 = vadd.f32 0.0, %v1363
      %v1365 = vpop.f32.mrf.mxu0
      %v1366 = vadd.f32 0.0, %v1365
      %1367 = vmatmul.bf16.gmra.mxu0 %v787
      %v1368 = vpop.f32.mrf.mxu0
      %v1369 = vadd.f32 0.0, %v1368
      %v1370 = vpop.f32.mrf.mxu0
      %v1371 = vadd.f32 0.0, %v1370
      %1372 = vmatmul.bf16.gmra.mxu0 %v789
      %v1373 = vpop.f32.mrf.mxu0
      %v1374 = vadd.f32 0.0, %v1373
      %v1375 = vpop.f32.mrf.mxu0
      %v1376 = vadd.f32 0.0, %v1375
      %1377 = vmatmul.bf16.gmra.mxu0 %v791
      %v1378 = vpop.f32.mrf.mxu0
      %v1379 = vadd.f32 0.0, %v1378
      %v1380 = vpop.f32.mrf.mxu0
      %v1381 = vadd.f32 0.0, %v1380
      %1382 = vmatmul.bf16.gmra.mxu0 %v793
      %v1383 = vpop.f32.mrf.mxu0
      %v1384 = vadd.f32 0.0, %v1383
      %v1385 = vpop.f32.mrf.mxu0
      %v1386 = vadd.f32 0.0, %v1385
      %1387 = vmatmul.bf16.gmra.mxu0 %v795
      %v1388 = vpop.f32.mrf.mxu0
      %v1389 = vadd.f32 0.0, %v1388
      %v1390 = vpop.f32.mrf.mxu0
      %v1391 = vadd.f32 0.0, %v1390
      %1392 = vmatmul.bf16.gmra.mxu0 %v797
      %v1393 = vpop.f32.mrf.mxu0
      %v1394 = vadd.f32 0.0, %v1393
      %v1395 = vpop.f32.mrf.mxu0
      %v1396 = vadd.f32 0.0, %v1395
      %1397 = vmatmul.bf16.gmra.mxu0 %v799
      %v1398 = vpop.f32.mrf.mxu0
      %v1399 = vadd.f32 0.0, %v1398
      %v1400 = vpop.f32.mrf.mxu0
      %v1401 = vadd.f32 0.0, %v1400
      %1402 = vmatmul.bf16.gmra.mxu0 %v801
      %v1403 = vpop.f32.mrf.mxu0
      %v1404 = vadd.f32 0.0, %v1403
      %v1405 = vpop.f32.mrf.mxu0
      %v1406 = vadd.f32 0.0, %v1405
      %1407 = vmatmul.bf16.gmra.mxu0 %v803
      %v1408 = vpop.f32.mrf.mxu0
      %v1409 = vadd.f32 0.0, %v1408
      %v1410 = vpop.f32.mrf.mxu0
      %v1411 = vadd.f32 0.0, %v1410
      %1412 = vmatmul.bf16.gmra.mxu0 %v805
      %v1413 = vpop.f32.mrf.mxu0
      %v1414 = vadd.f32 0.0, %v1413
      %v1415 = vpop.f32.mrf.mxu0
      %v1416 = vadd.f32 0.0, %v1415
      %1417 = vmatmul.bf16.gmra.mxu0 %v807
      %v1418 = vpop.f32.mrf.mxu0
      %v1419 = vadd.f32 0.0, %v1418
      %v1420 = vpop.f32.mrf.mxu0
      %v1421 = vadd.f32 0.0, %v1420
      %1422 = vmatmul.bf16.gmra.mxu0 %v809
      %v1423 = vpop.f32.mrf.mxu0
      %v1424 = vadd.f32 0.0, %v1423
      %v1425 = vpop.f32.mrf.mxu0
      %v1426 = vadd.f32 0.0, %v1425
      %1427 = vmatmul.bf16.gmra.mxu0 %v811
      %v1428 = vpop.f32.mrf.mxu0
      %v1429 = vadd.f32 0.0, %v1428
      %v1430 = vpop.f32.mrf.mxu0
      %v1431 = vadd.f32 0.0, %v1430
      %1432 = vmatmul.bf16.gmra.mxu0 %v813
      %v1433 = vpop.f32.mrf.mxu0
      %v1434 = vadd.f32 0.0, %v1433
      %v1435 = vpop.f32.mrf.mxu0
      %v1436 = vadd.f32 0.0, %v1435
      %1437 = vmatmul.bf16.gmra.mxu0 %v815
      %v1438 = vpop.f32.mrf.mxu0
      %v1439 = vadd.f32 0.0, %v1438
      %v1440 = vpop.f32.mrf.mxu0
      %v1441 = vadd.f32 0.0, %v1440
      %1442 = vmatmul.bf16.gmra.mxu0 %v817
      %v1443 = vpop.f32.mrf.mxu0
      %v1444 = vadd.f32 0.0, %v1443
      %v1445 = vpop.f32.mrf.mxu0
      %v1446 = vadd.f32 0.0, %v1445
      %1447 = vmatmul.bf16.gmra.mxu0 %v819
      %v1448 = vpop.f32.mrf.mxu0
      %v1449 = vadd.f32 0.0, %v1448
      %v1450 = vpop.f32.mrf.mxu0
      %v1451 = vadd.f32 0.0, %v1450
      %1452 = vmatmul.bf16.gmra.mxu0 %v821
      %v1453 = vpop.f32.mrf.mxu0
      %v1454 = vadd.f32 0.0, %v1453
      %v1455 = vpop.f32.mrf.mxu0
      %v1456 = vadd.f32 0.0, %v1455
      %1457 = vmatmul.bf16.gmra.mxu0 %v823
      %v1458 = vpop.f32.mrf.mxu0
      %v1459 = vadd.f32 0.0, %v1458
      %v1460 = vpop.f32.mrf.mxu0
      %v1461 = vadd.f32 0.0, %v1460
      %1462 = vmatmul.bf16.gmra.mxu0 %v825
      %v1463 = vpop.f32.mrf.mxu0
      %v1464 = vadd.f32 0.0, %v1463
      %v1465 = vpop.f32.mrf.mxu0
      %v1466 = vadd.f32 0.0, %v1465
      %1467 = vmatmul.bf16.gmra.mxu0 %v827
      %v1468 = vpop.f32.mrf.mxu0
      %v1469 = vadd.f32 0.0, %v1468
      %v1470 = vpop.f32.mrf.mxu0
      %v1471 = vadd.f32 0.0, %v1470
      %1472 = vmatmul.bf16.gmra.mxu0 %v829
      %v1473 = vpop.f32.mrf.mxu0
      %v1474 = vadd.f32 0.0, %v1473
      %v1475 = vpop.f32.mrf.mxu0
      %v1476 = vadd.f32 0.0, %v1475
      %1477 = vdwg.mxu0
      %1478 = vmatpush.bf16.msra.mxu0 0
      %1479 = vmatpush.bf16.msra.mxu0 0
      %1480 = vmatpush.bf16.msra.mxu0 0
      %1481 = vmatpush.bf16.msra.mxu0 0
      %1482 = vmatpush.bf16.msra.mxu0 0
      %1483 = vmatpush.bf16.msra.mxu0 0
      %1484 = vmatpush.bf16.msra.mxu0 %v1147
      %1485 = vmatpush.bf16.msra.mxu0 %v941
      %1486 = vmatmul.bf16.gmra.mxu0 %v954
      %v1487 = vpop.f32.mrf.mxu0
      %v1488 = vadd.f32 %v1159, %v1487
      %v1489 = vpop.f32.mrf.mxu0
      %v1490 = vadd.f32 %v1161, %v1489
      %1491 = vmatmul.bf16.gmra.mxu0 %v957
      %v1492 = vpop.f32.mrf.mxu0
      %v1493 = vadd.f32 %v1164, %v1492
      %v1494 = vpop.f32.mrf.mxu0
      %v1495 = vadd.f32 %v1166, %v1494
      %1496 = vmatmul.bf16.gmra.mxu0 %v960
      %v1497 = vpop.f32.mrf.mxu0
      %v1498 = vadd.f32 %v1169, %v1497
      %v1499 = vpop.f32.mrf.mxu0
      %v1500 = vadd.f32 %v1171, %v1499
      %1501 = vmatmul.bf16.gmra.mxu0 %v963
      %v1502 = vpop.f32.mrf.mxu0
      %v1503 = vadd.f32 %v1174, %v1502
      %v1504 = vpop.f32.mrf.mxu0
      %v1505 = vadd.f32 %v1176, %v1504
      %1506 = vmatmul.bf16.gmra.mxu0 %v966
      %v1507 = vpop.f32.mrf.mxu0
      %v1508 = vadd.f32 %v1179, %v1507
      %v1509 = vpop.f32.mrf.mxu0
      %v1510 = vadd.f32 %v1181, %v1509
      %1511 = vmatmul.bf16.gmra.mxu0 %v969
      %v1512 = vpop.f32.mrf.mxu0
      %v1513 = vadd.f32 %v1184, %v1512
      %v1514 = vpop.f32.mrf.mxu0
      %v1515 = vadd.f32 %v1186, %v1514
      %1516 = vmatmul.bf16.gmra.mxu0 %v972
      %v1517 = vpop.f32.mrf.mxu0
      %v1518 = vadd.f32 %v1189, %v1517
      %v1519 = vpop.f32.mrf.mxu0
      %v1520 = vadd.f32 %v1191, %v1519
      %1521 = vmatmul.bf16.gmra.mxu0 %v975
      %v1522 = vpop.f32.mrf.mxu0
      %v1523 = vadd.f32 %v1194, %v1522
      %v1524 = vpop.f32.mrf.mxu0
      %v1525 = vadd.f32 %v1196, %v1524
      %1526 = vmatmul.bf16.gmra.mxu0 %v978
      %v1527 = vpop.f32.mrf.mxu0
      %v1528 = vadd.f32 %v1199, %v1527
      %v1529 = vpop.f32.mrf.mxu0
      %v1530 = vadd.f32 %v1201, %v1529
      %1531 = vmatmul.bf16.gmra.mxu0 %v981
      %v1532 = vpop.f32.mrf.mxu0
      %v1533 = vadd.f32 %v1204, %v1532
      %v1534 = vpop.f32.mrf.mxu0
      %v1535 = vadd.f32 %v1206, %v1534
      %1536 = vmatmul.bf16.gmra.mxu0 %v984
      %v1537 = vpop.f32.mrf.mxu0
      %v1538 = vadd.f32 %v1209, %v1537
      %v1539 = vpop.f32.mrf.mxu0
      %v1540 = vadd.f32 %v1211, %v1539
      %1541 = vmatmul.bf16.gmra.mxu0 %v987
      %v1542 = vpop.f32.mrf.mxu0
      %v1543 = vadd.f32 %v1214, %v1542
      %v1544 = vpop.f32.mrf.mxu0
      %v1545 = vadd.f32 %v1216, %v1544
      %1546 = vmatmul.bf16.gmra.mxu0 %v990
      %v1547 = vpop.f32.mrf.mxu0
      %v1548 = vadd.f32 %v1219, %v1547
      %v1549 = vpop.f32.mrf.mxu0
      %v1550 = vadd.f32 %v1221, %v1549
      %1551 = vmatmul.bf16.gmra.mxu0 %v993
      %v1552 = vpop.f32.mrf.mxu0
      %v1553 = vadd.f32 %v1224, %v1552
      %v1554 = vpop.f32.mrf.mxu0
      %v1555 = vadd.f32 %v1226, %v1554
      %1556 = vmatmul.bf16.gmra.mxu0 %v996
      %v1557 = vpop.f32.mrf.mxu0
      %v1558 = vadd.f32 %v1229, %v1557
      %v1559 = vpop.f32.mrf.mxu0
      %v1560 = vadd.f32 %v1231, %v1559
      %1561 = vmatmul.bf16.gmra.mxu0 %v999
      %v1562 = vpop.f32.mrf.mxu0
      %v1563 = vadd.f32 %v1234, %v1562
      %v1564 = vpop.f32.mrf.mxu0
      %v1565 = vadd.f32 %v1236, %v1564
      %1566 = vmatmul.bf16.gmra.mxu0 %v1002
      %v1567 = vpop.f32.mrf.mxu0
      %v1568 = vadd.f32 %v1239, %v1567
      %v1569 = vpop.f32.mrf.mxu0
      %v1570 = vadd.f32 %v1241, %v1569
      %1571 = vmatmul.bf16.gmra.mxu0 %v1005
      %v1572 = vpop.f32.mrf.mxu0
      %v1573 = vadd.f32 %v1244, %v1572
      %v1574 = vpop.f32.mrf.mxu0
      %v1575 = vadd.f32 %v1246, %v1574
      %1576 = vmatmul.bf16.gmra.mxu0 %v1008
      %v1577 = vpop.f32.mrf.mxu0
      %v1578 = vadd.f32 %v1249, %v1577
      %v1579 = vpop.f32.mrf.mxu0
      %v1580 = vadd.f32 %v1251, %v1579
      %1581 = vmatmul.bf16.gmra.mxu0 %v1011
      %v1582 = vpop.f32.mrf.mxu0
      %v1583 = vadd.f32 %v1254, %v1582
      %v1584 = vpop.f32.mrf.mxu0
      %v1585 = vadd.f32 %v1256, %v1584
      %1586 = vmatmul.bf16.gmra.mxu0 %v1014
      %v1587 = vpop.f32.mrf.mxu0
      %v1588 = vadd.f32 %v1259, %v1587
      %v1589 = vpop.f32.mrf.mxu0
      %v1590 = vadd.f32 %v1261, %v1589
      %1591 = vmatmul.bf16.gmra.mxu0 %v1017
      %v1592 = vpop.f32.mrf.mxu0
      %v1593 = vadd.f32 %v1264, %v1592
      %v1594 = vpop.f32.mrf.mxu0
      %v1595 = vadd.f32 %v1266, %v1594
      %1596 = vmatmul.bf16.gmra.mxu0 %v1020
      %v1597 = vpop.f32.mrf.mxu0
      %v1598 = vadd.f32 %v1269, %v1597
      %v1599 = vpop.f32.mrf.mxu0
      %v1600 = vadd.f32 %v1271, %v1599
      %1601 = vmatmul.bf16.gmra.mxu0 %v1023
      %v1602 = vpop.f32.mrf.mxu0
      %v1603 = vadd.f32 %v1274, %v1602
      %v1604 = vpop.f32.mrf.mxu0
      %v1605 = vadd.f32 %v1276, %v1604
      %1606 = vmatmul.bf16.gmra.mxu0 %v1026
      %v1607 = vpop.f32.mrf.mxu0
      %v1608 = vadd.f32 %v1279, %v1607
      %v1609 = vpop.f32.mrf.mxu0
      %v1610 = vadd.f32 %v1281, %v1609
      %1611 = vmatmul.bf16.gmra.mxu0 %v1029
      %v1612 = vpop.f32.mrf.mxu0
      %v1613 = vadd.f32 %v1284, %v1612
      %v1614 = vpop.f32.mrf.mxu0
      %v1615 = vadd.f32 %v1286, %v1614
      %1616 = vmatmul.bf16.gmra.mxu0 %v1032
      %v1617 = vpop.f32.mrf.mxu0
      %v1618 = vadd.f32 %v1289, %v1617
      %v1619 = vpop.f32.mrf.mxu0
      %v1620 = vadd.f32 %v1291, %v1619
      %1621 = vmatmul.bf16.gmra.mxu0 %v1035
      %v1622 = vpop.f32.mrf.mxu0
      %v1623 = vadd.f32 %v1294, %v1622
      %v1624 = vpop.f32.mrf.mxu0
      %v1625 = vadd.f32 %v1296, %v1624
      %1626 = vmatmul.bf16.gmra.mxu0 %v1038
      %v1627 = vpop.f32.mrf.mxu0
      %v1628 = vadd.f32 %v1299, %v1627
      %v1629 = vpop.f32.mrf.mxu0
      %v1630 = vadd.f32 %v1301, %v1629
      %1631 = vmatmul.bf16.gmra.mxu0 %v1041
      %v1632 = vpop.f32.mrf.mxu0
      %v1633 = vadd.f32 %v1304, %v1632
      %v1634 = vpop.f32.mrf.mxu0
      %v1635 = vadd.f32 %v1306, %v1634
      %1636 = vmatmul.bf16.gmra.mxu0 %v1044
      %v1637 = vpop.f32.mrf.mxu0
      %v1638 = vadd.f32 %v1309, %v1637
      %v1639 = vpop.f32.mrf.mxu0
      %v1640 = vadd.f32 %v1311, %v1639
      %1641 = vmatmul.bf16.gmra.mxu0 %v1047
      %v1642 = vpop.f32.mrf.mxu0
      %v1643 = vadd.f32 %v1314, %v1642
      %v1644 = vpop.f32.mrf.mxu0
      %v1645 = vadd.f32 %v1316, %v1644
      %1646 = vmatmul.bf16.gmra.mxu0 %v1050
      %v1647 = vpop.f32.mrf.mxu0
      %v1648 = vadd.f32 %v1319, %v1647
      %v1649 = vpop.f32.mrf.mxu0
      %v1650 = vadd.f32 %v1321, %v1649
      %1651 = vmatmul.bf16.gmra.mxu0 %v1053
      %v1652 = vpop.f32.mrf.mxu0
      %v1653 = vadd.f32 %v1324, %v1652
      %v1654 = vpop.f32.mrf.mxu0
      %v1655 = vadd.f32 %v1326, %v1654
      %1656 = vmatmul.bf16.gmra.mxu0 %v1056
      %v1657 = vpop.f32.mrf.mxu0
      %v1658 = vadd.f32 %v1329, %v1657
      %v1659 = vpop.f32.mrf.mxu0
      %v1660 = vadd.f32 %v1331, %v1659
      %1661 = vmatmul.bf16.gmra.mxu0 %v1059
      %v1662 = vpop.f32.mrf.mxu0
      %v1663 = vadd.f32 %v1334, %v1662
      %v1664 = vpop.f32.mrf.mxu0
      %v1665 = vadd.f32 %v1336, %v1664
      %1666 = vmatmul.bf16.gmra.mxu0 %v1062
      %v1667 = vpop.f32.mrf.mxu0
      %v1668 = vadd.f32 %v1339, %v1667
      %v1669 = vpop.f32.mrf.mxu0
      %v1670 = vadd.f32 %v1341, %v1669
      %1671 = vmatmul.bf16.gmra.mxu0 %v1065
      %v1672 = vpop.f32.mrf.mxu0
      %v1673 = vadd.f32 %v1344, %v1672
      %v1674 = vpop.f32.mrf.mxu0
      %v1675 = vadd.f32 %v1346, %v1674
      %1676 = vmatmul.bf16.gmra.mxu0 %v1068
      %v1677 = vpop.f32.mrf.mxu0
      %v1678 = vadd.f32 %v1349, %v1677
      %v1679 = vpop.f32.mrf.mxu0
      %v1680 = vadd.f32 %v1351, %v1679
      %1681 = vmatmul.bf16.gmra.mxu0 %v1071
      %v1682 = vpop.f32.mrf.mxu0
      %v1683 = vadd.f32 %v1354, %v1682
      %v1684 = vpop.f32.mrf.mxu0
      %v1685 = vadd.f32 %v1356, %v1684
      %1686 = vmatmul.bf16.gmra.mxu0 %v1074
      %v1687 = vpop.f32.mrf.mxu0
      %v1688 = vadd.f32 %v1359, %v1687
      %v1689 = vpop.f32.mrf.mxu0
      %v1690 = vadd.f32 %v1361, %v1689
      %1691 = vmatmul.bf16.gmra.mxu0 %v1077
      %v1692 = vpop.f32.mrf.mxu0
      %v1693 = vadd.f32 %v1364, %v1692
      %v1694 = vpop.f32.mrf.mxu0
      %v1695 = vadd.f32 %v1366, %v1694
      %1696 = vmatmul.bf16.gmra.mxu0 %v1080
      %v1697 = vpop.f32.mrf.mxu0
      %v1698 = vadd.f32 %v1369, %v1697
      %v1699 = vpop.f32.mrf.mxu0
      %v1700 = vadd.f32 %v1371, %v1699
      %1701 = vmatmul.bf16.gmra.mxu0 %v1083
      %v1702 = vpop.f32.mrf.mxu0
      %v1703 = vadd.f32 %v1374, %v1702
      %v1704 = vpop.f32.mrf.mxu0
      %v1705 = vadd.f32 %v1376, %v1704
      %1706 = vmatmul.bf16.gmra.mxu0 %v1086
      %v1707 = vpop.f32.mrf.mxu0
      %v1708 = vadd.f32 %v1379, %v1707
      %v1709 = vpop.f32.mrf.mxu0
      %v1710 = vadd.f32 %v1381, %v1709
      %1711 = vmatmul.bf16.gmra.mxu0 %v1089
      %v1712 = vpop.f32.mrf.mxu0
      %v1713 = vadd.f32 %v1384, %v1712
      %v1714 = vpop.f32.mrf.mxu0
      %v1715 = vadd.f32 %v1386, %v1714
      %1716 = vmatmul.bf16.gmra.mxu0 %v1092
      %v1717 = vpop.f32.mrf.mxu0
      %v1718 = vadd.f32 %v1389, %v1717
      %v1719 = vpop.f32.mrf.mxu0
      %v1720 = vadd.f32 %v1391, %v1719
      %1721 = vmatmul.bf16.gmra.mxu0 %v1095
      %v1722 = vpop.f32.mrf.mxu0
      %v1723 = vadd.f32 %v1394, %v1722
      %v1724 = vpop.f32.mrf.mxu0
      %v1725 = vadd.f32 %v1396, %v1724
      %1726 = vmatmul.bf16.gmra.mxu0 %v1098
      %v1727 = vpop.f32.mrf.mxu0
      %v1728 = vadd.f32 %v1399, %v1727
      %v1729 = vpop.f32.mrf.mxu0
      %v1730 = vadd.f32 %v1401, %v1729
      %1731 = vmatmul.bf16.gmra.mxu0 %v1101
      %v1732 = vpop.f32.mrf.mxu0
      %v1733 = vadd.f32 %v1404, %v1732
      %v1734 = vpop.f32.mrf.mxu0
      %v1735 = vadd.f32 %v1406, %v1734
      %1736 = vmatmul.bf16.gmra.mxu0 %v1104
      %v1737 = vpop.f32.mrf.mxu0
      %v1738 = vadd.f32 %v1409, %v1737
      %v1739 = vpop.f32.mrf.mxu0
      %v1740 = vadd.f32 %v1411, %v1739
      %1741 = vmatmul.bf16.gmra.mxu0 %v1107
      %v1742 = vpop.f32.mrf.mxu0
      %v1743 = vadd.f32 %v1414, %v1742
      %v1744 = vpop.f32.mrf.mxu0
      %v1745 = vadd.f32 %v1416, %v1744
      %1746 = vmatmul.bf16.gmra.mxu0 %v1110
      %v1747 = vpop.f32.mrf.mxu0
      %v1748 = vadd.f32 %v1419, %v1747
      %v1749 = vpop.f32.mrf.mxu0
      %v1750 = vadd.f32 %v1421, %v1749
      %1751 = vmatmul.bf16.gmra.mxu0 %v1113
      %v1752 = vpop.f32.mrf.mxu0
      %v1753 = vadd.f32 %v1424, %v1752
      %v1754 = vpop.f32.mrf.mxu0
      %v1755 = vadd.f32 %v1426, %v1754
      %1756 = vmatmul.bf16.gmra.mxu0 %v1116
      %v1757 = vpop.f32.mrf.mxu0
      %v1758 = vadd.f32 %v1429, %v1757
      %v1759 = vpop.f32.mrf.mxu0
      %v1760 = vadd.f32 %v1431, %v1759
      %1761 = vmatmul.bf16.gmra.mxu0 %v1119
      %v1762 = vpop.f32.mrf.mxu0
      %v1763 = vadd.f32 %v1434, %v1762
      %v1764 = vpop.f32.mrf.mxu0
      %v1765 = vadd.f32 %v1436, %v1764
      %1766 = vmatmul.bf16.gmra.mxu0 %v1122
      %v1767 = vpop.f32.mrf.mxu0
      %v1768 = vadd.f32 %v1439, %v1767
      %v1769 = vpop.f32.mrf.mxu0
      %v1770 = vadd.f32 %v1441, %v1769
      %1771 = vmatmul.bf16.gmra.mxu0 %v1125
      %v1772 = vpop.f32.mrf.mxu0
      %v1773 = vadd.f32 %v1444, %v1772
      %v1774 = vpop.f32.mrf.mxu0
      %v1775 = vadd.f32 %v1446, %v1774
      %1776 = vmatmul.bf16.gmra.mxu0 %v1128
      %v1777 = vpop.f32.mrf.mxu0
      %v1778 = vadd.f32 %v1449, %v1777
      %v1779 = vpop.f32.mrf.mxu0
      %v1780 = vadd.f32 %v1451, %v1779
      %1781 = vmatmul.bf16.gmra.mxu0 %v1131
      %v1782 = vpop.f32.mrf.mxu0
      %v1783 = vadd.f32 %v1454, %v1782
      %v1784 = vpop.f32.mrf.mxu0
      %v1785 = vadd.f32 %v1456, %v1784
      %1786 = vmatmul.bf16.gmra.mxu0 %v1134
      %v1787 = vpop.f32.mrf.mxu0
      %v1788 = vadd.f32 %v1459, %v1787
      %v1789 = vpop.f32.mrf.mxu0
      %v1790 = vadd.f32 %v1461, %v1789
      %1791 = vmatmul.bf16.gmra.mxu0 %v1137
      %v1792 = vpop.f32.mrf.mxu0
      %v1793 = vadd.f32 %v1464, %v1792
      %v1794 = vpop.f32.mrf.mxu0
      %v1795 = vadd.f32 %v1466, %v1794
      %1796 = vmatmul.bf16.gmra.mxu0 %v1140
      %v1797 = vpop.f32.mrf.mxu0
      %v1798 = vadd.f32 %v1469, %v1797
      %v1799 = vpop.f32.mrf.mxu0
      %v1800 = vadd.f32 %v1471, %v1799
      %1801 = vmatmul.bf16.gmra.mxu0 %v1143
      %v1802 = vpop.f32.mrf.mxu0
      %v1803 = vadd.f32 %v1474, %v1802
      %v1804 = vpop.f32.mrf.mxu0
      %v1805 = vadd.f32 %v1476, %v1804
      %1806 = vdwg.mxu0
      %v1807 = vmax.f32 %v1488, 0.0
      %v1808 = vmax.f32 %v1490, 0.0
      %v1809 = vmax.f32 %v1493, 0.0
      %v1810 = vmax.f32 %v1495, 0.0
      %v1811 = vmax.f32 %v1498, 0.0
      %v1812 = vmax.f32 %v1500, 0.0
      %v1813 = vmax.f32 %v1503, 0.0
      %v1814 = vmax.f32 %v1505, 0.0
      %v1815 = vmax.f32 %v1508, 0.0
      %v1816 = vmax.f32 %v1510, 0.0
      %v1817 = vmax.f32 %v1513, 0.0
      %v1818 = vmax.f32 %v1515, 0.0
      %v1819 = vmax.f32 %v1518, 0.0
      %v1820 = vmax.f32 %v1520, 0.0
      %v1821 = vmax.f32 %v1523, 0.0
      %v1822 = vmax.f32 %v1525, 0.0
      %v1823 = vmax.f32 %v1528, 0.0
      %v1824 = vmax.f32 %v1530, 0.0
      %v1825 = vmax.f32 %v1533, 0.0
      %v1826 = vmax.f32 %v1535, 0.0
      %v1827 = vmax.f32 %v1538, 0.0
      %v1828 = vmax.f32 %v1540, 0.0
      %v1829 = vmax.f32 %v1543, 0.0
      %v1830 = vmax.f32 %v1545, 0.0
      %v1831 = vmax.f32 %v1548, 0.0
      %v1832 = vmax.f32 %v1550, 0.0
      %v1833 = vmax.f32 %v1553, 0.0
      %v1834 = vmax.f32 %v1555, 0.0
      %v1835 = vmax.f32 %v1558, 0.0
      %v1836 = vmax.f32 %v1560, 0.0
      %v1837 = vmax.f32 %v1563, 0.0
      %v1838 = vmax.f32 %v1565, 0.0
      %v1839 = vmax.f32 %v1568, 0.0
      %v1840 = vmax.f32 %v1570, 0.0
      %v1841 = vmax.f32 %v1573, 0.0
      %v1842 = vmax.f32 %v1575, 0.0
      %v1843 = vmax.f32 %v1578, 0.0
      %v1844 = vmax.f32 %v1580, 0.0
      %v1845 = vmax.f32 %v1583, 0.0
      %v1846 = vmax.f32 %v1585, 0.0
      %v1847 = vmax.f32 %v1588, 0.0
      %v1848 = vmax.f32 %v1590, 0.0
      %v1849 = vmax.f32 %v1593, 0.0
      %v1850 = vmax.f32 %v1595, 0.0
      %v1851 = vmax.f32 %v1598, 0.0
      %v1852 = vmax.f32 %v1600, 0.0
      %v1853 = vmax.f32 %v1603, 0.0
      %v1854 = vmax.f32 %v1605, 0.0
      %v1855 = vmax.f32 %v1608, 0.0
      %v1856 = vmax.f32 %v1610, 0.0
      %v1857 = vmax.f32 %v1613, 0.0
      %v1858 = vmax.f32 %v1615, 0.0
      %v1859 = vmax.f32 %v1618, 0.0
      %v1860 = vmax.f32 %v1620, 0.0
      %v1861 = vmax.f32 %v1623, 0.0
      %v1862 = vmax.f32 %v1625, 0.0
      %v1863 = vmax.f32 %v1628, 0.0
      %v1864 = vmax.f32 %v1630, 0.0
      %v1865 = vmax.f32 %v1633, 0.0
      %v1866 = vmax.f32 %v1635, 0.0
      %v1867 = vmax.f32 %v1638, 0.0
      %v1868 = vmax.f32 %v1640, 0.0
      %v1869 = vmax.f32 %v1643, 0.0
      %v1870 = vmax.f32 %v1645, 0.0
      %v1871 = vmax.f32 %v1648, 0.0
      %v1872 = vmax.f32 %v1650, 0.0
      %v1873 = vmax.f32 %v1653, 0.0
      %v1874 = vmax.f32 %v1655, 0.0
      %v1875 = vmax.f32 %v1658, 0.0
      %v1876 = vmax.f32 %v1660, 0.0
      %v1877 = vmax.f32 %v1663, 0.0
      %v1878 = vmax.f32 %v1665, 0.0
      %v1879 = vmax.f32 %v1668, 0.0
      %v1880 = vmax.f32 %v1670, 0.0
      %v1881 = vmax.f32 %v1673, 0.0
      %v1882 = vmax.f32 %v1675, 0.0
      %v1883 = vmax.f32 %v1678, 0.0
      %v1884 = vmax.f32 %v1680, 0.0
      %v1885 = vmax.f32 %v1683, 0.0
      %v1886 = vmax.f32 %v1685, 0.0
      %v1887 = vmax.f32 %v1688, 0.0
      %v1888 = vmax.f32 %v1690, 0.0
      %v1889 = vmax.f32 %v1693, 0.0
      %v1890 = vmax.f32 %v1695, 0.0
      %v1891 = vmax.f32 %v1698, 0.0
      %v1892 = vmax.f32 %v1700, 0.0
      %v1893 = vmax.f32 %v1703, 0.0
      %v1894 = vmax.f32 %v1705, 0.0
      %v1895 = vmax.f32 %v1708, 0.0
      %v1896 = vmax.f32 %v1710, 0.0
      %v1897 = vmax.f32 %v1713, 0.0
      %v1898 = vmax.f32 %v1715, 0.0
      %v1899 = vmax.f32 %v1718, 0.0
      %v1900 = vmax.f32 %v1720, 0.0
      %v1901 = vmax.f32 %v1723, 0.0
      %v1902 = vmax.f32 %v1725, 0.0
      %v1903 = vmax.f32 %v1728, 0.0
      %v1904 = vmax.f32 %v1730, 0.0
      %v1905 = vmax.f32 %v1733, 0.0
      %v1906 = vmax.f32 %v1735, 0.0
      %v1907 = vmax.f32 %v1738, 0.0
      %v1908 = vmax.f32 %v1740, 0.0
      %v1909 = vmax.f32 %v1743, 0.0
      %v1910 = vmax.f32 %v1745, 0.0
      %v1911 = vmax.f32 %v1748, 0.0
      %v1912 = vmax.f32 %v1750, 0.0
      %v1913 = vmax.f32 %v1753, 0.0
      %v1914 = vmax.f32 %v1755, 0.0
      %v1915 = vmax.f32 %v1758, 0.0
      %v1916 = vmax.f32 %v1760, 0.0
      %v1917 = vmax.f32 %v1763, 0.0
      %v1918 = vmax.f32 %v1765, 0.0
      %v1919 = vmax.f32 %v1768, 0.0
      %v1920 = vmax.f32 %v1770, 0.0
      %v1921 = vmax.f32 %v1773, 0.0
      %v1922 = vmax.f32 %v1775, 0.0
      %v1923 = vmax.f32 %v1778, 0.0
      %v1924 = vmax.f32 %v1780, 0.0
      %v1925 = vmax.f32 %v1783, 0.0
      %v1926 = vmax.f32 %v1785, 0.0
      %v1927 = vmax.f32 %v1788, 0.0
      %v1928 = vmax.f32 %v1790, 0.0
      %v1929 = vmax.f32 %v1793, 0.0
      %v1930 = vmax.f32 %v1795, 0.0
      %v1931 = vmax.f32 %v1798, 0.0
      %v1932 = vmax.f32 %v1800, 0.0
      %v1933 = vmax.f32 %v1803, 0.0
      %v1934 = vmax.f32 %v1805, 0.0
      %v1935 = vld [vmem:[%s2] sm:$0x1]
      %v1936 = vperm.slane %v1935, 0
      %v1937 = vmul.f32 %v1807, %v1936
      %v1938 = vmul.f32 %v1808, %v1936
      %v1939 = vmul.f32 %v1809, %v1936
      %v1940 = vmul.f32 %v1810, %v1936
      %v1941 = vmul.f32 %v1811, %v1936
      %v1942 = vmul.f32 %v1812, %v1936
      %v1943 = vmul.f32 %v1813, %v1936
      %v1944 = vmul.f32 %v1814, %v1936
      %v1945 = vmul.f32 %v1815, %v1936
      %v1946 = vmul.f32 %v1816, %v1936
      %v1947 = vmul.f32 %v1817, %v1936
      %v1948 = vmul.f32 %v1818, %v1936
      %v1949 = vmul.f32 %v1819, %v1936
      %v1950 = vmul.f32 %v1820, %v1936
      %v1951 = vmul.f32 %v1821, %v1936
      %v1952 = vmul.f32 %v1822, %v1936
      %v1953 = vmul.f32 %v1823, %v1936
      %v1954 = vmul.f32 %v1824, %v1936
      %v1955 = vmul.f32 %v1825, %v1936
      %v1956 = vmul.f32 %v1826, %v1936
      %v1957 = vmul.f32 %v1827, %v1936
      %v1958 = vmul.f32 %v1828, %v1936
      %v1959 = vmul.f32 %v1829, %v1936
      %v1960 = vmul.f32 %v1830, %v1936
      %v1961 = vmul.f32 %v1831, %v1936
      %v1962 = vmul.f32 %v1832, %v1936
      %v1963 = vmul.f32 %v1833, %v1936
      %v1964 = vmul.f32 %v1834, %v1936
      %v1965 = vmul.f32 %v1835, %v1936
      %v1966 = vmul.f32 %v1836, %v1936
      %v1967 = vmul.f32 %v1837, %v1936
      %v1968 = vmul.f32 %v1838, %v1936
      %v1969 = vmul.f32 %v1839, %v1936
      %v1970 = vmul.f32 %v1840, %v1936
      %v1971 = vmul.f32 %v1841, %v1936
      %v1972 = vmul.f32 %v1842, %v1936
      %v1973 = vmul.f32 %v1843, %v1936
      %v1974 = vmul.f32 %v1844, %v1936
      %v1975 = vmul.f32 %v1845, %v1936
      %v1976 = vmul.f32 %v1846, %v1936
      %v1977 = vmul.f32 %v1847, %v1936
      %v1978 = vmul.f32 %v1848, %v1936
      %v1979 = vmul.f32 %v1849, %v1936
      %v1980 = vmul.f32 %v1850, %v1936
      %v1981 = vmul.f32 %v1851, %v1936
      %v1982 = vmul.f32 %v1852, %v1936
      %v1983 = vmul.f32 %v1853, %v1936
      %v1984 = vmul.f32 %v1854, %v1936
      %v1985 = vmul.f32 %v1855, %v1936
      %v1986 = vmul.f32 %v1856, %v1936
      %v1987 = vmul.f32 %v1857, %v1936
      %v1988 = vmul.f32 %v1858, %v1936
      %v1989 = vmul.f32 %v1859, %v1936
      %v1990 = vmul.f32 %v1860, %v1936
      %v1991 = vmul.f32 %v1861, %v1936
      %v1992 = vmul.f32 %v1862, %v1936
      %v1993 = vmul.f32 %v1863, %v1936
      %v1994 = vmul.f32 %v1864, %v1936
      %v1995 = vmul.f32 %v1865, %v1936
      %v1996 = vmul.f32 %v1866, %v1936
      %v1997 = vmul.f32 %v1867, %v1936
      %v1998 = vmul.f32 %v1868, %v1936
      %v1999 = vmul.f32 %v1869, %v1936
      %v2000 = vmul.f32 %v1870, %v1936
      %v2001 = vmul.f32 %v1871, %v1936
      %v2002 = vmul.f32 %v1872, %v1936
      %v2003 = vmul.f32 %v1873, %v1936
      %v2004 = vmul.f32 %v1874, %v1936
      %v2005 = vmul.f32 %v1875, %v1936
      %v2006 = vmul.f32 %v1876, %v1936
      %v2007 = vmul.f32 %v1877, %v1936
      %v2008 = vmul.f32 %v1878, %v1936
      %v2009 = vmul.f32 %v1879, %v1936
      %v2010 = vmul.f32 %v1880, %v1936
      %v2011 = vmul.f32 %v1881, %v1936
      %v2012 = vmul.f32 %v1882, %v1936
      %v2013 = vmul.f32 %v1883, %v1936
      %v2014 = vmul.f32 %v1884, %v1936
      %v2015 = vmul.f32 %v1885, %v1936
      %v2016 = vmul.f32 %v1886, %v1936
      %v2017 = vmul.f32 %v1887, %v1936
      %v2018 = vmul.f32 %v1888, %v1936
      %v2019 = vmul.f32 %v1889, %v1936
      %v2020 = vmul.f32 %v1890, %v1936
      %v2021 = vmul.f32 %v1891, %v1936
      %v2022 = vmul.f32 %v1892, %v1936
      %v2023 = vmul.f32 %v1893, %v1936
      %v2024 = vmul.f32 %v1894, %v1936
      %v2025 = vmul.f32 %v1895, %v1936
      %v2026 = vmul.f32 %v1896, %v1936
      %v2027 = vmul.f32 %v1897, %v1936
      %v2028 = vmul.f32 %v1898, %v1936
      %v2029 = vmul.f32 %v1899, %v1936
      %v2030 = vmul.f32 %v1900, %v1936
      %v2031 = vmul.f32 %v1901, %v1936
      %v2032 = vmul.f32 %v1902, %v1936
      %v2033 = vmul.f32 %v1903, %v1936
      %v2034 = vmul.f32 %v1904, %v1936
      %v2035 = vmul.f32 %v1905, %v1936
      %v2036 = vmul.f32 %v1906, %v1936
      %v2037 = vmul.f32 %v1907, %v1936
      %v2038 = vmul.f32 %v1908, %v1936
      %v2039 = vmul.f32 %v1909, %v1936
      %v2040 = vmul.f32 %v1910, %v1936
      %v2041 = vmul.f32 %v1911, %v1936
      %v2042 = vmul.f32 %v1912, %v1936
      %v2043 = vmul.f32 %v1913, %v1936
      %v2044 = vmul.f32 %v1914, %v1936
      %v2045 = vmul.f32 %v1915, %v1936
      %v2046 = vmul.f32 %v1916, %v1936
      %v2047 = vmul.f32 %v1917, %v1936
      %v2048 = vmul.f32 %v1918, %v1936
      %v2049 = vmul.f32 %v1919, %v1936
      %v2050 = vmul.f32 %v1920, %v1936
      %v2051 = vmul.f32 %v1921, %v1936
      %v2052 = vmul.f32 %v1922, %v1936
      %v2053 = vmul.f32 %v1923, %v1936
      %v2054 = vmul.f32 %v1924, %v1936
      %v2055 = vmul.f32 %v1925, %v1936
      %v2056 = vmul.f32 %v1926, %v1936
      %v2057 = vmul.f32 %v1927, %v1936
      %v2058 = vmul.f32 %v1928, %v1936
      %v2059 = vmul.f32 %v1929, %v1936
      %v2060 = vmul.f32 %v1930, %v1936
      %v2061 = vmul.f32 %v1931, %v1936
      %v2062 = vmul.f32 %v1932, %v1936
      %v2063 = vmul.f32 %v1933, %v1936
      %v2064 = vmul.f32 %v1934, %v1936
      %v2065 = vld [vmem:[%s2 + $0x1] sm:$0x1]
      %v2066 = vperm.slane %v2065, 0
      %v2067 = vadd.f32 %v1937, %v2066
      %v2068 = vadd.f32 %v1938, %v2066
      %v2069 = vadd.f32 %v1939, %v2066
      %v2070 = vadd.f32 %v1940, %v2066
      %v2071 = vadd.f32 %v1941, %v2066
      %v2072 = vadd.f32 %v1942, %v2066
      %v2073 = vadd.f32 %v1943, %v2066
      %v2074 = vadd.f32 %v1944, %v2066
      %v2075 = vadd.f32 %v1945, %v2066
      %v2076 = vadd.f32 %v1946, %v2066
      %v2077 = vadd.f32 %v1947, %v2066
      %v2078 = vadd.f32 %v1948, %v2066
      %v2079 = vadd.f32 %v1949, %v2066
      %v2080 = vadd.f32 %v1950, %v2066
      %v2081 = vadd.f32 %v1951, %v2066
      %v2082 = vadd.f32 %v1952, %v2066
      %v2083 = vadd.f32 %v1953, %v2066
      %v2084 = vadd.f32 %v1954, %v2066
      %v2085 = vadd.f32 %v1955, %v2066
      %v2086 = vadd.f32 %v1956, %v2066
      %v2087 = vadd.f32 %v1957, %v2066
      %v2088 = vadd.f32 %v1958, %v2066
      %v2089 = vadd.f32 %v1959, %v2066
      %v2090 = vadd.f32 %v1960, %v2066
      %v2091 = vadd.f32 %v1961, %v2066
      %v2092 = vadd.f32 %v1962, %v2066
      %v2093 = vadd.f32 %v1963, %v2066
      %v2094 = vadd.f32 %v1964, %v2066
      %v2095 = vadd.f32 %v1965, %v2066
      %v2096 = vadd.f32 %v1966, %v2066
      %v2097 = vadd.f32 %v1967, %v2066
      %v2098 = vadd.f32 %v1968, %v2066
      %v2099 = vadd.f32 %v1969, %v2066
      %v2100 = vadd.f32 %v1970, %v2066
      %v2101 = vadd.f32 %v1971, %v2066
      %v2102 = vadd.f32 %v1972, %v2066
      %v2103 = vadd.f32 %v1973, %v2066
      %v2104 = vadd.f32 %v1974, %v2066
      %v2105 = vadd.f32 %v1975, %v2066
      %v2106 = vadd.f32 %v1976, %v2066
      %v2107 = vadd.f32 %v1977, %v2066
      %v2108 = vadd.f32 %v1978, %v2066
      %v2109 = vadd.f32 %v1979, %v2066
      %v2110 = vadd.f32 %v1980, %v2066
      %v2111 = vadd.f32 %v1981, %v2066
      %v2112 = vadd.f32 %v1982, %v2066
      %v2113 = vadd.f32 %v1983, %v2066
      %v2114 = vadd.f32 %v1984, %v2066
      %v2115 = vadd.f32 %v1985, %v2066
      %v2116 = vadd.f32 %v1986, %v2066
      %v2117 = vadd.f32 %v1987, %v2066
      %v2118 = vadd.f32 %v1988, %v2066
      %v2119 = vadd.f32 %v1989, %v2066
      %v2120 = vadd.f32 %v1990, %v2066
      %v2121 = vadd.f32 %v1991, %v2066
      %v2122 = vadd.f32 %v1992, %v2066
      %v2123 = vadd.f32 %v1993, %v2066
      %v2124 = vadd.f32 %v1994, %v2066
      %v2125 = vadd.f32 %v1995, %v2066
      %v2126 = vadd.f32 %v1996, %v2066
      %v2127 = vadd.f32 %v1997, %v2066
      %v2128 = vadd.f32 %v1998, %v2066
      %v2129 = vadd.f32 %v1999, %v2066
      %v2130 = vadd.f32 %v2000, %v2066
      %v2131 = vadd.f32 %v2001, %v2066
      %v2132 = vadd.f32 %v2002, %v2066
      %v2133 = vadd.f32 %v2003, %v2066
      %v2134 = vadd.f32 %v2004, %v2066
      %v2135 = vadd.f32 %v2005, %v2066
      %v2136 = vadd.f32 %v2006, %v2066
      %v2137 = vadd.f32 %v2007, %v2066
      %v2138 = vadd.f32 %v2008, %v2066
      %v2139 = vadd.f32 %v2009, %v2066
      %v2140 = vadd.f32 %v2010, %v2066
      %v2141 = vadd.f32 %v2011, %v2066
      %v2142 = vadd.f32 %v2012, %v2066
      %v2143 = vadd.f32 %v2013, %v2066
      %v2144 = vadd.f32 %v2014, %v2066
      %v2145 = vadd.f32 %v2015, %v2066
      %v2146 = vadd.f32 %v2016, %v2066
      %v2147 = vadd.f32 %v2017, %v2066
      %v2148 = vadd.f32 %v2018, %v2066
      %v2149 = vadd.f32 %v2019, %v2066
      %v2150 = vadd.f32 %v2020, %v2066
      %v2151 = vadd.f32 %v2021, %v2066
      %v2152 = vadd.f32 %v2022, %v2066
      %v2153 = vadd.f32 %v2023, %v2066
      %v2154 = vadd.f32 %v2024, %v2066
      %v2155 = vadd.f32 %v2025, %v2066
      %v2156 = vadd.f32 %v2026, %v2066
      %v2157 = vadd.f32 %v2027, %v2066
      %v2158 = vadd.f32 %v2028, %v2066
      %v2159 = vadd.f32 %v2029, %v2066
      %v2160 = vadd.f32 %v2030, %v2066
      %v2161 = vadd.f32 %v2031, %v2066
      %v2162 = vadd.f32 %v2032, %v2066
      %v2163 = vadd.f32 %v2033, %v2066
      %v2164 = vadd.f32 %v2034, %v2066
      %v2165 = vadd.f32 %v2035, %v2066
      %v2166 = vadd.f32 %v2036, %v2066
      %v2167 = vadd.f32 %v2037, %v2066
      %v2168 = vadd.f32 %v2038, %v2066
      %v2169 = vadd.f32 %v2039, %v2066
      %v2170 = vadd.f32 %v2040, %v2066
      %v2171 = vadd.f32 %v2041, %v2066
      %v2172 = vadd.f32 %v2042, %v2066
      %v2173 = vadd.f32 %v2043, %v2066
      %v2174 = vadd.f32 %v2044, %v2066
      %v2175 = vadd.f32 %v2045, %v2066
      %v2176 = vadd.f32 %v2046, %v2066
      %v2177 = vadd.f32 %v2047, %v2066
      %v2178 = vadd.f32 %v2048, %v2066
      %v2179 = vadd.f32 %v2049, %v2066
      %v2180 = vadd.f32 %v2050, %v2066
      %v2181 = vadd.f32 %v2051, %v2066
      %v2182 = vadd.f32 %v2052, %v2066
      %v2183 = vadd.f32 %v2053, %v2066
      %v2184 = vadd.f32 %v2054, %v2066
      %v2185 = vadd.f32 %v2055, %v2066
      %v2186 = vadd.f32 %v2056, %v2066
      %v2187 = vadd.f32 %v2057, %v2066
      %v2188 = vadd.f32 %v2058, %v2066
      %v2189 = vadd.f32 %v2059, %v2066
      %v2190 = vadd.f32 %v2060, %v2066
      %v2191 = vadd.f32 %v2061, %v2066
      %v2192 = vadd.f32 %v2062, %v2066
      %v2193 = vadd.f32 %v2063, %v2066
      %v2194 = vadd.f32 %v2064, %v2066
      %v2195 = vpack.c.bf16 %v2067, %v2067
      %v2196 = vpack.c.bf16 %v2068, %v2068
      %v2197 = vpack.c.bf16 %v2069, %v2069
      %v2198 = vpack.c.bf16 %v2070, %v2070
      %v2199 = vpack.c.bf16 %v2071, %v2071
      %v2200 = vpack.c.bf16 %v2072, %v2072
      %v2201 = vpack.c.bf16 %v2073, %v2073
      %v2202 = vpack.c.bf16 %v2074, %v2074
      %v2203 = vpack.c.bf16 %v2075, %v2075
      %v2204 = vpack.c.bf16 %v2076, %v2076
      %v2205 = vpack.c.bf16 %v2077, %v2077
      %v2206 = vpack.c.bf16 %v2078, %v2078
      %v2207 = vpack.c.bf16 %v2079, %v2079
      %v2208 = vpack.c.bf16 %v2080, %v2080
      %v2209 = vpack.c.bf16 %v2081, %v2081
      %v2210 = vpack.c.bf16 %v2082, %v2082
      %v2211 = vpack.c.bf16 %v2083, %v2083
      %v2212 = vpack.c.bf16 %v2084, %v2084
      %v2213 = vpack.c.bf16 %v2085, %v2085
      %v2214 = vpack.c.bf16 %v2086, %v2086
      %v2215 = vpack.c.bf16 %v2087, %v2087
      %v2216 = vpack.c.bf16 %v2088, %v2088
      %v2217 = vpack.c.bf16 %v2089, %v2089
      %v2218 = vpack.c.bf16 %v2090, %v2090
      %v2219 = vpack.c.bf16 %v2091, %v2091
      %v2220 = vpack.c.bf16 %v2092, %v2092
      %v2221 = vpack.c.bf16 %v2093, %v2093
      %v2222 = vpack.c.bf16 %v2094, %v2094
      %v2223 = vpack.c.bf16 %v2095, %v2095
      %v2224 = vpack.c.bf16 %v2096, %v2096
      %v2225 = vpack.c.bf16 %v2097, %v2097
      %v2226 = vpack.c.bf16 %v2098, %v2098
      %v2227 = vpack.c.bf16 %v2099, %v2099
      %v2228 = vpack.c.bf16 %v2100, %v2100
      %v2229 = vpack.c.bf16 %v2101, %v2101
      %v2230 = vpack.c.bf16 %v2102, %v2102
      %v2231 = vpack.c.bf16 %v2103, %v2103
      %v2232 = vpack.c.bf16 %v2104, %v2104
      %v2233 = vpack.c.bf16 %v2105, %v2105
      %v2234 = vpack.c.bf16 %v2106, %v2106
      %v2235 = vpack.c.bf16 %v2107, %v2107
      %v2236 = vpack.c.bf16 %v2108, %v2108
      %v2237 = vpack.c.bf16 %v2109, %v2109
      %v2238 = vpack.c.bf16 %v2110, %v2110
      %v2239 = vpack.c.bf16 %v2111, %v2111
      %v2240 = vpack.c.bf16 %v2112, %v2112
      %v2241 = vpack.c.bf16 %v2113, %v2113
      %v2242 = vpack.c.bf16 %v2114, %v2114
      %v2243 = vpack.c.bf16 %v2115, %v2115
      %v2244 = vpack.c.bf16 %v2116, %v2116
      %v2245 = vpack.c.bf16 %v2117, %v2117
      %v2246 = vpack.c.bf16 %v2118, %v2118
      %v2247 = vpack.c.bf16 %v2119, %v2119
      %v2248 = vpack.c.bf16 %v2120, %v2120
      %v2249 = vpack.c.bf16 %v2121, %v2121
      %v2250 = vpack.c.bf16 %v2122, %v2122
      %v2251 = vpack.c.bf16 %v2123, %v2123
      %v2252 = vpack.c.bf16 %v2124, %v2124
      %v2253 = vpack.c.bf16 %v2125, %v2125
      %v2254 = vpack.c.bf16 %v2126, %v2126
      %v2255 = vpack.c.bf16 %v2127, %v2127
      %v2256 = vpack.c.bf16 %v2128, %v2128
      %v2257 = vpack.c.bf16 %v2129, %v2129
      %v2258 = vpack.c.bf16 %v2130, %v2130
      %v2259 = vpack.c.bf16 %v2131, %v2131
      %v2260 = vpack.c.bf16 %v2132, %v2132
      %v2261 = vpack.c.bf16 %v2133, %v2133
      %v2262 = vpack.c.bf16 %v2134, %v2134
      %v2263 = vpack.c.bf16 %v2135, %v2135
      %v2264 = vpack.c.bf16 %v2136, %v2136
      %v2265 = vpack.c.bf16 %v2137, %v2137
      %v2266 = vpack.c.bf16 %v2138, %v2138
      %v2267 = vpack.c.bf16 %v2139, %v2139
      %v2268 = vpack.c.bf16 %v2140, %v2140
      %v2269 = vpack.c.bf16 %v2141, %v2141
      %v2270 = vpack.c.bf16 %v2142, %v2142
      %v2271 = vpack.c.bf16 %v2143, %v2143
      %v2272 = vpack.c.bf16 %v2144, %v2144
      %v2273 = vpack.c.bf16 %v2145, %v2145
      %v2274 = vpack.c.bf16 %v2146, %v2146
      %v2275 = vpack.c.bf16 %v2147, %v2147
      %v2276 = vpack.c.bf16 %v2148, %v2148
      %v2277 = vpack.c.bf16 %v2149, %v2149
      %v2278 = vpack.c.bf16 %v2150, %v2150
      %v2279 = vpack.c.bf16 %v2151, %v2151
      %v2280 = vpack.c.bf16 %v2152, %v2152
      %v2281 = vpack.c.bf16 %v2153, %v2153
      %v2282 = vpack.c.bf16 %v2154, %v2154
      %v2283 = vpack.c.bf16 %v2155, %v2155
      %v2284 = vpack.c.bf16 %v2156, %v2156
      %v2285 = vpack.c.bf16 %v2157, %v2157
      %v2286 = vpack.c.bf16 %v2158, %v2158
      %v2287 = vpack.c.bf16 %v2159, %v2159
      %v2288 = vpack.c.bf16 %v2160, %v2160
      %v2289 = vpack.c.bf16 %v2161, %v2161
      %v2290 = vpack.c.bf16 %v2162, %v2162
      %v2291 = vpack.c.bf16 %v2163, %v2163
      %v2292 = vpack.c.bf16 %v2164, %v2164
      %v2293 = vpack.c.bf16 %v2165, %v2165
      %v2294 = vpack.c.bf16 %v2166, %v2166
      %v2295 = vpack.c.bf16 %v2167, %v2167
      %v2296 = vpack.c.bf16 %v2168, %v2168
      %v2297 = vpack.c.bf16 %v2169, %v2169
      %v2298 = vpack.c.bf16 %v2170, %v2170
      %v2299 = vpack.c.bf16 %v2171, %v2171
      %v2300 = vpack.c.bf16 %v2172, %v2172
      %v2301 = vpack.c.bf16 %v2173, %v2173
      %v2302 = vpack.c.bf16 %v2174, %v2174
      %v2303 = vpack.c.bf16 %v2175, %v2175
      %v2304 = vpack.c.bf16 %v2176, %v2176
      %v2305 = vpack.c.bf16 %v2177, %v2177
      %v2306 = vpack.c.bf16 %v2178, %v2178
      %v2307 = vpack.c.bf16 %v2179, %v2179
      %v2308 = vpack.c.bf16 %v2180, %v2180
      %v2309 = vpack.c.bf16 %v2181, %v2181
      %v2310 = vpack.c.bf16 %v2182, %v2182
      %v2311 = vpack.c.bf16 %v2183, %v2183
      %v2312 = vpack.c.bf16 %v2184, %v2184
      %v2313 = vpack.c.bf16 %v2185, %v2185
      %v2314 = vpack.c.bf16 %v2186, %v2186
      %v2315 = vpack.c.bf16 %v2187, %v2187
      %v2316 = vpack.c.bf16 %v2188, %v2188
      %v2317 = vpack.c.bf16 %v2189, %v2189
      %v2318 = vpack.c.bf16 %v2190, %v2190
      %v2319 = vpack.c.bf16 %v2191, %v2191
      %v2320 = vpack.c.bf16 %v2192, %v2192
      %v2321 = vpack.c.bf16 %v2193, %v2193
      %v2322 = vpack.c.bf16 %v2194, %v2194
      %2323 = vst [vmem:[%s170] sm:$0xf] %v2195
      %2324 = vst [vmem:[%s170 + $0x4] sm:$0xf] %v2196
      %2325 = vst [vmem:[%s170 + $0x8] sm:$0xf] %v2197
      %2326 = vst [vmem:[%s170 + $0xc] sm:$0xf] %v2198
      %2327 = vst [vmem:[%s170 + $0x10] sm:$0xf] %v2199
      %2328 = vst [vmem:[%s170 + $0x14] sm:$0xf] %v2200
      %2329 = vst [vmem:[%s170 + $0x18] sm:$0xf] %v2201
      %2330 = vst [vmem:[%s170 + $0x1c] sm:$0xf] %v2202
      %2331 = vst [vmem:[%s170 + $0x20] sm:$0xf] %v2203
      %2332 = vst [vmem:[%s170 + $0x24] sm:$0xf] %v2204
      %2333 = vst [vmem:[%s170 + $0x28] sm:$0xf] %v2205
      %2334 = vst [vmem:[%s170 + $0x2c] sm:$0xf] %v2206
      %2335 = vst [vmem:[%s170 + $0x30] sm:$0xf] %v2207
      %2336 = vst [vmem:[%s170 + $0x34] sm:$0xf] %v2208
      %2337 = vst [vmem:[%s170 + $0x38] sm:$0xf] %v2209
      %2338 = vst [vmem:[%s170 + $0x3c] sm:$0xf] %v2210
      %2339 = vst [vmem:[%s170 + $0x40] sm:$0xf] %v2211
      %2340 = vst [vmem:[%s170 + $0x44] sm:$0xf] %v2212
      %2341 = vst [vmem:[%s170 + $0x48] sm:$0xf] %v2213
      %2342 = vst [vmem:[%s170 + $0x4c] sm:$0xf] %v2214
      %2343 = vst [vmem:[%s170 + $0x50] sm:$0xf] %v2215
      %2344 = vst [vmem:[%s170 + $0x54] sm:$0xf] %v2216
      %2345 = vst [vmem:[%s170 + $0x58] sm:$0xf] %v2217
      %2346 = vst [vmem:[%s170 + $0x5c] sm:$0xf] %v2218
      %2347 = vst [vmem:[%s170 + $0x60] sm:$0xf] %v2219
      %2348 = vst [vmem:[%s170 + $0x64] sm:$0xf] %v2220
      %2349 = vst [vmem:[%s170 + $0x68] sm:$0xf] %v2221
      %2350 = vst [vmem:[%s170 + $0x6c] sm:$0xf] %v2222
      %2351 = vst [vmem:[%s170 + $0x70] sm:$0xf] %v2223
      %2352 = vst [vmem:[%s170 + $0x74] sm:$0xf] %v2224
      %2353 = vst [vmem:[%s170 + $0x78] sm:$0xf] %v2225
      %2354 = vst [vmem:[%s170 + $0x7c] sm:$0xf] %v2226
      %2355 = vst [vmem:[%s170 + $0x80] sm:$0xf] %v2227
      %2356 = vst [vmem:[%s170 + $0x84] sm:$0xf] %v2228
      %2357 = vst [vmem:[%s170 + $0x88] sm:$0xf] %v2229
      %2358 = vst [vmem:[%s170 + $0x8c] sm:$0xf] %v2230
      %2359 = vst [vmem:[%s170 + $0x90] sm:$0xf] %v2231
      %2360 = vst [vmem:[%s170 + $0x94] sm:$0xf] %v2232
      %2361 = vst [vmem:[%s170 + $0x98] sm:$0xf] %v2233
      %2362 = vst [vmem:[%s170 + $0x9c] sm:$0xf] %v2234
      %2363 = vst [vmem:[%s170 + $0xa0] sm:$0xf] %v2235
      %2364 = vst [vmem:[%s170 + $0xa4] sm:$0xf] %v2236
      %2365 = vst [vmem:[%s170 + $0xa8] sm:$0xf] %v2237
      %2366 = vst [vmem:[%s170 + $0xac] sm:$0xf] %v2238
      %2367 = vst [vmem:[%s170 + $0xb0] sm:$0xf] %v2239
      %2368 = vst [vmem:[%s170 + $0xb4] sm:$0xf] %v2240
      %2369 = vst [vmem:[%s170 + $0xb8] sm:$0xf] %v2241
      %2370 = vst [vmem:[%s170 + $0xbc] sm:$0xf] %v2242
      %2371 = vst [vmem:[%s170 + $0xc0] sm:$0xf] %v2243
      %2372 = vst [vmem:[%s170 + $0xc4] sm:$0xf] %v2244
      %2373 = vst [vmem:[%s170 + $0xc8] sm:$0xf] %v2245
      %2374 = vst [vmem:[%s170 + $0xcc] sm:$0xf] %v2246
      %2375 = vst [vmem:[%s170 + $0xd0] sm:$0xf] %v2247
      %2376 = vst [vmem:[%s170 + $0xd4] sm:$0xf] %v2248
      %2377 = vst [vmem:[%s170 + $0xd8] sm:$0xf] %v2249
      %2378 = vst [vmem:[%s170 + $0xdc] sm:$0xf] %v2250
      %2379 = vst [vmem:[%s170 + $0xe0] sm:$0xf] %v2251
      %2380 = vst [vmem:[%s170 + $0xe4] sm:$0xf] %v2252
      %2381 = vst [vmem:[%s170 + $0xe8] sm:$0xf] %v2253
      %2382 = vst [vmem:[%s170 + $0xec] sm:$0xf] %v2254
      %2383 = vst [vmem:[%s170 + $0xf0] sm:$0xf] %v2255
      %2384 = vst [vmem:[%s170 + $0xf4] sm:$0xf] %v2256
      %2385 = vst [vmem:[%s170 + $0xf8] sm:$0xf] %v2257
      %2386 = vst [vmem:[%s170 + $0xfc] sm:$0xf] %v2258
      %2387 = vst [vmem:[%s170 + $0x100] sm:$0xf] %v2259
      %2388 = vst [vmem:[%s170 + $0x104] sm:$0xf] %v2260
      %2389 = vst [vmem:[%s170 + $0x108] sm:$0xf] %v2261
      %2390 = vst [vmem:[%s170 + $0x10c] sm:$0xf] %v2262
      %2391 = vst [vmem:[%s170 + $0x110] sm:$0xf] %v2263
      %2392 = vst [vmem:[%s170 + $0x114] sm:$0xf] %v2264
      %2393 = vst [vmem:[%s170 + $0x118] sm:$0xf] %v2265
      %2394 = vst [vmem:[%s170 + $0x11c] sm:$0xf] %v2266
      %2395 = vst [vmem:[%s170 + $0x120] sm:$0xf] %v2267
      %2396 = vst [vmem:[%s170 + $0x124] sm:$0xf] %v2268
      %2397 = vst [vmem:[%s170 + $0x128] sm:$0xf] %v2269
      %2398 = vst [vmem:[%s170 + $0x12c] sm:$0xf] %v2270
      %2399 = vst [vmem:[%s170 + $0x130] sm:$0xf] %v2271
      %2400 = vst [vmem:[%s170 + $0x134] sm:$0xf] %v2272
      %2401 = vst [vmem:[%s170 + $0x138] sm:$0xf] %v2273
      %2402 = vst [vmem:[%s170 + $0x13c] sm:$0xf] %v2274
      %2403 = vst [vmem:[%s170 + $0x140] sm:$0xf] %v2275
      %2404 = vst [vmem:[%s170 + $0x144] sm:$0xf] %v2276
      %2405 = vst [vmem:[%s170 + $0x148] sm:$0xf] %v2277
      %2406 = vst [vmem:[%s170 + $0x14c] sm:$0xf] %v2278
      %2407 = vst [vmem:[%s170 + $0x150] sm:$0xf] %v2279
      %2408 = vst [vmem:[%s170 + $0x154] sm:$0xf] %v2280
      %2409 = vst [vmem:[%s170 + $0x158] sm:$0xf] %v2281
      %2410 = vst [vmem:[%s170 + $0x15c] sm:$0xf] %v2282
      %2411 = vst [vmem:[%s170 + $0x160] sm:$0xf] %v2283
      %2412 = vst [vmem:[%s170 + $0x164] sm:$0xf] %v2284
      %2413 = vst [vmem:[%s170 + $0x168] sm:$0xf] %v2285
      %2414 = vst [vmem:[%s170 + $0x16c] sm:$0xf] %v2286
      %2415 = vst [vmem:[%s170 + $0x170] sm:$0xf] %v2287
      %2416 = vst [vmem:[%s170 + $0x174] sm:$0xf] %v2288
      %2417 = vst [vmem:[%s170 + $0x178] sm:$0xf] %v2289
      %2418 = vst [vmem:[%s170 + $0x17c] sm:$0xf] %v2290
      %2419 = vst [vmem:[%s170 + $0x180] sm:$0xf] %v2291
      %2420 = vst [vmem:[%s170 + $0x184] sm:$0xf] %v2292
      %2421 = vst [vmem:[%s170 + $0x188] sm:$0xf] %v2293
      %2422 = vst [vmem:[%s170 + $0x18c] sm:$0xf] %v2294
      %2423 = vst [vmem:[%s170 + $0x190] sm:$0xf] %v2295
      %2424 = vst [vmem:[%s170 + $0x194] sm:$0xf] %v2296
      %2425 = vst [vmem:[%s170 + $0x198] sm:$0xf] %v2297
      %2426 = vst [vmem:[%s170 + $0x19c] sm:$0xf] %v2298
      %2427 = vst [vmem:[%s170 + $0x1a0] sm:$0xf] %v2299
      %2428 = vst [vmem:[%s170 + $0x1a4] sm:$0xf] %v2300
      %2429 = vst [vmem:[%s170 + $0x1a8] sm:$0xf] %v2301
      %2430 = vst [vmem:[%s170 + $0x1ac] sm:$0xf] %v2302
      %2431 = vst [vmem:[%s170 + $0x1b0] sm:$0xf] %v2303
      %2432 = vst [vmem:[%s170 + $0x1b4] sm:$0xf] %v2304
      %2433 = vst [vmem:[%s170 + $0x1b8] sm:$0xf] %v2305
      %2434 = vst [vmem:[%s170 + $0x1bc] sm:$0xf] %v2306
      %2435 = vst [vmem:[%s170 + $0x1c0] sm:$0xf] %v2307
      %2436 = vst [vmem:[%s170 + $0x1c4] sm:$0xf] %v2308
      %2437 = vst [vmem:[%s170 + $0x1c8] sm:$0xf] %v2309
      %2438 = vst [vmem:[%s170 + $0x1cc] sm:$0xf] %v2310
      %2439 = vst [vmem:[%s170 + $0x1d0] sm:$0xf] %v2311
      %2440 = vst [vmem:[%s170 + $0x1d4] sm:$0xf] %v2312
      %2441 = vst [vmem:[%s170 + $0x1d8] sm:$0xf] %v2313
      %2442 = vst [vmem:[%s170 + $0x1dc] sm:$0xf] %v2314
      %2443 = vst [vmem:[%s170 + $0x1e0] sm:$0xf] %v2315
      %2444 = vst [vmem:[%s170 + $0x1e4] sm:$0xf] %v2316
      %2445 = vst [vmem:[%s170 + $0x1e8] sm:$0xf] %v2317
      %2446 = vst [vmem:[%s170 + $0x1ec] sm:$0xf] %v2318
      %2447 = vst [vmem:[%s170 + $0x1f0] sm:$0xf] %v2319
      %2448 = vst [vmem:[%s170 + $0x1f4] sm:$0xf] %v2320
      %2449 = vst [vmem:[%s170 + $0x1f8] sm:$0xf] %v2321
      %2450 = vst [vmem:[%s170 + $0x1fc] sm:$0xf] %v2322
      %p2451 = scmp.lt.s32.totalorder %s14, 1
      %s2452 = scalar_select %p2451, %s14, 1
      %s2453 = smul.addr %s2452, 128
      %s2454 = smul.addr %s2453, 4
      %s2455 = scalar_lea.vmem %s3, %s2454
      // Predicated region
      $region33: #{_lambda_.10} parent=31 // pred_check
        %p2456 = pneg %p100
      $region34: #{_lambda_.10} parent=31 // pred_check_branch
        %2458 = sbr.rel (%p2456) target = $region36
      $region35: #{_lambda_.10} parent=31 // pred_region
        _
      $region36: #{_lambda_.10} parent=31 // pred_fallthru
        _
    $region32: #{_lambda_.10} parent=5 // pred_fallthru
      _
    %p2459 = scmp.le.s32.totalorder 2, %s9
    // Predicated region
    $region37: #{_lambda_.10} parent=5 // pred_check
      %p2460 = pneg %p2459
    $region38: #{_lambda_.10} parent=5 // pred_check_branch
      %2462 = sbr.rel (%p2460) target = $region40
    $region39: #{_lambda_.10} parent=5 // pred_region
      %s2463 = ssub.s32 %s9, 2
      // Predicated region
      $region41: #{_lambda_.10} parent=39 // pred_check
        %p2464 = pneg %p106
      $region42: #{_lambda_.10} parent=39 // pred_check_branch
        %2466 = sbr.rel (%p2464) target = $region44
      $region43: #{_lambda_.10} parent=39 // pred_region
        %p2467 = scmp.lt.s32.totalorder %s15, 1
        %s2468 = scalar_select %p2467, %s15, 1
        %s2469 = smul.addr %s2468, 128
        %s2470 = smul.addr %s2469, 4
        %s2471 = scalar_lea.vmem %s3, %s2470
      $region44: #{_lambda_.10} parent=39 // pred_fallthru
        _
    $region40: #{_lambda_.10} parent=5 // pred_fallthru
      _
  $region6: #{_lambda_.10} parent=0 // loop_footer
    %s13 = sadd.s32 1, %s9
  $region7: #{_lambda_.10} parent=0 // loop_footer_branch
    %8 = sbr.rel target = $region3
  $region8: #{_lambda_.10} parent=0 // loop_exit
    _

// kernel: _lambda_.11
$region0: #{_lambda_.11}
  #allocation0 [shape = 'u32[]', space=smem, size = 0x4, offset = 0x4, fixed_abs, tag = 'smem constant byte address 0x4 - core index']
  #allocation1 [shape = 'u32[72,128]{1,0:T(1,128)}', space=vmem, size = 0x9000, scoped, tag = 'internal scratch']
  %s0 = inlined_call_operand.vmem [shape: bf16[2,256,152], index: 0, kind: input, shape index: {}]
  %s1 = inlined_call_operand.vmem [shape: bf16[152,128], index: 1, kind: input, shape index: {}]
  %s2 = inlined_call_operand.vmem [shape: f32[8,128], index: 2, kind: input, shape index: {}]
  %s3 = inlined_call_operand.vmem [shape: bf16[2,256,128], index: 3, kind: output, shape index: {}]
  %s4 = sld [smem:[#allocation0]]
  $region45: #{_lambda_.11} parent=0
    _
  %s6 = ssub.s32 1, %s4
  %s7 = scalar_select 0, %s6, %s4
  loop: start=0, step=1, limit=4
  $region2: #{_lambda_.11} parent=0 // loop_pre_header
    _
  $region3: #{_lambda_.11} parent=0 // loop_header
    %s9 = sphi 0, %s13
    %p10 = scmp.ge.s32.totalorder %s9, 4
    %s19 = sphi 0, %s21
    %s22 = sphi 0, %s19
    %s23 = sphi 0, %s22
    %s39 = sphi 0, %s23
    %s43 = sphi 0, %s43
    %s45 = sphi 0, %s43
    %s46 = sphi 0, %s45
    %s60 = sphi 0, %s46
    %s64 = sphi 0, %s64
    %s66 = sphi 0, %s64
    %s67 = sphi 0, %s66
    %s81 = sphi 0, %s67
    %s87 = sphi 0, %s89
    %s90 = sphi 0, %s87
    %s91 = sphi 0, %s90
    %s107 = sphi 0, %s91
  $region4: #{_lambda_.11} parent=0 // loop_header_branch
    %12 = sbr.rel (%p10) target = $region8
  $region5: #{_lambda_.11} parent=0 // loop_body
    %s14 = ssub.s32 %s9, 1
    %s15 = ssub.s32 %s9, 2
    %s16 = sadd.s32 %s9, 1
    %s17 = ssub.s32 %s9, %s16
    %p18 = scmp.eq.s32.totalorder %s17, 0
    %s20 = sadd.s32 %s19, 1
    %s21 = scalar_select %p18, %s19, %s20
    %p24 = pneg %p18
    %p25 = scmp.eq.s32.totalorder %s9, 1
    %p26 = por %p24, %p25
    %p27 = scmp.ne.s32.totalorder %s19, %s22
    %p28 = scmp.eq.s32.totalorder %s9, 0
    %p29 = por %p27, %p28
    %p30 = scmp.ne.s32.totalorder %s19, %s22
    %p31 = scmp.eq.s32.totalorder %s14, 1
    %p32 = por %p30, %p31
    %p33 = scmp.ne.s32.totalorder %s22, %s23
    %p34 = scmp.eq.s32.totalorder %s14, 0
    %p35 = por %p33, %p34
    %p36 = scmp.ne.s32.totalorder %s22, %s23
    %p37 = scmp.eq.s32.totalorder %s15, 1
    %p38 = por %p36, %p37
    %p40 = scmp.ne.s32.totalorder %s23, %s39
    %p41 = scmp.eq.s32.totalorder %s15, 0
    %p42 = por %p40, %p41
    %s44 = sadd.s32 %s43, 1
    %p47 = scmp.eq.s32.totalorder %s9, 1
    %p48 = scmp.ne.s32.totalorder %s43, %s45
    %p49 = scmp.eq.s32.totalorder %s9, 0
    %p50 = por %p48, %p49
    %p51 = scmp.ne.s32.totalorder %s43, %s45
    %p52 = scmp.eq.s32.totalorder %s14, 1
    %p53 = por %p51, %p52
    %p54 = scmp.ne.s32.totalorder %s45, %s46
    %p55 = scmp.eq.s32.totalorder %s14, 0
    %p56 = por %p54, %p55
    %p57 = scmp.ne.s32.totalorder %s45, %s46
    %p58 = scmp.eq.s32.totalorder %s15, 1
    %p59 = por %p57, %p58
    %p61 = scmp.ne.s32.totalorder %s46, %s60
    %p62 = scmp.eq.s32.totalorder %s15, 0
    %p63 = por %p61, %p62
    %s65 = sadd.s32 %s64, 1
    %p68 = scmp.eq.s32.totalorder %s9, 1
    %p69 = scmp.ne.s32.totalorder %s64, %s66
    %p70 = scmp.eq.s32.totalorder %s9, 0
    %p71 = por %p69, %p70
    %p72 = scmp.ne.s32.totalorder %s64, %s66
    %p73 = scmp.eq.s32.totalorder %s14, 1
    %p74 = por %p72, %p73
    %p75 = scmp.ne.s32.totalorder %s66, %s67
    %p76 = scmp.eq.s32.totalorder %s14, 0
    %p77 = por %p75, %p76
    %p78 = scmp.ne.s32.totalorder %s66, %s67
    %p79 = scmp.eq.s32.totalorder %s15, 1
    %p80 = por %p78, %p79
    %p82 = scmp.ne.s32.totalorder %s67, %s81
    %p83 = scmp.eq.s32.totalorder %s15, 0
    %p84 = por %p82, %p83
    %s85 = ssub.s32 %s9, %s16
    %p86 = scmp.eq.s32.totalorder %s85, 0
    %s88 = sadd.s32 %s87, 1
    %s89 = scalar_select %p86, %s87, %s88
    %p92 = pneg %p86
    %p93 = scmp.eq.s32.totalorder %s9, 1
    %p94 = por %p92, %p93
    %p95 = scmp.ne.s32.totalorder %s87, %s90
    %p96 = scmp.eq.s32.totalorder %s9, 0
    %p97 = por %p95, %p96
    %p98 = scmp.ne.s32.totalorder %s87, %s90
    %p99 = scmp.eq.s32.totalorder %s14, 1
    %p100 = por %p98, %p99
    %p101 = scmp.ne.s32.totalorder %s90, %s91
    %p102 = scmp.eq.s32.totalorder %s14, 0
    %p103 = por %p101, %p102
    %p104 = scmp.ne.s32.totalorder %s90, %s91
    %p105 = scmp.eq.s32.totalorder %s15, 1
    %p106 = por %p104, %p105
    %p108 = scmp.ne.s32.totalorder %s91, %s107
    %p109 = scmp.eq.s32.totalorder %s15, 0
    %p110 = por %p108, %p109
    %p111 = scmp.le.s32.totalorder 1, %s9
    %p112 = scmp.lt.s32.totalorder %s9, 3
    %p113 = pnand %p111, %p112
    %p114 = pneg %p113
    // Predicated region
    $region9: #{_lambda_.11} parent=5 // pred_check
      _
    $region10: #{_lambda_.11} parent=5 // pred_check_branch
      %116 = sbr.rel (%p113) target = $region12
    $region11: #{_lambda_.11} parent=5 // pred_region
      %s117 = ssub.s32 %s9, 1
      // Predicated region
      $region13: #{_lambda_.11} parent=11 // pred_check
        %p118 = pneg %p56
      $region14: #{_lambda_.11} parent=11 // pred_check_branch
        %120 = sbr.rel (%p118) target = $region16
      $region15: #{_lambda_.11} parent=11 // pred_region
        _
      $region16: #{_lambda_.11} parent=11 // pred_fallthru
        _
      // Predicated region
      $region17: #{_lambda_.11} parent=11 // pred_check
        %p121 = pneg %p77
      $region18: #{_lambda_.11} parent=11 // pred_check_branch
        %123 = sbr.rel (%p121) target = $region20
      $region19: #{_lambda_.11} parent=11 // pred_region
        _
      $region20: #{_lambda_.11} parent=11 // pred_fallthru
        _
    $region12: #{_lambda_.11} parent=5 // pred_fallthru
      _
    %p124 = scmp.lt.s32.totalorder %s9, 2
    // Predicated region
    $region21: #{_lambda_.11} parent=5 // pred_check
      %p125 = pneg %p124
    $region22: #{_lambda_.11} parent=5 // pred_check_branch
      %127 = sbr.rel (%p125) target = $region24
    $region23: #{_lambda_.11} parent=5 // pred_region
      // Predicated region
      $region25: #{_lambda_.11} parent=23 // pred_check
        %p128 = pneg %p29
      $region26: #{_lambda_.11} parent=23 // pred_check_branch
        %130 = sbr.rel (%p128) target = $region28
      $region27: #{_lambda_.11} parent=23 // pred_region
        %p131 = scmp.lt.s32.totalorder %s9, 1
        %s132 = scalar_select %p131, %s9, 1
        %s133 = smul.addr %s132, 64
        %s134 = smul.addr %s133, 4
        %s135 = scalar_lea.vmem %s0, %s134
      $region28: #{_lambda_.11} parent=23 // pred_fallthru
        _
    $region24: #{_lambda_.11} parent=5 // pred_fallthru
      _
    %p136 = scmp.le.s32.totalorder 1, %s9
    %p137 = scmp.lt.s32.totalorder %s9, 3
    %p138 = pnand %p136, %p137
    %p139 = pneg %p138
    // Predicated region
    $region29: #{_lambda_.11} parent=5 // pred_check
      _
    $region30: #{_lambda_.11} parent=5 // pred_check_branch
      %141 = sbr.rel (%p138) target = $region32
    $region31: #{_lambda_.11} parent=5 // pred_region
      %s142 = ssub.s32 %s9, 1
      %p143 = scmp.lt.s32.totalorder %s14, 1
      %s144 = scalar_select %p143, %s14, 1
      %s145 = smul.addr %s144, 64
      %s146 = smul.addr %s145, 4
      %s147 = scalar_lea.vmem %s0, %s146
      %p148 = pneg %p35
      %p149 = pneg %p32
      %p150 = pneg %p56
      %p151 = pneg %p53
      %p152 = pneg %p77
      %p153 = pneg %p74
      %p154 = pneg %p103
      %p155 = pneg %p100
      %p156 = scmp.lt.s32.totalorder %s14, 1
      %s157 = scalar_select %p156, %s14, 1
      %s158 = smul.addr %s157, 32
      %s159 = smul.addr %s158, 4
      %s160 = scalar_lea.vmem %s3, %s159
      %p161 = scmp.lt.s32.totalorder %s14, 1
      %s162 = scalar_select %p161, %s14, 1
      %s163 = smul.addr %s162, 64
      %s164 = smul.addr %s163, 4
      %s165 = scalar_lea.vmem %s0, %s164
      %p166 = scmp.lt.s32.totalorder %s14, 1
      %s167 = scalar_select %p166, %s14, 1
      %s168 = smul.addr %s167, 32
      %s169 = smul.addr %s168, 4
      %s170 = scalar_lea.vmem %s3, %s169
      %v172 = vld [vmem:[%s165] sm:$0xff]
      %v173 = vld [vmem:[%s165 + $0x8] sm:$0xff]
      %v174 = vld [vmem:[%s165 + $0x10] sm:$0xff]
      %v175 = vld [vmem:[%s165 + $0x18] sm:$0xff]
      %v176 = vld [vmem:[%s165 + $0x20] sm:$0xff]
      %v177 = vld [vmem:[%s165 + $0x28] sm:$0xff]
      %v178 = vld [vmem:[%s165 + $0x30] sm:$0xff]
      %v179 = vld [vmem:[%s165 + $0x38] sm:$0xff]
      %v180 = vld [vmem:[%s165 + $0x40] sm:$0xff]
      %v181 = vld [vmem:[%s165 + $0x48] sm:$0xff]
      %v182 = vld [vmem:[%s165 + $0x50] sm:$0xff]
      %v183 = vld [vmem:[%s165 + $0x58] sm:$0xff]
      %v184 = vld [vmem:[%s165 + $0x60] sm:$0xff]
      %v185 = vld [vmem:[%s165 + $0x68] sm:$0xff]
      %v186 = vld [vmem:[%s165 + $0x70] sm:$0xff]
      %v187 = vld [vmem:[%s165 + $0x78] sm:$0xff]
      %v188 = vld [vmem:[%s165 + $0x80] sm:$0xff]
      %v189 = vld [vmem:[%s165 + $0x88] sm:$0xff]
      %v190 = vld [vmem:[%s165 + $0x90] sm:$0xff]
      %v191 = vld [vmem:[%s165 + $0x98] sm:$0xff]
      %v192 = vld [vmem:[%s165 + $0xa0] sm:$0xff]
      %v193 = vld [vmem:[%s165 + $0xa8] sm:$0xff]
      %v194 = vld [vmem:[%s165 + $0xb0] sm:$0xff]
      %v195 = vld [vmem:[%s165 + $0xb8] sm:$0xff]
      %v196 = vld [vmem:[%s165 + $0xc0] sm:$0xff]
      %v197 = vld [vmem:[%s165 + $0xc8] sm:$0xff]
      %v198 = vld [vmem:[%s165 + $0xd0] sm:$0xff]
      %v199 = vld [vmem:[%s165 + $0xd8] sm:$0xff]
      %v200 = vld [vmem:[%s165 + $0xe0] sm:$0xff]
      %v201 = vld [vmem:[%s165 + $0xe8] sm:$0xff]
      %v202 = vld [vmem:[%s165 + $0xf0] sm:$0xff]
      %v203 = vld [vmem:[%s165 + $0xf8] sm:$0xff]
      %v204 = vld [vmem:[%s1] sm:$0xf]
      %v205 = vld [vmem:[%s1 + $0x4] sm:$0xf]
      %v206 = vld [vmem:[%s1 + $0x8] sm:$0xf]
      %v207 = vld [vmem:[%s1 + $0xc] sm:$0xf]
      %v208 = vld [vmem:[%s1 + $0x10] sm:$0xf]
      %v209 = vld [vmem:[%s1 + $0x14] sm:$0xf]
      %v210 = vld [vmem:[%s1 + $0x18] sm:$0xf]
      %v211 = vld [vmem:[%s1 + $0x1c] sm:$0xf]
      %v212 = vld [vmem:[%s1 + $0x20] sm:$0xf]
      %v213 = vld [vmem:[%s1 + $0x24] sm:$0xf]
      %v214 = vld [vmem:[%s1 + $0x28] sm:$0xf]
      %v215 = vld [vmem:[%s1 + $0x2c] sm:$0xf]
      %v216 = vld [vmem:[%s1 + $0x30] sm:$0xf]
      %v217 = vld [vmem:[%s1 + $0x34] sm:$0xf]
      %v218 = vld [vmem:[%s1 + $0x38] sm:$0xf]
      %v219 = vld [vmem:[%s1 + $0x3c] sm:$0xf]
      %v220 = vld [vmem:[%s1 + $0x40] sm:$0xf]
      %v221 = vld [vmem:[%s1 + $0x44] sm:$0xf]
      %v222 = vld [vmem:[%s1 + $0x48] sm:$0xf]
      %v255 = vunpack.c.l.b16 %v172
      %v256 = vunpack.c.h.b16 %v172
      %v257 = vunpack.c.l.b16 %v173
      %v258 = vunpack.c.h.b16 %v173
      %v259 = vunpack.c.l.b16 %v174
      %v260 = vunpack.c.h.b16 %v174
      %v261 = vunpack.c.l.b16 %v175
      %v262 = vunpack.c.h.b16 %v175
      %v263 = vunpack.c.l.b16 %v176
      %v264 = vunpack.c.h.b16 %v176
      %v265 = vunpack.c.l.b16 %v177
      %v266 = vunpack.c.h.b16 %v177
      %v267 = vunpack.c.l.b16 %v178
      %v268 = vunpack.c.h.b16 %v178
      %v269 = vunpack.c.l.b16 %v179
      %v270 = vunpack.c.h.b16 %v179
      %v271 = vunpack.c.l.b16 %v180
      %v272 = vunpack.c.h.b16 %v180
      %v273 = vunpack.c.l.b16 %v181
      %v274 = vunpack.c.h.b16 %v181
      %v275 = vunpack.c.l.b16 %v182
      %v276 = vunpack.c.h.b16 %v182
      %v277 = vunpack.c.l.b16 %v183
      %v278 = vunpack.c.h.b16 %v183
      %v279 = vunpack.c.l.b16 %v184
      %v280 = vunpack.c.h.b16 %v184
      %v281 = vunpack.c.l.b16 %v185
      %v282 = vunpack.c.h.b16 %v185
      %v283 = vunpack.c.l.b16 %v186
      %v284 = vunpack.c.h.b16 %v186
      %v285 = vunpack.c.l.b16 %v187
      %v286 = vunpack.c.h.b16 %v187
      %v287 = vunpack.c.l.b16 %v188
      %v288 = vunpack.c.h.b16 %v188
      %v289 = vunpack.c.l.b16 %v189
      %v290 = vunpack.c.h.b16 %v189
      %v291 = vunpack.c.l.b16 %v190
      %v292 = vunpack.c.h.b16 %v190
      %v293 = vunpack.c.l.b16 %v191
      %v294 = vunpack.c.h.b16 %v191
      %v295 = vunpack.c.l.b16 %v192
      %v296 = vunpack.c.h.b16 %v192
      %v297 = vunpack.c.l.b16 %v193
      %v298 = vunpack.c.h.b16 %v193
      %v299 = vunpack.c.l.b16 %v194
      %v300 = vunpack.c.h.b16 %v194
      %v301 = vunpack.c.l.b16 %v195
      %v302 = vunpack.c.h.b16 %v195
      %v303 = vunpack.c.l.b16 %v196
      %v304 = vunpack.c.h.b16 %v196
      %v305 = vunpack.c.l.b16 %v197
      %v306 = vunpack.c.h.b16 %v197
      %v307 = vunpack.c.l.b16 %v198
      %v308 = vunpack.c.h.b16 %v198
      %v309 = vunpack.c.l.b16 %v199
      %v310 = vunpack.c.h.b16 %v199
      %v311 = vunpack.c.l.b16 %v200
      %v312 = vunpack.c.h.b16 %v200
      %v313 = vunpack.c.l.b16 %v201
      %v314 = vunpack.c.h.b16 %v201
      %v315 = vunpack.c.l.b16 %v202
      %v316 = vunpack.c.h.b16 %v202
      %v317 = vunpack.c.l.b16 %v203
      %v318 = vunpack.c.h.b16 %v203
      %v319 = vpack.c.b16 %v257, %v255
      %v320 = vpack.c.b16 %v258, %v256
      %v321 = vpack.c.b16 %v261, %v259
      %v322 = vpack.c.b16 %v262, %v260
      %v323 = vpack.c.b16 %v265, %v263
      %v324 = vpack.c.b16 %v266, %v264
      %v325 = vpack.c.b16 %v269, %v267
      %v326 = vpack.c.b16 %v270, %v268
      %v327 = vpack.c.b16 %v273, %v271
      %v328 = vpack.c.b16 %v274, %v272
      %v329 = vpack.c.b16 %v277, %v275
      %v330 = vpack.c.b16 %v278, %v276
      %v331 = vpack.c.b16 %v281, %v279
      %v332 = vpack.c.b16 %v282, %v280
      %v333 = vpack.c.b16 %v285, %v283
      %v334 = vpack.c.b16 %v286, %v284
      %v335 = vpack.c.b16 %v289, %v287
      %v336 = vpack.c.b16 %v290, %v288
      %v337 = vpack.c.b16 %v293, %v291
      %v338 = vpack.c.b16 %v294, %v292
      %v339 = vpack.c.b16 %v297, %v295
      %v340 = vpack.c.b16 %v298, %v296
      %v341 = vpack.c.b16 %v301, %v299
      %v342 = vpack.c.b16 %v302, %v300
      %v343 = vpack.c.b16 %v305, %v303
      %v344 = vpack.c.b16 %v306, %v304
      %v345 = vpack.c.b16 %v309, %v307
      %v346 = vpack.c.b16 %v310, %v308
      %v347 = vpack.c.b16 %v313, %v311
      %v348 = vpack.c.b16 %v314, %v312
      %v349 = vpack.c.b16 %v317, %v315
      %v350 = vpack.c.b16 %v318, %v316
      %v386 = vunpack.c.l.b16 %v204
      %v387 = vunpack.c.l.b16 %v205
      %v388 = vunpack.c.l.b16 %v206
      %v389 = vunpack.c.l.b16 %v207
      %v390 = vunpack.c.l.b16 %v208
      %v391 = vunpack.c.l.b16 %v209
      %v392 = vunpack.c.l.b16 %v210
      %v393 = vunpack.c.l.b16 %v211
      %v394 = vunpack.c.l.b16 %v212
      %v395 = vunpack.c.l.b16 %v213
      %v396 = vunpack.c.l.b16 %v214
      %v397 = vunpack.c.l.b16 %v215
      %v398 = vunpack.c.l.b16 %v216
      %v399 = vunpack.c.l.b16 %v217
      %v400 = vunpack.c.l.b16 %v218
      %v401 = vunpack.c.l.b16 %v219
      %v402 = vunpack.c.l.b16 %v220
      %v403 = vunpack.c.l.b16 %v221
      %v404 = vunpack.c.l.b16 %v222
      %v405 = vpack.c.b16 %v387, %v386
      %v406 = vpack.c.b16 %v389, %v388
      %v407 = vpack.c.b16 %v391, %v390
      %v408 = vpack.c.b16 %v393, %v392
      %v409 = vpack.c.b16 %v395, %v394
      %v410 = vpack.c.b16 %v397, %v396
      %v411 = vpack.c.b16 %v399, %v398
      %v412 = vpack.c.b16 %v401, %v400
      %v413 = vpack.c.b16 %v403, %v402
      %v414 = vpack.c.b16 %v404, %v404
      %vm424 = vcmask 195584
      %v426 = vsel %vm424, %v320, 0
      %v429 = vsel %vm424, %v322, 0
      %v432 = vsel %vm424, %v324, 0
      %v435 = vsel %vm424, %v326, 0
      %v438 = vsel %vm424, %v328, 0
      %v441 = vsel %vm424, %v330, 0
      %v444 = vsel %vm424, %v332, 0
      %v447 = vsel %vm424, %v334, 0
      %v450 = vsel %vm424, %v336, 0
      %v453 = vsel %vm424, %v338, 0
      %v456 = vsel %vm424, %v340, 0
      %v459 = vsel %vm424, %v342, 0
      %v462 = vsel %vm424, %v344, 0
      %v465 = vsel %vm424, %v346, 0
      %v468 = vsel %vm424, %v348, 0
      %v471 = vsel %vm424, %v350, 0
      %vm473 = vcmask 1043456
      %v475 = vsel %vm473, %v414, 0
      %477 = vmatpush.bf16.msra.mxu0 %v412
      %478 = vmatpush.bf16.msra.mxu0 %v411
      %479 = vmatpush.bf16.msra.mxu0 %v410
      %480 = vmatpush.bf16.msra.mxu0 %v409
      %481 = vmatpush.bf16.msra.mxu0 %v408
      %482 = vmatpush.bf16.msra.mxu0 %v407
      %483 = vmatpush.bf16.msra.mxu0 %v406
      %484 = vmatpush.bf16.msra.mxu0 %v405
      %485 = vmatmul.bf16.gmra.mxu0 %v319
      %v486 = vpop.f32.mrf.mxu0
      %v487 = vadd.f32 0.0, %v486
      %v488 = vpop.f32.mrf.mxu0
      %v489 = vadd.f32 0.0, %v488
      %490 = vmatmul.bf16.gmra.mxu0 %v321
      %v491 = vpop.f32.mrf.mxu0
      %v492 = vadd.f32 0.0, %v491
      %v493 = vpop.f32.mrf.mxu0
      %v494 = vadd.f32 0.0, %v493
      %495 = vmatmul.bf16.gmra.mxu0 %v323
      %v496 = vpop.f32.mrf.mxu0
      %v497 = vadd.f32 0.0, %v496
      %v498 = vpop.f32.mrf.mxu0
      %v499 = vadd.f32 0.0, %v498
      %500 = vmatmul.bf16.gmra.mxu0 %v325
      %v501 = vpop.f32.mrf.mxu0
      %v502 = vadd.f32 0.0, %v501
      %v503 = vpop.f32.mrf.mxu0
      %v504 = vadd.f32 0.0, %v503
      %505 = vmatmul.bf16.gmra.mxu0 %v327
      %v506 = vpop.f32.mrf.mxu0
      %v507 = vadd.f32 0.0, %v506
      %v508 = vpop.f32.mrf.mxu0
      %v509 = vadd.f32 0.0, %v508
      %510 = vmatmul.bf16.gmra.mxu0 %v329
      %v511 = vpop.f32.mrf.mxu0
      %v512 = vadd.f32 0.0, %v511
      %v513 = vpop.f32.mrf.mxu0
      %v514 = vadd.f32 0.0, %v513
      %515 = vmatmul.bf16.gmra.mxu0 %v331
      %v516 = vpop.f32.mrf.mxu0
      %v517 = vadd.f32 0.0, %v516
      %v518 = vpop.f32.mrf.mxu0
      %v519 = vadd.f32 0.0, %v518
      %520 = vmatmul.bf16.gmra.mxu0 %v333
      %v521 = vpop.f32.mrf.mxu0
      %v522 = vadd.f32 0.0, %v521
      %v523 = vpop.f32.mrf.mxu0
      %v524 = vadd.f32 0.0, %v523
      %525 = vmatmul.bf16.gmra.mxu0 %v335
      %v526 = vpop.f32.mrf.mxu0
      %v527 = vadd.f32 0.0, %v526
      %v528 = vpop.f32.mrf.mxu0
      %v529 = vadd.f32 0.0, %v528
      %530 = vmatmul.bf16.gmra.mxu0 %v337
      %v531 = vpop.f32.mrf.mxu0
      %v532 = vadd.f32 0.0, %v531
      %v533 = vpop.f32.mrf.mxu0
      %v534 = vadd.f32 0.0, %v533
      %535 = vmatmul.bf16.gmra.mxu0 %v339
      %v536 = vpop.f32.mrf.mxu0
      %v537 = vadd.f32 0.0, %v536
      %v538 = vpop.f32.mrf.mxu0
      %v539 = vadd.f32 0.0, %v538
      %540 = vmatmul.bf16.gmra.mxu0 %v341
      %v541 = vpop.f32.mrf.mxu0
      %v542 = vadd.f32 0.0, %v541
      %v543 = vpop.f32.mrf.mxu0
      %v544 = vadd.f32 0.0, %v543
      %545 = vmatmul.bf16.gmra.mxu0 %v343
      %v546 = vpop.f32.mrf.mxu0
      %v547 = vadd.f32 0.0, %v546
      %v548 = vpop.f32.mrf.mxu0
      %v549 = vadd.f32 0.0, %v548
      %550 = vmatmul.bf16.gmra.mxu0 %v345
      %v551 = vpop.f32.mrf.mxu0
      %v552 = vadd.f32 0.0, %v551
      %v553 = vpop.f32.mrf.mxu0
      %v554 = vadd.f32 0.0, %v553
      %555 = vmatmul.bf16.gmra.mxu0 %v347
      %v556 = vpop.f32.mrf.mxu0
      %v557 = vadd.f32 0.0, %v556
      %v558 = vpop.f32.mrf.mxu0
      %v559 = vadd.f32 0.0, %v558
      %560 = vmatmul.bf16.gmra.mxu0 %v349
      %v561 = vpop.f32.mrf.mxu0
      %v562 = vadd.f32 0.0, %v561
      %v563 = vpop.f32.mrf.mxu0
      %v564 = vadd.f32 0.0, %v563
      %565 = vdwg.mxu0
      %566 = vmatpush.bf16.msra.mxu0 0
      %567 = vmatpush.bf16.msra.mxu0 0
      %568 = vmatpush.bf16.msra.mxu0 0
      %569 = vmatpush.bf16.msra.mxu0 0
      %570 = vmatpush.bf16.msra.mxu0 0
      %571 = vmatpush.bf16.msra.mxu0 0
      %572 = vmatpush.bf16.msra.mxu0 %v475
      %573 = vmatpush.bf16.msra.mxu0 %v413
      %574 = vmatmul.bf16.gmra.mxu0 %v426
      %v575 = vpop.f32.mrf.mxu0
      %v576 = vadd.f32 %v487, %v575
      %v577 = vpop.f32.mrf.mxu0
      %v578 = vadd.f32 %v489, %v577
      %579 = vmatmul.bf16.gmra.mxu0 %v429
      %v580 = vpop.f32.mrf.mxu0
      %v581 = vadd.f32 %v492, %v580
      %v582 = vpop.f32.mrf.mxu0
      %v583 = vadd.f32 %v494, %v582
      %584 = vmatmul.bf16.gmra.mxu0 %v432
      %v585 = vpop.f32.mrf.mxu0
      %v586 = vadd.f32 %v497, %v585
      %v587 = vpop.f32.mrf.mxu0
      %v588 = vadd.f32 %v499, %v587
      %589 = vmatmul.bf16.gmra.mxu0 %v435
      %v590 = vpop.f32.mrf.mxu0
      %v591 = vadd.f32 %v502, %v590
      %v592 = vpop.f32.mrf.mxu0
      %v593 = vadd.f32 %v504, %v592
      %594 = vmatmul.bf16.gmra.mxu0 %v438
      %v595 = vpop.f32.mrf.mxu0
      %v596 = vadd.f32 %v507, %v595
      %v597 = vpop.f32.mrf.mxu0
      %v598 = vadd.f32 %v509, %v597
      %599 = vmatmul.bf16.gmra.mxu0 %v441
      %v600 = vpop.f32.mrf.mxu0
      %v601 = vadd.f32 %v512, %v600
      %v602 = vpop.f32.mrf.mxu0
      %v603 = vadd.f32 %v514, %v602
      %604 = vmatmul.bf16.gmra.mxu0 %v444
      %v605 = vpop.f32.mrf.mxu0
      %v606 = vadd.f32 %v517, %v605
      %v607 = vpop.f32.mrf.mxu0
      %v608 = vadd.f32 %v519, %v607
      %609 = vmatmul.bf16.gmra.mxu0 %v447
      %v610 = vpop.f32.mrf.mxu0
      %v611 = vadd.f32 %v522, %v610
      %v612 = vpop.f32.mrf.mxu0
      %v613 = vadd.f32 %v524, %v612
      %614 = vmatmul.bf16.gmra.mxu0 %v450
      %v615 = vpop.f32.mrf.mxu0
      %v616 = vadd.f32 %v527, %v615
      %v617 = vpop.f32.mrf.mxu0
      %v618 = vadd.f32 %v529, %v617
      %619 = vmatmul.bf16.gmra.mxu0 %v453
      %v620 = vpop.f32.mrf.mxu0
      %v621 = vadd.f32 %v532, %v620
      %v622 = vpop.f32.mrf.mxu0
      %v623 = vadd.f32 %v534, %v622
      %624 = vmatmul.bf16.gmra.mxu0 %v456
      %v625 = vpop.f32.mrf.mxu0
      %v626 = vadd.f32 %v537, %v625
      %v627 = vpop.f32.mrf.mxu0
      %v628 = vadd.f32 %v539, %v627
      %629 = vmatmul.bf16.gmra.mxu0 %v459
      %v630 = vpop.f32.mrf.mxu0
      %v631 = vadd.f32 %v542, %v630
      %v632 = vpop.f32.mrf.mxu0
      %v633 = vadd.f32 %v544, %v632
      %634 = vmatmul.bf16.gmra.mxu0 %v462
      %v635 = vpop.f32.mrf.mxu0
      %v636 = vadd.f32 %v547, %v635
      %v637 = vpop.f32.mrf.mxu0
      %v638 = vadd.f32 %v549, %v637
      %639 = vmatmul.bf16.gmra.mxu0 %v465
      %v640 = vpop.f32.mrf.mxu0
      %v641 = vadd.f32 %v552, %v640
      %v642 = vpop.f32.mrf.mxu0
      %v643 = vadd.f32 %v554, %v642
      %644 = vmatmul.bf16.gmra.mxu0 %v468
      %v645 = vpop.f32.mrf.mxu0
      %v646 = vadd.f32 %v557, %v645
      %v647 = vpop.f32.mrf.mxu0
      %v648 = vadd.f32 %v559, %v647
      %649 = vmatmul.bf16.gmra.mxu0 %v471
      %v650 = vpop.f32.mrf.mxu0
      %v651 = vadd.f32 %v562, %v650
      %v652 = vpop.f32.mrf.mxu0
      %v653 = vadd.f32 %v564, %v652
      %654 = vdwg.mxu0
      %v655 = vmax.f32 %v576, 0.0
      %v656 = vmax.f32 %v578, 0.0
      %v657 = vmax.f32 %v581, 0.0
      %v658 = vmax.f32 %v583, 0.0
      %v659 = vmax.f32 %v586, 0.0
      %v660 = vmax.f32 %v588, 0.0
      %v661 = vmax.f32 %v591, 0.0
      %v662 = vmax.f32 %v593, 0.0
      %v663 = vmax.f32 %v596, 0.0
      %v664 = vmax.f32 %v598, 0.0
      %v665 = vmax.f32 %v601, 0.0
      %v666 = vmax.f32 %v603, 0.0
      %v667 = vmax.f32 %v606, 0.0
      %v668 = vmax.f32 %v608, 0.0
      %v669 = vmax.f32 %v611, 0.0
      %v670 = vmax.f32 %v613, 0.0
      %v671 = vmax.f32 %v616, 0.0
      %v672 = vmax.f32 %v618, 0.0
      %v673 = vmax.f32 %v621, 0.0
      %v674 = vmax.f32 %v623, 0.0
      %v675 = vmax.f32 %v626, 0.0
      %v676 = vmax.f32 %v628, 0.0
      %v677 = vmax.f32 %v631, 0.0
      %v678 = vmax.f32 %v633, 0.0
      %v679 = vmax.f32 %v636, 0.0
      %v680 = vmax.f32 %v638, 0.0
      %v681 = vmax.f32 %v641, 0.0
      %v682 = vmax.f32 %v643, 0.0
      %v683 = vmax.f32 %v646, 0.0
      %v684 = vmax.f32 %v648, 0.0
      %v685 = vmax.f32 %v651, 0.0
      %v686 = vmax.f32 %v653, 0.0
      %v687 = vld [vmem:[%s2] sm:$0x1]
      %v688 = vperm.slane %v687, 0
      %v689 = vmul.f32 %v655, %v688
      %v690 = vmul.f32 %v656, %v688
      %v691 = vmul.f32 %v657, %v688
      %v692 = vmul.f32 %v658, %v688
      %v693 = vmul.f32 %v659, %v688
      %v694 = vmul.f32 %v660, %v688
      %v695 = vmul.f32 %v661, %v688
      %v696 = vmul.f32 %v662, %v688
      %v697 = vmul.f32 %v663, %v688
      %v698 = vmul.f32 %v664, %v688
      %v699 = vmul.f32 %v665, %v688
      %v700 = vmul.f32 %v666, %v688
      %v701 = vmul.f32 %v667, %v688
      %v702 = vmul.f32 %v668, %v688
      %v703 = vmul.f32 %v669, %v688
      %v704 = vmul.f32 %v670, %v688
      %v705 = vmul.f32 %v671, %v688
      %v706 = vmul.f32 %v672, %v688
      %v707 = vmul.f32 %v673, %v688
      %v708 = vmul.f32 %v674, %v688
      %v709 = vmul.f32 %v675, %v688
      %v710 = vmul.f32 %v676, %v688
      %v711 = vmul.f32 %v677, %v688
      %v712 = vmul.f32 %v678, %v688
      %v713 = vmul.f32 %v679, %v688
      %v714 = vmul.f32 %v680, %v688
      %v715 = vmul.f32 %v681, %v688
      %v716 = vmul.f32 %v682, %v688
      %v717 = vmul.f32 %v683, %v688
      %v718 = vmul.f32 %v684, %v688
      %v719 = vmul.f32 %v685, %v688
      %v720 = vmul.f32 %v686, %v688
      %v721 = vld [vmem:[%s2 + $0x1] sm:$0x1]
      %v722 = vperm.slane %v721, 0
      %v723 = vadd.f32 %v689, %v722
      %v724 = vadd.f32 %v690, %v722
      %v725 = vadd.f32 %v691, %v722
      %v726 = vadd.f32 %v692, %v722
      %v727 = vadd.f32 %v693, %v722
      %v728 = vadd.f32 %v694, %v722
      %v729 = vadd.f32 %v695, %v722
      %v730 = vadd.f32 %v696, %v722
      %v731 = vadd.f32 %v697, %v722
      %v732 = vadd.f32 %v698, %v722
      %v733 = vadd.f32 %v699, %v722
      %v734 = vadd.f32 %v700, %v722
      %v735 = vadd.f32 %v701, %v722
      %v736 = vadd.f32 %v702, %v722
      %v737 = vadd.f32 %v703, %v722
      %v738 = vadd.f32 %v704, %v722
      %v739 = vadd.f32 %v705, %v722
      %v740 = vadd.f32 %v706, %v722
      %v741 = vadd.f32 %v707, %v722
      %v742 = vadd.f32 %v708, %v722
      %v743 = vadd.f32 %v709, %v722
      %v744 = vadd.f32 %v710, %v722
      %v745 = vadd.f32 %v711, %v722
      %v746 = vadd.f32 %v712, %v722
      %v747 = vadd.f32 %v713, %v722
      %v748 = vadd.f32 %v714, %v722
      %v749 = vadd.f32 %v715, %v722
      %v750 = vadd.f32 %v716, %v722
      %v751 = vadd.f32 %v717, %v722
      %v752 = vadd.f32 %v718, %v722
      %v753 = vadd.f32 %v719, %v722
      %v754 = vadd.f32 %v720, %v722
      %v755 = vpack.c.bf16 %v723, %v723
      %v756 = vpack.c.bf16 %v724, %v724
      %v757 = vpack.c.bf16 %v725, %v725
      %v758 = vpack.c.bf16 %v726, %v726
      %v759 = vpack.c.bf16 %v727, %v727
      %v760 = vpack.c.bf16 %v728, %v728
      %v761 = vpack.c.bf16 %v729, %v729
      %v762 = vpack.c.bf16 %v730, %v730
      %v763 = vpack.c.bf16 %v731, %v731
      %v764 = vpack.c.bf16 %v732, %v732
      %v765 = vpack.c.bf16 %v733, %v733
      %v766 = vpack.c.bf16 %v734, %v734
      %v767 = vpack.c.bf16 %v735, %v735
      %v768 = vpack.c.bf16 %v736, %v736
      %v769 = vpack.c.bf16 %v737, %v737
      %v770 = vpack.c.bf16 %v738, %v738
      %v771 = vpack.c.bf16 %v739, %v739
      %v772 = vpack.c.bf16 %v740, %v740
      %v773 = vpack.c.bf16 %v741, %v741
      %v774 = vpack.c.bf16 %v742, %v742
      %v775 = vpack.c.bf16 %v743, %v743
      %v776 = vpack.c.bf16 %v744, %v744
      %v777 = vpack.c.bf16 %v745, %v745
      %v778 = vpack.c.bf16 %v746, %v746
      %v779 = vpack.c.bf16 %v747, %v747
      %v780 = vpack.c.bf16 %v748, %v748
      %v781 = vpack.c.bf16 %v749, %v749
      %v782 = vpack.c.bf16 %v750, %v750
      %v783 = vpack.c.bf16 %v751, %v751
      %v784 = vpack.c.bf16 %v752, %v752
      %v785 = vpack.c.bf16 %v753, %v753
      %v786 = vpack.c.bf16 %v754, %v754
      %787 = vst [vmem:[%s170] sm:$0xf] %v755
      %788 = vst [vmem:[%s170 + $0x4] sm:$0xf] %v756
      %789 = vst [vmem:[%s170 + $0x8] sm:$0xf] %v757
      %790 = vst [vmem:[%s170 + $0xc] sm:$0xf] %v758
      %791 = vst [vmem:[%s170 + $0x10] sm:$0xf] %v759
      %792 = vst [vmem:[%s170 + $0x14] sm:$0xf] %v760
      %793 = vst [vmem:[%s170 + $0x18] sm:$0xf] %v761
      %794 = vst [vmem:[%s170 + $0x1c] sm:$0xf] %v762
      %795 = vst [vmem:[%s170 + $0x20] sm:$0xf] %v763
      %796 = vst [vmem:[%s170 + $0x24] sm:$0xf] %v764
      %797 = vst [vmem:[%s170 + $0x28] sm:$0xf] %v765
      %798 = vst [vmem:[%s170 + $0x2c] sm:$0xf] %v766
      %799 = vst [vmem:[%s170 + $0x30] sm:$0xf] %v767
      %800 = vst [vmem:[%s170 + $0x34] sm:$0xf] %v768
      %801 = vst [vmem:[%s170 + $0x38] sm:$0xf] %v769
      %802 = vst [vmem:[%s170 + $0x3c] sm:$0xf] %v770
      %803 = vst [vmem:[%s170 + $0x40] sm:$0xf] %v771
      %804 = vst [vmem:[%s170 + $0x44] sm:$0xf] %v772
      %805 = vst [vmem:[%s170 + $0x48] sm:$0xf] %v773
      %806 = vst [vmem:[%s170 + $0x4c] sm:$0xf] %v774
      %807 = vst [vmem:[%s170 + $0x50] sm:$0xf] %v775
      %808 = vst [vmem:[%s170 + $0x54] sm:$0xf] %v776
      %809 = vst [vmem:[%s170 + $0x58] sm:$0xf] %v777
      %810 = vst [vmem:[%s170 + $0x5c] sm:$0xf] %v778
      %811 = vst [vmem:[%s170 + $0x60] sm:$0xf] %v779
      %812 = vst [vmem:[%s170 + $0x64] sm:$0xf] %v780
      %813 = vst [vmem:[%s170 + $0x68] sm:$0xf] %v781
      %814 = vst [vmem:[%s170 + $0x6c] sm:$0xf] %v782
      %815 = vst [vmem:[%s170 + $0x70] sm:$0xf] %v783
      %816 = vst [vmem:[%s170 + $0x74] sm:$0xf] %v784
      %817 = vst [vmem:[%s170 + $0x78] sm:$0xf] %v785
      %818 = vst [vmem:[%s170 + $0x7c] sm:$0xf] %v786
      %p819 = scmp.lt.s32.totalorder %s14, 1
      %s820 = scalar_select %p819, %s14, 1
      %s821 = smul.addr %s820, 32
      %s822 = smul.addr %s821, 4
      %s823 = scalar_lea.vmem %s3, %s822
      // Predicated region
      $region33: #{_lambda_.11} parent=31 // pred_check
        %p824 = pneg %p100
      $region34: #{_lambda_.11} parent=31 // pred_check_branch
        %826 = sbr.rel (%p824) target = $region36
      $region35: #{_lambda_.11} parent=31 // pred_region
        _
      $region36: #{_lambda_.11} parent=31 // pred_fallthru
        _
    $region32: #{_lambda_.11} parent=5 // pred_fallthru
      _
    %p827 = scmp.le.s32.totalorder 2, %s9
    // Predicated region
    $region37: #{_lambda_.11} parent=5 // pred_check
      %p828 = pneg %p827
    $region38: #{_lambda_.11} parent=5 // pred_check_branch
      %830 = sbr.rel (%p828) target = $region40
    $region39: #{_lambda_.11} parent=5 // pred_region
      %s831 = ssub.s32 %s9, 2
      // Predicated region
      $region41: #{_lambda_.11} parent=39 // pred_check
        %p832 = pneg %p106
      $region42: #{_lambda_.11} parent=39 // pred_check_branch
        %834 = sbr.rel (%p832) target = $region44
      $region43: #{_lambda_.11} parent=39 // pred_region
        %p835 = scmp.lt.s32.totalorder %s15, 1
        %s836 = scalar_select %p835, %s15, 1
        %s837 = smul.addr %s836, 32
        %s838 = smul.addr %s837, 4
        %s839 = scalar_lea.vmem %s3, %s838
      $region44: #{_lambda_.11} parent=39 // pred_fallthru
        _
    $region40: #{_lambda_.11} parent=5 // pred_fallthru
      _
  $region6: #{_lambda_.11} parent=0 // loop_footer
    %s13 = sadd.s32 1, %s9
  $region7: #{_lambda_.11} parent=0 // loop_footer_branch
    %8 = sbr.rel target = $region3
  $region8: #{_lambda_.11} parent=0 // loop_exit
    _

// kernel: _lambda_.13
$region0: #{_lambda_.13}
  #allocation0 [shape = 'u32[]', space=smem, size = 0x4, offset = 0x4, fixed_abs, tag = 'smem constant byte address 0x4 - core index']
  #allocation1 [shape = 'u32[72,128]{1,0:T(1,128)}', space=vmem, size = 0x9000, scoped, tag = 'internal scratch']
  %s0 = inlined_call_operand.vmem [shape: bf16[2,256,296], index: 0, kind: input, shape index: {}]
  %s1 = inlined_call_operand.vmem [shape: bf16[296,128], index: 1, kind: input, shape index: {}]
  %s2 = inlined_call_operand.vmem [shape: f32[8,128], index: 2, kind: input, shape index: {}]
  %s3 = inlined_call_operand.vmem [shape: bf16[2,256,128], index: 3, kind: output, shape index: {}]
  %s4 = sld [smem:[#allocation0]]
  $region45: #{_lambda_.13} parent=0
    _
  %s6 = ssub.s32 1, %s4
  %s7 = scalar_select 0, %s6, %s4
  loop: start=0, step=1, limit=4
  $region2: #{_lambda_.13} parent=0 // loop_pre_header
    _
  $region3: #{_lambda_.13} parent=0 // loop_header
    %s9 = sphi 0, %s13
    %p10 = scmp.ge.s32.totalorder %s9, 4
    %s19 = sphi 0, %s21
    %s22 = sphi 0, %s19
    %s23 = sphi 0, %s22
    %s39 = sphi 0, %s23
    %s43 = sphi 0, %s43
    %s45 = sphi 0, %s43
    %s46 = sphi 0, %s45
    %s60 = sphi 0, %s46
    %s64 = sphi 0, %s64
    %s66 = sphi 0, %s64
    %s67 = sphi 0, %s66
    %s81 = sphi 0, %s67
    %s87 = sphi 0, %s89
    %s90 = sphi 0, %s87
    %s91 = sphi 0, %s90
    %s107 = sphi 0, %s91
  $region4: #{_lambda_.13} parent=0 // loop_header_branch
    %12 = sbr.rel (%p10) target = $region8
  $region5: #{_lambda_.13} parent=0 // loop_body
    %s14 = ssub.s32 %s9, 1
    %s15 = ssub.s32 %s9, 2
    %s16 = sadd.s32 %s9, 1
    %s17 = ssub.s32 %s9, %s16
    %p18 = scmp.eq.s32.totalorder %s17, 0
    %s20 = sadd.s32 %s19, 1
    %s21 = scalar_select %p18, %s19, %s20
    %p24 = pneg %p18
    %p25 = scmp.eq.s32.totalorder %s9, 1
    %p26 = por %p24, %p25
    %p27 = scmp.ne.s32.totalorder %s19, %s22
    %p28 = scmp.eq.s32.totalorder %s9, 0
    %p29 = por %p27, %p28
    %p30 = scmp.ne.s32.totalorder %s19, %s22
    %p31 = scmp.eq.s32.totalorder %s14, 1
    %p32 = por %p30, %p31
    %p33 = scmp.ne.s32.totalorder %s22, %s23
    %p34 = scmp.eq.s32.totalorder %s14, 0
    %p35 = por %p33, %p34
    %p36 = scmp.ne.s32.totalorder %s22, %s23
    %p37 = scmp.eq.s32.totalorder %s15, 1
    %p38 = por %p36, %p37
    %p40 = scmp.ne.s32.totalorder %s23, %s39
    %p41 = scmp.eq.s32.totalorder %s15, 0
    %p42 = por %p40, %p41
    %s44 = sadd.s32 %s43, 1
    %p47 = scmp.eq.s32.totalorder %s9, 1
    %p48 = scmp.ne.s32.totalorder %s43, %s45
    %p49 = scmp.eq.s32.totalorder %s9, 0
    %p50 = por %p48, %p49
    %p51 = scmp.ne.s32.totalorder %s43, %s45
    %p52 = scmp.eq.s32.totalorder %s14, 1
    %p53 = por %p51, %p52
    %p54 = scmp.ne.s32.totalorder %s45, %s46
    %p55 = scmp.eq.s32.totalorder %s14, 0
    %p56 = por %p54, %p55
    %p57 = scmp.ne.s32.totalorder %s45, %s46
    %p58 = scmp.eq.s32.totalorder %s15, 1
    %p59 = por %p57, %p58
    %p61 = scmp.ne.s32.totalorder %s46, %s60
    %p62 = scmp.eq.s32.totalorder %s15, 0
    %p63 = por %p61, %p62
    %s65 = sadd.s32 %s64, 1
    %p68 = scmp.eq.s32.totalorder %s9, 1
    %p69 = scmp.ne.s32.totalorder %s64, %s66
    %p70 = scmp.eq.s32.totalorder %s9, 0
    %p71 = por %p69, %p70
    %p72 = scmp.ne.s32.totalorder %s64, %s66
    %p73 = scmp.eq.s32.totalorder %s14, 1
    %p74 = por %p72, %p73
    %p75 = scmp.ne.s32.totalorder %s66, %s67
    %p76 = scmp.eq.s32.totalorder %s14, 0
    %p77 = por %p75, %p76
    %p78 = scmp.ne.s32.totalorder %s66, %s67
    %p79 = scmp.eq.s32.totalorder %s15, 1
    %p80 = por %p78, %p79
    %p82 = scmp.ne.s32.totalorder %s67, %s81
    %p83 = scmp.eq.s32.totalorder %s15, 0
    %p84 = por %p82, %p83
    %s85 = ssub.s32 %s9, %s16
    %p86 = scmp.eq.s32.totalorder %s85, 0
    %s88 = sadd.s32 %s87, 1
    %s89 = scalar_select %p86, %s87, %s88
    %p92 = pneg %p86
    %p93 = scmp.eq.s32.totalorder %s9, 1
    %p94 = por %p92, %p93
    %p95 = scmp.ne.s32.totalorder %s87, %s90
    %p96 = scmp.eq.s32.totalorder %s9, 0
    %p97 = por %p95, %p96
    %p98 = scmp.ne.s32.totalorder %s87, %s90
    %p99 = scmp.eq.s32.totalorder %s14, 1
    %p100 = por %p98, %p99
    %p101 = scmp.ne.s32.totalorder %s90, %s91
    %p102 = scmp.eq.s32.totalorder %s14, 0
    %p103 = por %p101, %p102
    %p104 = scmp.ne.s32.totalorder %s90, %s91
    %p105 = scmp.eq.s32.totalorder %s15, 1
    %p106 = por %p104, %p105
    %p108 = scmp.ne.s32.totalorder %s91, %s107
    %p109 = scmp.eq.s32.totalorder %s15, 0
    %p110 = por %p108, %p109
    %p111 = scmp.le.s32.totalorder 1, %s9
    %p112 = scmp.lt.s32.totalorder %s9, 3
    %p113 = pnand %p111, %p112
    %p114 = pneg %p113
    // Predicated region
    $region9: #{_lambda_.13} parent=5 // pred_check
      _
    $region10: #{_lambda_.13} parent=5 // pred_check_branch
      %116 = sbr.rel (%p113) target = $region12
    $region11: #{_lambda_.13} parent=5 // pred_region
      %s117 = ssub.s32 %s9, 1
      // Predicated region
      $region13: #{_lambda_.13} parent=11 // pred_check
        %p118 = pneg %p56
      $region14: #{_lambda_.13} parent=11 // pred_check_branch
        %120 = sbr.rel (%p118) target = $region16
      $region15: #{_lambda_.13} parent=11 // pred_region
        _
      $region16: #{_lambda_.13} parent=11 // pred_fallthru
        _
      // Predicated region
      $region17: #{_lambda_.13} parent=11 // pred_check
        %p121 = pneg %p77
      $region18: #{_lambda_.13} parent=11 // pred_check_branch
        %123 = sbr.rel (%p121) target = $region20
      $region19: #{_lambda_.13} parent=11 // pred_region
        _
      $region20: #{_lambda_.13} parent=11 // pred_fallthru
        _
    $region12: #{_lambda_.13} parent=5 // pred_fallthru
      _
    %p124 = scmp.lt.s32.totalorder %s9, 2
    // Predicated region
    $region21: #{_lambda_.13} parent=5 // pred_check
      %p125 = pneg %p124
    $region22: #{_lambda_.13} parent=5 // pred_check_branch
      %127 = sbr.rel (%p125) target = $region24
    $region23: #{_lambda_.13} parent=5 // pred_region
      // Predicated region
      $region25: #{_lambda_.13} parent=23 // pred_check
        %p128 = pneg %p29
      $region26: #{_lambda_.13} parent=23 // pred_check_branch
        %130 = sbr.rel (%p128) target = $region28
      $region27: #{_lambda_.13} parent=23 // pred_region
        %p131 = scmp.lt.s32.totalorder %s9, 1
        %s132 = scalar_select %p131, %s9, 1
        %s133 = smul.addr %s132, 96
        %s134 = smul.addr %s133, 4
        %s135 = scalar_lea.vmem %s0, %s134
      $region28: #{_lambda_.13} parent=23 // pred_fallthru
        _
    $region24: #{_lambda_.13} parent=5 // pred_fallthru
      _
    %p136 = scmp.le.s32.totalorder 1, %s9
    %p137 = scmp.lt.s32.totalorder %s9, 3
    %p138 = pnand %p136, %p137
    %p139 = pneg %p138
    // Predicated region
    $region29: #{_lambda_.13} parent=5 // pred_check
      _
    $region30: #{_lambda_.13} parent=5 // pred_check_branch
      %141 = sbr.rel (%p138) target = $region32
    $region31: #{_lambda_.13} parent=5 // pred_region
      %s142 = ssub.s32 %s9, 1
      %p143 = scmp.lt.s32.totalorder %s14, 1
      %s144 = scalar_select %p143, %s14, 1
      %s145 = smul.addr %s144, 96
      %s146 = smul.addr %s145, 4
      %s147 = scalar_lea.vmem %s0, %s146
      %p148 = pneg %p35
      %p149 = pneg %p32
      %p150 = pneg %p56
      %p151 = pneg %p53
      %p152 = pneg %p77
      %p153 = pneg %p74
      %p154 = pneg %p103
      %p155 = pneg %p100
      %p156 = scmp.lt.s32.totalorder %s14, 1
      %s157 = scalar_select %p156, %s14, 1
      %s158 = smul.addr %s157, 32
      %s159 = smul.addr %s158, 4
      %s160 = scalar_lea.vmem %s3, %s159
      %p161 = scmp.lt.s32.totalorder %s14, 1
      %s162 = scalar_select %p161, %s14, 1
      %s163 = smul.addr %s162, 96
      %s164 = smul.addr %s163, 4
      %s165 = scalar_lea.vmem %s0, %s164
      %p166 = scmp.lt.s32.totalorder %s14, 1
      %s167 = scalar_select %p166, %s14, 1
      %s168 = smul.addr %s167, 32
      %s169 = smul.addr %s168, 4
      %s170 = scalar_lea.vmem %s3, %s169
      %v172 = vld [vmem:[%s165] sm:$0xff]
      %v173 = vld [vmem:[%s165 + $0x8] sm:$0xf]
      %v174 = vld [vmem:[%s165 + $0xc] sm:$0xff]
      %v175 = vld [vmem:[%s165 + $0x14] sm:$0xf]
      %v176 = vld [vmem:[%s165 + $0x18] sm:$0xff]
      %v177 = vld [vmem:[%s165 + $0x20] sm:$0xf]
      %v178 = vld [vmem:[%s165 + $0x24] sm:$0xff]
      %v179 = vld [vmem:[%s165 + $0x2c] sm:$0xf]
      %v180 = vld [vmem:[%s165 + $0x30] sm:$0xff]
      %v181 = vld [vmem:[%s165 + $0x38] sm:$0xf]
      %v182 = vld [vmem:[%s165 + $0x3c] sm:$0xff]
      %v183 = vld [vmem:[%s165 + $0x44] sm:$0xf]
      %v184 = vld [vmem:[%s165 + $0x48] sm:$0xff]
      %v185 = vld [vmem:[%s165 + $0x50] sm:$0xf]
      %v186 = vld [vmem:[%s165 + $0x54] sm:$0xff]
      %v187 = vld [vmem:[%s165 + $0x5c] sm:$0xf]
      %v188 = vld [vmem:[%s165 + $0x60] sm:$0xff]
      %v189 = vld [vmem:[%s165 + $0x68] sm:$0xf]
      %v190 = vld [vmem:[%s165 + $0x6c] sm:$0xff]
      %v191 = vld [vmem:[%s165 + $0x74] sm:$0xf]
      %v192 = vld [vmem:[%s165 + $0x78] sm:$0xff]
      %v193 = vld [vmem:[%s165 + $0x80] sm:$0xf]
      %v194 = vld [vmem:[%s165 + $0x84] sm:$0xff]
      %v195 = vld [vmem:[%s165 + $0x8c] sm:$0xf]
      %v196 = vld [vmem:[%s165 + $0x90] sm:$0xff]
      %v197 = vld [vmem:[%s165 + $0x98] sm:$0xf]
      %v198 = vld [vmem:[%s165 + $0x9c] sm:$0xff]
      %v199 = vld [vmem:[%s165 + $0xa4] sm:$0xf]
      %v200 = vld [vmem:[%s165 + $0xa8] sm:$0xff]
      %v201 = vld [vmem:[%s165 + $0xb0] sm:$0xf]
      %v202 = vld [vmem:[%s165 + $0xb4] sm:$0xff]
      %v203 = vld [vmem:[%s165 + $0xbc] sm:$0xf]
      %v204 = vld [vmem:[%s165 + $0xc0] sm:$0xff]
      %v205 = vld [vmem:[%s165 + $0xc8] sm:$0xf]
      %v206 = vld [vmem:[%s165 + $0xcc] sm:$0xff]
      %v207 = vld [vmem:[%s165 + $0xd4] sm:$0xf]
      %v208 = vld [vmem:[%s165 + $0xd8] sm:$0xff]
      %v209 = vld [vmem:[%s165 + $0xe0] sm:$0xf]
      %v210 = vld [vmem:[%s165 + $0xe4] sm:$0xff]
      %v211 = vld [vmem:[%s165 + $0xec] sm:$0xf]
      %v212 = vld [vmem:[%s165 + $0xf0] sm:$0xff]
      %v213 = vld [vmem:[%s165 + $0xf8] sm:$0xf]
      %v214 = vld [vmem:[%s165 + $0xfc] sm:$0xff]
      %v215 = vld [vmem:[%s165 + $0x104] sm:$0xf]
      %v216 = vld [vmem:[%s165 + $0x108] sm:$0xff]
      %v217 = vld [vmem:[%s165 + $0x110] sm:$0xf]
      %v218 = vld [vmem:[%s165 + $0x114] sm:$0xff]
      %v219 = vld [vmem:[%s165 + $0x11c] sm:$0xf]
      %v220 = vld [vmem:[%s165 + $0x120] sm:$0xff]
      %v221 = vld [vmem:[%s165 + $0x128] sm:$0xf]
      %v222 = vld [vmem:[%s165 + $0x12c] sm:$0xff]
      %v223 = vld [vmem:[%s165 + $0x134] sm:$0xf]
      %v224 = vld [vmem:[%s165 + $0x138] sm:$0xff]
      %v225 = vld [vmem:[%s165 + $0x140] sm:$0xf]
      %v226 = vld [vmem:[%s165 + $0x144] sm:$0xff]
      %v227 = vld [vmem:[%s165 + $0x14c] sm:$0xf]
      %v228 = vld [vmem:[%s165 + $0x150] sm:$0xff]
      %v229 = vld [vmem:[%s165 + $0x158] sm:$0xf]
      %v230 = vld [vmem:[%s165 + $0x15c] sm:$0xff]
      %v231 = vld [vmem:[%s165 + $0x164] sm:$0xf]
      %v232 = vld [vmem:[%s165 + $0x168] sm:$0xff]
      %v233 = vld [vmem:[%s165 + $0x170] sm:$0xf]
      %v234 = vld [vmem:[%s165 + $0x174] sm:$0xff]
      %v235 = vld [vmem:[%s165 + $0x17c] sm:$0xf]
      %v236 = vld [vmem:[%s1] sm:$0xf]
      %v237 = vld [vmem:[%s1 + $0x4] sm:$0xf]
      %v238 = vld [vmem:[%s1 + $0x8] sm:$0xf]
      %v239 = vld [vmem:[%s1 + $0xc] sm:$0xf]
      %v240 = vld [vmem:[%s1 + $0x10] sm:$0xf]
      %v241 = vld [vmem:[%s1 + $0x14] sm:$0xf]
      %v242 = vld [vmem:[%s1 + $0x18] sm:$0xf]
      %v243 = vld [vmem:[%s1 + $0x1c] sm:$0xf]
      %v244 = vld [vmem:[%s1 + $0x20] sm:$0xf]
      %v245 = vld [vmem:[%s1 + $0x24] sm:$0xf]
      %v246 = vld [vmem:[%s1 + $0x28] sm:$0xf]
      %v247 = vld [vmem:[%s1 + $0x2c] sm:$0xf]
      %v248 = vld [vmem:[%s1 + $0x30] sm:$0xf]
      %v249 = vld [vmem:[%s1 + $0x34] sm:$0xf]
      %v250 = vld [vmem:[%s1 + $0x38] sm:$0xf]
      %v251 = vld [vmem:[%s1 + $0x3c] sm:$0xf]
      %v252 = vld [vmem:[%s1 + $0x40] sm:$0xf]
      %v253 = vld [vmem:[%s1 + $0x44] sm:$0xf]
      %v254 = vld [vmem:[%s1 + $0x48] sm:$0xf]
      %v255 = vld [vmem:[%s1 + $0x4c] sm:$0xf]
      %v256 = vld [vmem:[%s1 + $0x50] sm:$0xf]
      %v257 = vld [vmem:[%s1 + $0x54] sm:$0xf]
      %v258 = vld [vmem:[%s1 + $0x58] sm:$0xf]
      %v259 = vld [vmem:[%s1 + $0x5c] sm:$0xf]
      %v260 = vld [vmem:[%s1 + $0x60] sm:$0xf]
      %v261 = vld [vmem:[%s1 + $0x64] sm:$0xf]
      %v262 = vld [vmem:[%s1 + $0x68] sm:$0xf]
      %v263 = vld [vmem:[%s1 + $0x6c] sm:$0xf]
      %v264 = vld [vmem:[%s1 + $0x70] sm:$0xf]
      %v265 = vld [vmem:[%s1 + $0x74] sm:$0xf]
      %v266 = vld [vmem:[%s1 + $0x78] sm:$0xf]
      %v267 = vld [vmem:[%s1 + $0x7c] sm:$0xf]
      %v268 = vld [vmem:[%s1 + $0x80] sm:$0xf]
      %v269 = vld [vmem:[%s1 + $0x84] sm:$0xf]
      %v270 = vld [vmem:[%s1 + $0x88] sm:$0xf]
      %v271 = vld [vmem:[%s1 + $0x8c] sm:$0xf]
      %v272 = vld [vmem:[%s1 + $0x90] sm:$0xf]
      %v337 = vunpack.c.l.b16 %v172
      %v338 = vunpack.c.h.b16 %v172
      %v339 = vunpack.c.l.b16 %v173
      %v340 = vunpack.c.l.b16 %v174
      %v341 = vunpack.c.h.b16 %v174
      %v342 = vunpack.c.l.b16 %v175
      %v343 = vunpack.c.l.b16 %v176
      %v344 = vunpack.c.h.b16 %v176
      %v345 = vunpack.c.l.b16 %v177
      %v346 = vunpack.c.l.b16 %v178
      %v347 = vunpack.c.h.b16 %v178
      %v348 = vunpack.c.l.b16 %v179
      %v349 = vunpack.c.l.b16 %v180
      %v350 = vunpack.c.h.b16 %v180
      %v351 = vunpack.c.l.b16 %v181
      %v352 = vunpack.c.l.b16 %v182
      %v353 = vunpack.c.h.b16 %v182
      %v354 = vunpack.c.l.b16 %v183
      %v355 = vunpack.c.l.b16 %v184
      %v356 = vunpack.c.h.b16 %v184
      %v357 = vunpack.c.l.b16 %v185
      %v358 = vunpack.c.l.b16 %v186
      %v359 = vunpack.c.h.b16 %v186
      %v360 = vunpack.c.l.b16 %v187
      %v361 = vunpack.c.l.b16 %v188
      %v362 = vunpack.c.h.b16 %v188
      %v363 = vunpack.c.l.b16 %v189
      %v364 = vunpack.c.l.b16 %v190
      %v365 = vunpack.c.h.b16 %v190
      %v366 = vunpack.c.l.b16 %v191
      %v367 = vunpack.c.l.b16 %v192
      %v368 = vunpack.c.h.b16 %v192
      %v369 = vunpack.c.l.b16 %v193
      %v370 = vunpack.c.l.b16 %v194
      %v371 = vunpack.c.h.b16 %v194
      %v372 = vunpack.c.l.b16 %v195
      %v373 = vunpack.c.l.b16 %v196
      %v374 = vunpack.c.h.b16 %v196
      %v375 = vunpack.c.l.b16 %v197
      %v376 = vunpack.c.l.b16 %v198
      %v377 = vunpack.c.h.b16 %v198
      %v378 = vunpack.c.l.b16 %v199
      %v379 = vunpack.c.l.b16 %v200
      %v380 = vunpack.c.h.b16 %v200
      %v381 = vunpack.c.l.b16 %v201
      %v382 = vunpack.c.l.b16 %v202
      %v383 = vunpack.c.h.b16 %v202
      %v384 = vunpack.c.l.b16 %v203
      %v385 = vunpack.c.l.b16 %v204
      %v386 = vunpack.c.h.b16 %v204
      %v387 = vunpack.c.l.b16 %v205
      %v388 = vunpack.c.l.b16 %v206
      %v389 = vunpack.c.h.b16 %v206
      %v390 = vunpack.c.l.b16 %v207
      %v391 = vunpack.c.l.b16 %v208
      %v392 = vunpack.c.h.b16 %v208
      %v393 = vunpack.c.l.b16 %v209
      %v394 = vunpack.c.l.b16 %v210
      %v395 = vunpack.c.h.b16 %v210
      %v396 = vunpack.c.l.b16 %v211
      %v397 = vunpack.c.l.b16 %v212
      %v398 = vunpack.c.h.b16 %v212
      %v399 = vunpack.c.l.b16 %v213
      %v400 = vunpack.c.l.b16 %v214
      %v401 = vunpack.c.h.b16 %v214
      %v402 = vunpack.c.l.b16 %v215
      %v403 = vunpack.c.l.b16 %v216
      %v404 = vunpack.c.h.b16 %v216
      %v405 = vunpack.c.l.b16 %v217
      %v406 = vunpack.c.l.b16 %v218
      %v407 = vunpack.c.h.b16 %v218
      %v408 = vunpack.c.l.b16 %v219
      %v409 = vunpack.c.l.b16 %v220
      %v410 = vunpack.c.h.b16 %v220
      %v411 = vunpack.c.l.b16 %v221
      %v412 = vunpack.c.l.b16 %v222
      %v413 = vunpack.c.h.b16 %v222
      %v414 = vunpack.c.l.b16 %v223
      %v415 = vunpack.c.l.b16 %v224
      %v416 = vunpack.c.h.b16 %v224
      %v417 = vunpack.c.l.b16 %v225
      %v418 = vunpack.c.l.b16 %v226
      %v419 = vunpack.c.h.b16 %v226
      %v420 = vunpack.c.l.b16 %v227
      %v421 = vunpack.c.l.b16 %v228
      %v422 = vunpack.c.h.b16 %v228
      %v423 = vunpack.c.l.b16 %v229
      %v424 = vunpack.c.l.b16 %v230
      %v425 = vunpack.c.h.b16 %v230
      %v426 = vunpack.c.l.b16 %v231
      %v427 = vunpack.c.l.b16 %v232
      %v428 = vunpack.c.h.b16 %v232
      %v429 = vunpack.c.l.b16 %v233
      %v430 = vunpack.c.l.b16 %v234
      %v431 = vunpack.c.h.b16 %v234
      %v432 = vunpack.c.l.b16 %v235
      %v433 = vpack.c.b16 %v340, %v337
      %v434 = vpack.c.b16 %v341, %v338
      %v435 = vpack.c.b16 %v342, %v339
      %v436 = vpack.c.b16 %v346, %v343
      %v437 = vpack.c.b16 %v347, %v344
      %v438 = vpack.c.b16 %v348, %v345
      %v439 = vpack.c.b16 %v352, %v349
      %v440 = vpack.c.b16 %v353, %v350
      %v441 = vpack.c.b16 %v354, %v351
      %v442 = vpack.c.b16 %v358, %v355
      %v443 = vpack.c.b16 %v359, %v356
      %v444 = vpack.c.b16 %v360, %v357
      %v445 = vpack.c.b16 %v364, %v361
      %v446 = vpack.c.b16 %v365, %v362
      %v447 = vpack.c.b16 %v366, %v363
      %v448 = vpack.c.b16 %v370, %v367
      %v449 = vpack.c.b16 %v371, %v368
      %v450 = vpack.c.b16 %v372, %v369
      %v451 = vpack.c.b16 %v376, %v373
      %v452 = vpack.c.b16 %v377, %v374
      %v453 = vpack.c.b16 %v378, %v375
      %v454 = vpack.c.b16 %v382, %v379
      %v455 = vpack.c.b16 %v383, %v380
      %v456 = vpack.c.b16 %v384, %v381
      %v457 = vpack.c.b16 %v388, %v385
      %v458 = vpack.c.b16 %v389, %v386
      %v459 = vpack.c.b16 %v390, %v387
      %v460 = vpack.c.b16 %v394, %v391
      %v461 = vpack.c.b16 %v395, %v392
      %v462 = vpack.c.b16 %v396, %v393
      %v463 = vpack.c.b16 %v400, %v397
      %v464 = vpack.c.b16 %v401, %v398
      %v465 = vpack.c.b16 %v402, %v399
      %v466 = vpack.c.b16 %v406, %v403
      %v467 = vpack.c.b16 %v407, %v404
      %v468 = vpack.c.b16 %v408, %v405
      %v469 = vpack.c.b16 %v412, %v409
      %v470 = vpack.c.b16 %v413, %v410
      %v471 = vpack.c.b16 %v414, %v411
      %v472 = vpack.c.b16 %v418, %v415
      %v473 = vpack.c.b16 %v419, %v416
      %v474 = vpack.c.b16 %v420, %v417
      %v475 = vpack.c.b16 %v424, %v421
      %v476 = vpack.c.b16 %v425, %v422
      %v477 = vpack.c.b16 %v426, %v423
      %v478 = vpack.c.b16 %v430, %v427
      %v479 = vpack.c.b16 %v431, %v428
      %v480 = vpack.c.b16 %v432, %v429
      %v550 = vunpack.c.l.b16 %v236
      %v551 = vunpack.c.l.b16 %v237
      %v552 = vunpack.c.l.b16 %v238
      %v553 = vunpack.c.l.b16 %v239
      %v554 = vunpack.c.l.b16 %v240
      %v555 = vunpack.c.l.b16 %v241
      %v556 = vunpack.c.l.b16 %v242
      %v557 = vunpack.c.l.b16 %v243
      %v558 = vunpack.c.l.b16 %v244
      %v559 = vunpack.c.l.b16 %v245
      %v560 = vunpack.c.l.b16 %v246
      %v561 = vunpack.c.l.b16 %v247
      %v562 = vunpack.c.l.b16 %v248
      %v563 = vunpack.c.l.b16 %v249
      %v564 = vunpack.c.l.b16 %v250
      %v565 = vunpack.c.l.b16 %v251
      %v566 = vunpack.c.l.b16 %v252
      %v567 = vunpack.c.l.b16 %v253
      %v568 = vunpack.c.l.b16 %v254
      %v569 = vunpack.c.l.b16 %v255
      %v570 = vunpack.c.l.b16 %v256
      %v571 = vunpack.c.l.b16 %v257
      %v572 = vunpack.c.l.b16 %v258
      %v573 = vunpack.c.l.b16 %v259
      %v574 = vunpack.c.l.b16 %v260
      %v575 = vunpack.c.l.b16 %v261
      %v576 = vunpack.c.l.b16 %v262
      %v577 = vunpack.c.l.b16 %v263
      %v578 = vunpack.c.l.b16 %v264
      %v579 = vunpack.c.l.b16 %v265
      %v580 = vunpack.c.l.b16 %v266
      %v581 = vunpack.c.l.b16 %v267
      %v582 = vunpack.c.l.b16 %v268
      %v583 = vunpack.c.l.b16 %v269
      %v584 = vunpack.c.l.b16 %v270
      %v585 = vunpack.c.l.b16 %v271
      %v586 = vunpack.c.l.b16 %v272
      %v587 = vpack.c.b16 %v551, %v550
      %v588 = vpack.c.b16 %v553, %v552
      %v589 = vpack.c.b16 %v555, %v554
      %v590 = vpack.c.b16 %v557, %v556
      %v591 = vpack.c.b16 %v559, %v558
      %v592 = vpack.c.b16 %v561, %v560
      %v593 = vpack.c.b16 %v563, %v562
      %v594 = vpack.c.b16 %v565, %v564
      %v595 = vpack.c.b16 %v567, %v566
      %v596 = vpack.c.b16 %v569, %v568
      %v597 = vpack.c.b16 %v571, %v570
      %v598 = vpack.c.b16 %v573, %v572
      %v599 = vpack.c.b16 %v575, %v574
      %v600 = vpack.c.b16 %v577, %v576
      %v601 = vpack.c.b16 %v579, %v578
      %v602 = vpack.c.b16 %v581, %v580
      %v603 = vpack.c.b16 %v583, %v582
      %v604 = vpack.c.b16 %v585, %v584
      %v605 = vpack.c.b16 %v586, %v586
      %vm624 = vcmask 326656
      %v626 = vsel %vm624, %v435, 0
      %v629 = vsel %vm624, %v438, 0
      %v632 = vsel %vm624, %v441, 0
      %v635 = vsel %vm624, %v444, 0
      %v638 = vsel %vm624, %v447, 0
      %v641 = vsel %vm624, %v450, 0
      %v644 = vsel %vm624, %v453, 0
      %v647 = vsel %vm624, %v456, 0
      %v650 = vsel %vm624, %v459, 0
      %v653 = vsel %vm624, %v462, 0
      %v656 = vsel %vm624, %v465, 0
      %v659 = vsel %vm624, %v468, 0
      %v662 = vsel %vm624, %v471, 0
      %v665 = vsel %vm624, %v474, 0
      %v668 = vsel %vm624, %v477, 0
      %v671 = vsel %vm624, %v480, 0
      %vm673 = vcmask 1043456
      %v675 = vsel %vm673, %v605, 0
      %677 = vmatpush.bf16.msra.mxu0 %v594
      %678 = vmatpush.bf16.msra.mxu0 %v593
      %679 = vmatpush.bf16.msra.mxu0 %v592
      %680 = vmatpush.bf16.msra.mxu0 %v591
      %681 = vmatpush.bf16.msra.mxu0 %v590
      %682 = vmatpush.bf16.msra.mxu0 %v589
      %683 = vmatpush.bf16.msra.mxu0 %v588
      %684 = vmatpush.bf16.msra.mxu0 %v587
      %685 = vmatmul.bf16.gmra.mxu0 %v433
      %v686 = vpop.f32.mrf.mxu0
      %v687 = vadd.f32 0.0, %v686
      %v688 = vpop.f32.mrf.mxu0
      %v689 = vadd.f32 0.0, %v688
      %690 = vmatmul.bf16.gmra.mxu0 %v436
      %v691 = vpop.f32.mrf.mxu0
      %v692 = vadd.f32 0.0, %v691
      %v693 = vpop.f32.mrf.mxu0
      %v694 = vadd.f32 0.0, %v693
      %695 = vmatmul.bf16.gmra.mxu0 %v439
      %v696 = vpop.f32.mrf.mxu0
      %v697 = vadd.f32 0.0, %v696
      %v698 = vpop.f32.mrf.mxu0
      %v699 = vadd.f32 0.0, %v698
      %700 = vmatmul.bf16.gmra.mxu0 %v442
      %v701 = vpop.f32.mrf.mxu0
      %v702 = vadd.f32 0.0, %v701
      %v703 = vpop.f32.mrf.mxu0
      %v704 = vadd.f32 0.0, %v703
      %705 = vmatmul.bf16.gmra.mxu0 %v445
      %v706 = vpop.f32.mrf.mxu0
      %v707 = vadd.f32 0.0, %v706
      %v708 = vpop.f32.mrf.mxu0
      %v709 = vadd.f32 0.0, %v708
      %710 = vmatmul.bf16.gmra.mxu0 %v448
      %v711 = vpop.f32.mrf.mxu0
      %v712 = vadd.f32 0.0, %v711
      %v713 = vpop.f32.mrf.mxu0
      %v714 = vadd.f32 0.0, %v713
      %715 = vmatmul.bf16.gmra.mxu0 %v451
      %v716 = vpop.f32.mrf.mxu0
      %v717 = vadd.f32 0.0, %v716
      %v718 = vpop.f32.mrf.mxu0
      %v719 = vadd.f32 0.0, %v718
      %720 = vmatmul.bf16.gmra.mxu0 %v454
      %v721 = vpop.f32.mrf.mxu0
      %v722 = vadd.f32 0.0, %v721
      %v723 = vpop.f32.mrf.mxu0
      %v724 = vadd.f32 0.0, %v723
      %725 = vmatmul.bf16.gmra.mxu0 %v457
      %v726 = vpop.f32.mrf.mxu0
      %v727 = vadd.f32 0.0, %v726
      %v728 = vpop.f32.mrf.mxu0
      %v729 = vadd.f32 0.0, %v728
      %730 = vmatmul.bf16.gmra.mxu0 %v460
      %v731 = vpop.f32.mrf.mxu0
      %v732 = vadd.f32 0.0, %v731
      %v733 = vpop.f32.mrf.mxu0
      %v734 = vadd.f32 0.0, %v733
      %735 = vmatmul.bf16.gmra.mxu0 %v463
      %v736 = vpop.f32.mrf.mxu0
      %v737 = vadd.f32 0.0, %v736
      %v738 = vpop.f32.mrf.mxu0
      %v739 = vadd.f32 0.0, %v738
      %740 = vmatmul.bf16.gmra.mxu0 %v466
      %v741 = vpop.f32.mrf.mxu0
      %v742 = vadd.f32 0.0, %v741
      %v743 = vpop.f32.mrf.mxu0
      %v744 = vadd.f32 0.0, %v743
      %745 = vmatmul.bf16.gmra.mxu0 %v469
      %v746 = vpop.f32.mrf.mxu0
      %v747 = vadd.f32 0.0, %v746
      %v748 = vpop.f32.mrf.mxu0
      %v749 = vadd.f32 0.0, %v748
      %750 = vmatmul.bf16.gmra.mxu0 %v472
      %v751 = vpop.f32.mrf.mxu0
      %v752 = vadd.f32 0.0, %v751
      %v753 = vpop.f32.mrf.mxu0
      %v754 = vadd.f32 0.0, %v753
      %755 = vmatmul.bf16.gmra.mxu0 %v475
      %v756 = vpop.f32.mrf.mxu0
      %v757 = vadd.f32 0.0, %v756
      %v758 = vpop.f32.mrf.mxu0
      %v759 = vadd.f32 0.0, %v758
      %760 = vmatmul.bf16.gmra.mxu0 %v478
      %v761 = vpop.f32.mrf.mxu0
      %v762 = vadd.f32 0.0, %v761
      %v763 = vpop.f32.mrf.mxu0
      %v764 = vadd.f32 0.0, %v763
      %765 = vdwg.mxu0
      %766 = vmatpush.bf16.msra.mxu0 %v602
      %767 = vmatpush.bf16.msra.mxu0 %v601
      %768 = vmatpush.bf16.msra.mxu0 %v600
      %769 = vmatpush.bf16.msra.mxu0 %v599
      %770 = vmatpush.bf16.msra.mxu0 %v598
      %771 = vmatpush.bf16.msra.mxu0 %v597
      %772 = vmatpush.bf16.msra.mxu0 %v596
      %773 = vmatpush.bf16.msra.mxu0 %v595
      %774 = vmatmul.bf16.gmra.mxu0 %v434
      %v775 = vpop.f32.mrf.mxu0
      %v776 = vadd.f32 %v687, %v775
      %v777 = vpop.f32.mrf.mxu0
      %v778 = vadd.f32 %v689, %v777
      %779 = vmatmul.bf16.gmra.mxu0 %v437
      %v780 = vpop.f32.mrf.mxu0
      %v781 = vadd.f32 %v692, %v780
      %v782 = vpop.f32.mrf.mxu0
      %v783 = vadd.f32 %v694, %v782
      %784 = vmatmul.bf16.gmra.mxu0 %v440
      %v785 = vpop.f32.mrf.mxu0
      %v786 = vadd.f32 %v697, %v785
      %v787 = vpop.f32.mrf.mxu0
      %v788 = vadd.f32 %v699, %v787
      %789 = vmatmul.bf16.gmra.mxu0 %v443
      %v790 = vpop.f32.mrf.mxu0
      %v791 = vadd.f32 %v702, %v790
      %v792 = vpop.f32.mrf.mxu0
      %v793 = vadd.f32 %v704, %v792
      %794 = vmatmul.bf16.gmra.mxu0 %v446
      %v795 = vpop.f32.mrf.mxu0
      %v796 = vadd.f32 %v707, %v795
      %v797 = vpop.f32.mrf.mxu0
      %v798 = vadd.f32 %v709, %v797
      %799 = vmatmul.bf16.gmra.mxu0 %v449
      %v800 = vpop.f32.mrf.mxu0
      %v801 = vadd.f32 %v712, %v800
      %v802 = vpop.f32.mrf.mxu0
      %v803 = vadd.f32 %v714, %v802
      %804 = vmatmul.bf16.gmra.mxu0 %v452
      %v805 = vpop.f32.mrf.mxu0
      %v806 = vadd.f32 %v717, %v805
      %v807 = vpop.f32.mrf.mxu0
      %v808 = vadd.f32 %v719, %v807
      %809 = vmatmul.bf16.gmra.mxu0 %v455
      %v810 = vpop.f32.mrf.mxu0
      %v811 = vadd.f32 %v722, %v810
      %v812 = vpop.f32.mrf.mxu0
      %v813 = vadd.f32 %v724, %v812
      %814 = vmatmul.bf16.gmra.mxu0 %v458
      %v815 = vpop.f32.mrf.mxu0
      %v816 = vadd.f32 %v727, %v815
      %v817 = vpop.f32.mrf.mxu0
      %v818 = vadd.f32 %v729, %v817
      %819 = vmatmul.bf16.gmra.mxu0 %v461
      %v820 = vpop.f32.mrf.mxu0
      %v821 = vadd.f32 %v732, %v820
      %v822 = vpop.f32.mrf.mxu0
      %v823 = vadd.f32 %v734, %v822
      %824 = vmatmul.bf16.gmra.mxu0 %v464
      %v825 = vpop.f32.mrf.mxu0
      %v826 = vadd.f32 %v737, %v825
      %v827 = vpop.f32.mrf.mxu0
      %v828 = vadd.f32 %v739, %v827
      %829 = vmatmul.bf16.gmra.mxu0 %v467
      %v830 = vpop.f32.mrf.mxu0
      %v831 = vadd.f32 %v742, %v830
      %v832 = vpop.f32.mrf.mxu0
      %v833 = vadd.f32 %v744, %v832
      %834 = vmatmul.bf16.gmra.mxu0 %v470
      %v835 = vpop.f32.mrf.mxu0
      %v836 = vadd.f32 %v747, %v835
      %v837 = vpop.f32.mrf.mxu0
      %v838 = vadd.f32 %v749, %v837
      %839 = vmatmul.bf16.gmra.mxu0 %v473
      %v840 = vpop.f32.mrf.mxu0
      %v841 = vadd.f32 %v752, %v840
      %v842 = vpop.f32.mrf.mxu0
      %v843 = vadd.f32 %v754, %v842
      %844 = vmatmul.bf16.gmra.mxu0 %v476
      %v845 = vpop.f32.mrf.mxu0
      %v846 = vadd.f32 %v757, %v845
      %v847 = vpop.f32.mrf.mxu0
      %v848 = vadd.f32 %v759, %v847
      %849 = vmatmul.bf16.gmra.mxu0 %v479
      %v850 = vpop.f32.mrf.mxu0
      %v851 = vadd.f32 %v762, %v850
      %v852 = vpop.f32.mrf.mxu0
      %v853 = vadd.f32 %v764, %v852
      %854 = vdwg.mxu0
      %855 = vmatpush.bf16.msra.mxu0 0
      %856 = vmatpush.bf16.msra.mxu0 0
      %857 = vmatpush.bf16.msra.mxu0 0
      %858 = vmatpush.bf16.msra.mxu0 0
      %859 = vmatpush.bf16.msra.mxu0 0
      %860 = vmatpush.bf16.msra.mxu0 %v675
      %861 = vmatpush.bf16.msra.mxu0 %v604
      %862 = vmatpush.bf16.msra.mxu0 %v603
      %863 = vmatmul.bf16.gmra.mxu0 %v626
      %v864 = vpop.f32.mrf.mxu0
      %v865 = vadd.f32 %v776, %v864
      %v866 = vpop.f32.mrf.mxu0
      %v867 = vadd.f32 %v778, %v866
      %868 = vmatmul.bf16.gmra.mxu0 %v629
      %v869 = vpop.f32.mrf.mxu0
      %v870 = vadd.f32 %v781, %v869
      %v871 = vpop.f32.mrf.mxu0
      %v872 = vadd.f32 %v783, %v871
      %873 = vmatmul.bf16.gmra.mxu0 %v632
      %v874 = vpop.f32.mrf.mxu0
      %v875 = vadd.f32 %v786, %v874
      %v876 = vpop.f32.mrf.mxu0
      %v877 = vadd.f32 %v788, %v876
      %878 = vmatmul.bf16.gmra.mxu0 %v635
      %v879 = vpop.f32.mrf.mxu0
      %v880 = vadd.f32 %v791, %v879
      %v881 = vpop.f32.mrf.mxu0
      %v882 = vadd.f32 %v793, %v881
      %883 = vmatmul.bf16.gmra.mxu0 %v638
      %v884 = vpop.f32.mrf.mxu0
      %v885 = vadd.f32 %v796, %v884
      %v886 = vpop.f32.mrf.mxu0
      %v887 = vadd.f32 %v798, %v886
      %888 = vmatmul.bf16.gmra.mxu0 %v641
      %v889 = vpop.f32.mrf.mxu0
      %v890 = vadd.f32 %v801, %v889
      %v891 = vpop.f32.mrf.mxu0
      %v892 = vadd.f32 %v803, %v891
      %893 = vmatmul.bf16.gmra.mxu0 %v644
      %v894 = vpop.f32.mrf.mxu0
      %v895 = vadd.f32 %v806, %v894
      %v896 = vpop.f32.mrf.mxu0
      %v897 = vadd.f32 %v808, %v896
      %898 = vmatmul.bf16.gmra.mxu0 %v647
      %v899 = vpop.f32.mrf.mxu0
      %v900 = vadd.f32 %v811, %v899
      %v901 = vpop.f32.mrf.mxu0
      %v902 = vadd.f32 %v813, %v901
      %903 = vmatmul.bf16.gmra.mxu0 %v650
      %v904 = vpop.f32.mrf.mxu0
      %v905 = vadd.f32 %v816, %v904
      %v906 = vpop.f32.mrf.mxu0
      %v907 = vadd.f32 %v818, %v906
      %908 = vmatmul.bf16.gmra.mxu0 %v653
      %v909 = vpop.f32.mrf.mxu0
      %v910 = vadd.f32 %v821, %v909
      %v911 = vpop.f32.mrf.mxu0
      %v912 = vadd.f32 %v823, %v911
      %913 = vmatmul.bf16.gmra.mxu0 %v656
      %v914 = vpop.f32.mrf.mxu0
      %v915 = vadd.f32 %v826, %v914
      %v916 = vpop.f32.mrf.mxu0
      %v917 = vadd.f32 %v828, %v916
      %918 = vmatmul.bf16.gmra.mxu0 %v659
      %v919 = vpop.f32.mrf.mxu0
      %v920 = vadd.f32 %v831, %v919
      %v921 = vpop.f32.mrf.mxu0
      %v922 = vadd.f32 %v833, %v921
      %923 = vmatmul.bf16.gmra.mxu0 %v662
      %v924 = vpop.f32.mrf.mxu0
      %v925 = vadd.f32 %v836, %v924
      %v926 = vpop.f32.mrf.mxu0
      %v927 = vadd.f32 %v838, %v926
      %928 = vmatmul.bf16.gmra.mxu0 %v665
      %v929 = vpop.f32.mrf.mxu0
      %v930 = vadd.f32 %v841, %v929
      %v931 = vpop.f32.mrf.mxu0
      %v932 = vadd.f32 %v843, %v931
      %933 = vmatmul.bf16.gmra.mxu0 %v668
      %v934 = vpop.f32.mrf.mxu0
      %v935 = vadd.f32 %v846, %v934
      %v936 = vpop.f32.mrf.mxu0
      %v937 = vadd.f32 %v848, %v936
      %938 = vmatmul.bf16.gmra.mxu0 %v671
      %v939 = vpop.f32.mrf.mxu0
      %v940 = vadd.f32 %v851, %v939
      %v941 = vpop.f32.mrf.mxu0
      %v942 = vadd.f32 %v853, %v941
      %943 = vdwg.mxu0
      %v944 = vmax.f32 %v865, 0.0
      %v945 = vmax.f32 %v867, 0.0
      %v946 = vmax.f32 %v870, 0.0
      %v947 = vmax.f32 %v872, 0.0
      %v948 = vmax.f32 %v875, 0.0
      %v949 = vmax.f32 %v877, 0.0
      %v950 = vmax.f32 %v880, 0.0
      %v951 = vmax.f32 %v882, 0.0
      %v952 = vmax.f32 %v885, 0.0
      %v953 = vmax.f32 %v887, 0.0
      %v954 = vmax.f32 %v890, 0.0
      %v955 = vmax.f32 %v892, 0.0
      %v956 = vmax.f32 %v895, 0.0
      %v957 = vmax.f32 %v897, 0.0
      %v958 = vmax.f32 %v900, 0.0
      %v959 = vmax.f32 %v902, 0.0
      %v960 = vmax.f32 %v905, 0.0
      %v961 = vmax.f32 %v907, 0.0
      %v962 = vmax.f32 %v910, 0.0
      %v963 = vmax.f32 %v912, 0.0
      %v964 = vmax.f32 %v915, 0.0
      %v965 = vmax.f32 %v917, 0.0
      %v966 = vmax.f32 %v920, 0.0
      %v967 = vmax.f32 %v922, 0.0
      %v968 = vmax.f32 %v925, 0.0
      %v969 = vmax.f32 %v927, 0.0
      %v970 = vmax.f32 %v930, 0.0
      %v971 = vmax.f32 %v932, 0.0
      %v972 = vmax.f32 %v935, 0.0
      %v973 = vmax.f32 %v937, 0.0
      %v974 = vmax.f32 %v940, 0.0
      %v975 = vmax.f32 %v942, 0.0
      %v976 = vld [vmem:[%s2] sm:$0x1]
      %v977 = vperm.slane %v976, 0
      %v978 = vmul.f32 %v944, %v977
      %v979 = vmul.f32 %v945, %v977
      %v980 = vmul.f32 %v946, %v977
      %v981 = vmul.f32 %v947, %v977
      %v982 = vmul.f32 %v948, %v977
      %v983 = vmul.f32 %v949, %v977
      %v984 = vmul.f32 %v950, %v977
      %v985 = vmul.f32 %v951, %v977
      %v986 = vmul.f32 %v952, %v977
      %v987 = vmul.f32 %v953, %v977
      %v988 = vmul.f32 %v954, %v977
      %v989 = vmul.f32 %v955, %v977
      %v990 = vmul.f32 %v956, %v977
      %v991 = vmul.f32 %v957, %v977
      %v992 = vmul.f32 %v958, %v977
      %v993 = vmul.f32 %v959, %v977
      %v994 = vmul.f32 %v960, %v977
      %v995 = vmul.f32 %v961, %v977
      %v996 = vmul.f32 %v962, %v977
      %v997 = vmul.f32 %v963, %v977
      %v998 = vmul.f32 %v964, %v977
      %v999 = vmul.f32 %v965, %v977
      %v1000 = vmul.f32 %v966, %v977
      %v1001 = vmul.f32 %v967, %v977
      %v1002 = vmul.f32 %v968, %v977
      %v1003 = vmul.f32 %v969, %v977
      %v1004 = vmul.f32 %v970, %v977
      %v1005 = vmul.f32 %v971, %v977
      %v1006 = vmul.f32 %v972, %v977
      %v1007 = vmul.f32 %v973, %v977
      %v1008 = vmul.f32 %v974, %v977
      %v1009 = vmul.f32 %v975, %v977
      %v1010 = vld [vmem:[%s2 + $0x1] sm:$0x1]
      %v1011 = vperm.slane %v1010, 0
      %v1012 = vadd.f32 %v978, %v1011
      %v1013 = vadd.f32 %v979, %v1011
      %v1014 = vadd.f32 %v980, %v1011
      %v1015 = vadd.f32 %v981, %v1011
      %v1016 = vadd.f32 %v982, %v1011
      %v1017 = vadd.f32 %v983, %v1011
      %v1018 = vadd.f32 %v984, %v1011
      %v1019 = vadd.f32 %v985, %v1011
      %v1020 = vadd.f32 %v986, %v1011
      %v1021 = vadd.f32 %v987, %v1011
      %v1022 = vadd.f32 %v988, %v1011
      %v1023 = vadd.f32 %v989, %v1011
      %v1024 = vadd.f32 %v990, %v1011
      %v1025 = vadd.f32 %v991, %v1011
      %v1026 = vadd.f32 %v992, %v1011
      %v1027 = vadd.f32 %v993, %v1011
      %v1028 = vadd.f32 %v994, %v1011
      %v1029 = vadd.f32 %v995, %v1011
      %v1030 = vadd.f32 %v996, %v1011
      %v1031 = vadd.f32 %v997, %v1011
      %v1032 = vadd.f32 %v998, %v1011
      %v1033 = vadd.f32 %v999, %v1011
      %v1034 = vadd.f32 %v1000, %v1011
      %v1035 = vadd.f32 %v1001, %v1011
      %v1036 = vadd.f32 %v1002, %v1011
      %v1037 = vadd.f32 %v1003, %v1011
      %v1038 = vadd.f32 %v1004, %v1011
      %v1039 = vadd.f32 %v1005, %v1011
      %v1040 = vadd.f32 %v1006, %v1011
      %v1041 = vadd.f32 %v1007, %v1011
      %v1042 = vadd.f32 %v1008, %v1011
      %v1043 = vadd.f32 %v1009, %v1011
      %v1044 = vpack.c.bf16 %v1012, %v1012
      %v1045 = vpack.c.bf16 %v1013, %v1013
      %v1046 = vpack.c.bf16 %v1014, %v1014
      %v1047 = vpack.c.bf16 %v1015, %v1015
      %v1048 = vpack.c.bf16 %v1016, %v1016
      %v1049 = vpack.c.bf16 %v1017, %v1017
      %v1050 = vpack.c.bf16 %v1018, %v1018
      %v1051 = vpack.c.bf16 %v1019, %v1019
      %v1052 = vpack.c.bf16 %v1020, %v1020
      %v1053 = vpack.c.bf16 %v1021, %v1021
      %v1054 = vpack.c.bf16 %v1022, %v1022
      %v1055 = vpack.c.bf16 %v1023, %v1023
      %v1056 = vpack.c.bf16 %v1024, %v1024
      %v1057 = vpack.c.bf16 %v1025, %v1025
      %v1058 = vpack.c.bf16 %v1026, %v1026
      %v1059 = vpack.c.bf16 %v1027, %v1027
      %v1060 = vpack.c.bf16 %v1028, %v1028
      %v1061 = vpack.c.bf16 %v1029, %v1029
      %v1062 = vpack.c.bf16 %v1030, %v1030
      %v1063 = vpack.c.bf16 %v1031, %v1031
      %v1064 = vpack.c.bf16 %v1032, %v1032
      %v1065 = vpack.c.bf16 %v1033, %v1033
      %v1066 = vpack.c.bf16 %v1034, %v1034
      %v1067 = vpack.c.bf16 %v1035, %v1035
      %v1068 = vpack.c.bf16 %v1036, %v1036
      %v1069 = vpack.c.bf16 %v1037, %v1037
      %v1070 = vpack.c.bf16 %v1038, %v1038
      %v1071 = vpack.c.bf16 %v1039, %v1039
      %v1072 = vpack.c.bf16 %v1040, %v1040
      %v1073 = vpack.c.bf16 %v1041, %v1041
      %v1074 = vpack.c.bf16 %v1042, %v1042
      %v1075 = vpack.c.bf16 %v1043, %v1043
      %1076 = vst [vmem:[%s170] sm:$0xf] %v1044
      %1077 = vst [vmem:[%s170 + $0x4] sm:$0xf] %v1045
      %1078 = vst [vmem:[%s170 + $0x8] sm:$0xf] %v1046
      %1079 = vst [vmem:[%s170 + $0xc] sm:$0xf] %v1047
      %1080 = vst [vmem:[%s170 + $0x10] sm:$0xf] %v1048
      %1081 = vst [vmem:[%s170 + $0x14] sm:$0xf] %v1049
      %1082 = vst [vmem:[%s170 + $0x18] sm:$0xf] %v1050
      %1083 = vst [vmem:[%s170 + $0x1c] sm:$0xf] %v1051
      %1084 = vst [vmem:[%s170 + $0x20] sm:$0xf] %v1052
      %1085 = vst [vmem:[%s170 + $0x24] sm:$0xf] %v1053
      %1086 = vst [vmem:[%s170 + $0x28] sm:$0xf] %v1054
      %1087 = vst [vmem:[%s170 + $0x2c] sm:$0xf] %v1055
      %1088 = vst [vmem:[%s170 + $0x30] sm:$0xf] %v1056
      %1089 = vst [vmem:[%s170 + $0x34] sm:$0xf] %v1057
      %1090 = vst [vmem:[%s170 + $0x38] sm:$0xf] %v1058
      %1091 = vst [vmem:[%s170 + $0x3c] sm:$0xf] %v1059
      %1092 = vst [vmem:[%s170 + $0x40] sm:$0xf] %v1060
      %1093 = vst [vmem:[%s170 + $0x44] sm:$0xf] %v1061
      %1094 = vst [vmem:[%s170 + $0x48] sm:$0xf] %v1062
      %1095 = vst [vmem:[%s170 + $0x4c] sm:$0xf] %v1063
      %1096 = vst [vmem:[%s170 + $0x50] sm:$0xf] %v1064
      %1097 = vst [vmem:[%s170 + $0x54] sm:$0xf] %v1065
      %1098 = vst [vmem:[%s170 + $0x58] sm:$0xf] %v1066
      %1099 = vst [vmem:[%s170 + $0x5c] sm:$0xf] %v1067
      %1100 = vst [vmem:[%s170 + $0x60] sm:$0xf] %v1068
      %1101 = vst [vmem:[%s170 + $0x64] sm:$0xf] %v1069
      %1102 = vst [vmem:[%s170 + $0x68] sm:$0xf] %v1070
      %1103 = vst [vmem:[%s170 + $0x6c] sm:$0xf] %v1071
      %1104 = vst [vmem:[%s170 + $0x70] sm:$0xf] %v1072
      %1105 = vst [vmem:[%s170 + $0x74] sm:$0xf] %v1073
      %1106 = vst [vmem:[%s170 + $0x78] sm:$0xf] %v1074
      %1107 = vst [vmem:[%s170 + $0x7c] sm:$0xf] %v1075
      %p1108 = scmp.lt.s32.totalorder %s14, 1
      %s1109 = scalar_select %p1108, %s14, 1
      %s1110 = smul.addr %s1109, 32
      %s1111 = smul.addr %s1110, 4
      %s1112 = scalar_lea.vmem %s3, %s1111
      // Predicated region
      $region33: #{_lambda_.13} parent=31 // pred_check
        %p1113 = pneg %p100
      $region34: #{_lambda_.13} parent=31 // pred_check_branch
        %1115 = sbr.rel (%p1113) target = $region36
      $region35: #{_lambda_.13} parent=31 // pred_region
        _
      $region36: #{_lambda_.13} parent=31 // pred_fallthru
        _
    $region32: #{_lambda_.13} parent=5 // pred_fallthru
      _
    %p1116 = scmp.le.s32.totalorder 2, %s9
    // Predicated region
    $region37: #{_lambda_.13} parent=5 // pred_check
      %p1117 = pneg %p1116
    $region38: #{_lambda_.13} parent=5 // pred_check_branch
      %1119 = sbr.rel (%p1117) target = $region40
    $region39: #{_lambda_.13} parent=5 // pred_region
      %s1120 = ssub.s32 %s9, 2
      // Predicated region
      $region41: #{_lambda_.13} parent=39 // pred_check
        %p1121 = pneg %p106
      $region42: #{_lambda_.13} parent=39 // pred_check_branch
        %1123 = sbr.rel (%p1121) target = $region44
      $region43: #{_lambda_.13} parent=39 // pred_region
        %p1124 = scmp.lt.s32.totalorder %s15, 1
        %s1125 = scalar_select %p1124, %s15, 1
        %s1126 = smul.addr %s1125, 32
        %s1127 = smul.addr %s1126, 4
        %s1128 = scalar_lea.vmem %s3, %s1127
      $region44: #{_lambda_.13} parent=39 // pred_fallthru
        _
    $region40: #{_lambda_.13} parent=5 // pred_fallthru
      _
  $region6: #{_lambda_.13} parent=0 // loop_footer
    %s13 = sadd.s32 1, %s9
  $region7: #{_lambda_.13} parent=0 // loop_footer_branch
    %8 = sbr.rel target = $region3
  $region8: #{_lambda_.13} parent=0 // loop_exit
    _

// kernel: _lambda_.14
$region0: #{_lambda_.14}
  #allocation0 [shape = 'u32[]', space=smem, size = 0x4, offset = 0x4, fixed_abs, tag = 'smem constant byte address 0x4 - core index']
  #allocation1 [shape = 'u32[72,128]{1,0:T(1,128)}', space=vmem, size = 0x9000, scoped, tag = 'internal scratch']
  %s0 = inlined_call_operand.vmem [shape: bf16[2,64,296], index: 0, kind: input, shape index: {}]
  %s1 = inlined_call_operand.vmem [shape: bf16[296,128], index: 1, kind: input, shape index: {}]
  %s2 = inlined_call_operand.vmem [shape: f32[8,128], index: 2, kind: input, shape index: {}]
  %s3 = inlined_call_operand.vmem [shape: bf16[2,64,128], index: 3, kind: output, shape index: {}]
  %s4 = sld [smem:[#allocation0]]
  $region45: #{_lambda_.14} parent=0
    _
  %s6 = ssub.s32 1, %s4
  %s7 = scalar_select 0, %s6, %s4
  loop: start=0, step=1, limit=4
  $region2: #{_lambda_.14} parent=0 // loop_pre_header
    _
  $region3: #{_lambda_.14} parent=0 // loop_header
    %s9 = sphi 0, %s13
    %p10 = scmp.ge.s32.totalorder %s9, 4
    %s19 = sphi 0, %s21
    %s22 = sphi 0, %s19
    %s23 = sphi 0, %s22
    %s39 = sphi 0, %s23
    %s43 = sphi 0, %s43
    %s45 = sphi 0, %s43
    %s46 = sphi 0, %s45
    %s60 = sphi 0, %s46
    %s64 = sphi 0, %s64
    %s66 = sphi 0, %s64
    %s67 = sphi 0, %s66
    %s81 = sphi 0, %s67
    %s87 = sphi 0, %s89
    %s90 = sphi 0, %s87
    %s91 = sphi 0, %s90
    %s107 = sphi 0, %s91
  $region4: #{_lambda_.14} parent=0 // loop_header_branch
    %12 = sbr.rel (%p10) target = $region8
  $region5: #{_lambda_.14} parent=0 // loop_body
    %s14 = ssub.s32 %s9, 1
    %s15 = ssub.s32 %s9, 2
    %s16 = sadd.s32 %s9, 1
    %s17 = ssub.s32 %s9, %s16
    %p18 = scmp.eq.s32.totalorder %s17, 0
    %s20 = sadd.s32 %s19, 1
    %s21 = scalar_select %p18, %s19, %s20
    %p24 = pneg %p18
    %p25 = scmp.eq.s32.totalorder %s9, 1
    %p26 = por %p24, %p25
    %p27 = scmp.ne.s32.totalorder %s19, %s22
    %p28 = scmp.eq.s32.totalorder %s9, 0
    %p29 = por %p27, %p28
    %p30 = scmp.ne.s32.totalorder %s19, %s22
    %p31 = scmp.eq.s32.totalorder %s14, 1
    %p32 = por %p30, %p31
    %p33 = scmp.ne.s32.totalorder %s22, %s23
    %p34 = scmp.eq.s32.totalorder %s14, 0
    %p35 = por %p33, %p34
    %p36 = scmp.ne.s32.totalorder %s22, %s23
    %p37 = scmp.eq.s32.totalorder %s15, 1
    %p38 = por %p36, %p37
    %p40 = scmp.ne.s32.totalorder %s23, %s39
    %p41 = scmp.eq.s32.totalorder %s15, 0
    %p42 = por %p40, %p41
    %s44 = sadd.s32 %s43, 1
    %p47 = scmp.eq.s32.totalorder %s9, 1
    %p48 = scmp.ne.s32.totalorder %s43, %s45
    %p49 = scmp.eq.s32.totalorder %s9, 0
    %p50 = por %p48, %p49
    %p51 = scmp.ne.s32.totalorder %s43, %s45
    %p52 = scmp.eq.s32.totalorder %s14, 1
    %p53 = por %p51, %p52
    %p54 = scmp.ne.s32.totalorder %s45, %s46
    %p55 = scmp.eq.s32.totalorder %s14, 0
    %p56 = por %p54, %p55
    %p57 = scmp.ne.s32.totalorder %s45, %s46
    %p58 = scmp.eq.s32.totalorder %s15, 1
    %p59 = por %p57, %p58
    %p61 = scmp.ne.s32.totalorder %s46, %s60
    %p62 = scmp.eq.s32.totalorder %s15, 0
    %p63 = por %p61, %p62
    %s65 = sadd.s32 %s64, 1
    %p68 = scmp.eq.s32.totalorder %s9, 1
    %p69 = scmp.ne.s32.totalorder %s64, %s66
    %p70 = scmp.eq.s32.totalorder %s9, 0
    %p71 = por %p69, %p70
    %p72 = scmp.ne.s32.totalorder %s64, %s66
    %p73 = scmp.eq.s32.totalorder %s14, 1
    %p74 = por %p72, %p73
    %p75 = scmp.ne.s32.totalorder %s66, %s67
    %p76 = scmp.eq.s32.totalorder %s14, 0
    %p77 = por %p75, %p76
    %p78 = scmp.ne.s32.totalorder %s66, %s67
    %p79 = scmp.eq.s32.totalorder %s15, 1
    %p80 = por %p78, %p79
    %p82 = scmp.ne.s32.totalorder %s67, %s81
    %p83 = scmp.eq.s32.totalorder %s15, 0
    %p84 = por %p82, %p83
    %s85 = ssub.s32 %s9, %s16
    %p86 = scmp.eq.s32.totalorder %s85, 0
    %s88 = sadd.s32 %s87, 1
    %s89 = scalar_select %p86, %s87, %s88
    %p92 = pneg %p86
    %p93 = scmp.eq.s32.totalorder %s9, 1
    %p94 = por %p92, %p93
    %p95 = scmp.ne.s32.totalorder %s87, %s90
    %p96 = scmp.eq.s32.totalorder %s9, 0
    %p97 = por %p95, %p96
    %p98 = scmp.ne.s32.totalorder %s87, %s90
    %p99 = scmp.eq.s32.totalorder %s14, 1
    %p100 = por %p98, %p99
    %p101 = scmp.ne.s32.totalorder %s90, %s91
    %p102 = scmp.eq.s32.totalorder %s14, 0
    %p103 = por %p101, %p102
    %p104 = scmp.ne.s32.totalorder %s90, %s91
    %p105 = scmp.eq.s32.totalorder %s15, 1
    %p106 = por %p104, %p105
    %p108 = scmp.ne.s32.totalorder %s91, %s107
    %p109 = scmp.eq.s32.totalorder %s15, 0
    %p110 = por %p108, %p109
    %p111 = scmp.le.s32.totalorder 1, %s9
    %p112 = scmp.lt.s32.totalorder %s9, 3
    %p113 = pnand %p111, %p112
    %p114 = pneg %p113
    // Predicated region
    $region9: #{_lambda_.14} parent=5 // pred_check
      _
    $region10: #{_lambda_.14} parent=5 // pred_check_branch
      %116 = sbr.rel (%p113) target = $region12
    $region11: #{_lambda_.14} parent=5 // pred_region
      %s117 = ssub.s32 %s9, 1
      // Predicated region
      $region13: #{_lambda_.14} parent=11 // pred_check
        %p118 = pneg %p56
      $region14: #{_lambda_.14} parent=11 // pred_check_branch
        %120 = sbr.rel (%p118) target = $region16
      $region15: #{_lambda_.14} parent=11 // pred_region
        _
      $region16: #{_lambda_.14} parent=11 // pred_fallthru
        _
      // Predicated region
      $region17: #{_lambda_.14} parent=11 // pred_check
        %p121 = pneg %p77
      $region18: #{_lambda_.14} parent=11 // pred_check_branch
        %123 = sbr.rel (%p121) target = $region20
      $region19: #{_lambda_.14} parent=11 // pred_region
        _
      $region20: #{_lambda_.14} parent=11 // pred_fallthru
        _
    $region12: #{_lambda_.14} parent=5 // pred_fallthru
      _
    %p124 = scmp.lt.s32.totalorder %s9, 2
    // Predicated region
    $region21: #{_lambda_.14} parent=5 // pred_check
      %p125 = pneg %p124
    $region22: #{_lambda_.14} parent=5 // pred_check_branch
      %127 = sbr.rel (%p125) target = $region24
    $region23: #{_lambda_.14} parent=5 // pred_region
      // Predicated region
      $region25: #{_lambda_.14} parent=23 // pred_check
        %p128 = pneg %p29
      $region26: #{_lambda_.14} parent=23 // pred_check_branch
        %130 = sbr.rel (%p128) target = $region28
      $region27: #{_lambda_.14} parent=23 // pred_region
        %p131 = scmp.lt.s32.totalorder %s9, 1
        %s132 = scalar_select %p131, %s9, 1
        %s133 = smul.addr %s132, 24
        %s134 = smul.addr %s133, 4
        %s135 = scalar_lea.vmem %s0, %s134
      $region28: #{_lambda_.14} parent=23 // pred_fallthru
        _
    $region24: #{_lambda_.14} parent=5 // pred_fallthru
      _
    %p136 = scmp.le.s32.totalorder 1, %s9
    %p137 = scmp.lt.s32.totalorder %s9, 3
    %p138 = pnand %p136, %p137
    %p139 = pneg %p138
    // Predicated region
    $region29: #{_lambda_.14} parent=5 // pred_check
      _
    $region30: #{_lambda_.14} parent=5 // pred_check_branch
      %141 = sbr.rel (%p138) target = $region32
    $region31: #{_lambda_.14} parent=5 // pred_region
      %s142 = ssub.s32 %s9, 1
      %p143 = scmp.lt.s32.totalorder %s14, 1
      %s144 = scalar_select %p143, %s14, 1
      %s145 = smul.addr %s144, 24
      %s146 = smul.addr %s145, 4
      %s147 = scalar_lea.vmem %s0, %s146
      %p148 = pneg %p35
      %p149 = pneg %p32
      %p150 = pneg %p56
      %p151 = pneg %p53
      %p152 = pneg %p77
      %p153 = pneg %p74
      %p154 = pneg %p103
      %p155 = pneg %p100
      %p156 = scmp.lt.s32.totalorder %s14, 1
      %s157 = scalar_select %p156, %s14, 1
      %s158 = smul.addr %s157, 8
      %s159 = smul.addr %s158, 4
      %s160 = scalar_lea.vmem %s3, %s159
      %p161 = scmp.lt.s32.totalorder %s14, 1
      %s162 = scalar_select %p161, %s14, 1
      %s163 = smul.addr %s162, 24
      %s164 = smul.addr %s163, 4
      %s165 = scalar_lea.vmem %s0, %s164
      %p166 = scmp.lt.s32.totalorder %s14, 1
      %s167 = scalar_select %p166, %s14, 1
      %s168 = smul.addr %s167, 8
      %s169 = smul.addr %s168, 4
      %s170 = scalar_lea.vmem %s3, %s169
      %v172 = vld [vmem:[%s165] sm:$0xff]
      %v173 = vld [vmem:[%s165 + $0x8] sm:$0xf]
      %v174 = vld [vmem:[%s165 + $0xc] sm:$0xff]
      %v175 = vld [vmem:[%s165 + $0x14] sm:$0xf]
      %v176 = vld [vmem:[%s165 + $0x18] sm:$0xff]
      %v177 = vld [vmem:[%s165 + $0x20] sm:$0xf]
      %v178 = vld [vmem:[%s165 + $0x24] sm:$0xff]
      %v179 = vld [vmem:[%s165 + $0x2c] sm:$0xf]
      %v180 = vld [vmem:[%s165 + $0x30] sm:$0xff]
      %v181 = vld [vmem:[%s165 + $0x38] sm:$0xf]
      %v182 = vld [vmem:[%s165 + $0x3c] sm:$0xff]
      %v183 = vld [vmem:[%s165 + $0x44] sm:$0xf]
      %v184 = vld [vmem:[%s165 + $0x48] sm:$0xff]
      %v185 = vld [vmem:[%s165 + $0x50] sm:$0xf]
      %v186 = vld [vmem:[%s165 + $0x54] sm:$0xff]
      %v187 = vld [vmem:[%s165 + $0x5c] sm:$0xf]
      %v188 = vld [vmem:[%s1] sm:$0xf]
      %v189 = vld [vmem:[%s1 + $0x4] sm:$0xf]
      %v190 = vld [vmem:[%s1 + $0x8] sm:$0xf]
      %v191 = vld [vmem:[%s1 + $0xc] sm:$0xf]
      %v192 = vld [vmem:[%s1 + $0x10] sm:$0xf]
      %v193 = vld [vmem:[%s1 + $0x14] sm:$0xf]
      %v194 = vld [vmem:[%s1 + $0x18] sm:$0xf]
      %v195 = vld [vmem:[%s1 + $0x1c] sm:$0xf]
      %v196 = vld [vmem:[%s1 + $0x20] sm:$0xf]
      %v197 = vld [vmem:[%s1 + $0x24] sm:$0xf]
      %v198 = vld [vmem:[%s1 + $0x28] sm:$0xf]
      %v199 = vld [vmem:[%s1 + $0x2c] sm:$0xf]
      %v200 = vld [vmem:[%s1 + $0x30] sm:$0xf]
      %v201 = vld [vmem:[%s1 + $0x34] sm:$0xf]
      %v202 = vld [vmem:[%s1 + $0x38] sm:$0xf]
      %v203 = vld [vmem:[%s1 + $0x3c] sm:$0xf]
      %v204 = vld [vmem:[%s1 + $0x40] sm:$0xf]
      %v205 = vld [vmem:[%s1 + $0x44] sm:$0xf]
      %v206 = vld [vmem:[%s1 + $0x48] sm:$0xf]
      %v207 = vld [vmem:[%s1 + $0x4c] sm:$0xf]
      %v208 = vld [vmem:[%s1 + $0x50] sm:$0xf]
      %v209 = vld [vmem:[%s1 + $0x54] sm:$0xf]
      %v210 = vld [vmem:[%s1 + $0x58] sm:$0xf]
      %v211 = vld [vmem:[%s1 + $0x5c] sm:$0xf]
      %v212 = vld [vmem:[%s1 + $0x60] sm:$0xf]
      %v213 = vld [vmem:[%s1 + $0x64] sm:$0xf]
      %v214 = vld [vmem:[%s1 + $0x68] sm:$0xf]
      %v215 = vld [vmem:[%s1 + $0x6c] sm:$0xf]
      %v216 = vld [vmem:[%s1 + $0x70] sm:$0xf]
      %v217 = vld [vmem:[%s1 + $0x74] sm:$0xf]
      %v218 = vld [vmem:[%s1 + $0x78] sm:$0xf]
      %v219 = vld [vmem:[%s1 + $0x7c] sm:$0xf]
      %v220 = vld [vmem:[%s1 + $0x80] sm:$0xf]
      %v221 = vld [vmem:[%s1 + $0x84] sm:$0xf]
      %v222 = vld [vmem:[%s1 + $0x88] sm:$0xf]
      %v223 = vld [vmem:[%s1 + $0x8c] sm:$0xf]
      %v224 = vld [vmem:[%s1 + $0x90] sm:$0xf]
      %v241 = vunpack.c.l.b16 %v172
      %v242 = vunpack.c.h.b16 %v172
      %v243 = vunpack.c.l.b16 %v173
      %v244 = vunpack.c.l.b16 %v174
      %v245 = vunpack.c.h.b16 %v174
      %v246 = vunpack.c.l.b16 %v175
      %v247 = vunpack.c.l.b16 %v176
      %v248 = vunpack.c.h.b16 %v176
      %v249 = vunpack.c.l.b16 %v177
      %v250 = vunpack.c.l.b16 %v178
      %v251 = vunpack.c.h.b16 %v178
      %v252 = vunpack.c.l.b16 %v179
      %v253 = vunpack.c.l.b16 %v180
      %v254 = vunpack.c.h.b16 %v180
      %v255 = vunpack.c.l.b16 %v181
      %v256 = vunpack.c.l.b16 %v182
      %v257 = vunpack.c.h.b16 %v182
      %v258 = vunpack.c.l.b16 %v183
      %v259 = vunpack.c.l.b16 %v184
      %v260 = vunpack.c.h.b16 %v184
      %v261 = vunpack.c.l.b16 %v185
      %v262 = vunpack.c.l.b16 %v186
      %v263 = vunpack.c.h.b16 %v186
      %v264 = vunpack.c.l.b16 %v187
      %v265 = vpack.c.b16 %v244, %v241
      %v266 = vpack.c.b16 %v245, %v242
      %v267 = vpack.c.b16 %v246, %v243
      %v268 = vpack.c.b16 %v250, %v247
      %v269 = vpack.c.b16 %v251, %v248
      %v270 = vpack.c.b16 %v252, %v249
      %v271 = vpack.c.b16 %v256, %v253
      %v272 = vpack.c.b16 %v257, %v254
      %v273 = vpack.c.b16 %v258, %v255
      %v274 = vpack.c.b16 %v262, %v259
      %v275 = vpack.c.b16 %v263, %v260
      %v276 = vpack.c.b16 %v264, %v261
      %v322 = vunpack.c.l.b16 %v188
      %v323 = vunpack.c.l.b16 %v189
      %v324 = vunpack.c.l.b16 %v190
      %v325 = vunpack.c.l.b16 %v191
      %v326 = vunpack.c.l.b16 %v192
      %v327 = vunpack.c.l.b16 %v193
      %v328 = vunpack.c.l.b16 %v194
      %v329 = vunpack.c.l.b16 %v195
      %v330 = vunpack.c.l.b16 %v196
      %v331 = vunpack.c.l.b16 %v197
      %v332 = vunpack.c.l.b16 %v198
      %v333 = vunpack.c.l.b16 %v199
      %v334 = vunpack.c.l.b16 %v200
      %v335 = vunpack.c.l.b16 %v201
      %v336 = vunpack.c.l.b16 %v202
      %v337 = vunpack.c.l.b16 %v203
      %v338 = vunpack.c.l.b16 %v204
      %v339 = vunpack.c.l.b16 %v205
      %v340 = vunpack.c.l.b16 %v206
      %v341 = vunpack.c.l.b16 %v207
      %v342 = vunpack.c.l.b16 %v208
      %v343 = vunpack.c.l.b16 %v209
      %v344 = vunpack.c.l.b16 %v210
      %v345 = vunpack.c.l.b16 %v211
      %v346 = vunpack.c.l.b16 %v212
      %v347 = vunpack.c.l.b16 %v213
      %v348 = vunpack.c.l.b16 %v214
      %v349 = vunpack.c.l.b16 %v215
      %v350 = vunpack.c.l.b16 %v216
      %v351 = vunpack.c.l.b16 %v217
      %v352 = vunpack.c.l.b16 %v218
      %v353 = vunpack.c.l.b16 %v219
      %v354 = vunpack.c.l.b16 %v220
      %v355 = vunpack.c.l.b16 %v221
      %v356 = vunpack.c.l.b16 %v222
      %v357 = vunpack.c.l.b16 %v223
      %v358 = vunpack.c.l.b16 %v224
      %v359 = vpack.c.b16 %v323, %v322
      %v360 = vpack.c.b16 %v325, %v324
      %v361 = vpack.c.b16 %v327, %v326
      %v362 = vpack.c.b16 %v329, %v328
      %v363 = vpack.c.b16 %v331, %v330
      %v364 = vpack.c.b16 %v333, %v332
      %v365 = vpack.c.b16 %v335, %v334
      %v366 = vpack.c.b16 %v337, %v336
      %v367 = vpack.c.b16 %v339, %v338
      %v368 = vpack.c.b16 %v341, %v340
      %v369 = vpack.c.b16 %v343, %v342
      %v370 = vpack.c.b16 %v345, %v344
      %v371 = vpack.c.b16 %v347, %v346
      %v372 = vpack.c.b16 %v349, %v348
      %v373 = vpack.c.b16 %v351, %v350
      %v374 = vpack.c.b16 %v353, %v352
      %v375 = vpack.c.b16 %v355, %v354
      %v376 = vpack.c.b16 %v357, %v356
      %v377 = vpack.c.b16 %v358, %v358
      %vm396 = vcmask 326656
      %v398 = vsel %vm396, %v267, 0
      %v401 = vsel %vm396, %v270, 0
      %v404 = vsel %vm396, %v273, 0
      %v407 = vsel %vm396, %v276, 0
      %vm409 = vcmask 1043456
      %v411 = vsel %vm409, %v377, 0
      %413 = vmatpush.bf16.msra.mxu0 %v366
      %414 = vmatpush.bf16.msra.mxu0 %v365
      %415 = vmatpush.bf16.msra.mxu0 %v364
      %416 = vmatpush.bf16.msra.mxu0 %v363
      %417 = vmatpush.bf16.msra.mxu0 %v362
      %418 = vmatpush.bf16.msra.mxu0 %v361
      %419 = vmatpush.bf16.msra.mxu0 %v360
      %420 = vmatpush.bf16.msra.mxu0 %v359
      %421 = vmatmul.bf16.gmra.mxu0 %v265
      %v422 = vpop.f32.mrf.mxu0
      %v423 = vadd.f32 0.0, %v422
      %v424 = vpop.f32.mrf.mxu0
      %v425 = vadd.f32 0.0, %v424
      %426 = vmatmul.bf16.gmra.mxu0 %v268
      %v427 = vpop.f32.mrf.mxu0
      %v428 = vadd.f32 0.0, %v427
      %v429 = vpop.f32.mrf.mxu0
      %v430 = vadd.f32 0.0, %v429
      %431 = vmatmul.bf16.gmra.mxu0 %v271
      %v432 = vpop.f32.mrf.mxu0
      %v433 = vadd.f32 0.0, %v432
      %v434 = vpop.f32.mrf.mxu0
      %v435 = vadd.f32 0.0, %v434
      %436 = vmatmul.bf16.gmra.mxu0 %v274
      %v437 = vpop.f32.mrf.mxu0
      %v438 = vadd.f32 0.0, %v437
      %v439 = vpop.f32.mrf.mxu0
      %v440 = vadd.f32 0.0, %v439
      %441 = vdwg.mxu0
      %442 = vmatpush.bf16.msra.mxu0 %v374
      %443 = vmatpush.bf16.msra.mxu0 %v373
      %444 = vmatpush.bf16.msra.mxu0 %v372
      %445 = vmatpush.bf16.msra.mxu0 %v371
      %446 = vmatpush.bf16.msra.mxu0 %v370
      %447 = vmatpush.bf16.msra.mxu0 %v369
      %448 = vmatpush.bf16.msra.mxu0 %v368
      %449 = vmatpush.bf16.msra.mxu0 %v367
      %450 = vmatmul.bf16.gmra.mxu0 %v266
      %v451 = vpop.f32.mrf.mxu0
      %v452 = vadd.f32 %v423, %v451
      %v453 = vpop.f32.mrf.mxu0
      %v454 = vadd.f32 %v425, %v453
      %455 = vmatmul.bf16.gmra.mxu0 %v269
      %v456 = vpop.f32.mrf.mxu0
      %v457 = vadd.f32 %v428, %v456
      %v458 = vpop.f32.mrf.mxu0
      %v459 = vadd.f32 %v430, %v458
      %460 = vmatmul.bf16.gmra.mxu0 %v272
      %v461 = vpop.f32.mrf.mxu0
      %v462 = vadd.f32 %v433, %v461
      %v463 = vpop.f32.mrf.mxu0
      %v464 = vadd.f32 %v435, %v463
      %465 = vmatmul.bf16.gmra.mxu0 %v275
      %v466 = vpop.f32.mrf.mxu0
      %v467 = vadd.f32 %v438, %v466
      %v468 = vpop.f32.mrf.mxu0
      %v469 = vadd.f32 %v440, %v468
      %470 = vdwg.mxu0
      %471 = vmatpush.bf16.msra.mxu0 0
      %472 = vmatpush.bf16.msra.mxu0 0
      %473 = vmatpush.bf16.msra.mxu0 0
      %474 = vmatpush.bf16.msra.mxu0 0
      %475 = vmatpush.bf16.msra.mxu0 0
      %476 = vmatpush.bf16.msra.mxu0 %v411
      %477 = vmatpush.bf16.msra.mxu0 %v376
      %478 = vmatpush.bf16.msra.mxu0 %v375
      %479 = vmatmul.bf16.gmra.mxu0 %v398
      %v480 = vpop.f32.mrf.mxu0
      %v481 = vadd.f32 %v452, %v480
      %v482 = vpop.f32.mrf.mxu0
      %v483 = vadd.f32 %v454, %v482
      %484 = vmatmul.bf16.gmra.mxu0 %v401
      %v485 = vpop.f32.mrf.mxu0
      %v486 = vadd.f32 %v457, %v485
      %v487 = vpop.f32.mrf.mxu0
      %v488 = vadd.f32 %v459, %v487
      %489 = vmatmul.bf16.gmra.mxu0 %v404
      %v490 = vpop.f32.mrf.mxu0
      %v491 = vadd.f32 %v462, %v490
      %v492 = vpop.f32.mrf.mxu0
      %v493 = vadd.f32 %v464, %v492
      %494 = vmatmul.bf16.gmra.mxu0 %v407
      %v495 = vpop.f32.mrf.mxu0
      %v496 = vadd.f32 %v467, %v495
      %v497 = vpop.f32.mrf.mxu0
      %v498 = vadd.f32 %v469, %v497
      %499 = vdwg.mxu0
      %v500 = vmax.f32 %v481, 0.0
      %v501 = vmax.f32 %v483, 0.0
      %v502 = vmax.f32 %v486, 0.0
      %v503 = vmax.f32 %v488, 0.0
      %v504 = vmax.f32 %v491, 0.0
      %v505 = vmax.f32 %v493, 0.0
      %v506 = vmax.f32 %v496, 0.0
      %v507 = vmax.f32 %v498, 0.0
      %v508 = vld [vmem:[%s2] sm:$0x1]
      %v509 = vperm.slane %v508, 0
      %v510 = vmul.f32 %v500, %v509
      %v511 = vmul.f32 %v501, %v509
      %v512 = vmul.f32 %v502, %v509
      %v513 = vmul.f32 %v503, %v509
      %v514 = vmul.f32 %v504, %v509
      %v515 = vmul.f32 %v505, %v509
      %v516 = vmul.f32 %v506, %v509
      %v517 = vmul.f32 %v507, %v509
      %v518 = vld [vmem:[%s2 + $0x1] sm:$0x1]
      %v519 = vperm.slane %v518, 0
      %v520 = vadd.f32 %v510, %v519
      %v521 = vadd.f32 %v511, %v519
      %v522 = vadd.f32 %v512, %v519
      %v523 = vadd.f32 %v513, %v519
      %v524 = vadd.f32 %v514, %v519
      %v525 = vadd.f32 %v515, %v519
      %v526 = vadd.f32 %v516, %v519
      %v527 = vadd.f32 %v517, %v519
      %v528 = vpack.c.bf16 %v520, %v520
      %v529 = vpack.c.bf16 %v521, %v521
      %v530 = vpack.c.bf16 %v522, %v522
      %v531 = vpack.c.bf16 %v523, %v523
      %v532 = vpack.c.bf16 %v524, %v524
      %v533 = vpack.c.bf16 %v525, %v525
      %v534 = vpack.c.bf16 %v526, %v526
      %v535 = vpack.c.bf16 %v527, %v527
      %536 = vst [vmem:[%s170] sm:$0xf] %v528
      %537 = vst [vmem:[%s170 + $0x4] sm:$0xf] %v529
      %538 = vst [vmem:[%s170 + $0x8] sm:$0xf] %v530
      %539 = vst [vmem:[%s170 + $0xc] sm:$0xf] %v531
      %540 = vst [vmem:[%s170 + $0x10] sm:$0xf] %v532
      %541 = vst [vmem:[%s170 + $0x14] sm:$0xf] %v533
      %542 = vst [vmem:[%s170 + $0x18] sm:$0xf] %v534
      %543 = vst [vmem:[%s170 + $0x1c] sm:$0xf] %v535
      %p544 = scmp.lt.s32.totalorder %s14, 1
      %s545 = scalar_select %p544, %s14, 1
      %s546 = smul.addr %s545, 8
      %s547 = smul.addr %s546, 4
      %s548 = scalar_lea.vmem %s3, %s547
      // Predicated region
      $region33: #{_lambda_.14} parent=31 // pred_check
        %p549 = pneg %p100
      $region34: #{_lambda_.14} parent=31 // pred_check_branch
        %551 = sbr.rel (%p549) target = $region36
      $region35: #{_lambda_.14} parent=31 // pred_region
        _
      $region36: #{_lambda_.14} parent=31 // pred_fallthru
        _
    $region32: #{_lambda_.14} parent=5 // pred_fallthru
      _
    %p552 = scmp.le.s32.totalorder 2, %s9
    // Predicated region
    $region37: #{_lambda_.14} parent=5 // pred_check
      %p553 = pneg %p552
    $region38: #{_lambda_.14} parent=5 // pred_check_branch
      %555 = sbr.rel (%p553) target = $region40
    $region39: #{_lambda_.14} parent=5 // pred_region
      %s556 = ssub.s32 %s9, 2
      // Predicated region
      $region41: #{_lambda_.14} parent=39 // pred_check
        %p557 = pneg %p106
      $region42: #{_lambda_.14} parent=39 // pred_check_branch
        %559 = sbr.rel (%p557) target = $region44
      $region43: #{_lambda_.14} parent=39 // pred_region
        %p560 = scmp.lt.s32.totalorder %s15, 1
        %s561 = scalar_select %p560, %s15, 1
        %s562 = smul.addr %s561, 8
        %s563 = smul.addr %s562, 4
        %s564 = scalar_lea.vmem %s3, %s563
      $region44: #{_lambda_.14} parent=39 // pred_fallthru
        _
    $region40: #{_lambda_.14} parent=5 // pred_fallthru
      _
  $region6: #{_lambda_.14} parent=0 // loop_footer
    %s13 = sadd.s32 1, %s9
  $region7: #{_lambda_.14} parent=0 // loop_footer_branch
    %8 = sbr.rel target = $region3
  $region8: #{_lambda_.14} parent=0 // loop_exit
    _

// kernel: _lambda_.17
$region0: #{_lambda_.17}
  #allocation0 [shape = 'u32[]', space=smem, size = 0x4, offset = 0x4, fixed_abs, tag = 'smem constant byte address 0x4 - core index']
  #allocation1 [shape = 'u32[72,128]{1,0:T(1,128)}', space=vmem, size = 0x9000, scoped, tag = 'internal scratch']
  %s0 = inlined_call_operand.vmem [shape: bf16[2,64,40], index: 0, kind: input, shape index: {}]
  %s1 = inlined_call_operand.vmem [shape: bf16[40,128], index: 1, kind: input, shape index: {}]
  %s2 = inlined_call_operand.vmem [shape: f32[8,128], index: 2, kind: input, shape index: {}]
  %s3 = inlined_call_operand.hbm [shape: f32[2,1,128], index: 3, kind: output, shape index: {}]
  %s4 = sld [smem:[#allocation0]]
  $region45: #{_lambda_.17} parent=0
    _
  %s6 = ssub.s32 1, %s4
  %s7 = scalar_select 0, %s6, %s4
  $region1: #{_lambda_.17} parent=0
    #allocation2 [shape = 'u8[1024]{0}', space=vmem, size = 0x400, scoped, tag = 'output window, operand 0']
    #allocation3 [shape = 's32[2]{0}', space=sflag, size = 0x8, scoped, tag = 'scoped memory for _lambda_.17']
    %8 = vsyncpa [#allocation3], 0
    %s9 = scalar_lea.sflag [#allocation3], 1
    %10 = vsyncpa %s9, 0
    loop: start=0, step=1, limit=4
    $region2: #{_lambda_.17} parent=1 // loop_pre_header
      _
    $region3: #{_lambda_.17} parent=1 // loop_header
      %s12 = sphi 0, %s16
      %p13 = scmp.ge.s32.totalorder %s12, 4
      %s22 = sphi 0, %s24
      %s25 = sphi 0, %s22
      %s26 = sphi 0, %s25
      %s42 = sphi 0, %s26
      %s46 = sphi 0, %s46
      %s48 = sphi 0, %s46
      %s49 = sphi 0, %s48
      %s63 = sphi 0, %s49
      %s67 = sphi 0, %s67
      %s69 = sphi 0, %s67
      %s70 = sphi 0, %s69
      %s84 = sphi 0, %s70
      %s90 = sphi 0, %s92
      %s93 = sphi 0, %s90
      %s94 = sphi 0, %s93
      %s110 = sphi 0, %s94
    $region4: #{_lambda_.17} parent=1 // loop_header_branch
      %15 = sbr.rel (%p13) target = $region8
    $region5: #{_lambda_.17} parent=1 // loop_body
      %s17 = ssub.s32 %s12, 1
      %s18 = ssub.s32 %s12, 2
      %s19 = sadd.s32 %s12, 1
      %s20 = ssub.s32 %s12, %s19
      %p21 = scmp.eq.s32.totalorder %s20, 0
      %s23 = sadd.s32 %s22, 1
      %s24 = scalar_select %p21, %s22, %s23
      %p27 = pneg %p21
      %p28 = scmp.eq.s32.totalorder %s12, 1
      %p29 = por %p27, %p28
      %p30 = scmp.ne.s32.totalorder %s22, %s25
      %p31 = scmp.eq.s32.totalorder %s12, 0
      %p32 = por %p30, %p31
      %p33 = scmp.ne.s32.totalorder %s22, %s25
      %p34 = scmp.eq.s32.totalorder %s17, 1
      %p35 = por %p33, %p34
      %p36 = scmp.ne.s32.totalorder %s25, %s26
      %p37 = scmp.eq.s32.totalorder %s17, 0
      %p38 = por %p36, %p37
      %p39 = scmp.ne.s32.totalorder %s25, %s26
      %p40 = scmp.eq.s32.totalorder %s18, 1
      %p41 = por %p39, %p40
      %p43 = scmp.ne.s32.totalorder %s26, %s42
      %p44 = scmp.eq.s32.totalorder %s18, 0
      %p45 = por %p43, %p44
      %s47 = sadd.s32 %s46, 1
      %p50 = scmp.eq.s32.totalorder %s12, 1
      %p51 = scmp.ne.s32.totalorder %s46, %s48
      %p52 = scmp.eq.s32.totalorder %s12, 0
      %p53 = por %p51, %p52
      %p54 = scmp.ne.s32.totalorder %s46, %s48
      %p55 = scmp.eq.s32.totalorder %s17, 1
      %p56 = por %p54, %p55
      %p57 = scmp.ne.s32.totalorder %s48, %s49
      %p58 = scmp.eq.s32.totalorder %s17, 0
      %p59 = por %p57, %p58
      %p60 = scmp.ne.s32.totalorder %s48, %s49
      %p61 = scmp.eq.s32.totalorder %s18, 1
      %p62 = por %p60, %p61
      %p64 = scmp.ne.s32.totalorder %s49, %s63
      %p65 = scmp.eq.s32.totalorder %s18, 0
      %p66 = por %p64, %p65
      %s68 = sadd.s32 %s67, 1
      %p71 = scmp.eq.s32.totalorder %s12, 1
      %p72 = scmp.ne.s32.totalorder %s67, %s69
      %p73 = scmp.eq.s32.totalorder %s12, 0
      %p74 = por %p72, %p73
      %p75 = scmp.ne.s32.totalorder %s67, %s69
      %p76 = scmp.eq.s32.totalorder %s17, 1
      %p77 = por %p75, %p76
      %p78 = scmp.ne.s32.totalorder %s69, %s70
      %p79 = scmp.eq.s32.totalorder %s17, 0
      %p80 = por %p78, %p79
      %p81 = scmp.ne.s32.totalorder %s69, %s70
      %p82 = scmp.eq.s32.totalorder %s18, 1
      %p83 = por %p81, %p82
      %p85 = scmp.ne.s32.totalorder %s70, %s84
      %p86 = scmp.eq.s32.totalorder %s18, 0
      %p87 = por %p85, %p86
      %s88 = ssub.s32 %s12, %s19
      %p89 = scmp.eq.s32.totalorder %s88, 0
      %s91 = sadd.s32 %s90, 1
      %s92 = scalar_select %p89, %s90, %s91
      %p95 = pneg %p89
      %p96 = scmp.eq.s32.totalorder %s12, 1
      %p97 = por %p95, %p96
      %p98 = scmp.ne.s32.totalorder %s90, %s93
      %p99 = scmp.eq.s32.totalorder %s12, 0
      %p100 = por %p98, %p99
      %p101 = scmp.ne.s32.totalorder %s90, %s93
      %p102 = scmp.eq.s32.totalorder %s17, 1
      %p103 = por %p101, %p102
      %p104 = scmp.ne.s32.totalorder %s93, %s94
      %p105 = scmp.eq.s32.totalorder %s17, 0
      %p106 = por %p104, %p105
      %p107 = scmp.ne.s32.totalorder %s93, %s94
      %p108 = scmp.eq.s32.totalorder %s18, 1
      %p109 = por %p107, %p108
      %p111 = scmp.ne.s32.totalorder %s94, %s110
      %p112 = scmp.eq.s32.totalorder %s18, 0
      %p113 = por %p111, %p112
      %p114 = scmp.le.s32.totalorder 1, %s12
      %p115 = scmp.lt.s32.totalorder %s12, 3
      %p116 = pnand %p114, %p115
      %p117 = pneg %p116
      // Predicated region
      $region9: #{_lambda_.17} parent=5 // pred_check
        _
      $region10: #{_lambda_.17} parent=5 // pred_check_branch
        %119 = sbr.rel (%p116) target = $region12
      $region11: #{_lambda_.17} parent=5 // pred_region
        %s120 = ssub.s32 %s12, 1
        // Predicated region
        $region13: #{_lambda_.17} parent=11 // pred_check
          %p121 = pneg %p59
        $region14: #{_lambda_.17} parent=11 // pred_check_branch
          %123 = sbr.rel (%p121) target = $region16
        $region15: #{_lambda_.17} parent=11 // pred_region
          _
        $region16: #{_lambda_.17} parent=11 // pred_fallthru
          _
        // Predicated region
        $region17: #{_lambda_.17} parent=11 // pred_check
          %p124 = pneg %p80
        $region18: #{_lambda_.17} parent=11 // pred_check_branch
          %126 = sbr.rel (%p124) target = $region20
        $region19: #{_lambda_.17} parent=11 // pred_region
          _
        $region20: #{_lambda_.17} parent=11 // pred_fallthru
          _
      $region12: #{_lambda_.17} parent=5 // pred_fallthru
        _
      %p127 = scmp.lt.s32.totalorder %s12, 2
      // Predicated region
      $region21: #{_lambda_.17} parent=5 // pred_check
        %p128 = pneg %p127
      $region22: #{_lambda_.17} parent=5 // pred_check_branch
        %130 = sbr.rel (%p128) target = $region24
      $region23: #{_lambda_.17} parent=5 // pred_region
        // Predicated region
        $region25: #{_lambda_.17} parent=23 // pred_check
          %p131 = pneg %p32
        $region26: #{_lambda_.17} parent=23 // pred_check_branch
          %133 = sbr.rel (%p131) target = $region28
        $region27: #{_lambda_.17} parent=23 // pred_region
          %p134 = scmp.lt.s32.totalorder %s12, 1
          %s135 = scalar_select %p134, %s12, 1
          %s136 = smul.addr %s135, 8
          %s137 = smul.addr %s136, 4
          %s138 = scalar_lea.vmem %s0, %s137
        $region28: #{_lambda_.17} parent=23 // pred_fallthru
          _
      $region24: #{_lambda_.17} parent=5 // pred_fallthru
        _
      %p139 = scmp.le.s32.totalorder 1, %s12
      %p140 = scmp.lt.s32.totalorder %s12, 3
      %p141 = pnand %p139, %p140
      %p142 = pneg %p141
      // Predicated region
      $region29: #{_lambda_.17} parent=5 // pred_check
        _
      $region30: #{_lambda_.17} parent=5 // pred_check_branch
        %144 = sbr.rel (%p141) target = $region32
      $region31: #{_lambda_.17} parent=5 // pred_region
        %s145 = ssub.s32 %s12, 1
        %p146 = scmp.lt.s32.totalorder %s17, 1
        %s147 = scalar_select %p146, %s17, 1
        %s148 = smul.addr %s147, 8
        %s149 = smul.addr %s148, 4
        %s150 = scalar_lea.vmem %s0, %s149
        %p151 = pneg %p38
        %p152 = pneg %p35
        %p153 = pneg %p59
        %p154 = pneg %p56
        %p155 = pneg %p80
        %p156 = pneg %p77
        %p157 = pneg %p106
        %p158 = pneg %p103
        %s159 = sand.u32 %s93, 1
        %s160 = scalar_lea.sflag [#allocation3], %s159
        %s161 = sand.u32 %s93, 1
        %s162 = scalar_lea.vmem [#allocation2], %s161
        %p163 = scmp.lt.s32.totalorder %s17, 1
        %s164 = scalar_select %p163, %s17, 1
        %s165 = smul.addr %s164, 8
        %s166 = smul.addr %s165, 4
        %s167 = scalar_lea.vmem %s0, %s166
        %v169 = vld [vmem:[%s167] sm:$0xf]
        %v170 = vld [vmem:[%s167 + $0x4] sm:$0xf]
        %v171 = vld [vmem:[%s167 + $0x8] sm:$0xf]
        %v172 = vld [vmem:[%s167 + $0xc] sm:$0xf]
        %v173 = vld [vmem:[%s167 + $0x10] sm:$0xf]
        %v174 = vld [vmem:[%s167 + $0x14] sm:$0xf]
        %v175 = vld [vmem:[%s167 + $0x18] sm:$0xf]
        %v176 = vld [vmem:[%s167 + $0x1c] sm:$0xf]
        %v177 = vld [vmem:[%s1] sm:$0xf]
        %v178 = vld [vmem:[%s1 + $0x4] sm:$0xf]
        %v179 = vld [vmem:[%s1 + $0x8] sm:$0xf]
        %v180 = vld [vmem:[%s1 + $0xc] sm:$0xf]
        %v181 = vld [vmem:[%s1 + $0x10] sm:$0xf]
        %v190 = vunpack.c.l.b16 %v169
        %v191 = vunpack.c.l.b16 %v170
        %v192 = vunpack.c.l.b16 %v171
        %v193 = vunpack.c.l.b16 %v172
        %v194 = vunpack.c.l.b16 %v173
        %v195 = vunpack.c.l.b16 %v174
        %v196 = vunpack.c.l.b16 %v175
        %v197 = vunpack.c.l.b16 %v176
        %v198 = vpack.c.b16 %v191, %v190
        %v199 = vpack.c.b16 %v193, %v192
        %v200 = vpack.c.b16 %v195, %v194
        %v201 = vpack.c.b16 %v197, %v196
        %v207 = vunpack.c.l.b16 %v177
        %v208 = vunpack.c.l.b16 %v178
        %v209 = vunpack.c.l.b16 %v179
        %v210 = vunpack.c.l.b16 %v180
        %v211 = vunpack.c.l.b16 %v181
        %v212 = vpack.c.b16 %v208, %v207
        %v213 = vpack.c.b16 %v210, %v209
        %v214 = vpack.c.b16 %v211, %v211
        %vm217 = vcmask 326656
        %v219 = vsel %vm217, %v198, 0
        %v222 = vsel %vm217, %v199, 0
        %v225 = vsel %vm217, %v200, 0
        %v228 = vsel %vm217, %v201, 0
        %vm230 = vcmask 1043456
        %v232 = vsel %vm230, %v214, 0
        %234 = vmatpush.bf16.msra.mxu0 0
        %235 = vmatpush.bf16.msra.mxu0 0
        %236 = vmatpush.bf16.msra.mxu0 0
        %237 = vmatpush.bf16.msra.mxu0 0
        %238 = vmatpush.bf16.msra.mxu0 0
        %239 = vmatpush.bf16.msra.mxu0 %v232
        %240 = vmatpush.bf16.msra.mxu0 %v213
        %241 = vmatpush.bf16.msra.mxu0 %v212
        %242 = vmatmul.bf16.gmra.mxu0 %v219
        %v243 = vpop.f32.mrf.mxu0
        %v244 = vadd.f32 0.0, %v243
        %v245 = vpop.f32.mrf.mxu0
        %v246 = vadd.f32 0.0, %v245
        %247 = vmatmul.bf16.gmra.mxu0 %v222
        %v248 = vpop.f32.mrf.mxu0
        %v249 = vadd.f32 0.0, %v248
        %v250 = vpop.f32.mrf.mxu0
        %v251 = vadd.f32 0.0, %v250
        %252 = vmatmul.bf16.gmra.mxu0 %v225
        %v253 = vpop.f32.mrf.mxu0
        %v254 = vadd.f32 0.0, %v253
        %v255 = vpop.f32.mrf.mxu0
        %v256 = vadd.f32 0.0, %v255
        %257 = vmatmul.bf16.gmra.mxu0 %v228
        %v258 = vpop.f32.mrf.mxu0
        %v259 = vadd.f32 0.0, %v258
        %v260 = vpop.f32.mrf.mxu0
        %v261 = vadd.f32 0.0, %v260
        %262 = vdwg.mxu0
        %v263 = vmax.f32 %v244, 0.0
        %v264 = vmax.f32 %v246, 0.0
        %v265 = vmax.f32 %v249, 0.0
        %v266 = vmax.f32 %v251, 0.0
        %v267 = vmax.f32 %v254, 0.0
        %v268 = vmax.f32 %v256, 0.0
        %v269 = vmax.f32 %v259, 0.0
        %v270 = vmax.f32 %v261, 0.0
        %v271 = vld [vmem:[%s2] sm:$0x1]
        %v272 = vperm.slane %v271, 0
        %v273 = vmul.f32 %v263, %v272
        %v274 = vmul.f32 %v264, %v272
        %v275 = vmul.f32 %v265, %v272
        %v276 = vmul.f32 %v266, %v272
        %v277 = vmul.f32 %v267, %v272
        %v278 = vmul.f32 %v268, %v272
        %v279 = vmul.f32 %v269, %v272
        %v280 = vmul.f32 %v270, %v272
        %v281 = vld [vmem:[%s2 + $0x1] sm:$0x1]
        %v282 = vperm.slane %v281, 0
        %v283 = vadd.f32 %v273, %v282
        %v284 = vadd.f32 %v274, %v282
        %v285 = vadd.f32 %v275, %v282
        %v286 = vadd.f32 %v276, %v282
        %v287 = vadd.f32 %v277, %v282
        %v288 = vadd.f32 %v278, %v282
        %v289 = vadd.f32 %v279, %v282
        %v290 = vadd.f32 %v280, %v282
        %v291 = vadd.f32 %v283, %v284
        %v292 = vadd.f32 %v291, %v285
        %v293 = vadd.f32 %v292, %v286
        %v294 = vadd.f32 %v293, %v287
        %v295 = vadd.f32 %v294, %v288
        %v296 = vadd.f32 %v295, %v289
        %v297 = vadd.f32 %v296, %v290
        %v298 = vrot.slane %v297, 4
        %v299 = vadd.f32 %v297, %v298
        %v300 = vrot.slane %v299, 2
        %v301 = vadd.f32 %v299, %v300
        %v302 = vrot.slane %v301, 1
        %v303 = vadd.f32 %v301, %v302
        %v304 = vrcp.pop 64.0
        %v305 = vmul.f32 64.0, %v304
        %v306 = vsub.f32 1.0, %v305
        %v307 = vmul.f32 %v304, %v306
        %v308 = vadd.f32 %v304, %v307
        %vm309 = vweird.f32 %v304
        %v310 = vsel %vm309, %v304, %v308
        %v311 = vmul.f32 %v303, %v310
        %312 = vst [vmem:[%s162] sm:$0x1] %v311
        %s313 = sand.u32 %s93, 1
        %s314 = scalar_lea.sflag [#allocation3], %s313
        %s315 = sand.u32 %s93, 1
        %s316 = scalar_lea.vmem [#allocation2], %s315
        // Predicated region
        $region33: #{_lambda_.17} parent=31 // pred_check
          %p317 = pneg %p103
        $region34: #{_lambda_.17} parent=31 // pred_check_branch
          %319 = sbr.rel (%p317) target = $region36
        $region35: #{_lambda_.17} parent=31 // pred_region
          %321 = vsyncadd %s314, 0
          %s322 = scalar_lea.hbm %s3, %s17
          %s324 = sshll.u32 %s316, 4
          %s325 = int_to_ptr.vmem [resolvable:$true] %s324
          %s326 = sshll.u32 %s322, 4
          %s327 = int_to_ptr.hbm [resolvable:$true] %s326
          %329 = dma.vmem_to_hbm [thread:$0]  %s325, 16, %s327, %s314
        $region36: #{_lambda_.17} parent=31 // pred_fallthru
          _
      $region32: #{_lambda_.17} parent=5 // pred_fallthru
        _
      %p330 = scmp.le.s32.totalorder 2, %s12
      // Predicated region
      $region37: #{_lambda_.17} parent=5 // pred_check
        %p331 = pneg %p330
      $region38: #{_lambda_.17} parent=5 // pred_check_branch
        %333 = sbr.rel (%p331) target = $region40
      $region39: #{_lambda_.17} parent=5 // pred_region
        %s334 = ssub.s32 %s12, 2
        // Predicated region
        $region41: #{_lambda_.17} parent=39 // pred_check
          %p335 = pneg %p109
        $region42: #{_lambda_.17} parent=39 // pred_check_branch
          %337 = sbr.rel (%p335) target = $region44
        $region43: #{_lambda_.17} parent=39 // pred_region
          %s338 = sand.u32 %s94, 1
          %s339 = scalar_lea.sflag [#allocation3], %s338
          %s340 = sand.u32 %s94, 1
          %s341 = scalar_lea.vmem [#allocation2], %s340
          %343 = dma.done %s339, 16
        $region44: #{_lambda_.17} parent=39 // pred_fallthru
          _
      $region40: #{_lambda_.17} parent=5 // pred_fallthru
        _
    $region6: #{_lambda_.17} parent=1 // loop_footer
      %s16 = sadd.s32 1, %s12
    $region7: #{_lambda_.17} parent=1 // loop_footer_branch
      %11 = sbr.rel target = $region3
    $region8: #{_lambda_.17} parent=1 // loop_exit
      _
    %344 = vsyncpa [#allocation3], 1
    %s345 = scalar_lea.sflag [#allocation3], 1
    %346 = vsyncpa %s345, 1

</llo_original>
